<compile_context>
chip_gen: v7x
topology: tpu7x:2x2x1
jax: 0.10.0
libtpu: 0.0.40
codegen_flags: <defaults>
</compile_context>

<pallas_src>
import functools

import jax
import jax.numpy as jnp
from jax.experimental import pallas as pl
from jax.experimental.pallas import tpu as pltpu

F32 = jnp.float32
BF16 = jnp.bfloat16
T_STEPS = 4            # hard-coded by `x.unsqueeze(0).repeat(4,1,1,1)` and LIF step=4
DIM_HEAD = 64          # hard-coded by Conv1d(in_channels=64, out_channels=64)
EPS_BN = 1e-5
EPS_LN = 1e-5
TAU = 2.0
LIF_THRESH = 1.0
ATTN_SCALE = 0.125
TI_ALPHA = 0.6
VMEM_LIMIT_BYTES = 48 * 1024 * 1024   # headroom even on v7x (64 MiB physical VMEM)

VMEM_SPEC = pl.BlockSpec(memory_space=pltpu.MemorySpace.VMEM)


# ---------------------------------------------------------------------------
# helpers usable inside kernels
# ---------------------------------------------------------------------------
def _erf(x):
    # erf via Abramowitz–Stegun 7.1.26 (|err| < 1.5e-7 ≈ f32 eps); matches torch exact-erf GELU.
    p = 0.3275911
    a1, a2, a3, a4, a5 = 0.254829592, -0.284496736, 1.421413741, -1.453152027, 1.061405429
    ax = jnp.abs(x)
    t = 1.0 / (1.0 + p * ax)
    poly = ((((a5 * t + a4) * t + a3) * t + a2) * t + a1) * t
    y = 1.0 - poly * jnp.exp(-ax * ax)
    return jnp.where(x >= 0.0, y, -y)


def _gelu_exact(x):
    return 0.5 * x * (1.0 + _erf(x * (1.0 / jnp.sqrt(2.0).astype(F32))))


def _lif_spike(mem, inp):
    """One LIF step: integrate, fire (heaviside), hard reset to 0."""
    mem = mem + (inp - mem) / TAU
    spike = (mem - LIF_THRESH >= 0.0).astype(F32)
    mem = mem * (1.0 - spike)
    return mem, spike


def _pick_cout_tile(cout, cap=512):
    """Largest multiple-of-128 divisor of cout that is <= cap (whole axis if none)."""
    if cout <= cap:
        return cout
    t = (cap // 128) * 128
    while t >= 128:
        if cout % t == 0:
            return t
        t -= 128
    return cout    # TODO(synk): pad instead of falling back to a full-axis block


def _pick_row_tile(rows, cap=512):
    """Largest multiple-of-16 (then 8) divisor of rows <= cap (whole axis if none)."""
    if rows <= cap:
        return rows
    for align in (16, 8):
        t = cap - cap % align
        while t >= align:
            if rows % t == 0:
                return t
            t -= align
    return rows    # TODO(synk): pad instead of falling back to a full-axis block


# ---------------------------------------------------------------------------
# BatchNorm1d (training-mode) folded into per-channel scale/shift — XLA glue.
# Exact Gram-matrix identity lets the Pallas kernel be row-tiled without a
# second stats pass or full-x VMEM residency.
# ---------------------------------------------------------------------------
def _fold_bn_linear(x3, w, b, gamma, beta):
    """x3: (T, G, Cin); w: (Cin, Cout); b/gamma/beta: (1, Cout) -> (scale, shift) (1, Cout)
    such that  BN(x @ W + b) == (x @ W) * scale + shift  with batch statistics."""
    t, g, cin = x3.shape
    rows = t * g
    x2 = x3.reshape(rows, cin)
    m = jnp.sum(x2, axis=0, dtype=F32) / rows                                  # (Cin,)
    gram = jnp.einsum('rc,rd->cd', x2, x2, preferred_element_type=F32) / rows  # (Cin,Cin)
    b0, g0, be0 = b[0], gamma[0], beta[0]
    mean_y = m @ w + b0                                                        # (Cout,)
    aw = gram @ w                                                              # (Cin,Cout)
    ey2 = jnp.sum(w * aw, axis=0) + 2.0 * b0 * (mean_y - b0) + b0 * b0
    var = jnp.maximum(ey2 - mean_y * mean_y, 0.0)                              # clamp >= 0
    scale = g0 * jax.lax.rsqrt(var + EPS_BN)
    shift = be0 - mean_y * scale + b0 * scale                                  # bias folded
    return scale.reshape(1, -1), shift.reshape(1, -1)


# ---------------------------------------------------------------------------
# Pallas kernels
# ---------------------------------------------------------------------------
def _linear_bn_lif_kernel(x_ref, w_ref, scale_ref, shift_ref, *rest, T, with_res):
    """(x[t] @ W) * scale + shift -> LIF over the T leading groups (layer_by_layer, step=T).
    Optional residual added to the spike output (proj path)."""
    if with_res:
        res_ref, out_ref = rest
    else:
        (out_ref,) = rest
    w = w_ref[...]
    scale = scale_ref[...]
    shift = shift_ref[...]
    gt = x_ref.shape[1]
    ct = w.shape[1]
    mem = jnp.zeros((gt, ct), F32)
    for t in range(T):
        y = jnp.dot(x_ref[t].astype(F32), w, preferred_element_type=F32)
        z = y * scale + shift
        mem, spike = _lif_spike(mem, z)
        if with_res:
            out_ref[t] = (spike + res_ref[t]).astype(out_ref.dtype)
        else:
            out_ref[t] = spike.astype(out_ref.dtype)


def _attn_step_kernel(q_ref, k_ref, v_ref, convr_ref, memq_ref, memt_ref, mema_ref,
                      wc_ref, bc_ref,
                      spk_ref, conv_ref, memq_o_ref, memt_o_ref, mema_o_ref,
                      *, H, Dh, is_first):
    """One spiking-attention timestep for one batch element (grid over B).

    Activation refs are (1, N, C=H*Dh).  Does:
      q_temporal_interactor_lif -> alpha mix with q[i] -> temporal_interactor_lif
      -> per-head attention (q@k^T *0.125 @v) -> attn_lif
      -> temporal Conv1d(64,64,k=3,pad=1) of this step's q_ti as ONE stacked matmul,
         feeding the NEXT step (torch's raw-reshape quirk replayed in XLA glue).
    All output stores are single full-width (lane-dense) writes.
    """
    N = q_ref.shape[1]
    C = H * Dh
    q_i = q_ref[0].astype(F32)                                   # (N, C) spikes {0,1}

    if is_first:
        # step 0: q_temporal_interaction = q[0]; the temporal LIF nodes are not called.
        q_ti = q_i
        memq_o_ref[0] = memq_ref[0]
        memt_o_ref[0] = memt_ref[0]
    else:
        mq, sq = _lif_spike(memq_ref[0], convr_ref[0])
        memq_o_ref[0] = mq
        mix = sq * TI_ALPHA + q_i * (1.0 - TI_ALPHA)
        mt, st = _lif_spike(memt_ref[0], mix)
        memt_o_ref[0] = mt
        q_ti = st

    k_i = k_ref[0]                                               # (N, C) bf16 spikes
    v_i = v_ref[0].astype(F32)
    dn_qkt = (((1,), (1,)), ((), ()))                            # q @ k^T
    dn_sv = (((1,), (0,)), ((), ()))                             # s @ v

    # Per-head spiking attention; spikes are exactly {0,1} -> bf16 MXU operands lossless.
    attn_parts = []
    for h in range(H):
        lo = h * Dh
        qh = q_ti[:, lo:lo + Dh]
        kh = k_i[:, lo:lo + Dh]
        vh = v_i[:, lo:lo + Dh]
        s = jax.lax.dot_general(qh.astype(BF16), kh.astype(BF16), dn_qkt,
                                preferred_element_type=F32) * ATTN_SCALE
        attn_parts.append(jax.lax.dot_general(s, vh, dn_sv, preferred_element_type=F32))
    attn = attn_parts[0] if H == 1 else jnp.concatenate(attn_parts, axis=1)   # (N, C)

    ma, sa = _lif_spike(mema_ref[0], attn)                       # attn_lif step
    mema_o_ref[0] = ma
    spk_ref[0] = sa.astype(spk_ref.dtype)

    # Temporal Conv1d of this step's q_ti for the NEXT step: build [x(n-1)|x(n)|x(n+1)]
    # per head, stack all heads along rows, single (H*N, 3*Dh) @ (3*Dh, Dh) matmul.
    zrow = jnp.zeros((1, C), F32)
    q_prev = jnp.concatenate([zrow, q_ti[:N - 1, :]], axis=0)
    q_next = jnp.concatenate([q_ti[1:, :], zrow], axis=0)
    cat_parts = []
    for h in range(H):
        lo = h * Dh
        cat_parts.append(jnp.concatenate(
            [q_prev[:, lo:lo + Dh], q_ti[:, lo:lo + Dh], q_next[:, lo:lo + Dh]], axis=1))
    cat = cat_parts[0] if H == 1 else jnp.concatenate(cat_parts, axis=0)      # (H*N, 3Dh)
    conv = jnp.dot(cat, wc_ref[...], preferred_element_type=F32) + bc_ref[...]
    if H == 1:
        conv_ref[0] = conv
    else:
        conv_ref[0] = jnp.concatenate([conv[h * N:(h + 1) * N, :] for h in range(H)], axis=1)


def _ff_kernel(x_ref, g_ref, w1a_ref, w1g_ref, w2_ref, res_ref, o_ref, acc_ref):
    """LayerNorm -> Linear(no bias) -> GEGLU -> Linear(no bias) + residual.
    Rows tiled ("parallel"); hidden dim tiled ("arbitrary") with an f32 VMEM accumulator."""
    kh = pl.program_id(1)

    @pl.when(kh == 0)
    def _():
        acc_ref[...] = jnp.zeros_like(acc_ref)

    x = x_ref[...]
    mu = jnp.mean(x, axis=-1, keepdims=True)
    var = jnp.mean((x - mu) ** 2, axis=-1, keepdims=True)
    xh = (x - mu) * jax.lax.rsqrt(var + EPS_LN) * g_ref[...]
    a = jnp.dot(xh, w1a_ref[...], preferred_element_type=F32)     # value half
    g = jnp.dot(xh, w1g_ref[...], preferred_element_type=F32)     # gate half
    h = _gelu_exact(g) * a
    acc_ref[...] += jnp.dot(h, w2_ref[...], preferred_element_type=F32)

    @pl.when(kh == pl.num_programs(1) - 1)
    def _():
        o_ref[...] = acc_ref[...] + res_ref[...]


def _mean_ln_kernel(x_ref, g_ref, o_ref, *, T):
    """Mean over the T spike steps of the cls token, then LayerNorm."""
    x = x_ref[...]                                                # (T, B, C)
    acc = x[0]
    for t in range(1, T):
        acc = acc + x[t]
    m = acc / float(T)
    mu = jnp.mean(m, axis=-1, keepdims=True)
    var = jnp.mean((m - mu) ** 2, axis=-1, keepdims=True)
    o_ref[...] = (m - mu) * jax.lax.rsqrt(var + EPS_LN) * g_ref[...]


# ---------------------------------------------------------------------------
# pallas_call wrappers
# ---------------------------------------------------------------------------
def linear_bn_lif(x3, w, scale, shift, *, out_dtype, residual=None):
    """x3: (T, G, Cin) -> spikes (T, G, Cout); BN already folded into (scale, shift)."""
    T_, G, Cin = x3.shape
    Cout = w.shape[1]
    gt = _pick_row_tile(G)
    ct = _pick_cout_tile(Cout)
    kern = functools.partial(_linear_bn_lif_kernel, T=T_, with_res=residual is not None)
    in_specs = [
        pl.BlockSpec((T_, gt, Cin), lambda i, j: (0, i, 0)),
        pl.BlockSpec((Cin, ct), lambda i, j: (0, j)),
        pl.BlockSpec((1, ct), lambda i, j: (0, j)),
        pl.BlockSpec((1, ct), lambda i, j: (0, j)),
    ]
    args = [x3, w, scale, shift]
    if residual is not None:
        in_specs.append(pl.BlockSpec((T_, gt, ct), lambda i, j: (0, i, j)))
        args.append(residual)
    return pl.pallas_call(
        kern,
        out_shape=jax.ShapeDtypeStruct((T_, G, Cout), out_dtype),
        grid=(G // gt, Cout // ct),
        in_specs=in_specs,
        out_specs=pl.BlockSpec((T_, gt, ct), lambda i, j: (0, i, j)),
        compiler_params=pltpu.CompilerParams(
            dimension_semantics=("parallel", "parallel"),
            vmem_limit_bytes=VMEM_LIMIT_BYTES),
    )(*args)


def attn_step(q_i, k_i, v_i, conv_r, mem_q, mem_t, mem_a, conv_w, conv_b,
              *, H, Dh, is_first):
    B, N, C = q_i.shape
    kern = functools.partial(_attn_step_kernel, H=H, Dh=Dh, is_first=is_first)
    act_spec = pl.BlockSpec((1, N, C), lambda b: (b, 0, 0))
    w_spec = pl.BlockSpec((3 * Dh, Dh), lambda b: (0, 0))
    b_spec = pl.BlockSpec((1, Dh), lambda b: (0, 0))
    sd_f32 = jax.ShapeDtypeStruct((B, N, C), F32)
    sd_bf16 = jax.ShapeDtypeStruct((B, N, C), BF16)
    return pl.pallas_call(
        kern,
        out_shape=(sd_bf16, sd_f32, sd_f32, sd_f32, sd_f32),
        grid=(B,),
        in_specs=[act_spec] * 7 + [w_spec, b_spec],
        out_specs=(act_spec,) * 5,
        compiler_params=pltpu.CompilerParams(
            dimension_semantics=("parallel",),
            vmem_limit_bytes=VMEM_LIMIT_BYTES),
    )(q_i, k_i, v_i, conv_r, mem_q, mem_t, mem_a, conv_w, conv_b)


def feed_forward(x2d, ln_g, w1a_t, w1g_t, w2_t, residual):
    rows, C = x2d.shape
    hidden = w1a_t.shape[1]
    rt = _pick_row_tile(rows)
    ht = _pick_cout_tile(hidden, cap=1024)
    return pl.pallas_call(
        _ff_kernel,
        out_shape=jax.ShapeDtypeStruct((rows, C), F32),
        grid=(rows // rt, hidden // ht),
        in_specs=[
            pl.BlockSpec((rt, C), lambda i, k: (i, 0)),
            pl.BlockSpec((1, C), lambda i, k: (0, 0)),
            pl.BlockSpec((C, ht), lambda i, k: (0, k)),
            pl.BlockSpec((C, ht), lambda i, k: (0, k)),
            pl.BlockSpec((ht, C), lambda i, k: (k, 0)),
            pl.BlockSpec((rt, C), lambda i, k: (i, 0)),
        ],
        out_specs=pl.BlockSpec((rt, C), lambda i, k: (i, 0)),
        scratch_shapes=[pltpu.VMEM((rt, C), F32)],
        compiler_params=pltpu.CompilerParams(
            dimension_semantics=("parallel", "arbitrary"),
            vmem_limit_bytes=VMEM_LIMIT_BYTES),
    )(x2d, ln_g, w1a_t, w1g_t, w2_t, residual)


def mean_ln(xcls, ln_g, *, T):
    Tn, B, C = xcls.shape
    kern = functools.partial(_mean_ln_kernel, T=T)
    return pl.pallas_call(
        kern,
        out_shape=jax.ShapeDtypeStruct((B, C), F32),
        in_specs=[VMEM_SPEC, VMEM_SPEC],
        out_specs=VMEM_SPEC,
    )(xcls, ln_g)


# ---------------------------------------------------------------------------
# model glue (residuals fused into kernels / torch raw-reshape replay)
# ---------------------------------------------------------------------------
def _replay_torch_conv_reshape(conv_nd, *, B, N, H, Dh):
    """Replay torch's  conv1d_out(B*H, 64, N).reshape(B, H, N, 64)  — a raw row-major
    re-chunk of the transposed per-head conv output (NOT a transpose) — and bring the
    result back to the (B, N, H*Dh) head-major column layout used by the kernels."""
    c = conv_nd.reshape(B, N, H, Dh).transpose(0, 2, 3, 1)       # (B, H, Dh, N) torch layout
    c = c.reshape(B, H, N, Dh)                                   # raw re-chunk replay
    return c.transpose(0, 2, 1, 3).reshape(B, N, H * Dh)


def attention_block(x4, p, *, T, B, N, C, H, Dh):
    """Attention(x) + x, residual fused into the proj kernel."""
    gsize = B * N
    x3 = x4.reshape(T, gsize, C)

    # fused Q|K|V projection: BN is per-channel and LIF elementwise, so concatenating the
    # three Linear layers along the output axis is exact.  Spikes stored bf16 (lossless).
    sc, sh = _fold_bn_linear(x3, p['qkv_w'], p['qkv_b'], p['qkv_bn_g'], p['qkv_bn_b'])
    qkv = linear_bn_lif(x3, p['qkv_w'], sc, sh, out_dtype=BF16)   # (T, G, 3C) bf16
    qkv = qkv.reshape(T, B, N, 3 * C)
    q_all = qkv[..., 0 * C:1 * C]
    k_all = qkv[..., 1 * C:2 * C]
    v_all = qkv[..., 2 * C:3 * C]

    zeros = jnp.zeros((B, N, C), F32)
    mem_q, mem_t, mem_a = zeros, zeros, zeros
    conv_r = zeros
    spikes = []
    for i in range(T):
        spk, conv_nd, mem_q, mem_t, mem_a = attn_step(
            q_all[i], k_all[i], v_all[i], conv_r, mem_q, mem_t, mem_a,
            p['conv_w'], p['conv_b'], H=H, Dh=Dh, is_first=(i == 0))
        spikes.append(spk)
        if i + 1 < T:
            conv_r = _replay_torch_conv_reshape(conv_nd, B=B, N=N, H=H, Dh=Dh)

    spk3 = jnp.stack(spikes, axis=0).reshape(T, gsize, C)         # attn_lif spikes, bf16
    sc, sh = _fold_bn_linear(spk3, p['proj_w'], p['proj_b'], p['proj_bn_g'], p['proj_bn_b'])
    out = linear_bn_lif(spk3, p['proj_w'], sc, sh, out_dtype=F32, residual=x3)
    return out.reshape(T, B, N, C)


def text_transformer_forward(tokens, params):
    # TODO(synk): the reference computes a pad mask but this Attention variant never
    # consumes it; dropout p=0.0 is likewise a no-op — both intentionally omitted.
    tok_emb = params['tok_emb']
    C = tok_emb.shape[1]
    Dh = DIM_HEAD
    H = C // Dh
    T = T_STEPS
    b, n = tokens.shape

    emb = tok_emb[tokens] + params['pos_emb'][:n][None, :, :]        # (b, n, C)
    cls = jnp.broadcast_to(params['cls'][None, None, :], (b, 1, C))
    x = jnp.concatenate([cls, emb], axis=1).astype(F32)              # (b, N, C)
    N = n + 1
    x4 = jnp.broadcast_to(x[None], (T, b, N, C))                     # (T, B, N, C)

    for layer in params['layers']:
        x4 = attention_block(x4, layer['attn'], T=T, B=b, N=N, C=C, H=H, Dh=Dh)
        ff = layer['ff']
        rows = T * b * N
        x2d = x4.reshape(rows, C)
        x4 = feed_forward(x2d, ff['ln_g'], ff['w1a_t'], ff['w1g_t'], ff['w2_t'],
                          residual=x2d).reshape(T, b, N, C)

    xcls = x4[:, :, 0, :]                                            # (T, B, C) cls token
    return mean_ln(xcls, params['final_ln_g'], T=T)                  # (B, C)


# ---------------------------------------------------------------------------
# deterministic synthetic parameter init (shapes from the reference __init__)
# ---------------------------------------------------------------------------
def init_params(key, *, dim, depth, num_tokens, max_seq_len, heads, dim_head):
    inner = heads * dim_head
    hidden = int(dim * 4 * 2 / 3)                 # FeedForward dim_hidden
    assert inner == dim and dim_head == 64, \
        "reference module requires dim == heads*dim_head and dim_head == 64"
    keys = iter(jax.random.split(key, 128))

    def nrm(shape, scale=0.1):
        return (scale * jax.random.normal(next(keys), shape)).astype(F32)

    params = {
        'tok_emb': nrm((num_tokens, dim), 1.0),
        'pos_emb': nrm((max_seq_len, dim), 1.0),
        'cls': nrm((dim,), 1.0),
        'final_ln_g': jnp.ones((1, dim), F32),
        'layers': [],
    }
    for _ in range(depth):
        attn = {
            'qkv_w': nrm((dim, 3 * inner)),                      # q|k|v fused, stored (in, out)
            'qkv_b': nrm((1, 3 * inner), 0.05),
            'qkv_bn_g': jnp.ones((1, 3 * inner), F32),
            'qkv_bn_b': jnp.zeros((1, 3 * inner), F32),
            'proj_w': nrm((dim, dim)),
            'proj_b': nrm((1, dim), 0.05),
            'proj_bn_g': jnp.ones((1, dim), F32),
            'proj_bn_b': jnp.zeros((1, dim), F32),
            'conv_w': nrm((3 * 64, 64)),                         # [tap-1 ; tap0 ; tap+1] x (in, out)
            'conv_b': nrm((1, 64), 0.05),
        }
        ff = {
            'ln_g': jnp.ones((1, dim), F32),
            'w1a_t': nrm((dim, hidden)),                         # GEGLU value half
            'w1g_t': nrm((dim, hidden)),                         # GEGLU gate half
            'w2_t': nrm((hidden, dim)),
        }
        params['layers'].append({'attn': attn, 'ff': ff})
    return params


# ---------------------------------------------------------------------------
if __name__ == "__main__":
    key = jax.random.PRNGKey(0)
    kp, kt = jax.random.split(key)

    DIM, HEADS, DEPTH = 64, 1, 2
    NUM_TOKENS, MAX_SEQ_LEN = 50, 16
    B, n = 2, 7                                   # -> N = n + 1 = 8 (cls + tokens)

    params = init_params(kp, dim=DIM, depth=DEPTH, num_tokens=NUM_TOKENS,
                         max_seq_len=MAX_SEQ_LEN, heads=HEADS, dim_head=DIM_HEAD)
    tokens = jax.random.randint(kt, (B, n), 1, NUM_TOKENS, dtype=jnp.int32)  # avoid pad_id=0

    out = jax.jit(text_transformer_forward)(tokens, params)
    out = jax.block_until_ready(out)

    assert out.shape == (B, DIM), out.shape
    assert bool(jnp.all(jnp.isfinite(out)))
    print("KERNEL_OK")
</pallas_src>

<mosaic_0001>
module attributes {stable_mosaic.version = 11 : i64} {
  func.func @_linear_bn_lif_kernel(%arg0: i32, %arg1: i32, %arg2: memref<4x16x64xf32, #tpu.memory_space<vmem>>, %arg3: memref<64x192xf32, #tpu.memory_space<vmem>>, %arg4: memref<1x192xf32, #tpu.memory_space<vmem>>, %arg5: memref<1x192xf32, #tpu.memory_space<vmem>>, %arg6: memref<4x16x192xbf16, #tpu.memory_space<vmem>>) attributes {dimension_semantics = [#tpu.dimension_semantics<parallel>, #tpu.dimension_semantics<parallel>], iteration_bounds = array<i64: 1, 1>, scalar_prefetch = 0 : i64, scratch_operands = 0 : i64, tpu.core_type = #tpu.core_type<tc>, window_params = [{transform_indices = @transform_0, window_bounds = array<i64: 4, 16, 64>}, {transform_indices = @transform_1, window_bounds = array<i64: 64, 192>}, {transform_indices = @transform_2, window_bounds = array<i64: 1, 192>}, {transform_indices = @transform_3, window_bounds = array<i64: 1, 192>}, {transform_indices = @transform_4, window_bounds = array<i64: 4, 16, 192>}]} {
    %c0 = arith.constant 0 : index
    %c0_0 = arith.constant 0 : index
    %0 = vector.load %arg3[%c0, %c0_0] : memref<64x192xf32, #tpu.memory_space<vmem>>, vector<64x192xf32>
    %c0_1 = arith.constant 0 : index
    %c0_2 = arith.constant 0 : index
    %1 = vector.load %arg4[%c0_1, %c0_2] : memref<1x192xf32, #tpu.memory_space<vmem>>, vector<1x192xf32>
    %c0_3 = arith.constant 0 : index
    %c0_4 = arith.constant 0 : index
    %2 = vector.load %arg5[%c0_3, %c0_4] : memref<1x192xf32, #tpu.memory_space<vmem>>, vector<1x192xf32>
    %cst = arith.constant 0.000000e+00 : f32
    %3 = vector.broadcast %cst : f32 to vector<16x192xf32>
    %c0_5 = arith.constant 0 : index
    %c0_6 = arith.constant 0 : index
    %c0_7 = arith.constant 0 : index
    %4 = vector.load %arg2[%c0_5, %c0_6, %c0_7] : memref<4x16x64xf32, #tpu.memory_space<vmem>>, vector<1x16x64xf32>
    %5 = vector.shape_cast %4 : vector<1x16x64xf32> to vector<16x64xf32>
    %cst_8 = arith.constant dense<0.000000e+00> : vector<16x192xf32>
    %6 = tpu.matmul %5, %0, %cst_8 {dimension_numbers = #tpu.dot_dimension_numbers<[1], [0], [0], [1], [0, 0, 1, 1], [], []>} : vector<16x64xf32>, vector<64x192xf32>, vector<16x192xf32> -> vector<16x192xf32>
    %7 = vector.broadcast %1 : vector<1x192xf32> to vector<16x192xf32>
    %8 = arith.mulf %6, %7 : vector<16x192xf32>
    %9 = vector.broadcast %2 : vector<1x192xf32> to vector<16x192xf32>
    %10 = arith.addf %8, %9 : vector<16x192xf32>
    %11 = arith.subf %10, %3 : vector<16x192xf32>
    %cst_9 = arith.constant 2.000000e+00 : f32
    %12 = vector.broadcast %cst_9 : f32 to vector<16x192xf32>
    %13 = arith.divf %11, %12 : vector<16x192xf32>
    %14 = arith.addf %3, %13 : vector<16x192xf32>
    %cst_10 = arith.constant 1.000000e+00 : f32
    %15 = vector.broadcast %cst_10 : f32 to vector<16x192xf32>
    %16 = arith.subf %14, %15 : vector<16x192xf32>
    %cst_11 = arith.constant 0.000000e+00 : f32
    %17 = vector.broadcast %cst_11 : f32 to vector<16x192xf32>
    %18 = arith.cmpf oge, %16, %17 : vector<16x192xf32>
    %19 = arith.extui %18 : vector<16x192xi1> to vector<16x192xi32>
    %20 = arith.sitofp %19 : vector<16x192xi32> to vector<16x192xf32>
    %cst_12 = arith.constant 1.000000e+00 : f32
    %21 = vector.broadcast %cst_12 : f32 to vector<16x192xf32>
    %22 = arith.subf %21, %20 : vector<16x192xf32>
    %23 = arith.mulf %14, %22 : vector<16x192xf32>
    %24 = arith.truncf %20 : vector<16x192xf32> to vector<16x192xbf16>
    %c0_13 = arith.constant 0 : index
    %c0_14 = arith.constant 0 : index
    %c0_15 = arith.constant 0 : index
    %25 = vector.load %arg6[%c0_13, %c0_14, %c0_15] : memref<4x16x192xbf16, #tpu.memory_space<vmem>>, vector<1x16x192xbf16>
    %26 = vector.shape_cast %25 : vector<1x16x192xbf16> to vector<16x192xbf16>
    %27 = vector.shape_cast %24 : vector<16x192xbf16> to vector<1x16x192xbf16>
    tpu.vector_store %arg6[%c0_13, %c0_14, %c0_15], %27 {strides = array<i32>} : memref<4x16x192xbf16, #tpu.memory_space<vmem>>, vector<1x16x192xbf16>,
    %c1 = arith.constant 1 : index
    %c0_16 = arith.constant 0 : index
    %c0_17 = arith.constant 0 : index
    %28 = vector.load %arg2[%c1, %c0_16, %c0_17] : memref<4x16x64xf32, #tpu.memory_space<vmem>>, vector<1x16x64xf32>
    %29 = vector.shape_cast %28 : vector<1x16x64xf32> to vector<16x64xf32>
    %cst_18 = arith.constant dense<0.000000e+00> : vector<16x192xf32>
    %30 = tpu.matmul %29, %0, %cst_18 {dimension_numbers = #tpu.dot_dimension_numbers<[1], [0], [0], [1], [0, 0, 1, 1], [], []>} : vector<16x64xf32>, vector<64x192xf32>, vector<16x192xf32> -> vector<16x192xf32>
    %31 = vector.broadcast %1 : vector<1x192xf32> to vector<16x192xf32>
    %32 = arith.mulf %30, %31 : vector<16x192xf32>
    %33 = vector.broadcast %2 : vector<1x192xf32> to vector<16x192xf32>
    %34 = arith.addf %32, %33 : vector<16x192xf32>
    %35 = arith.subf %34, %23 : vector<16x192xf32>
    %cst_19 = arith.constant 2.000000e+00 : f32
    %36 = vector.broadcast %cst_19 : f32 to vector<16x192xf32>
    %37 = arith.divf %35, %36 : vector<16x192xf32>
    %38 = arith.addf %23, %37 : vector<16x192xf32>
    %cst_20 = arith.constant 1.000000e+00 : f32
    %39 = vector.broadcast %cst_20 : f32 to vector<16x192xf32>
    %40 = arith.subf %38, %39 : vector<16x192xf32>
    %cst_21 = arith.constant 0.000000e+00 : f32
    %41 = vector.broadcast %cst_21 : f32 to vector<16x192xf32>
    %42 = arith.cmpf oge, %40, %41 : vector<16x192xf32>
    %43 = arith.extui %42 : vector<16x192xi1> to vector<16x192xi32>
    %44 = arith.sitofp %43 : vector<16x192xi32> to vector<16x192xf32>
    %cst_22 = arith.constant 1.000000e+00 : f32
    %45 = vector.broadcast %cst_22 : f32 to vector<16x192xf32>
    %46 = arith.subf %45, %44 : vector<16x192xf32>
    %47 = arith.mulf %38, %46 : vector<16x192xf32>
    %48 = arith.truncf %44 : vector<16x192xf32> to vector<16x192xbf16>
    %c1_23 = arith.constant 1 : index
    %c0_24 = arith.constant 0 : index
    %c0_25 = arith.constant 0 : index
    %49 = vector.load %arg6[%c1_23, %c0_24, %c0_25] : memref<4x16x192xbf16, #tpu.memory_space<vmem>>, vector<1x16x192xbf16>
    %50 = vector.shape_cast %49 : vector<1x16x192xbf16> to vector<16x192xbf16>
    %51 = vector.shape_cast %48 : vector<16x192xbf16> to vector<1x16x192xbf16>
    tpu.vector_store %arg6[%c1_23, %c0_24, %c0_25], %51 {strides = array<i32>} : memref<4x16x192xbf16, #tpu.memory_space<vmem>>, vector<1x16x192xbf16>,
    %c2 = arith.constant 2 : index
    %c0_26 = arith.constant 0 : index
    %c0_27 = arith.constant 0 : index
    %52 = vector.load %arg2[%c2, %c0_26, %c0_27] : memref<4x16x64xf32, #tpu.memory_space<vmem>>, vector<1x16x64xf32>
    %53 = vector.shape_cast %52 : vector<1x16x64xf32> to vector<16x64xf32>
    %cst_28 = arith.constant dense<0.000000e+00> : vector<16x192xf32>
    %54 = tpu.matmul %53, %0, %cst_28 {dimension_numbers = #tpu.dot_dimension_numbers<[1], [0], [0], [1], [0, 0, 1, 1], [], []>} : vector<16x64xf32>, vector<64x192xf32>, vector<16x192xf32> -> vector<16x192xf32>
    %55 = vector.broadcast %1 : vector<1x192xf32> to vector<16x192xf32>
    %56 = arith.mulf %54, %55 : vector<16x192xf32>
    %57 = vector.broadcast %2 : vector<1x192xf32> to vector<16x192xf32>
    %58 = arith.addf %56, %57 : vector<16x192xf32>
    %59 = arith.subf %58, %47 : vector<16x192xf32>
    %cst_29 = arith.constant 2.000000e+00 : f32
    %60 = vector.broadcast %cst_29 : f32 to vector<16x192xf32>
    %61 = arith.divf %59, %60 : vector<16x192xf32>
    %62 = arith.addf %47, %61 : vector<16x192xf32>
    %cst_30 = arith.constant 1.000000e+00 : f32
    %63 = vector.broadcast %cst_30 : f32 to vector<16x192xf32>
    %64 = arith.subf %62, %63 : vector<16x192xf32>
    %cst_31 = arith.constant 0.000000e+00 : f32
    %65 = vector.broadcast %cst_31 : f32 to vector<16x192xf32>
    %66 = arith.cmpf oge, %64, %65 : vector<16x192xf32>
    %67 = arith.extui %66 : vector<16x192xi1> to vector<16x192xi32>
    %68 = arith.sitofp %67 : vector<16x192xi32> to vector<16x192xf32>
    %cst_32 = arith.constant 1.000000e+00 : f32
    %69 = vector.broadcast %cst_32 : f32 to vector<16x192xf32>
    %70 = arith.subf %69, %68 : vector<16x192xf32>
    %71 = arith.mulf %62, %70 : vector<16x192xf32>
    %72 = arith.truncf %68 : vector<16x192xf32> to vector<16x192xbf16>
    %c2_33 = arith.constant 2 : index
    %c0_34 = arith.constant 0 : index
    %c0_35 = arith.constant 0 : index
    %73 = vector.load %arg6[%c2_33, %c0_34, %c0_35] : memref<4x16x192xbf16, #tpu.memory_space<vmem>>, vector<1x16x192xbf16>
    %74 = vector.shape_cast %73 : vector<1x16x192xbf16> to vector<16x192xbf16>
    %75 = vector.shape_cast %72 : vector<16x192xbf16> to vector<1x16x192xbf16>
    tpu.vector_store %arg6[%c2_33, %c0_34, %c0_35], %75 {strides = array<i32>} : memref<4x16x192xbf16, #tpu.memory_space<vmem>>, vector<1x16x192xbf16>,
    %c3 = arith.constant 3 : index
    %c0_36 = arith.constant 0 : index
    %c0_37 = arith.constant 0 : index
    %76 = vector.load %arg2[%c3, %c0_36, %c0_37] : memref<4x16x64xf32, #tpu.memory_space<vmem>>, vector<1x16x64xf32>
    %77 = vector.shape_cast %76 : vector<1x16x64xf32> to vector<16x64xf32>
    %cst_38 = arith.constant dense<0.000000e+00> : vector<16x192xf32>
    %78 = tpu.matmul %77, %0, %cst_38 {dimension_numbers = #tpu.dot_dimension_numbers<[1], [0], [0], [1], [0, 0, 1, 1], [], []>} : vector<16x64xf32>, vector<64x192xf32>, vector<16x192xf32> -> vector<16x192xf32>
    %79 = vector.broadcast %1 : vector<1x192xf32> to vector<16x192xf32>
    %80 = arith.mulf %78, %79 : vector<16x192xf32>
    %81 = vector.broadcast %2 : vector<1x192xf32> to vector<16x192xf32>
    %82 = arith.addf %80, %81 : vector<16x192xf32>
    %83 = arith.subf %82, %71 : vector<16x192xf32>
    %cst_39 = arith.constant 2.000000e+00 : f32
    %84 = vector.broadcast %cst_39 : f32 to vector<16x192xf32>
    %85 = arith.divf %83, %84 : vector<16x192xf32>
    %86 = arith.addf %71, %85 : vector<16x192xf32>
    %cst_40 = arith.constant 1.000000e+00 : f32
    %87 = vector.broadcast %cst_40 : f32 to vector<16x192xf32>
    %88 = arith.subf %86, %87 : vector<16x192xf32>
    %cst_41 = arith.constant 0.000000e+00 : f32
    %89 = vector.broadcast %cst_41 : f32 to vector<16x192xf32>
    %90 = arith.cmpf oge, %88, %89 : vector<16x192xf32>
    %91 = arith.extui %90 : vector<16x192xi1> to vector<16x192xi32>
    %92 = arith.sitofp %91 : vector<16x192xi32> to vector<16x192xf32>
    %93 = arith.truncf %92 : vector<16x192xf32> to vector<16x192xbf16>
    %c3_42 = arith.constant 3 : index
    %c0_43 = arith.constant 0 : index
    %c0_44 = arith.constant 0 : index
    %94 = vector.load %arg6[%c3_42, %c0_43, %c0_44] : memref<4x16x192xbf16, #tpu.memory_space<vmem>>, vector<1x16x192xbf16>
    %95 = vector.shape_cast %94 : vector<1x16x192xbf16> to vector<16x192xbf16>
    %96 = vector.shape_cast %93 : vector<16x192xbf16> to vector<1x16x192xbf16>
    tpu.vector_store %arg6[%c3_42, %c0_43, %c0_44], %96 {strides = array<i32>} : memref<4x16x192xbf16, #tpu.memory_space<vmem>>, vector<1x16x192xbf16>,
    return
  }
  func.func @transform_0(%arg0: i32, %arg1: i32) -> (i32, i32, i32) {
    %c0_i32 = arith.constant 0 : i32
    %c0_i32_0 = arith.constant 0 : i32
    %c0_i32_1 = arith.constant 0 : i32
    return %c0_i32, %arg0, %c0_i32_0 : i32, i32, i32
  }
  func.func @transform_1(%arg0: i32, %arg1: i32) -> (i32, i32) {
    %c0_i32 = arith.constant 0 : i32
    %c0_i32_0 = arith.constant 0 : i32
    return %c0_i32, %arg1 : i32, i32
  }
  func.func @transform_2(%arg0: i32, %arg1: i32) -> (i32, i32) {
    %c0_i32 = arith.constant 0 : i32
    %c0_i32_0 = arith.constant 0 : i32
    return %c0_i32, %arg1 : i32, i32
  }
  func.func @transform_3(%arg0: i32, %arg1: i32) -> (i32, i32) {
    %c0_i32 = arith.constant 0 : i32
    %c0_i32_0 = arith.constant 0 : i32
    return %c0_i32, %arg1 : i32, i32
  }
  func.func @transform_4(%arg0: i32, %arg1: i32) -> (i32, i32, i32) {
    %c0_i32 = arith.constant 0 : i32
    %c0_i32_0 = arith.constant 0 : i32
    return %c0_i32, %arg0, %arg1 : i32, i32, i32
  }
}

module attributes {stable_mosaic.version = 11 : i64} {
  func.func @_attn_step_kernel(%arg0: i32, %arg1: memref<1x8x64xbf16, #tpu.memory_space<vmem>>, %arg2: memref<1x8x64xbf16, #tpu.memory_space<vmem>>, %arg3: memref<1x8x64xbf16, #tpu.memory_space<vmem>>, %arg4: memref<1x8x64xf32, #tpu.memory_space<vmem>>, %arg5: memref<1x8x64xf32, #tpu.memory_space<vmem>>, %arg6: memref<1x8x64xf32, #tpu.memory_space<vmem>>, %arg7: memref<1x8x64xf32, #tpu.memory_space<vmem>>, %arg8: memref<192x64xf32, #tpu.memory_space<vmem>>, %arg9: memref<1x64xf32, #tpu.memory_space<vmem>>, %arg10: memref<1x8x64xbf16, #tpu.memory_space<vmem>>, %arg11: memref<1x8x64xf32, #tpu.memory_space<vmem>>, %arg12: memref<1x8x64xf32, #tpu.memory_space<vmem>>, %arg13: memref<1x8x64xf32, #tpu.memory_space<vmem>>, %arg14: memref<1x8x64xf32, #tpu.memory_space<vmem>>) attributes {dimension_semantics = [#tpu.dimension_semantics<parallel>], iteration_bounds = array<i64: 2>, scalar_prefetch = 0 : i64, scratch_operands = 0 : i64, tpu.core_type = #tpu.core_type<tc>, window_params = [{transform_indices = @transform_0, window_bounds = array<i64: 1, 8, 64>}, {transform_indices = @transform_1, window_bounds = array<i64: 1, 8, 64>}, {transform_indices = @transform_2, window_bounds = array<i64: 1, 8, 64>}, {transform_indices = @transform_3, window_bounds = array<i64: 1, 8, 64>}, {transform_indices = @transform_4, window_bounds = array<i64: 1, 8, 64>}, {transform_indices = @transform_5, window_bounds = array<i64: 1, 8, 64>}, {transform_indices = @transform_6, window_bounds = array<i64: 1, 8, 64>}, {pipeline_mode = #tpu.pipeline_mode<synchronous>, transform_indices = @transform_7, window_bounds = array<i64: 192, 64>}, {pipeline_mode = #tpu.pipeline_mode<synchronous>, transform_indices = @transform_8, window_bounds = array<i64: 1, 64>}, {transform_indices = @transform_9, window_bounds = array<i64: 1, 8, 64>}, {transform_indices = @transform_10, window_bounds = array<i64: 1, 8, 64>}, {transform_indices = @transform_11, window_bounds = array<i64: 1, 8, 64>}, {transform_indices = @transform_12, window_bounds = array<i64: 1, 8, 64>}, {transform_indices = @transform_13, window_bounds = array<i64: 1, 8, 64>}]} {
    %c0 = arith.constant 0 : index
    %c0_0 = arith.constant 0 : index
    %c0_1 = arith.constant 0 : index
    %0 = vector.load %arg1[%c0, %c0_0, %c0_1] : memref<1x8x64xbf16, #tpu.memory_space<vmem>>, vector<1x8x64xbf16>
    %1 = vector.shape_cast %0 : vector<1x8x64xbf16> to vector<8x64xbf16>
    %2 = arith.extf %1 : vector<8x64xbf16> to vector<8x64xf32>
    %c0_2 = arith.constant 0 : index
    %c0_3 = arith.constant 0 : index
    %c0_4 = arith.constant 0 : index
    %3 = vector.load %arg5[%c0_2, %c0_3, %c0_4] : memref<1x8x64xf32, #tpu.memory_space<vmem>>, vector<1x8x64xf32>
    %4 = vector.shape_cast %3 : vector<1x8x64xf32> to vector<8x64xf32>
    %c0_5 = arith.constant 0 : index
    %c0_6 = arith.constant 0 : index
    %c0_7 = arith.constant 0 : index
    %5 = vector.load %arg12[%c0_5, %c0_6, %c0_7] : memref<1x8x64xf32, #tpu.memory_space<vmem>>, vector<1x8x64xf32>
    %6 = vector.shape_cast %5 : vector<1x8x64xf32> to vector<8x64xf32>
    %7 = vector.shape_cast %4 : vector<8x64xf32> to vector<1x8x64xf32>
    tpu.vector_store %arg12[%c0_5, %c0_6, %c0_7], %7 {strides = array<i32>} : memref<1x8x64xf32, #tpu.memory_space<vmem>>, vector<1x8x64xf32>,
    %c0_8 = arith.constant 0 : index
    %c0_9 = arith.constant 0 : index
    %c0_10 = arith.constant 0 : index
    %8 = vector.load %arg6[%c0_8, %c0_9, %c0_10] : memref<1x8x64xf32, #tpu.memory_space<vmem>>, vector<1x8x64xf32>
    %9 = vector.shape_cast %8 : vector<1x8x64xf32> to vector<8x64xf32>
    %c0_11 = arith.constant 0 : index
    %c0_12 = arith.constant 0 : index
    %c0_13 = arith.constant 0 : index
    %10 = vector.load %arg13[%c0_11, %c0_12, %c0_13] : memref<1x8x64xf32, #tpu.memory_space<vmem>>, vector<1x8x64xf32>
    %11 = vector.shape_cast %10 : vector<1x8x64xf32> to vector<8x64xf32>
    %12 = vector.shape_cast %9 : vector<8x64xf32> to vector<1x8x64xf32>
    tpu.vector_store %arg13[%c0_11, %c0_12, %c0_13], %12 {strides = array<i32>} : memref<1x8x64xf32, #tpu.memory_space<vmem>>, vector<1x8x64xf32>,
    %c0_14 = arith.constant 0 : index
    %c0_15 = arith.constant 0 : index
    %c0_16 = arith.constant 0 : index
    %13 = vector.load %arg2[%c0_14, %c0_15, %c0_16] : memref<1x8x64xbf16, #tpu.memory_space<vmem>>, vector<1x8x64xbf16>
    %14 = vector.shape_cast %13 : vector<1x8x64xbf16> to vector<8x64xbf16>
    %c0_17 = arith.constant 0 : index
    %c0_18 = arith.constant 0 : index
    %c0_19 = arith.constant 0 : index
    %15 = vector.load %arg3[%c0_17, %c0_18, %c0_19] : memref<1x8x64xbf16, #tpu.memory_space<vmem>>, vector<1x8x64xbf16>
    %16 = vector.shape_cast %15 : vector<1x8x64xbf16> to vector<8x64xbf16>
    %17 = arith.extf %16 : vector<8x64xbf16> to vector<8x64xf32>
    %18 = arith.truncf %2 : vector<8x64xf32> to vector<8x64xbf16>
    %cst = arith.constant dense<0.000000e+00> : vector<8x8xf32>
    %19 = tpu.matmul %18, %14, %cst {dimension_numbers = #tpu.dot_dimension_numbers<[1], [1], [0], [0], [0, 0, 1, 0], [], []>} : vector<8x64xbf16>, vector<8x64xbf16>, vector<8x8xf32> -> vector<8x8xf32>
    %cst_20 = arith.constant 1.250000e-01 : f32
    %20 = vector.broadcast %cst_20 : f32 to vector<8x8xf32>
    %21 = arith.mulf %19, %20 : vector<8x8xf32>
    %cst_21 = arith.constant dense<0.000000e+00> : vector<8x64xf32>
    %22 = tpu.matmul %21, %17, %cst_21 {dimension_numbers = #tpu.dot_dimension_numbers<[1], [0], [0], [1], [0, 0, 1, 1], [], []>} : vector<8x8xf32>, vector<8x64xf32>, vector<8x64xf32> -> vector<8x64xf32>
    %c0_22 = arith.constant 0 : index
    %c0_23 = arith.constant 0 : index
    %c0_24 = arith.constant 0 : index
    %23 = vector.load %arg7[%c0_22, %c0_23, %c0_24] : memref<1x8x64xf32, #tpu.memory_space<vmem>>, vector<1x8x64xf32>
    %24 = vector.shape_cast %23 : vector<1x8x64xf32> to vector<8x64xf32>
    %25 = arith.subf %22, %24 : vector<8x64xf32>
    %cst_25 = arith.constant 2.000000e+00 : f32
    %26 = vector.broadcast %cst_25 : f32 to vector<8x64xf32>
    %27 = arith.divf %25, %26 : vector<8x64xf32>
    %28 = arith.addf %24, %27 : vector<8x64xf32>
    %cst_26 = arith.constant 1.000000e+00 : f32
    %29 = vector.broadcast %cst_26 : f32 to vector<8x64xf32>
    %30 = arith.subf %28, %29 : vector<8x64xf32>
    %cst_27 = arith.constant 0.000000e+00 : f32
    %31 = vector.broadcast %cst_27 : f32 to vector<8x64xf32>
    %32 = arith.cmpf oge, %30, %31 : vector<8x64xf32>
    %33 = arith.extui %32 : vector<8x64xi1> to vector<8x64xi32>
    %34 = arith.sitofp %33 : vector<8x64xi32> to vector<8x64xf32>
    %cst_28 = arith.constant 1.000000e+00 : f32
    %35 = vector.broadcast %cst_28 : f32 to vector<8x64xf32>
    %36 = arith.subf %35, %34 : vector<8x64xf32>
    %37 = arith.mulf %28, %36 : vector<8x64xf32>
    %c0_29 = arith.constant 0 : index
    %c0_30 = arith.constant 0 : index
    %c0_31 = arith.constant 0 : index
    %38 = vector.load %arg14[%c0_29, %c0_30, %c0_31] : memref<1x8x64xf32, #tpu.memory_space<vmem>>, vector<1x8x64xf32>
    %39 = vector.shape_cast %38 : vector<1x8x64xf32> to vector<8x64xf32>
    %40 = vector.shape_cast %37 : vector<8x64xf32> to vector<1x8x64xf32>
    tpu.vector_store %arg14[%c0_29, %c0_30, %c0_31], %40 {strides = array<i32>} : memref<1x8x64xf32, #tpu.memory_space<vmem>>, vector<1x8x64xf32>,
    %41 = arith.truncf %34 : vector<8x64xf32> to vector<8x64xbf16>
    %c0_32 = arith.constant 0 : index
    %c0_33 = arith.constant 0 : index
    %c0_34 = arith.constant 0 : index
    %42 = vector.load %arg10[%c0_32, %c0_33, %c0_34] : memref<1x8x64xbf16, #tpu.memory_space<vmem>>, vector<1x8x64xbf16>
    %43 = vector.shape_cast %42 : vector<1x8x64xbf16> to vector<8x64xbf16>
    %44 = vector.shape_cast %41 : vector<8x64xbf16> to vector<1x8x64xbf16>
    tpu.vector_store %arg10[%c0_32, %c0_33, %c0_34], %44 {strides = array<i32>} : memref<1x8x64xbf16, #tpu.memory_space<vmem>>, vector<1x8x64xbf16>,
    %cst_35 = arith.constant 0.000000e+00 : f32
    %45 = vector.broadcast %cst_35 : f32 to vector<1x64xf32>
    %46 = vector.extract_strided_slice %2 {offsets = [0, 0], sizes = [7, 64], strides = [1, 1]} : vector<8x64xf32> to vector<7x64xf32>
    %47 = tpu.concatenate %45, %46 in 0 : vector<1x64xf32>, vector<7x64xf32> -> vector<8x64xf32>
    %48 = vector.extract_strided_slice %2 {offsets = [1, 0], sizes = [7, 64], strides = [1, 1]} : vector<8x64xf32> to vector<7x64xf32>
    %49 = tpu.concatenate %48, %45 in 0 : vector<7x64xf32>, vector<1x64xf32> -> vector<8x64xf32>
    %50 = tpu.concatenate %47, %2, %49 in 1 : vector<8x64xf32>, vector<8x64xf32>, vector<8x64xf32> -> vector<8x192xf32>
    %c0_36 = arith.constant 0 : index
    %c0_37 = arith.constant 0 : index
    %51 = vector.load %arg8[%c0_36, %c0_37] : memref<192x64xf32, #tpu.memory_space<vmem>>, vector<192x64xf32>
    %cst_38 = arith.constant dense<0.000000e+00> : vector<8x64xf32>
    %52 = tpu.matmul %50, %51, %cst_38 {dimension_numbers = #tpu.dot_dimension_numbers<[1], [0], [0], [1], [0, 0, 1, 1], [], []>} : vector<8x192xf32>, vector<192x64xf32>, vector<8x64xf32> -> vector<8x64xf32>
    %c0_39 = arith.constant 0 : index
    %c0_40 = arith.constant 0 : index
    %53 = vector.load %arg9[%c0_39, %c0_40] : memref<1x64xf32, #tpu.memory_space<vmem>>, vector<1x64xf32>
    %54 = vector.broadcast %53 : vector<1x64xf32> to vector<8x64xf32>
    %55 = arith.addf %52, %54 : vector<8x64xf32>
    %c0_41 = arith.constant 0 : index
    %c0_42 = arith.constant 0 : index
    %c0_43 = arith.constant 0 : index
    %56 = vector.load %arg11[%c0_41, %c0_42, %c0_43] : memref<1x8x64xf32, #tpu.memory_space<vmem>>, vector<1x8x64xf32>
    %57 = vector.shape_cast %56 : vector<1x8x64xf32> to vector<8x64xf32>
    %58 = vector.shape_cast %55 : vector<8x64xf32> to vector<1x8x64xf32>
    tpu.vector_store %arg11[%c0_41, %c0_42, %c0_43], %58 {strides = array<i32>} : memref<1x8x64xf32, #tpu.memory_space<vmem>>, vector<1x8x64xf32>,
    return
  }
  func.func @transform_0(%arg0: i32) -> (i32, i32, i32) {
    %c0_i32 = arith.constant 0 : i32
    %c0_i32_0 = arith.constant 0 : i32
    %c0_i32_1 = arith.constant 0 : i32
    return %arg0, %c0_i32, %c0_i32_0 : i32, i32, i32
  }
  func.func @transform_1(%arg0: i32) -> (i32, i32, i32) {
    %c0_i32 = arith.constant 0 : i32
    %c0_i32_0 = arith.constant 0 : i32
    %c0_i32_1 = arith.constant 0 : i32
    return %arg0, %c0_i32, %c0_i32_0 : i32, i32, i32
  }
  func.func @transform_2(%arg0: i32) -> (i32, i32, i32) {
    %c0_i32 = arith.constant 0 : i32
    %c0_i32_0 = arith.constant 0 : i32
    %c0_i32_1 = arith.constant 0 : i32
    return %arg0, %c0_i32, %c0_i32_0 : i32, i32, i32
  }
  func.func @transform_3(%arg0: i32) -> (i32, i32, i32) {
    %c0_i32 = arith.constant 0 : i32
    %c0_i32_0 = arith.constant 0 : i32
    %c0_i32_1 = arith.constant 0 : i32
    return %arg0, %c0_i32, %c0_i32_0 : i32, i32, i32
  }
  func.func @transform_4(%arg0: i32) -> (i32, i32, i32) {
    %c0_i32 = arith.constant 0 : i32
    %c0_i32_0 = arith.constant 0 : i32
    %c0_i32_1 = arith.constant 0 : i32
    return %arg0, %c0_i32, %c0_i32_0 : i32, i32, i32
  }
  func.func @transform_5(%arg0: i32) -> (i32, i32, i32) {
    %c0_i32 = arith.constant 0 : i32
    %c0_i32_0 = arith.constant 0 : i32
    %c0_i32_1 = arith.constant 0 : i32
    return %arg0, %c0_i32, %c0_i32_0 : i32, i32, i32
  }
  func.func @transform_6(%arg0: i32) -> (i32, i32, i32) {
    %c0_i32 = arith.constant 0 : i32
    %c0_i32_0 = arith.constant 0 : i32
    %c0_i32_1 = arith.constant 0 : i32
    return %arg0, %c0_i32, %c0_i32_0 : i32, i32, i32
  }
  func.func @transform_7(%arg0: i32) -> (i32, i32) {
    %c0_i32 = arith.constant 0 : i32
    %c0_i32_0 = arith.constant 0 : i32
    %c0_i32_1 = arith.constant 0 : i32
    return %c0_i32, %c0_i32_0 : i32, i32
  }
  func.func @transform_8(%arg0: i32) -> (i32, i32) {
    %c0_i32 = arith.constant 0 : i32
    %c0_i32_0 = arith.constant 0 : i32
    %c0_i32_1 = arith.constant 0 : i32
    return %c0_i32, %c0_i32_0 : i32, i32
  }
  func.func @transform_9(%arg0: i32) -> (i32, i32, i32) {
    %c0_i32 = arith.constant 0 : i32
    %c0_i32_0 = arith.constant 0 : i32
    %c0_i32_1 = arith.constant 0 : i32
    return %arg0, %c0_i32, %c0_i32_0 : i32, i32, i32
  }
  func.func @transform_10(%arg0: i32) -> (i32, i32, i32) {
    %c0_i32 = arith.constant 0 : i32
    %c0_i32_0 = arith.constant 0 : i32
    %c0_i32_1 = arith.constant 0 : i32
    return %arg0, %c0_i32, %c0_i32_0 : i32, i32, i32
  }
  func.func @transform_11(%arg0: i32) -> (i32, i32, i32) {
    %c0_i32 = arith.constant 0 : i32
    %c0_i32_0 = arith.constant 0 : i32
    %c0_i32_1 = arith.constant 0 : i32
    return %arg0, %c0_i32, %c0_i32_0 : i32, i32, i32
  }
  func.func @transform_12(%arg0: i32) -> (i32, i32, i32) {
    %c0_i32 = arith.constant 0 : i32
    %c0_i32_0 = arith.constant 0 : i32
    %c0_i32_1 = arith.constant 0 : i32
    return %arg0, %c0_i32, %c0_i32_0 : i32, i32, i32
  }
  func.func @transform_13(%arg0: i32) -> (i32, i32, i32) {
    %c0_i32 = arith.constant 0 : i32
    %c0_i32_0 = arith.constant 0 : i32
    %c0_i32_1 = arith.constant 0 : i32
    return %arg0, %c0_i32, %c0_i32_0 : i32, i32, i32
  }
}

module attributes {stable_mosaic.version = 11 : i64} {
  func.func @_attn_step_kernel(%arg0: i32, %arg1: memref<1x8x64xbf16, #tpu.memory_space<vmem>>, %arg2: memref<1x8x64xbf16, #tpu.memory_space<vmem>>, %arg3: memref<1x8x64xbf16, #tpu.memory_space<vmem>>, %arg4: memref<1x8x64xf32, #tpu.memory_space<vmem>>, %arg5: memref<1x8x64xf32, #tpu.memory_space<vmem>>, %arg6: memref<1x8x64xf32, #tpu.memory_space<vmem>>, %arg7: memref<1x8x64xf32, #tpu.memory_space<vmem>>, %arg8: memref<192x64xf32, #tpu.memory_space<vmem>>, %arg9: memref<1x64xf32, #tpu.memory_space<vmem>>, %arg10: memref<1x8x64xbf16, #tpu.memory_space<vmem>>, %arg11: memref<1x8x64xf32, #tpu.memory_space<vmem>>, %arg12: memref<1x8x64xf32, #tpu.memory_space<vmem>>, %arg13: memref<1x8x64xf32, #tpu.memory_space<vmem>>, %arg14: memref<1x8x64xf32, #tpu.memory_space<vmem>>) attributes {dimension_semantics = [#tpu.dimension_semantics<parallel>], iteration_bounds = array<i64: 2>, scalar_prefetch = 0 : i64, scratch_operands = 0 : i64, tpu.core_type = #tpu.core_type<tc>, window_params = [{transform_indices = @transform_0, window_bounds = array<i64: 1, 8, 64>}, {transform_indices = @transform_1, window_bounds = array<i64: 1, 8, 64>}, {transform_indices = @transform_2, window_bounds = array<i64: 1, 8, 64>}, {transform_indices = @transform_3, window_bounds = array<i64: 1, 8, 64>}, {transform_indices = @transform_4, window_bounds = array<i64: 1, 8, 64>}, {transform_indices = @transform_5, window_bounds = array<i64: 1, 8, 64>}, {transform_indices = @transform_6, window_bounds = array<i64: 1, 8, 64>}, {pipeline_mode = #tpu.pipeline_mode<synchronous>, transform_indices = @transform_7, window_bounds = array<i64: 192, 64>}, {pipeline_mode = #tpu.pipeline_mode<synchronous>, transform_indices = @transform_8, window_bounds = array<i64: 1, 64>}, {transform_indices = @transform_9, window_bounds = array<i64: 1, 8, 64>}, {transform_indices = @transform_10, window_bounds = array<i64: 1, 8, 64>}, {transform_indices = @transform_11, window_bounds = array<i64: 1, 8, 64>}, {transform_indices = @transform_12, window_bounds = array<i64: 1, 8, 64>}, {transform_indices = @transform_13, window_bounds = array<i64: 1, 8, 64>}]} {
    %c0 = arith.constant 0 : index
    %c0_0 = arith.constant 0 : index
    %c0_1 = arith.constant 0 : index
    %0 = vector.load %arg1[%c0, %c0_0, %c0_1] : memref<1x8x64xbf16, #tpu.memory_space<vmem>>, vector<1x8x64xbf16>
    %1 = vector.shape_cast %0 : vector<1x8x64xbf16> to vector<8x64xbf16>
    %2 = arith.extf %1 : vector<8x64xbf16> to vector<8x64xf32>
    %c0_2 = arith.constant 0 : index
    %c0_3 = arith.constant 0 : index
    %c0_4 = arith.constant 0 : index
    %3 = vector.load %arg5[%c0_2, %c0_3, %c0_4] : memref<1x8x64xf32, #tpu.memory_space<vmem>>, vector<1x8x64xf32>
    %4 = vector.shape_cast %3 : vector<1x8x64xf32> to vector<8x64xf32>
    %c0_5 = arith.constant 0 : index
    %c0_6 = arith.constant 0 : index
    %c0_7 = arith.constant 0 : index
    %5 = vector.load %arg4[%c0_5, %c0_6, %c0_7] : memref<1x8x64xf32, #tpu.memory_space<vmem>>, vector<1x8x64xf32>
    %6 = vector.shape_cast %5 : vector<1x8x64xf32> to vector<8x64xf32>
    %7 = arith.subf %6, %4 : vector<8x64xf32>
    %cst = arith.constant 2.000000e+00 : f32
    %8 = vector.broadcast %cst : f32 to vector<8x64xf32>
    %9 = arith.divf %7, %8 : vector<8x64xf32>
    %10 = arith.addf %4, %9 : vector<8x64xf32>
    %cst_8 = arith.constant 1.000000e+00 : f32
    %11 = vector.broadcast %cst_8 : f32 to vector<8x64xf32>
    %12 = arith.subf %10, %11 : vector<8x64xf32>
    %cst_9 = arith.constant 0.000000e+00 : f32
    %13 = vector.broadcast %cst_9 : f32 to vector<8x64xf32>
    %14 = arith.cmpf oge, %12, %13 : vector<8x64xf32>
    %15 = arith.extui %14 : vector<8x64xi1> to vector<8x64xi32>
    %16 = arith.sitofp %15 : vector<8x64xi32> to vector<8x64xf32>
    %cst_10 = arith.constant 1.000000e+00 : f32
    %17 = vector.broadcast %cst_10 : f32 to vector<8x64xf32>
    %18 = arith.subf %17, %16 : vector<8x64xf32>
    %19 = arith.mulf %10, %18 : vector<8x64xf32>
    %c0_11 = arith.constant 0 : index
    %c0_12 = arith.constant 0 : index
    %c0_13 = arith.constant 0 : index
    %20 = vector.load %arg12[%c0_11, %c0_12, %c0_13] : memref<1x8x64xf32, #tpu.memory_space<vmem>>, vector<1x8x64xf32>
    %21 = vector.shape_cast %20 : vector<1x8x64xf32> to vector<8x64xf32>
    %22 = vector.shape_cast %19 : vector<8x64xf32> to vector<1x8x64xf32>
    tpu.vector_store %arg12[%c0_11, %c0_12, %c0_13], %22 {strides = array<i32>} : memref<1x8x64xf32, #tpu.memory_space<vmem>>, vector<1x8x64xf32>,
    %cst_14 = arith.constant 6.000000e-01 : f32
    %23 = vector.broadcast %cst_14 : f32 to vector<8x64xf32>
    %24 = arith.mulf %16, %23 : vector<8x64xf32>
    %cst_15 = arith.constant 4.000000e-01 : f32
    %25 = vector.broadcast %cst_15 : f32 to vector<8x64xf32>
    %26 = arith.mulf %2, %25 : vector<8x64xf32>
    %27 = arith.addf %24, %26 : vector<8x64xf32>
    %c0_16 = arith.constant 0 : index
    %c0_17 = arith.constant 0 : index
    %c0_18 = arith.constant 0 : index
    %28 = vector.load %arg6[%c0_16, %c0_17, %c0_18] : memref<1x8x64xf32, #tpu.memory_space<vmem>>, vector<1x8x64xf32>
    %29 = vector.shape_cast %28 : vector<1x8x64xf32> to vector<8x64xf32>
    %30 = arith.subf %27, %29 : vector<8x64xf32>
    %cst_19 = arith.constant 2.000000e+00 : f32
    %31 = vector.broadcast %cst_19 : f32 to vector<8x64xf32>
    %32 = arith.divf %30, %31 : vector<8x64xf32>
    %33 = arith.addf %29, %32 : vector<8x64xf32>
    %cst_20 = arith.constant 1.000000e+00 : f32
    %34 = vector.broadcast %cst_20 : f32 to vector<8x64xf32>
    %35 = arith.subf %33, %34 : vector<8x64xf32>
    %cst_21 = arith.constant 0.000000e+00 : f32
    %36 = vector.broadcast %cst_21 : f32 to vector<8x64xf32>
    %37 = arith.cmpf oge, %35, %36 : vector<8x64xf32>
    %38 = arith.extui %37 : vector<8x64xi1> to vector<8x64xi32>
    %39 = arith.sitofp %38 : vector<8x64xi32> to vector<8x64xf32>
    %cst_22 = arith.constant 1.000000e+00 : f32
    %40 = vector.broadcast %cst_22 : f32 to vector<8x64xf32>
    %41 = arith.subf %40, %39 : vector<8x64xf32>
    %42 = arith.mulf %33, %41 : vector<8x64xf32>
    %c0_23 = arith.constant 0 : index
    %c0_24 = arith.constant 0 : index
    %c0_25 = arith.constant 0 : index
    %43 = vector.load %arg13[%c0_23, %c0_24, %c0_25] : memref<1x8x64xf32, #tpu.memory_space<vmem>>, vector<1x8x64xf32>
    %44 = vector.shape_cast %43 : vector<1x8x64xf32> to vector<8x64xf32>
    %45 = vector.shape_cast %42 : vector<8x64xf32> to vector<1x8x64xf32>
    tpu.vector_store %arg13[%c0_23, %c0_24, %c0_25], %45 {strides = array<i32>} : memref<1x8x64xf32, #tpu.memory_space<vmem>>, vector<1x8x64xf32>,
    %c0_26 = arith.constant 0 : index
    %c0_27 = arith.constant 0 : index
    %c0_28 = arith.constant 0 : index
    %46 = vector.load %arg2[%c0_26, %c0_27, %c0_28] : memref<1x8x64xbf16, #tpu.memory_space<vmem>>, vector<1x8x64xbf16>
    %47 = vector.shape_cast %46 : vector<1x8x64xbf16> to vector<8x64xbf16>
    %c0_29 = arith.constant 0 : index
    %c0_30 = arith.constant 0 : index
    %c0_31 = arith.constant 0 : index
    %48 = vector.load %arg3[%c0_29, %c0_30, %c0_31] : memref<1x8x64xbf16, #tpu.memory_space<vmem>>, vector<1x8x64xbf16>
    %49 = vector.shape_cast %48 : vector<1x8x64xbf16> to vector<8x64xbf16>
    %50 = arith.extf %49 : vector<8x64xbf16> to vector<8x64xf32>
    %51 = arith.truncf %39 : vector<8x64xf32> to vector<8x64xbf16>
    %cst_32 = arith.constant dense<0.000000e+00> : vector<8x8xf32>
    %52 = tpu.matmul %51, %47, %cst_32 {dimension_numbers = #tpu.dot_dimension_numbers<[1], [1], [0], [0], [0, 0, 1, 0], [], []>} : vector<8x64xbf16>, vector<8x64xbf16>, vector<8x8xf32> -> vector<8x8xf32>
    %cst_33 = arith.constant 1.250000e-01 : f32
    %53 = vector.broadcast %cst_33 : f32 to vector<8x8xf32>
    %54 = arith.mulf %52, %53 : vector<8x8xf32>
    %cst_34 = arith.constant dense<0.000000e+00> : vector<8x64xf32>
    %55 = tpu.matmul %54, %50, %cst_34 {dimension_numbers = #tpu.dot_dimension_numbers<[1], [0], [0], [1], [0, 0, 1, 1], [], []>} : vector<8x8xf32>, vector<8x64xf32>, vector<8x64xf32> -> vector<8x64xf32>
    %c0_35 = arith.constant 0 : index
    %c0_36 = arith.constant 0 : index
    %c0_37 = arith.constant 0 : index
    %56 = vector.load %arg7[%c0_35, %c0_36, %c0_37] : memref<1x8x64xf32, #tpu.memory_space<vmem>>, vector<1x8x64xf32>
    %57 = vector.shape_cast %56 : vector<1x8x64xf32> to vector<8x64xf32>
    %58 = arith.subf %55, %57 : vector<8x64xf32>
    %cst_38 = arith.constant 2.000000e+00 : f32
    %59 = vector.broadcast %cst_38 : f32 to vector<8x64xf32>
    %60 = arith.divf %58, %59 : vector<8x64xf32>
    %61 = arith.addf %57, %60 : vector<8x64xf32>
    %cst_39 = arith.constant 1.000000e+00 : f32
    %62 = vector.broadcast %cst_39 : f32 to vector<8x64xf32>
    %63 = arith.subf %61, %62 : vector<8x64xf32>
    %cst_40 = arith.constant 0.000000e+00 : f32
    %64 = vector.broadcast %cst_40 : f32 to vector<8x64xf32>
    %65 = arith.cmpf oge, %63, %64 : vector<8x64xf32>
    %66 = arith.extui %65 : vector<8x64xi1> to vector<8x64xi32>
    %67 = arith.sitofp %66 : vector<8x64xi32> to vector<8x64xf32>
    %cst_41 = arith.constant 1.000000e+00 : f32
    %68 = vector.broadcast %cst_41 : f32 to vector<8x64xf32>
    %69 = arith.subf %68, %67 : vector<8x64xf32>
    %70 = arith.mulf %61, %69 : vector<8x64xf32>
    %c0_42 = arith.constant 0 : index
    %c0_43 = arith.constant 0 : index
    %c0_44 = arith.constant 0 : index
    %71 = vector.load %arg14[%c0_42, %c0_43, %c0_44] : memref<1x8x64xf32, #tpu.memory_space<vmem>>, vector<1x8x64xf32>
    %72 = vector.shape_cast %71 : vector<1x8x64xf32> to vector<8x64xf32>
    %73 = vector.shape_cast %70 : vector<8x64xf32> to vector<1x8x64xf32>
    tpu.vector_store %arg14[%c0_42, %c0_43, %c0_44], %73 {strides = array<i32>} : memref<1x8x64xf32, #tpu.memory_space<vmem>>, vector<1x8x64xf32>,
    %74 = arith.truncf %67 : vector<8x64xf32> to vector<8x64xbf16>
    %c0_45 = arith.constant 0 : index
    %c0_46 = arith.constant 0 : index
    %c0_47 = arith.constant 0 : index
    %75 = vector.load %arg10[%c0_45, %c0_46, %c0_47] : memref<1x8x64xbf16, #tpu.memory_space<vmem>>, vector<1x8x64xbf16>
    %76 = vector.shape_cast %75 : vector<1x8x64xbf16> to vector<8x64xbf16>
    %77 = vector.shape_cast %74 : vector<8x64xbf16> to vector<1x8x64xbf16>
    tpu.vector_store %arg10[%c0_45, %c0_46, %c0_47], %77 {strides = array<i32>} : memref<1x8x64xbf16, #tpu.memory_space<vmem>>, vector<1x8x64xbf16>,
    %cst_48 = arith.constant 0.000000e+00 : f32
    %78 = vector.broadcast %cst_48 : f32 to vector<1x64xf32>
    %79 = vector.extract_strided_slice %39 {offsets = [0, 0], sizes = [7, 64], strides = [1, 1]} : vector<8x64xf32> to vector<7x64xf32>
    %80 = tpu.concatenate %78, %79 in 0 : vector<1x64xf32>, vector<7x64xf32> -> vector<8x64xf32>
    %81 = vector.extract_strided_slice %39 {offsets = [1, 0], sizes = [7, 64], strides = [1, 1]} : vector<8x64xf32> to vector<7x64xf32>
    %82 = tpu.concatenate %81, %78 in 0 : vector<7x64xf32>, vector<1x64xf32> -> vector<8x64xf32>
    %83 = tpu.concatenate %80, %39, %82 in 1 : vector<8x64xf32>, vector<8x64xf32>, vector<8x64xf32> -> vector<8x192xf32>
    %c0_49 = arith.constant 0 : index
    %c0_50 = arith.constant 0 : index
    %84 = vector.load %arg8[%c0_49, %c0_50] : memref<192x64xf32, #tpu.memory_space<vmem>>, vector<192x64xf32>
    %cst_51 = arith.constant dense<0.000000e+00> : vector<8x64xf32>
    %85 = tpu.matmul %83, %84, %cst_51 {dimension_numbers = #tpu.dot_dimension_numbers<[1], [0], [0], [1], [0, 0, 1, 1], [], []>} : vector<8x192xf32>, vector<192x64xf32>, vector<8x64xf32> -> vector<8x64xf32>
    %c0_52 = arith.constant 0 : index
    %c0_53 = arith.constant 0 : index
    %86 = vector.load %arg9[%c0_52, %c0_53] : memref<1x64xf32, #tpu.memory_space<vmem>>, vector<1x64xf32>
    %87 = vector.broadcast %86 : vector<1x64xf32> to vector<8x64xf32>
    %88 = arith.addf %85, %87 : vector<8x64xf32>
    %c0_54 = arith.constant 0 : index
    %c0_55 = arith.constant 0 : index
    %c0_56 = arith.constant 0 : index
    %89 = vector.load %arg11[%c0_54, %c0_55, %c0_56] : memref<1x8x64xf32, #tpu.memory_space<vmem>>, vector<1x8x64xf32>
    %90 = vector.shape_cast %89 : vector<1x8x64xf32> to vector<8x64xf32>
    %91 = vector.shape_cast %88 : vector<8x64xf32> to vector<1x8x64xf32>
    tpu.vector_store %arg11[%c0_54, %c0_55, %c0_56], %91 {strides = array<i32>} : memref<1x8x64xf32, #tpu.memory_space<vmem>>, vector<1x8x64xf32>,
    return
  }
  func.func @transform_0(%arg0: i32) -> (i32, i32, i32) {
    %c0_i32 = arith.constant 0 : i32
    %c0_i32_0 = arith.constant 0 : i32
    %c0_i32_1 = arith.constant 0 : i32
    return %arg0, %c0_i32, %c0_i32_0 : i32, i32, i32
  }
  func.func @transform_1(%arg0: i32) -> (i32, i32, i32) {
    %c0_i32 = arith.constant 0 : i32
    %c0_i32_0 = arith.constant 0 : i32
    %c0_i32_1 = arith.constant 0 : i32
    return %arg0, %c0_i32, %c0_i32_0 : i32, i32, i32
  }
  func.func @transform_2(%arg0: i32) -> (i32, i32, i32) {
    %c0_i32 = arith.constant 0 : i32
    %c0_i32_0 = arith.constant 0 : i32
    %c0_i32_1 = arith.constant 0 : i32
    return %arg0, %c0_i32, %c0_i32_0 : i32, i32, i32
  }
  func.func @transform_3(%arg0: i32) -> (i32, i32, i32) {
    %c0_i32 = arith.constant 0 : i32
    %c0_i32_0 = arith.constant 0 : i32
    %c0_i32_1 = arith.constant 0 : i32
    return %arg0, %c0_i32, %c0_i32_0 : i32, i32, i32
  }
  func.func @transform_4(%arg0: i32) -> (i32, i32, i32) {
    %c0_i32 = arith.constant 0 : i32
    %c0_i32_0 = arith.constant 0 : i32
    %c0_i32_1 = arith.constant 0 : i32
    return %arg0, %c0_i32, %c0_i32_0 : i32, i32, i32
  }
  func.func @transform_5(%arg0: i32) -> (i32, i32, i32) {
    %c0_i32 = arith.constant 0 : i32
    %c0_i32_0 = arith.constant 0 : i32
    %c0_i32_1 = arith.constant 0 : i32
    return %arg0, %c0_i32, %c0_i32_0 : i32, i32, i32
  }
  func.func @transform_6(%arg0: i32) -> (i32, i32, i32) {
    %c0_i32 = arith.constant 0 : i32
    %c0_i32_0 = arith.constant 0 : i32
    %c0_i32_1 = arith.constant 0 : i32
    return %arg0, %c0_i32, %c0_i32_0 : i32, i32, i32
  }
  func.func @transform_7(%arg0: i32) -> (i32, i32) {
    %c0_i32 = arith.constant 0 : i32
    %c0_i32_0 = arith.constant 0 : i32
    %c0_i32_1 = arith.constant 0 : i32
    return %c0_i32, %c0_i32_0 : i32, i32
  }
  func.func @transform_8(%arg0: i32) -> (i32, i32) {
    %c0_i32 = arith.constant 0 : i32
    %c0_i32_0 = arith.constant 0 : i32
    %c0_i32_1 = arith.constant 0 : i32
    return %c0_i32, %c0_i32_0 : i32, i32
  }
  func.func @transform_9(%arg0: i32) -> (i32, i32, i32) {
    %c0_i32 = arith.constant 0 : i32
    %c0_i32_0 = arith.constant 0 : i32
    %c0_i32_1 = arith.constant 0 : i32
    return %arg0, %c0_i32, %c0_i32_0 : i32, i32, i32
  }
  func.func @transform_10(%arg0: i32) -> (i32, i32, i32) {
    %c0_i32 = arith.constant 0 : i32
    %c0_i32_0 = arith.constant 0 : i32
    %c0_i32_1 = arith.constant 0 : i32
    return %arg0, %c0_i32, %c0_i32_0 : i32, i32, i32
  }
  func.func @transform_11(%arg0: i32) -> (i32, i32, i32) {
    %c0_i32 = arith.constant 0 : i32
    %c0_i32_0 = arith.constant 0 : i32
    %c0_i32_1 = arith.constant 0 : i32
    return %arg0, %c0_i32, %c0_i32_0 : i32, i32, i32
  }
  func.func @transform_12(%arg0: i32) -> (i32, i32, i32) {
    %c0_i32 = arith.constant 0 : i32
    %c0_i32_0 = arith.constant 0 : i32
    %c0_i32_1 = arith.constant 0 : i32
    return %arg0, %c0_i32, %c0_i32_0 : i32, i32, i32
  }
  func.func @transform_13(%arg0: i32) -> (i32, i32, i32) {
    %c0_i32 = arith.constant 0 : i32
    %c0_i32_0 = arith.constant 0 : i32
    %c0_i32_1 = arith.constant 0 : i32
    return %arg0, %c0_i32, %c0_i32_0 : i32, i32, i32
  }
}

module attributes {stable_mosaic.version = 11 : i64} {
  func.func @_attn_step_kernel(%arg0: i32, %arg1: memref<1x8x64xbf16, #tpu.memory_space<vmem>>, %arg2: memref<1x8x64xbf16, #tpu.memory_space<vmem>>, %arg3: memref<1x8x64xbf16, #tpu.memory_space<vmem>>, %arg4: memref<1x8x64xf32, #tpu.memory_space<vmem>>, %arg5: memref<1x8x64xf32, #tpu.memory_space<vmem>>, %arg6: memref<1x8x64xf32, #tpu.memory_space<vmem>>, %arg7: memref<1x8x64xf32, #tpu.memory_space<vmem>>, %arg8: memref<192x64xf32, #tpu.memory_space<vmem>>, %arg9: memref<1x64xf32, #tpu.memory_space<vmem>>, %arg10: memref<1x8x64xbf16, #tpu.memory_space<vmem>>, %arg11: memref<1x8x64xf32, #tpu.memory_space<vmem>>, %arg12: memref<1x8x64xf32, #tpu.memory_space<vmem>>, %arg13: memref<1x8x64xf32, #tpu.memory_space<vmem>>, %arg14: memref<1x8x64xf32, #tpu.memory_space<vmem>>) attributes {dimension_semantics = [#tpu.dimension_semantics<parallel>], iteration_bounds = array<i64: 2>, scalar_prefetch = 0 : i64, scratch_operands = 0 : i64, tpu.core_type = #tpu.core_type<tc>, window_params = [{transform_indices = @transform_0, window_bounds = array<i64: 1, 8, 64>}, {transform_indices = @transform_1, window_bounds = array<i64: 1, 8, 64>}, {transform_indices = @transform_2, window_bounds = array<i64: 1, 8, 64>}, {transform_indices = @transform_3, window_bounds = array<i64: 1, 8, 64>}, {transform_indices = @transform_4, window_bounds = array<i64: 1, 8, 64>}, {transform_indices = @transform_5, window_bounds = array<i64: 1, 8, 64>}, {transform_indices = @transform_6, window_bounds = array<i64: 1, 8, 64>}, {pipeline_mode = #tpu.pipeline_mode<synchronous>, transform_indices = @transform_7, window_bounds = array<i64: 192, 64>}, {pipeline_mode = #tpu.pipeline_mode<synchronous>, transform_indices = @transform_8, window_bounds = array<i64: 1, 64>}, {transform_indices = @transform_9, window_bounds = array<i64: 1, 8, 64>}, {transform_indices = @transform_10, window_bounds = array<i64: 1, 8, 64>}, {transform_indices = @transform_11, window_bounds = array<i64: 1, 8, 64>}, {transform_indices = @transform_12, window_bounds = array<i64: 1, 8, 64>}, {transform_indices = @transform_13, window_bounds = array<i64: 1, 8, 64>}]} {
    %c0 = arith.constant 0 : index
    %c0_0 = arith.constant 0 : index
    %c0_1 = arith.constant 0 : index
    %0 = vector.load %arg1[%c0, %c0_0, %c0_1] : memref<1x8x64xbf16, #tpu.memory_space<vmem>>, vector<1x8x64xbf16>
    %1 = vector.shape_cast %0 : vector<1x8x64xbf16> to vector<8x64xbf16>
    %2 = arith.extf %1 : vector<8x64xbf16> to vector<8x64xf32>
    %c0_2 = arith.constant 0 : index
    %c0_3 = arith.constant 0 : index
    %c0_4 = arith.constant 0 : index
    %3 = vector.load %arg5[%c0_2, %c0_3, %c0_4] : memref<1x8x64xf32, #tpu.memory_space<vmem>>, vector<1x8x64xf32>
    %4 = vector.shape_cast %3 : vector<1x8x64xf32> to vector<8x64xf32>
    %c0_5 = arith.constant 0 : index
    %c0_6 = arith.constant 0 : index
    %c0_7 = arith.constant 0 : index
    %5 = vector.load %arg4[%c0_5, %c0_6, %c0_7] : memref<1x8x64xf32, #tpu.memory_space<vmem>>, vector<1x8x64xf32>
    %6 = vector.shape_cast %5 : vector<1x8x64xf32> to vector<8x64xf32>
    %7 = arith.subf %6, %4 : vector<8x64xf32>
    %cst = arith.constant 2.000000e+00 : f32
    %8 = vector.broadcast %cst : f32 to vector<8x64xf32>
    %9 = arith.divf %7, %8 : vector<8x64xf32>
    %10 = arith.addf %4, %9 : vector<8x64xf32>
    %cst_8 = arith.constant 1.000000e+00 : f32
    %11 = vector.broadcast %cst_8 : f32 to vector<8x64xf32>
    %12 = arith.subf %10, %11 : vector<8x64xf32>
    %cst_9 = arith.constant 0.000000e+00 : f32
    %13 = vector.broadcast %cst_9 : f32 to vector<8x64xf32>
    %14 = arith.cmpf oge, %12, %13 : vector<8x64xf32>
    %15 = arith.extui %14 : vector<8x64xi1> to vector<8x64xi32>
    %16 = arith.sitofp %15 : vector<8x64xi32> to vector<8x64xf32>
    %cst_10 = arith.constant 1.000000e+00 : f32
    %17 = vector.broadcast %cst_10 : f32 to vector<8x64xf32>
    %18 = arith.subf %17, %16 : vector<8x64xf32>
    %19 = arith.mulf %10, %18 : vector<8x64xf32>
    %c0_11 = arith.constant 0 : index
    %c0_12 = arith.constant 0 : index
    %c0_13 = arith.constant 0 : index
    %20 = vector.load %arg12[%c0_11, %c0_12, %c0_13] : memref<1x8x64xf32, #tpu.memory_space<vmem>>, vector<1x8x64xf32>
    %21 = vector.shape_cast %20 : vector<1x8x64xf32> to vector<8x64xf32>
    %22 = vector.shape_cast %19 : vector<8x64xf32> to vector<1x8x64xf32>
    tpu.vector_store %arg12[%c0_11, %c0_12, %c0_13], %22 {strides = array<i32>} : memref<1x8x64xf32, #tpu.memory_space<vmem>>, vector<1x8x64xf32>,
    %cst_14 = arith.constant 6.000000e-01 : f32
    %23 = vector.broadcast %cst_14 : f32 to vector<8x64xf32>
    %24 = arith.mulf %16, %23 : vector<8x64xf32>
    %cst_15 = arith.constant 4.000000e-01 : f32
    %25 = vector.broadcast %cst_15 : f32 to vector<8x64xf32>
    %26 = arith.mulf %2, %25 : vector<8x64xf32>
    %27 = arith.addf %24, %26 : vector<8x64xf32>
    %c0_16 = arith.constant 0 : index
    %c0_17 = arith.constant 0 : index
    %c0_18 = arith.constant 0 : index
    %28 = vector.load %arg6[%c0_16, %c0_17, %c0_18] : memref<1x8x64xf32, #tpu.memory_space<vmem>>, vector<1x8x64xf32>
    %29 = vector.shape_cast %28 : vector<1x8x64xf32> to vector<8x64xf32>
    %30 = arith.subf %27, %29 : vector<8x64xf32>
    %cst_19 = arith.constant 2.000000e+00 : f32
    %31 = vector.broadcast %cst_19 : f32 to vector<8x64xf32>
    %32 = arith.divf %30, %31 : vector<8x64xf32>
    %33 = arith.addf %29, %32 : vector<8x64xf32>
    %cst_20 = arith.constant 1.000000e+00 : f32
    %34 = vector.broadcast %cst_20 : f32 to vector<8x64xf32>
    %35 = arith.subf %33, %34 : vector<8x64xf32>
    %cst_21 = arith.constant 0.000000e+00 : f32
    %36 = vector.broadcast %cst_21 : f32 to vector<8x64xf32>
    %37 = arith.cmpf oge, %35, %36 : vector<8x64xf32>
    %38 = arith.extui %37 : vector<8x64xi1> to vector<8x64xi32>
    %39 = arith.sitofp %38 : vector<8x64xi32> to vector<8x64xf32>
    %cst_22 = arith.constant 1.000000e+00 : f32
    %40 = vector.broadcast %cst_22 : f32 to vector<8x64xf32>
    %41 = arith.subf %40, %39 : vector<8x64xf32>
    %42 = arith.mulf %33, %41 : vector<8x64xf32>
    %c0_23 = arith.constant 0 : index
    %c0_24 = arith.constant 0 : index
    %c0_25 = arith.constant 0 : index
    %43 = vector.load %arg13[%c0_23, %c0_24, %c0_25] : memref<1x8x64xf32, #tpu.memory_space<vmem>>, vector<1x8x64xf32>
    %44 = vector.shape_cast %43 : vector<1x8x64xf32> to vector<8x64xf32>
    %45 = vector.shape_cast %42 : vector<8x64xf32> to vector<1x8x64xf32>
    tpu.vector_store %arg13[%c0_23, %c0_24, %c0_25], %45 {strides = array<i32>} : memref<1x8x64xf32, #tpu.memory_space<vmem>>, vector<1x8x64xf32>,
    %c0_26 = arith.constant 0 : index
    %c0_27 = arith.constant 0 : index
    %c0_28 = arith.constant 0 : index
    %46 = vector.load %arg2[%c0_26, %c0_27, %c0_28] : memref<1x8x64xbf16, #tpu.memory_space<vmem>>, vector<1x8x64xbf16>
    %47 = vector.shape_cast %46 : vector<1x8x64xbf16> to vector<8x64xbf16>
    %c0_29 = arith.constant 0 : index
    %c0_30 = arith.constant 0 : index
    %c0_31 = arith.constant 0 : index
    %48 = vector.load %arg3[%c0_29, %c0_30, %c0_31] : memref<1x8x64xbf16, #tpu.memory_space<vmem>>, vector<1x8x64xbf16>
    %49 = vector.shape_cast %48 : vector<1x8x64xbf16> to vector<8x64xbf16>
    %50 = arith.extf %49 : vector<8x64xbf16> to vector<8x64xf32>
    %51 = arith.truncf %39 : vector<8x64xf32> to vector<8x64xbf16>
    %cst_32 = arith.constant dense<0.000000e+00> : vector<8x8xf32>
    %52 = tpu.matmul %51, %47, %cst_32 {dimension_numbers = #tpu.dot_dimension_numbers<[1], [1], [0], [0], [0, 0, 1, 0], [], []>} : vector<8x64xbf16>, vector<8x64xbf16>, vector<8x8xf32> -> vector<8x8xf32>
    %cst_33 = arith.constant 1.250000e-01 : f32
    %53 = vector.broadcast %cst_33 : f32 to vector<8x8xf32>
    %54 = arith.mulf %52, %53 : vector<8x8xf32>
    %cst_34 = arith.constant dense<0.000000e+00> : vector<8x64xf32>
    %55 = tpu.matmul %54, %50, %cst_34 {dimension_numbers = #tpu.dot_dimension_numbers<[1], [0], [0], [1], [0, 0, 1, 1], [], []>} : vector<8x8xf32>, vector<8x64xf32>, vector<8x64xf32> -> vector<8x64xf32>
    %c0_35 = arith.constant 0 : index
    %c0_36 = arith.constant 0 : index
    %c0_37 = arith.constant 0 : index
    %56 = vector.load %arg7[%c0_35, %c0_36, %c0_37] : memref<1x8x64xf32, #tpu.memory_space<vmem>>, vector<1x8x64xf32>
    %57 = vector.shape_cast %56 : vector<1x8x64xf32> to vector<8x64xf32>
    %58 = arith.subf %55, %57 : vector<8x64xf32>
    %cst_38 = arith.constant 2.000000e+00 : f32
    %59 = vector.broadcast %cst_38 : f32 to vector<8x64xf32>
    %60 = arith.divf %58, %59 : vector<8x64xf32>
    %61 = arith.addf %57, %60 : vector<8x64xf32>
    %cst_39 = arith.constant 1.000000e+00 : f32
    %62 = vector.broadcast %cst_39 : f32 to vector<8x64xf32>
    %63 = arith.subf %61, %62 : vector<8x64xf32>
    %cst_40 = arith.constant 0.000000e+00 : f32
    %64 = vector.broadcast %cst_40 : f32 to vector<8x64xf32>
    %65 = arith.cmpf oge, %63, %64 : vector<8x64xf32>
    %66 = arith.extui %65 : vector<8x64xi1> to vector<8x64xi32>
    %67 = arith.sitofp %66 : vector<8x64xi32> to vector<8x64xf32>
    %cst_41 = arith.constant 1.000000e+00 : f32
    %68 = vector.broadcast %cst_41 : f32 to vector<8x64xf32>
    %69 = arith.subf %68, %67 : vector<8x64xf32>
    %70 = arith.mulf %61, %69 : vector<8x64xf32>
    %c0_42 = arith.constant 0 : index
    %c0_43 = arith.constant 0 : index
    %c0_44 = arith.constant 0 : index
    %71 = vector.load %arg14[%c0_42, %c0_43, %c0_44] : memref<1x8x64xf32, #tpu.memory_space<vmem>>, vector<1x8x64xf32>
    %72 = vector.shape_cast %71 : vector<1x8x64xf32> to vector<8x64xf32>
    %73 = vector.shape_cast %70 : vector<8x64xf32> to vector<1x8x64xf32>
    tpu.vector_store %arg14[%c0_42, %c0_43, %c0_44], %73 {strides = array<i32>} : memref<1x8x64xf32, #tpu.memory_space<vmem>>, vector<1x8x64xf32>,
    %74 = arith.truncf %67 : vector<8x64xf32> to vector<8x64xbf16>
    %c0_45 = arith.constant 0 : index
    %c0_46 = arith.constant 0 : index
    %c0_47 = arith.constant 0 : index
    %75 = vector.load %arg10[%c0_45, %c0_46, %c0_47] : memref<1x8x64xbf16, #tpu.memory_space<vmem>>, vector<1x8x64xbf16>
    %76 = vector.shape_cast %75 : vector<1x8x64xbf16> to vector<8x64xbf16>
    %77 = vector.shape_cast %74 : vector<8x64xbf16> to vector<1x8x64xbf16>
    tpu.vector_store %arg10[%c0_45, %c0_46, %c0_47], %77 {strides = array<i32>} : memref<1x8x64xbf16, #tpu.memory_space<vmem>>, vector<1x8x64xbf16>,
    %cst_48 = arith.constant 0.000000e+00 : f32
    %78 = vector.broadcast %cst_48 : f32 to vector<1x64xf32>
    %79 = vector.extract_strided_slice %39 {offsets = [0, 0], sizes = [7, 64], strides = [1, 1]} : vector<8x64xf32> to vector<7x64xf32>
    %80 = tpu.concatenate %78, %79 in 0 : vector<1x64xf32>, vector<7x64xf32> -> vector<8x64xf32>
    %81 = vector.extract_strided_slice %39 {offsets = [1, 0], sizes = [7, 64], strides = [1, 1]} : vector<8x64xf32> to vector<7x64xf32>
    %82 = tpu.concatenate %81, %78 in 0 : vector<7x64xf32>, vector<1x64xf32> -> vector<8x64xf32>
    %83 = tpu.concatenate %80, %39, %82 in 1 : vector<8x64xf32>, vector<8x64xf32>, vector<8x64xf32> -> vector<8x192xf32>
    %c0_49 = arith.constant 0 : index
    %c0_50 = arith.constant 0 : index
    %84 = vector.load %arg8[%c0_49, %c0_50] : memref<192x64xf32, #tpu.memory_space<vmem>>, vector<192x64xf32>
    %cst_51 = arith.constant dense<0.000000e+00> : vector<8x64xf32>
    %85 = tpu.matmul %83, %84, %cst_51 {dimension_numbers = #tpu.dot_dimension_numbers<[1], [0], [0], [1], [0, 0, 1, 1], [], []>} : vector<8x192xf32>, vector<192x64xf32>, vector<8x64xf32> -> vector<8x64xf32>
    %c0_52 = arith.constant 0 : index
    %c0_53 = arith.constant 0 : index
    %86 = vector.load %arg9[%c0_52, %c0_53] : memref<1x64xf32, #tpu.memory_space<vmem>>, vector<1x64xf32>
    %87 = vector.broadcast %86 : vector<1x64xf32> to vector<8x64xf32>
    %88 = arith.addf %85, %87 : vector<8x64xf32>
    %c0_54 = arith.constant 0 : index
    %c0_55 = arith.constant 0 : index
    %c0_56 = arith.constant 0 : index
    %89 = vector.load %arg11[%c0_54, %c0_55, %c0_56] : memref<1x8x64xf32, #tpu.memory_space<vmem>>, vector<1x8x64xf32>
    %90 = vector.shape_cast %89 : vector<1x8x64xf32> to vector<8x64xf32>
    %91 = vector.shape_cast %88 : vector<8x64xf32> to vector<1x8x64xf32>
    tpu.vector_store %arg11[%c0_54, %c0_55, %c0_56], %91 {strides = array<i32>} : memref<1x8x64xf32, #tpu.memory_space<vmem>>, vector<1x8x64xf32>,
    return
  }
  func.func @transform_0(%arg0: i32) -> (i32, i32, i32) {
    %c0_i32 = arith.constant 0 : i32
    %c0_i32_0 = arith.constant 0 : i32
    %c0_i32_1 = arith.constant 0 : i32
    return %arg0, %c0_i32, %c0_i32_0 : i32, i32, i32
  }
  func.func @transform_1(%arg0: i32) -> (i32, i32, i32) {
    %c0_i32 = arith.constant 0 : i32
    %c0_i32_0 = arith.constant 0 : i32
    %c0_i32_1 = arith.constant 0 : i32
    return %arg0, %c0_i32, %c0_i32_0 : i32, i32, i32
  }
  func.func @transform_2(%arg0: i32) -> (i32, i32, i32) {
    %c0_i32 = arith.constant 0 : i32
    %c0_i32_0 = arith.constant 0 : i32
    %c0_i32_1 = arith.constant 0 : i32
    return %arg0, %c0_i32, %c0_i32_0 : i32, i32, i32
  }
  func.func @transform_3(%arg0: i32) -> (i32, i32, i32) {
    %c0_i32 = arith.constant 0 : i32
    %c0_i32_0 = arith.constant 0 : i32
    %c0_i32_1 = arith.constant 0 : i32
    return %arg0, %c0_i32, %c0_i32_0 : i32, i32, i32
  }
  func.func @transform_4(%arg0: i32) -> (i32, i32, i32) {
    %c0_i32 = arith.constant 0 : i32
    %c0_i32_0 = arith.constant 0 : i32
    %c0_i32_1 = arith.constant 0 : i32
    return %arg0, %c0_i32, %c0_i32_0 : i32, i32, i32
  }
  func.func @transform_5(%arg0: i32) -> (i32, i32, i32) {
    %c0_i32 = arith.constant 0 : i32
    %c0_i32_0 = arith.constant 0 : i32
    %c0_i32_1 = arith.constant 0 : i32
    return %arg0, %c0_i32, %c0_i32_0 : i32, i32, i32
  }
  func.func @transform_6(%arg0: i32) -> (i32, i32, i32) {
    %c0_i32 = arith.constant 0 : i32
    %c0_i32_0 = arith.constant 0 : i32
    %c0_i32_1 = arith.constant 0 : i32
    return %arg0, %c0_i32, %c0_i32_0 : i32, i32, i32
  }
  func.func @transform_7(%arg0: i32) -> (i32, i32) {
    %c0_i32 = arith.constant 0 : i32
    %c0_i32_0 = arith.constant 0 : i32
    %c0_i32_1 = arith.constant 0 : i32
    return %c0_i32, %c0_i32_0 : i32, i32
  }
  func.func @transform_8(%arg0: i32) -> (i32, i32) {
    %c0_i32 = arith.constant 0 : i32
    %c0_i32_0 = arith.constant 0 : i32
    %c0_i32_1 = arith.constant 0 : i32
    return %c0_i32, %c0_i32_0 : i32, i32
  }
  func.func @transform_9(%arg0: i32) -> (i32, i32, i32) {
    %c0_i32 = arith.constant 0 : i32
    %c0_i32_0 = arith.constant 0 : i32
    %c0_i32_1 = arith.constant 0 : i32
    return %arg0, %c0_i32, %c0_i32_0 : i32, i32, i32
  }
  func.func @transform_10(%arg0: i32) -> (i32, i32, i32) {
    %c0_i32 = arith.constant 0 : i32
    %c0_i32_0 = arith.constant 0 : i32
    %c0_i32_1 = arith.constant 0 : i32
    return %arg0, %c0_i32, %c0_i32_0 : i32, i32, i32
  }
  func.func @transform_11(%arg0: i32) -> (i32, i32, i32) {
    %c0_i32 = arith.constant 0 : i32
    %c0_i32_0 = arith.constant 0 : i32
    %c0_i32_1 = arith.constant 0 : i32
    return %arg0, %c0_i32, %c0_i32_0 : i32, i32, i32
  }
  func.func @transform_12(%arg0: i32) -> (i32, i32, i32) {
    %c0_i32 = arith.constant 0 : i32
    %c0_i32_0 = arith.constant 0 : i32
    %c0_i32_1 = arith.constant 0 : i32
    return %arg0, %c0_i32, %c0_i32_0 : i32, i32, i32
  }
  func.func @transform_13(%arg0: i32) -> (i32, i32, i32) {
    %c0_i32 = arith.constant 0 : i32
    %c0_i32_0 = arith.constant 0 : i32
    %c0_i32_1 = arith.constant 0 : i32
    return %arg0, %c0_i32, %c0_i32_0 : i32, i32, i32
  }
}

module attributes {stable_mosaic.version = 11 : i64} {
  func.func @_linear_bn_lif_kernel(%arg0: i32, %arg1: i32, %arg2: memref<4x16x64xbf16, #tpu.memory_space<vmem>>, %arg3: memref<64x64xf32, #tpu.memory_space<vmem>>, %arg4: memref<1x64xf32, #tpu.memory_space<vmem>>, %arg5: memref<1x64xf32, #tpu.memory_space<vmem>>, %arg6: memref<4x16x64xf32, #tpu.memory_space<vmem>>, %arg7: memref<4x16x64xf32, #tpu.memory_space<vmem>>) attributes {dimension_semantics = [#tpu.dimension_semantics<parallel>, #tpu.dimension_semantics<parallel>], iteration_bounds = array<i64: 1, 1>, scalar_prefetch = 0 : i64, scratch_operands = 0 : i64, tpu.core_type = #tpu.core_type<tc>, window_params = [{transform_indices = @transform_0, window_bounds = array<i64: 4, 16, 64>}, {transform_indices = @transform_1, window_bounds = array<i64: 64, 64>}, {transform_indices = @transform_2, window_bounds = array<i64: 1, 64>}, {transform_indices = @transform_3, window_bounds = array<i64: 1, 64>}, {transform_indices = @transform_4, window_bounds = array<i64: 4, 16, 64>}, {transform_indices = @transform_5, window_bounds = array<i64: 4, 16, 64>}]} {
    %c0 = arith.constant 0 : index
    %c0_0 = arith.constant 0 : index
    %0 = vector.load %arg3[%c0, %c0_0] : memref<64x64xf32, #tpu.memory_space<vmem>>, vector<64x64xf32>
    %c0_1 = arith.constant 0 : index
    %c0_2 = arith.constant 0 : index
    %1 = vector.load %arg4[%c0_1, %c0_2] : memref<1x64xf32, #tpu.memory_space<vmem>>, vector<1x64xf32>
    %c0_3 = arith.constant 0 : index
    %c0_4 = arith.constant 0 : index
    %2 = vector.load %arg5[%c0_3, %c0_4] : memref<1x64xf32, #tpu.memory_space<vmem>>, vector<1x64xf32>
    %cst = arith.constant 0.000000e+00 : f32
    %3 = vector.broadcast %cst : f32 to vector<16x64xf32>
    %c0_5 = arith.constant 0 : index
    %c0_6 = arith.constant 0 : index
    %c0_7 = arith.constant 0 : index
    %4 = vector.load %arg2[%c0_5, %c0_6, %c0_7] : memref<4x16x64xbf16, #tpu.memory_space<vmem>>, vector<1x16x64xbf16>
    %5 = vector.shape_cast %4 : vector<1x16x64xbf16> to vector<16x64xbf16>
    %6 = arith.extf %5 : vector<16x64xbf16> to vector<16x64xf32>
    %cst_8 = arith.constant dense<0.000000e+00> : vector<16x64xf32>
    %7 = tpu.matmul %6, %0, %cst_8 {dimension_numbers = #tpu.dot_dimension_numbers<[1], [0], [0], [1], [0, 0, 1, 1], [], []>} : vector<16x64xf32>, vector<64x64xf32>, vector<16x64xf32> -> vector<16x64xf32>
    %8 = vector.broadcast %1 : vector<1x64xf32> to vector<16x64xf32>
    %9 = arith.mulf %7, %8 : vector<16x64xf32>
    %10 = vector.broadcast %2 : vector<1x64xf32> to vector<16x64xf32>
    %11 = arith.addf %9, %10 : vector<16x64xf32>
    %12 = arith.subf %11, %3 : vector<16x64xf32>
    %cst_9 = arith.constant 2.000000e+00 : f32
    %13 = vector.broadcast %cst_9 : f32 to vector<16x64xf32>
    %14 = arith.divf %12, %13 : vector<16x64xf32>
    %15 = arith.addf %3, %14 : vector<16x64xf32>
    %cst_10 = arith.constant 1.000000e+00 : f32
    %16 = vector.broadcast %cst_10 : f32 to vector<16x64xf32>
    %17 = arith.subf %15, %16 : vector<16x64xf32>
    %cst_11 = arith.constant 0.000000e+00 : f32
    %18 = vector.broadcast %cst_11 : f32 to vector<16x64xf32>
    %19 = arith.cmpf oge, %17, %18 : vector<16x64xf32>
    %20 = arith.extui %19 : vector<16x64xi1> to vector<16x64xi32>
    %21 = arith.sitofp %20 : vector<16x64xi32> to vector<16x64xf32>
    %cst_12 = arith.constant 1.000000e+00 : f32
    %22 = vector.broadcast %cst_12 : f32 to vector<16x64xf32>
    %23 = arith.subf %22, %21 : vector<16x64xf32>
    %24 = arith.mulf %15, %23 : vector<16x64xf32>
    %c0_13 = arith.constant 0 : index
    %c0_14 = arith.constant 0 : index
    %c0_15 = arith.constant 0 : index
    %25 = vector.load %arg6[%c0_13, %c0_14, %c0_15] : memref<4x16x64xf32, #tpu.memory_space<vmem>>, vector<1x16x64xf32>
    %26 = vector.shape_cast %25 : vector<1x16x64xf32> to vector<16x64xf32>
    %27 = arith.addf %21, %26 : vector<16x64xf32>
    %c0_16 = arith.constant 0 : index
    %c0_17 = arith.constant 0 : index
    %c0_18 = arith.constant 0 : index
    %28 = vector.load %arg7[%c0_16, %c0_17, %c0_18] : memref<4x16x64xf32, #tpu.memory_space<vmem>>, vector<1x16x64xf32>
    %29 = vector.shape_cast %28 : vector<1x16x64xf32> to vector<16x64xf32>
    %30 = vector.shape_cast %27 : vector<16x64xf32> to vector<1x16x64xf32>
    tpu.vector_store %arg7[%c0_16, %c0_17, %c0_18], %30 {strides = array<i32>} : memref<4x16x64xf32, #tpu.memory_space<vmem>>, vector<1x16x64xf32>,
    %c1 = arith.constant 1 : index
    %c0_19 = arith.constant 0 : index
    %c0_20 = arith.constant 0 : index
    %31 = vector.load %arg2[%c1, %c0_19, %c0_20] : memref<4x16x64xbf16, #tpu.memory_space<vmem>>, vector<1x16x64xbf16>
    %32 = vector.shape_cast %31 : vector<1x16x64xbf16> to vector<16x64xbf16>
    %33 = arith.extf %32 : vector<16x64xbf16> to vector<16x64xf32>
    %cst_21 = arith.constant dense<0.000000e+00> : vector<16x64xf32>
    %34 = tpu.matmul %33, %0, %cst_21 {dimension_numbers = #tpu.dot_dimension_numbers<[1], [0], [0], [1], [0, 0, 1, 1], [], []>} : vector<16x64xf32>, vector<64x64xf32>, vector<16x64xf32> -> vector<16x64xf32>
    %35 = vector.broadcast %1 : vector<1x64xf32> to vector<16x64xf32>
    %36 = arith.mulf %34, %35 : vector<16x64xf32>
    %37 = vector.broadcast %2 : vector<1x64xf32> to vector<16x64xf32>
    %38 = arith.addf %36, %37 : vector<16x64xf32>
    %39 = arith.subf %38, %24 : vector<16x64xf32>
    %cst_22 = arith.constant 2.000000e+00 : f32
    %40 = vector.broadcast %cst_22 : f32 to vector<16x64xf32>
    %41 = arith.divf %39, %40 : vector<16x64xf32>
    %42 = arith.addf %24, %41 : vector<16x64xf32>
    %cst_23 = arith.constant 1.000000e+00 : f32
    %43 = vector.broadcast %cst_23 : f32 to vector<16x64xf32>
    %44 = arith.subf %42, %43 : vector<16x64xf32>
    %cst_24 = arith.constant 0.000000e+00 : f32
    %45 = vector.broadcast %cst_24 : f32 to vector<16x64xf32>
    %46 = arith.cmpf oge, %44, %45 : vector<16x64xf32>
    %47 = arith.extui %46 : vector<16x64xi1> to vector<16x64xi32>
    %48 = arith.sitofp %47 : vector<16x64xi32> to vector<16x64xf32>
    %cst_25 = arith.constant 1.000000e+00 : f32
    %49 = vector.broadcast %cst_25 : f32 to vector<16x64xf32>
    %50 = arith.subf %49, %48 : vector<16x64xf32>
    %51 = arith.mulf %42, %50 : vector<16x64xf32>
    %c1_26 = arith.constant 1 : index
    %c0_27 = arith.constant 0 : index
    %c0_28 = arith.constant 0 : index
    %52 = vector.load %arg6[%c1_26, %c0_27, %c0_28] : memref<4x16x64xf32, #tpu.memory_space<vmem>>, vector<1x16x64xf32>
    %53 = vector.shape_cast %52 : vector<1x16x64xf32> to vector<16x64xf32>
    %54 = arith.addf %48, %53 : vector<16x64xf32>
    %c1_29 = arith.constant 1 : index
    %c0_30 = arith.constant 0 : index
    %c0_31 = arith.constant 0 : index
    %55 = vector.load %arg7[%c1_29, %c0_30, %c0_31] : memref<4x16x64xf32, #tpu.memory_space<vmem>>, vector<1x16x64xf32>
    %56 = vector.shape_cast %55 : vector<1x16x64xf32> to vector<16x64xf32>
    %57 = vector.shape_cast %54 : vector<16x64xf32> to vector<1x16x64xf32>
    tpu.vector_store %arg7[%c1_29, %c0_30, %c0_31], %57 {strides = array<i32>} : memref<4x16x64xf32, #tpu.memory_space<vmem>>, vector<1x16x64xf32>,
    %c2 = arith.constant 2 : index
    %c0_32 = arith.constant 0 : index
    %c0_33 = arith.constant 0 : index
    %58 = vector.load %arg2[%c2, %c0_32, %c0_33] : memref<4x16x64xbf16, #tpu.memory_space<vmem>>, vector<1x16x64xbf16>
    %59 = vector.shape_cast %58 : vector<1x16x64xbf16> to vector<16x64xbf16>
    %60 = arith.extf %59 : vector<16x64xbf16> to vector<16x64xf32>
    %cst_34 = arith.constant dense<0.000000e+00> : vector<16x64xf32>
    %61 = tpu.matmul %60, %0, %cst_34 {dimension_numbers = #tpu.dot_dimension_numbers<[1], [0], [0], [1], [0, 0, 1, 1], [], []>} : vector<16x64xf32>, vector<64x64xf32>, vector<16x64xf32> -> vector<16x64xf32>
    %62 = vector.broadcast %1 : vector<1x64xf32> to vector<16x64xf32>
    %63 = arith.mulf %61, %62 : vector<16x64xf32>
    %64 = vector.broadcast %2 : vector<1x64xf32> to vector<16x64xf32>
    %65 = arith.addf %63, %64 : vector<16x64xf32>
    %66 = arith.subf %65, %51 : vector<16x64xf32>
    %cst_35 = arith.constant 2.000000e+00 : f32
    %67 = vector.broadcast %cst_35 : f32 to vector<16x64xf32>
    %68 = arith.divf %66, %67 : vector<16x64xf32>
    %69 = arith.addf %51, %68 : vector<16x64xf32>
    %cst_36 = arith.constant 1.000000e+00 : f32
    %70 = vector.broadcast %cst_36 : f32 to vector<16x64xf32>
    %71 = arith.subf %69, %70 : vector<16x64xf32>
    %cst_37 = arith.constant 0.000000e+00 : f32
    %72 = vector.broadcast %cst_37 : f32 to vector<16x64xf32>
    %73 = arith.cmpf oge, %71, %72 : vector<16x64xf32>
    %74 = arith.extui %73 : vector<16x64xi1> to vector<16x64xi32>
    %75 = arith.sitofp %74 : vector<16x64xi32> to vector<16x64xf32>
    %cst_38 = arith.constant 1.000000e+00 : f32
    %76 = vector.broadcast %cst_38 : f32 to vector<16x64xf32>
    %77 = arith.subf %76, %75 : vector<16x64xf32>
    %78 = arith.mulf %69, %77 : vector<16x64xf32>
    %c2_39 = arith.constant 2 : index
    %c0_40 = arith.constant 0 : index
    %c0_41 = arith.constant 0 : index
    %79 = vector.load %arg6[%c2_39, %c0_40, %c0_41] : memref<4x16x64xf32, #tpu.memory_space<vmem>>, vector<1x16x64xf32>
    %80 = vector.shape_cast %79 : vector<1x16x64xf32> to vector<16x64xf32>
    %81 = arith.addf %75, %80 : vector<16x64xf32>
    %c2_42 = arith.constant 2 : index
    %c0_43 = arith.constant 0 : index
    %c0_44 = arith.constant 0 : index
    %82 = vector.load %arg7[%c2_42, %c0_43, %c0_44] : memref<4x16x64xf32, #tpu.memory_space<vmem>>, vector<1x16x64xf32>
    %83 = vector.shape_cast %82 : vector<1x16x64xf32> to vector<16x64xf32>
    %84 = vector.shape_cast %81 : vector<16x64xf32> to vector<1x16x64xf32>
    tpu.vector_store %arg7[%c2_42, %c0_43, %c0_44], %84 {strides = array<i32>} : memref<4x16x64xf32, #tpu.memory_space<vmem>>, vector<1x16x64xf32>,
    %c3 = arith.constant 3 : index
    %c0_45 = arith.constant 0 : index
    %c0_46 = arith.constant 0 : index
    %85 = vector.load %arg2[%c3, %c0_45, %c0_46] : memref<4x16x64xbf16, #tpu.memory_space<vmem>>, vector<1x16x64xbf16>
    %86 = vector.shape_cast %85 : vector<1x16x64xbf16> to vector<16x64xbf16>
    %87 = arith.extf %86 : vector<16x64xbf16> to vector<16x64xf32>
    %cst_47 = arith.constant dense<0.000000e+00> : vector<16x64xf32>
    %88 = tpu.matmul %87, %0, %cst_47 {dimension_numbers = #tpu.dot_dimension_numbers<[1], [0], [0], [1], [0, 0, 1, 1], [], []>} : vector<16x64xf32>, vector<64x64xf32>, vector<16x64xf32> -> vector<16x64xf32>
    %89 = vector.broadcast %1 : vector<1x64xf32> to vector<16x64xf32>
    %90 = arith.mulf %88, %89 : vector<16x64xf32>
    %91 = vector.broadcast %2 : vector<1x64xf32> to vector<16x64xf32>
    %92 = arith.addf %90, %91 : vector<16x64xf32>
    %93 = arith.subf %92, %78 : vector<16x64xf32>
    %cst_48 = arith.constant 2.000000e+00 : f32
    %94 = vector.broadcast %cst_48 : f32 to vector<16x64xf32>
    %95 = arith.divf %93, %94 : vector<16x64xf32>
    %96 = arith.addf %78, %95 : vector<16x64xf32>
    %cst_49 = arith.constant 1.000000e+00 : f32
    %97 = vector.broadcast %cst_49 : f32 to vector<16x64xf32>
    %98 = arith.subf %96, %97 : vector<16x64xf32>
    %cst_50 = arith.constant 0.000000e+00 : f32
    %99 = vector.broadcast %cst_50 : f32 to vector<16x64xf32>
    %100 = arith.cmpf oge, %98, %99 : vector<16x64xf32>
    %101 = arith.extui %100 : vector<16x64xi1> to vector<16x64xi32>
    %102 = arith.sitofp %101 : vector<16x64xi32> to vector<16x64xf32>
    %c3_51 = arith.constant 3 : index
    %c0_52 = arith.constant 0 : index
    %c0_53 = arith.constant 0 : index
    %103 = vector.load %arg6[%c3_51, %c0_52, %c0_53] : memref<4x16x64xf32, #tpu.memory_space<vmem>>, vector<1x16x64xf32>
    %104 = vector.shape_cast %103 : vector<1x16x64xf32> to vector<16x64xf32>
    %105 = arith.addf %102, %104 : vector<16x64xf32>
    %c3_54 = arith.constant 3 : index
    %c0_55 = arith.constant 0 : index
    %c0_56 = arith.constant 0 : index
    %106 = vector.load %arg7[%c3_54, %c0_55, %c0_56] : memref<4x16x64xf32, #tpu.memory_space<vmem>>, vector<1x16x64xf32>
    %107 = vector.shape_cast %106 : vector<1x16x64xf32> to vector<16x64xf32>
    %108 = vector.shape_cast %105 : vector<16x64xf32> to vector<1x16x64xf32>
    tpu.vector_store %arg7[%c3_54, %c0_55, %c0_56], %108 {strides = array<i32>} : memref<4x16x64xf32, #tpu.memory_space<vmem>>, vector<1x16x64xf32>,
    return
  }
  func.func @transform_0(%arg0: i32, %arg1: i32) -> (i32, i32, i32) {
    %c0_i32 = arith.constant 0 : i32
    %c0_i32_0 = arith.constant 0 : i32
    %c0_i32_1 = arith.constant 0 : i32
    return %c0_i32, %arg0, %c0_i32_0 : i32, i32, i32
  }
  func.func @transform_1(%arg0: i32, %arg1: i32) -> (i32, i32) {
    %c0_i32 = arith.constant 0 : i32
    %c0_i32_0 = arith.constant 0 : i32
    return %c0_i32, %arg1 : i32, i32
  }
  func.func @transform_2(%arg0: i32, %arg1: i32) -> (i32, i32) {
    %c0_i32 = arith.constant 0 : i32
    %c0_i32_0 = arith.constant 0 : i32
    return %c0_i32, %arg1 : i32, i32
  }
  func.func @transform_3(%arg0: i32, %arg1: i32) -> (i32, i32) {
    %c0_i32 = arith.constant 0 : i32
    %c0_i32_0 = arith.constant 0 : i32
    return %c0_i32, %arg1 : i32, i32
  }
  func.func @transform_4(%arg0: i32, %arg1: i32) -> (i32, i32, i32) {
    %c0_i32 = arith.constant 0 : i32
    %c0_i32_0 = arith.constant 0 : i32
    return %c0_i32, %arg0, %arg1 : i32, i32, i32
  }
  func.func @transform_5(%arg0: i32, %arg1: i32) -> (i32, i32, i32) {
    %c0_i32 = arith.constant 0 : i32
    %c0_i32_0 = arith.constant 0 : i32
    return %c0_i32, %arg0, %arg1 : i32, i32, i32
  }
}

module attributes {stable_mosaic.version = 11 : i64} {
  func.func @_ff_kernel(%arg0: i32, %arg1: i32, %arg2: memref<64x64xf32, #tpu.memory_space<vmem>>, %arg3: memref<1x64xf32, #tpu.memory_space<vmem>>, %arg4: memref<64x170xf32, #tpu.memory_space<vmem>>, %arg5: memref<64x170xf32, #tpu.memory_space<vmem>>, %arg6: memref<170x64xf32, #tpu.memory_space<vmem>>, %arg7: memref<64x64xf32, #tpu.memory_space<vmem>>, %arg8: memref<64x64xf32, #tpu.memory_space<vmem>>, %arg9: memref<64x64xf32, #tpu.memory_space<vmem>>) attributes {dimension_semantics = [#tpu.dimension_semantics<parallel>, #tpu.dimension_semantics<arbitrary>], iteration_bounds = array<i64: 1, 1>, scalar_prefetch = 0 : i64, scratch_operands = 1 : i64, tpu.core_type = #tpu.core_type<tc>, window_params = [{transform_indices = @transform_0, window_bounds = array<i64: 64, 64>}, {pipeline_mode = #tpu.pipeline_mode<synchronous>, transform_indices = @transform_1, window_bounds = array<i64: 1, 64>}, {transform_indices = @transform_2, window_bounds = array<i64: 64, 170>}, {transform_indices = @transform_3, window_bounds = array<i64: 64, 170>}, {transform_indices = @transform_4, window_bounds = array<i64: 170, 64>}, {transform_indices = @transform_5, window_bounds = array<i64: 64, 64>}, {transform_indices = @transform_6, window_bounds = array<i64: 64, 64>}]} {
    %c0_i32 = arith.constant 0 : i32
    %0 = arith.cmpi eq, %arg1, %c0_i32 : i32
    %1 = arith.extui %0 : i1 to i32
    %c0_i32_0 = arith.constant 0 : i32
    %2 = arith.cmpi ne, %1, %c0_i32_0 : i32
    scf.if %2 {
      %cst_39 = arith.constant 0.000000e+00 : f32
      %80 = vector.broadcast %cst_39 : f32 to vector<64x64xf32>
      %c0_40 = arith.constant 0 : index
      %c0_41 = arith.constant 0 : index
      %81 = vector.load %arg9[%c0_40, %c0_41] : memref<64x64xf32, #tpu.memory_space<vmem>>, vector<64x64xf32>
      tpu.vector_store %arg9[%c0_40, %c0_41], %80 {strides = array<i32>} : memref<64x64xf32, #tpu.memory_space<vmem>>, vector<64x64xf32>,
    } else {
    }
    %c0 = arith.constant 0 : index
    %c0_1 = arith.constant 0 : index
    %3 = vector.load %arg2[%c0, %c0_1] : memref<64x64xf32, #tpu.memory_space<vmem>>, vector<64x64xf32>
    %cst = arith.constant dense<0.000000e+00> : vector<64xf32>
    %4 = vector.multi_reduction <add>, %3, %cst [1] : vector<64x64xf32> to vector<64xf32>
    %5 = vector.shape_cast %4 : vector<64xf32> to vector<64x1xf32>
    %cst_2 = arith.constant 6.400000e+01 : f32
    %6 = vector.broadcast %cst_2 : f32 to vector<64x1xf32>
    %7 = arith.divf %5, %6 : vector<64x1xf32>
    %8 = vector.broadcast %7 : vector<64x1xf32> to vector<64x64xf32>
    %9 = arith.subf %3, %8 : vector<64x64xf32>
    %10 = arith.mulf %9, %9 : vector<64x64xf32>
    %cst_3 = arith.constant dense<0.000000e+00> : vector<64xf32>
    %11 = vector.multi_reduction <add>, %10, %cst_3 [1] : vector<64x64xf32> to vector<64xf32>
    %12 = vector.shape_cast %11 : vector<64xf32> to vector<64x1xf32>
    %cst_4 = arith.constant 6.400000e+01 : f32
    %13 = vector.broadcast %cst_4 : f32 to vector<64x1xf32>
    %14 = arith.divf %12, %13 : vector<64x1xf32>
    %15 = vector.broadcast %7 : vector<64x1xf32> to vector<64x64xf32>
    %16 = arith.subf %3, %15 : vector<64x64xf32>
    %cst_5 = arith.constant 9.99999974E-6 : f32
    %17 = vector.broadcast %cst_5 : f32 to vector<64x1xf32>
    %18 = arith.addf %14, %17 : vector<64x1xf32>
    %19 = math.rsqrt %18 : vector<64x1xf32>
    %20 = vector.broadcast %19 : vector<64x1xf32> to vector<64x64xf32>
    %21 = arith.mulf %16, %20 : vector<64x64xf32>
    %c0_6 = arith.constant 0 : index
    %c0_7 = arith.constant 0 : index
    %22 = vector.load %arg3[%c0_6, %c0_7] : memref<1x64xf32, #tpu.memory_space<vmem>>, vector<1x64xf32>
    %23 = vector.broadcast %22 : vector<1x64xf32> to vector<64x64xf32>
    %24 = arith.mulf %21, %23 : vector<64x64xf32>
    %c0_8 = arith.constant 0 : index
    %c0_9 = arith.constant 0 : index
    %25 = vector.load %arg4[%c0_8, %c0_9] : memref<64x170xf32, #tpu.memory_space<vmem>>, vector<64x170xf32>
    %cst_10 = arith.constant dense<0.000000e+00> : vector<64x170xf32>
    %26 = tpu.matmul %24, %25, %cst_10 {dimension_numbers = #tpu.dot_dimension_numbers<[1], [0], [0], [1], [0, 0, 1, 1], [], []>} : vector<64x64xf32>, vector<64x170xf32>, vector<64x170xf32> -> vector<64x170xf32>
    %c0_11 = arith.constant 0 : index
    %c0_12 = arith.constant 0 : index
    %27 = vector.load %arg5[%c0_11, %c0_12] : memref<64x170xf32, #tpu.memory_space<vmem>>, vector<64x170xf32>
    %cst_13 = arith.constant dense<0.000000e+00> : vector<64x170xf32>
    %28 = tpu.matmul %24, %27, %cst_13 {dimension_numbers = #tpu.dot_dimension_numbers<[1], [0], [0], [1], [0, 0, 1, 1], [], []>} : vector<64x64xf32>, vector<64x170xf32>, vector<64x170xf32> -> vector<64x170xf32>
    %cst_14 = arith.constant 5.000000e-01 : f32
    %29 = vector.broadcast %cst_14 : f32 to vector<64x170xf32>
    %30 = arith.mulf %29, %28 : vector<64x170xf32>
    %cst_15 = arith.constant 2.000000e+00 : f32
    %31 = math.sqrt %cst_15 : f32
    %cst_16 = arith.constant 1.000000e+00 : f32
    %32 = arith.divf %cst_16, %31 : f32
    %33 = vector.broadcast %32 : f32 to vector<64x170xf32>
    %34 = arith.mulf %28, %33 : vector<64x170xf32>
    %35 = math.absf %34 : vector<64x170xf32>
    %cst_17 = arith.constant 0.327591091 : f32
    %36 = vector.broadcast %cst_17 : f32 to vector<64x170xf32>
    %37 = arith.mulf %36, %35 : vector<64x170xf32>
    %cst_18 = arith.constant 1.000000e+00 : f32
    %38 = vector.broadcast %cst_18 : f32 to vector<64x170xf32>
    %39 = arith.addf %38, %37 : vector<64x170xf32>
    %cst_19 = arith.constant 1.000000e+00 : f32
    %40 = vector.broadcast %cst_19 : f32 to vector<64x170xf32>
    %41 = arith.divf %40, %39 : vector<64x170xf32>
    %cst_20 = arith.constant 1.06140542 : f32
    %42 = vector.broadcast %cst_20 : f32 to vector<64x170xf32>
    %43 = arith.mulf %42, %41 : vector<64x170xf32>
    %cst_21 = arith.constant -1.45315206 : f32
    %44 = vector.broadcast %cst_21 : f32 to vector<64x170xf32>
    %45 = arith.addf %43, %44 : vector<64x170xf32>
    %46 = arith.mulf %45, %41 : vector<64x170xf32>
    %cst_22 = arith.constant 1.42141378 : f32
    %47 = vector.broadcast %cst_22 : f32 to vector<64x170xf32>
    %48 = arith.addf %46, %47 : vector<64x170xf32>
    %49 = arith.mulf %48, %41 : vector<64x170xf32>
    %cst_23 = arith.constant -0.284496725 : f32
    %50 = vector.broadcast %cst_23 : f32 to vector<64x170xf32>
    %51 = arith.addf %49, %50 : vector<64x170xf32>
    %52 = arith.mulf %51, %41 : vector<64x170xf32>
    %cst_24 = arith.constant 0.254829586 : f32
    %53 = vector.broadcast %cst_24 : f32 to vector<64x170xf32>
    %54 = arith.addf %52, %53 : vector<64x170xf32>
    %55 = arith.mulf %54, %41 : vector<64x170xf32>
    %cst_25 = arith.constant 0.000000e+00 : f32
    %56 = vector.broadcast %cst_25 : f32 to vector<64x170xf32>
    %57 = arith.subf %56, %35 : vector<64x170xf32>
    %58 = arith.mulf %57, %35 : vector<64x170xf32>
    %59 = math.exp %58 : vector<64x170xf32>
    %60 = arith.mulf %55, %59 : vector<64x170xf32>
    %cst_26 = arith.constant 1.000000e+00 : f32
    %61 = vector.broadcast %cst_26 : f32 to vector<64x170xf32>
    %62 = arith.subf %61, %60 : vector<64x170xf32>
    %cst_27 = arith.constant 0.000000e+00 : f32
    %63 = vector.broadcast %cst_27 : f32 to vector<64x170xf32>
    %64 = arith.cmpf oge, %34, %63 : vector<64x170xf32>
    %cst_28 = arith.constant 0.000000e+00 : f32
    %65 = vector.broadcast %cst_28 : f32 to vector<64x170xf32>
    %66 = arith.subf %65, %62 : vector<64x170xf32>
    %67 = arith.select %64, %62, %66 : vector<64x170xi1>, vector<64x170xf32>
    %cst_29 = arith.constant 1.000000e+00 : f32
    %68 = vector.broadcast %cst_29 : f32 to vector<64x170xf32>
    %69 = arith.addf %68, %67 : vector<64x170xf32>
    %70 = arith.mulf %30, %69 : vector<64x170xf32>
    %71 = arith.mulf %70, %26 : vector<64x170xf32>
    %c0_30 = arith.constant 0 : index
    %c0_31 = arith.constant 0 : index
    %72 = vector.load %arg9[%c0_30, %c0_31] : memref<64x64xf32, #tpu.memory_space<vmem>>, vector<64x64xf32>
    %c0_32 = arith.constant 0 : index
    %c0_33 = arith.constant 0 : index
    %73 = vector.load %arg6[%c0_32, %c0_33] : memref<170x64xf32, #tpu.memory_space<vmem>>, vector<170x64xf32>
    %cst_34 = arith.constant dense<0.000000e+00> : vector<64x64xf32>
    %74 = tpu.matmul %71, %73, %cst_34 {dimension_numbers = #tpu.dot_dimension_numbers<[1], [0], [0], [1], [0, 0, 1, 1], [], []>} : vector<64x170xf32>, vector<170x64xf32>, vector<64x64xf32> -> vector<64x64xf32>
    %75 = arith.addf %72, %74 : vector<64x64xf32>
    %c0_35 = arith.constant 0 : index
    %c0_36 = arith.constant 0 : index
    %76 = vector.load %arg9[%c0_35, %c0_36] : memref<64x64xf32, #tpu.memory_space<vmem>>, vector<64x64xf32>
    tpu.vector_store %arg9[%c0_35, %c0_36], %75 {strides = array<i32>} : memref<64x64xf32, #tpu.memory_space<vmem>>, vector<64x64xf32>,
    %c0_i32_37 = arith.constant 0 : i32
    %77 = arith.cmpi eq, %arg1, %c0_i32_37 : i32
    %78 = arith.extui %77 : i1 to i32
    %c0_i32_38 = arith.constant 0 : i32
    %79 = arith.cmpi ne, %78, %c0_i32_38 : i32
    scf.if %79 {
      %c0_39 = arith.constant 0 : index
      %c0_40 = arith.constant 0 : index
      %80 = vector.load %arg9[%c0_39, %c0_40] : memref<64x64xf32, #tpu.memory_space<vmem>>, vector<64x64xf32>
      %c0_41 = arith.constant 0 : index
      %c0_42 = arith.constant 0 : index
      %81 = vector.load %arg7[%c0_41, %c0_42] : memref<64x64xf32, #tpu.memory_space<vmem>>, vector<64x64xf32>
      %82 = arith.addf %80, %81 : vector<64x64xf32>
      %c0_43 = arith.constant 0 : index
      %c0_44 = arith.constant 0 : index
      %83 = vector.load %arg8[%c0_43, %c0_44] : memref<64x64xf32, #tpu.memory_space<vmem>>, vector<64x64xf32>
      tpu.vector_store %arg8[%c0_43, %c0_44], %82 {strides = array<i32>} : memref<64x64xf32, #tpu.memory_space<vmem>>, vector<64x64xf32>,
    } else {
    }
    return
  }
  func.func @transform_0(%arg0: i32, %arg1: i32) -> (i32, i32) {
    %c0_i32 = arith.constant 0 : i32
    %c0_i32_0 = arith.constant 0 : i32
    return %arg0, %c0_i32 : i32, i32
  }
  func.func @transform_1(%arg0: i32, %arg1: i32) -> (i32, i32) {
    %c0_i32 = arith.constant 0 : i32
    %c0_i32_0 = arith.constant 0 : i32
    %c0_i32_1 = arith.constant 0 : i32
    return %c0_i32, %c0_i32_0 : i32, i32
  }
  func.func @transform_2(%arg0: i32, %arg1: i32) -> (i32, i32) {
    %c0_i32 = arith.constant 0 : i32
    %c0_i32_0 = arith.constant 0 : i32
    return %c0_i32, %arg1 : i32, i32
  }
  func.func @transform_3(%arg0: i32, %arg1: i32) -> (i32, i32) {
    %c0_i32 = arith.constant 0 : i32
    %c0_i32_0 = arith.constant 0 : i32
    return %c0_i32, %arg1 : i32, i32
  }
  func.func @transform_4(%arg0: i32, %arg1: i32) -> (i32, i32) {
    %c0_i32 = arith.constant 0 : i32
    %c0_i32_0 = arith.constant 0 : i32
    return %arg1, %c0_i32 : i32, i32
  }
  func.func @transform_5(%arg0: i32, %arg1: i32) -> (i32, i32) {
    %c0_i32 = arith.constant 0 : i32
    %c0_i32_0 = arith.constant 0 : i32
    return %arg0, %c0_i32 : i32, i32
  }
  func.func @transform_6(%arg0: i32, %arg1: i32) -> (i32, i32) {
    %c0_i32 = arith.constant 0 : i32
    %c0_i32_0 = arith.constant 0 : i32
    return %arg0, %c0_i32 : i32, i32
  }
}

module attributes {stable_mosaic.version = 11 : i64} {
  func.func @_mean_ln_kernel(%arg0: memref<4x2x64xf32, #tpu.memory_space<vmem>>, %arg1: memref<1x64xf32, #tpu.memory_space<vmem>>, %arg2: memref<2x64xf32, #tpu.memory_space<vmem>>) attributes {dimension_semantics = [], scalar_prefetch = 0 : i64, scratch_operands = 0 : i64, tpu.core_type = #tpu.core_type<tc>} {
    %c0 = arith.constant 0 : index
    %c0_0 = arith.constant 0 : index
    %c0_1 = arith.constant 0 : index
    %0 = vector.load %arg0[%c0, %c0_0, %c0_1] : memref<4x2x64xf32, #tpu.memory_space<vmem>>, vector<4x2x64xf32>
    %1 = vector.extract_strided_slice %0 {offsets = [0, 0, 0], sizes = [1, 2, 64], strides = [1, 1, 1]} : vector<4x2x64xf32> to vector<1x2x64xf32>
    %2 = vector.shape_cast %1 : vector<1x2x64xf32> to vector<2x64xf32>
    %3 = vector.extract_strided_slice %0 {offsets = [1, 0, 0], sizes = [1, 2, 64], strides = [1, 1, 1]} : vector<4x2x64xf32> to vector<1x2x64xf32>
    %4 = vector.shape_cast %3 : vector<1x2x64xf32> to vector<2x64xf32>
    %5 = arith.addf %2, %4 : vector<2x64xf32>
    %6 = vector.extract_strided_slice %0 {offsets = [2, 0, 0], sizes = [1, 2, 64], strides = [1, 1, 1]} : vector<4x2x64xf32> to vector<1x2x64xf32>
    %7 = vector.shape_cast %6 : vector<1x2x64xf32> to vector<2x64xf32>
    %8 = arith.addf %5, %7 : vector<2x64xf32>
    %9 = vector.extract_strided_slice %0 {offsets = [3, 0, 0], sizes = [1, 2, 64], strides = [1, 1, 1]} : vector<4x2x64xf32> to vector<1x2x64xf32>
    %10 = vector.shape_cast %9 : vector<1x2x64xf32> to vector<2x64xf32>
    %11 = arith.addf %8, %10 : vector<2x64xf32>
    %cst = arith.constant 4.000000e+00 : f32
    %12 = vector.broadcast %cst : f32 to vector<2x64xf32>
    %13 = arith.divf %11, %12 : vector<2x64xf32>
    %cst_2 = arith.constant dense<0.000000e+00> : vector<2xf32>
    %14 = vector.multi_reduction <add>, %13, %cst_2 [1] : vector<2x64xf32> to vector<2xf32>
    %15 = vector.shape_cast %14 : vector<2xf32> to vector<2x1xf32>
    %cst_3 = arith.constant 6.400000e+01 : f32
    %16 = vector.broadcast %cst_3 : f32 to vector<2x1xf32>
    %17 = arith.divf %15, %16 : vector<2x1xf32>
    %18 = vector.broadcast %17 : vector<2x1xf32> to vector<2x64xf32>
    %19 = arith.subf %13, %18 : vector<2x64xf32>
    %20 = arith.mulf %19, %19 : vector<2x64xf32>
    %cst_4 = arith.constant dense<0.000000e+00> : vector<2xf32>
    %21 = vector.multi_reduction <add>, %20, %cst_4 [1] : vector<2x64xf32> to vector<2xf32>
    %22 = vector.shape_cast %21 : vector<2xf32> to vector<2x1xf32>
    %cst_5 = arith.constant 6.400000e+01 : f32
    %23 = vector.broadcast %cst_5 : f32 to vector<2x1xf32>
    %24 = arith.divf %22, %23 : vector<2x1xf32>
    %25 = vector.broadcast %17 : vector<2x1xf32> to vector<2x64xf32>
    %26 = arith.subf %13, %25 : vector<2x64xf32>
    %cst_6 = arith.constant 9.99999974E-6 : f32
    %27 = vector.broadcast %cst_6 : f32 to vector<2x1xf32>
    %28 = arith.addf %24, %27 : vector<2x1xf32>
    %29 = math.rsqrt %28 : vector<2x1xf32>
    %30 = vector.broadcast %29 : vector<2x1xf32> to vector<2x64xf32>
    %31 = arith.mulf %26, %30 : vector<2x64xf32>
    %c0_7 = arith.constant 0 : index
    %c0_8 = arith.constant 0 : index
    %32 = vector.load %arg1[%c0_7, %c0_8] : memref<1x64xf32, #tpu.memory_space<vmem>>, vector<1x64xf32>
    %33 = vector.broadcast %32 : vector<1x64xf32> to vector<2x64xf32>
    %34 = arith.mulf %31, %33 : vector<2x64xf32>
    %c0_9 = arith.constant 0 : index
    %c0_10 = arith.constant 0 : index
    %35 = vector.load %arg2[%c0_9, %c0_10] : memref<2x64xf32, #tpu.memory_space<vmem>>, vector<2x64xf32>
    tpu.vector_store %arg2[%c0_9, %c0_10], %34 {strides = array<i32>} : memref<2x64xf32, #tpu.memory_space<vmem>>, vector<2x64xf32>,
    return
  }
}

</mosaic_0001>

<llo_original>
// kernel: text_transformer_forward.15
$region0: #{text_transformer_forward.15}
  #allocation0 [shape = 'u32[]', space=smem, size = 0x4, offset = 0x4, fixed_abs, tag = 'smem constant byte address 0x4 - core index']
  #allocation1 [shape = 'u32[144,128]{1,0:T(1,128)}', space=vmem, size = 0x12000, scoped, tag = 'internal scratch']
  %s0 = inlined_call_operand.vmem [shape: f32[4,16,64], index: 0, kind: input, shape index: {}]
  %s1 = inlined_call_operand.vmem [shape: f32[64,192], index: 1, kind: input, shape index: {}]
  %s2 = inlined_call_operand.vmem [shape: f32[1,192], index: 2, kind: input, shape index: {}]
  %s3 = inlined_call_operand.vmem [shape: f32[1,192], index: 3, kind: input, shape index: {}]
  %s4 = inlined_call_operand.vmem [shape: bf16[4,16,192], index: 4, kind: output, shape index: {}]
  %s5 = sld [smem:[#allocation0]]
  $region26: #{text_transformer_forward.15} parent=0
    _
  %s7 = ssub.s32 1, %s5
  %s8 = scalar_select 0, %s7, %s5
  // Predicated region
  $region2: #{text_transformer_forward.15} parent=0 // pred_check
    _
  $region3: #{text_transformer_forward.15} parent=0 // pred_check_branch
    %10 = sbr.rel (0) target = $region5
  $region4: #{text_transformer_forward.15} parent=0 // pred_region
    _
  $region5: #{text_transformer_forward.15} parent=0 // pred_fallthru
    _
  // Predicated region
  $region6: #{text_transformer_forward.15} parent=0 // pred_check
    _
  $region7: #{text_transformer_forward.15} parent=0 // pred_check_branch
    %12 = sbr.rel (0) target = $region9
  $region8: #{text_transformer_forward.15} parent=0 // pred_region
    _
  $region9: #{text_transformer_forward.15} parent=0 // pred_fallthru
    _
  // Predicated region
  $region10: #{text_transformer_forward.15} parent=0 // pred_check
    _
  $region11: #{text_transformer_forward.15} parent=0 // pred_check_branch
    %14 = sbr.rel (0) target = $region13
  $region12: #{text_transformer_forward.15} parent=0 // pred_region
    _
  $region13: #{text_transformer_forward.15} parent=0 // pred_fallthru
    _
  // Predicated region
  $region14: #{text_transformer_forward.15} parent=0 // pred_check
    _
  $region15: #{text_transformer_forward.15} parent=0 // pred_check_branch
    %16 = sbr.rel (0) target = $region17
  $region16: #{text_transformer_forward.15} parent=0 // pred_region
    _
  $region17: #{text_transformer_forward.15} parent=0 // pred_fallthru
    _
  %v17 = vld [vmem:[%s1] sm:$0xff]
  %v18 = vld [vmem:[%s1 + $0x8] sm:$0xff]
  %v19 = vld [vmem:[%s1 + $0x10] sm:$0xff]
  %v20 = vld [vmem:[%s1 + $0x18] sm:$0xff]
  %v21 = vld [vmem:[%s1 + $0x20] sm:$0xff]
  %v22 = vld [vmem:[%s1 + $0x28] sm:$0xff]
  %v23 = vld [vmem:[%s1 + $0x30] sm:$0xff]
  %v24 = vld [vmem:[%s1 + $0x38] sm:$0xff]
  %v25 = vld [vmem:[%s1 + $0x40] sm:$0xff]
  %v26 = vld [vmem:[%s1 + $0x48] sm:$0xff]
  %v27 = vld [vmem:[%s1 + $0x50] sm:$0xff]
  %v28 = vld [vmem:[%s1 + $0x58] sm:$0xff]
  %v29 = vld [vmem:[%s1 + $0x60] sm:$0xff]
  %v30 = vld [vmem:[%s1 + $0x68] sm:$0xff]
  %v31 = vld [vmem:[%s1 + $0x70] sm:$0xff]
  %v32 = vld [vmem:[%s1 + $0x78] sm:$0xff]
  %v33 = vld [vmem:[%s2] sm:$0x3]
  %v34 = vld [vmem:[%s3] sm:$0x3]
  %v35 = vld [vmem:[%s0] sm:$0xff]
  %v36 = vld [vmem:[%s0 + $0x8] sm:$0xff]
  %vm37 = vcmask 523264
  %v39 = vsel %vm37, %v35, 0
  %v42 = vsel %vm37, %v36, 0
  %44 = vmatprep.subr.mxu0 %v18
  %45 = vmatpush1.msra.mxu0 %v17
  %46 = vmatprep.subr.mxu0 %v20
  %47 = vmatpush1.msra.mxu0 %v19
  %48 = vmatprep.subr.mxu0 %v22
  %49 = vmatpush1.msra.mxu0 %v21
  %50 = vmatprep.subr.mxu0 %v24
  %51 = vmatpush1.msra.mxu0 %v23
  %52 = vmatprep.subr.mxu0 %v26
  %53 = vmatpush1.msra.mxu0 %v25
  %54 = vmatprep.subr.mxu0 %v28
  %55 = vmatpush1.msra.mxu0 %v27
  %56 = vmatprep.subr.mxu0 %v30
  %57 = vmatpush1.msra.mxu0 %v29
  %58 = vmatprep.subr.mxu0 %v32
  %59 = vmatpush1.msra.mxu0 %v31
  %60 = vmatprep.subr.mxu0 0.0
  %61 = vmatpush1.msra.mxu0 0.0
  %62 = vmatprep.subr.mxu0 0.0
  %63 = vmatpush1.msra.mxu0 0.0
  %64 = vmatprep.subr.mxu0 0.0
  %65 = vmatpush1.msra.mxu0 0.0
  %66 = vmatprep.subr.mxu0 0.0
  %67 = vmatpush1.msra.mxu0 0.0
  %68 = vmatprep.subr.mxu0 0.0
  %69 = vmatpush1.msra.mxu0 0.0
  %70 = vmatprep.subr.mxu0 0.0
  %71 = vmatpush1.msra.mxu0 0.0
  %72 = vmatprep.subr.mxu0 0.0
  %73 = vmatpush1.msra.mxu0 0.0
  %74 = vmatprep.subr.mxu0 0.0
  %75 = vmatpush1.msra.mxu0 0.0
  %76 = vmatprep.subr.mxu0 0.0
  %77 = vmatpush1.msra.mxu0 0.0
  %78 = vmatprep.subr.mxu0 0.0
  %79 = vmatpush1.msra.mxu0 0.0
  %80 = vmatprep.subr.mxu0 0.0
  %81 = vmatpush1.msra.mxu0 0.0
  %82 = vmatprep.subr.mxu0 0.0
  %83 = vmatpush1.msra.mxu0 0.0
  %84 = vmatprep.subr.mxu0 0.0
  %85 = vmatpush1.msra.mxu0 0.0
  %86 = vmatprep.subr.mxu0 0.0
  %87 = vmatpush1.msra.mxu0 0.0
  %88 = vmatprep.subr.mxu0 0.0
  %89 = vmatpush1.msra.mxu0 0.0
  %90 = vmatprep.subr.mxu0 0.0
  %91 = vmatpush1.msra.mxu0 0.0
  %92 = vmatprep.subr.mxu0 0.0
  %93 = vmatpush1.msra.mxu0 0.0
  %94 = vmatprep.subr.mxu0 0.0
  %95 = vmatpush1.msra.mxu0 0.0
  %96 = vmatprep.subr.mxu0 0.0
  %97 = vmatpush1.msra.mxu0 0.0
  %98 = vmatprep.subr.mxu0 0.0
  %99 = vmatpush1.msra.mxu0 0.0
  %100 = vmatprep.subr.mxu0 0.0
  %101 = vmatpush1.msra.mxu0 0.0
  %102 = vmatprep.subr.mxu0 0.0
  %103 = vmatpush1.msra.mxu0 0.0
  %104 = vmatprep.subr.mxu0 0.0
  %105 = vmatpush1.msra.mxu0 0.0
  %106 = vmatprep.subr.mxu0 0.0
  %107 = vmatpush1.msra.mxu0 0.0
  %108 = vmatprep.mubr.f32.mxu0 0.0
  %109 = vmatmul.mubr.f32.gmra.mrb[0].mxu0 %v39
  %v110 = vpop.f32.mrb[0].mxu0
  %v111 = vadd.f32 0.0, %v110
  %v112 = vpop.f32.mrb[0].mxu0
  %v113 = vadd.f32 0.0, %v112
  %114 = vmatprep.mubr.f32.mxu0 0.0
  %115 = vmatmul.mubr.f32.gmra.mrb[0].mxu0 %v42
  %v116 = vpop.f32.mrb[0].mxu0
  %v117 = vadd.f32 0.0, %v116
  %v118 = vpop.f32.mrb[0].mxu0
  %v119 = vadd.f32 0.0, %v118
  %120 = vdwg.mxu0
  %v122 = vlaneseq
  %v123 = vshrl.u32 %v122, 7
  %v124 = vsub.s32 0, %v123
  %v125 = vrot.slane %v33, %v124
  %v126 = vlaneseq
  %v127 = vshrl.u32 %v126, 7
  %v128 = vsub.s32 1, %v127
  %v129 = vrot.slane %v33, %v128
  %v132 = vmul.f32 %v111, %v125
  %v133 = vmul.f32 %v113, %v129
  %v134 = vmul.f32 %v117, %v125
  %v135 = vmul.f32 %v119, %v129
  %v137 = vlaneseq
  %v138 = vshrl.u32 %v137, 7
  %v139 = vsub.s32 0, %v138
  %v140 = vrot.slane %v34, %v139
  %v141 = vlaneseq
  %v142 = vshrl.u32 %v141, 7
  %v143 = vsub.s32 1, %v142
  %v144 = vrot.slane %v34, %v143
  %v147 = vadd.f32 %v132, %v140
  %v148 = vadd.f32 %v133, %v144
  %v149 = vadd.f32 %v134, %v140
  %v150 = vadd.f32 %v135, %v144
  %v151 = vrcp.pop 2.0
  %v152 = vmul.f32 %v147, %v151
  %v153 = vmul.f32 %v148, %v151
  %v154 = vmul.f32 %v149, %v151
  %v155 = vmul.f32 %v150, %v151
  %v156 = vadd.f32 %v152, 0.0
  %v157 = vadd.f32 %v153, 0.0
  %v158 = vadd.f32 %v154, 0.0
  %v159 = vadd.f32 %v155, 0.0
  %v160 = vsub.f32 %v156, 1.0
  %v161 = vsub.f32 %v157, 1.0
  %v162 = vsub.f32 %v158, 1.0
  %v163 = vsub.f32 %v159, 1.0
  %vm164 = vcmp.ge.f32.partialorder %v160, 0.0
  %vm165 = vcmp.ge.f32.partialorder %v161, 0.0
  %vm166 = vcmp.ge.f32.partialorder %v162, 0.0
  %vm167 = vcmp.ge.f32.partialorder %v163, 0.0
  %v168 = vsel %vm164, 1, 0
  %v169 = vsel %vm165, 1, 0
  %v170 = vsel %vm166, 1, 0
  %v171 = vsel %vm167, 1, 0
  %v172 = vcvt.s32.f32 %v168
  %v173 = vcvt.s32.f32 %v169
  %v174 = vcvt.s32.f32 %v170
  %v175 = vcvt.s32.f32 %v171
  %v176 = vsub.f32 1.0, %v172
  %v177 = vsub.f32 1.0, %v173
  %v178 = vsub.f32 1.0, %v174
  %v179 = vsub.f32 1.0, %v175
  %v180 = vmul.f32 %v156, %v176
  %v181 = vmul.f32 %v157, %v177
  %v182 = vmul.f32 %v158, %v178
  %v183 = vmul.f32 %v159, %v179
  %v184 = vpack.c.bf16 %v174, %v172
  %v185 = vpack.c.bf16 %v175, %v173
  %v188 = vunpack.c.l.b16 %v184
  %v189 = vunpack.c.l.b16 %v185
  %v190 = vunpack.c.h.b16 %v184
  %v191 = vunpack.c.h.b16 %v185
  %v192 = vpack.c.b16 %v189, %v188
  %v193 = vpack.c.b16 %v191, %v190
  %vm196 = vcmask 1043456
  %vm197 = vcmask 523268
  %vm198 = vmor %vm197, %vm196
  %199 = vst.msk [vmem:[%s4] sm:$0xff] %vm198, %v192
  %200 = vst.msk [vmem:[%s4 + $0x8] sm:$0xff] %vm198, %v193
  %s201 = scalar_lea.vmem %s0, 16
  %v202 = vld [vmem:[%s201] sm:$0xff]
  %v203 = vld [vmem:[%s201 + $0x8] sm:$0xff]
  %v205 = vsel %vm37, %v202, 0
  %v208 = vsel %vm37, %v203, 0
  %210 = vmatprep.subr.mxu0 %v18
  %211 = vmatpush1.msra.mxu0 %v17
  %212 = vmatprep.subr.mxu0 %v20
  %213 = vmatpush1.msra.mxu0 %v19
  %214 = vmatprep.subr.mxu0 %v22
  %215 = vmatpush1.msra.mxu0 %v21
  %216 = vmatprep.subr.mxu0 %v24
  %217 = vmatpush1.msra.mxu0 %v23
  %218 = vmatprep.subr.mxu0 %v26
  %219 = vmatpush1.msra.mxu0 %v25
  %220 = vmatprep.subr.mxu0 %v28
  %221 = vmatpush1.msra.mxu0 %v27
  %222 = vmatprep.subr.mxu0 %v30
  %223 = vmatpush1.msra.mxu0 %v29
  %224 = vmatprep.subr.mxu0 %v32
  %225 = vmatpush1.msra.mxu0 %v31
  %226 = vmatprep.subr.mxu0 0.0
  %227 = vmatpush1.msra.mxu0 0.0
  %228 = vmatprep.subr.mxu0 0.0
  %229 = vmatpush1.msra.mxu0 0.0
  %230 = vmatprep.subr.mxu0 0.0
  %231 = vmatpush1.msra.mxu0 0.0
  %232 = vmatprep.subr.mxu0 0.0
  %233 = vmatpush1.msra.mxu0 0.0
  %234 = vmatprep.subr.mxu0 0.0
  %235 = vmatpush1.msra.mxu0 0.0
  %236 = vmatprep.subr.mxu0 0.0
  %237 = vmatpush1.msra.mxu0 0.0
  %238 = vmatprep.subr.mxu0 0.0
  %239 = vmatpush1.msra.mxu0 0.0
  %240 = vmatprep.subr.mxu0 0.0
  %241 = vmatpush1.msra.mxu0 0.0
  %242 = vmatprep.subr.mxu0 0.0
  %243 = vmatpush1.msra.mxu0 0.0
  %244 = vmatprep.subr.mxu0 0.0
  %245 = vmatpush1.msra.mxu0 0.0
  %246 = vmatprep.subr.mxu0 0.0
  %247 = vmatpush1.msra.mxu0 0.0
  %248 = vmatprep.subr.mxu0 0.0
  %249 = vmatpush1.msra.mxu0 0.0
  %250 = vmatprep.subr.mxu0 0.0
  %251 = vmatpush1.msra.mxu0 0.0
  %252 = vmatprep.subr.mxu0 0.0
  %253 = vmatpush1.msra.mxu0 0.0
  %254 = vmatprep.subr.mxu0 0.0
  %255 = vmatpush1.msra.mxu0 0.0
  %256 = vmatprep.subr.mxu0 0.0
  %257 = vmatpush1.msra.mxu0 0.0
  %258 = vmatprep.subr.mxu0 0.0
  %259 = vmatpush1.msra.mxu0 0.0
  %260 = vmatprep.subr.mxu0 0.0
  %261 = vmatpush1.msra.mxu0 0.0
  %262 = vmatprep.subr.mxu0 0.0
  %263 = vmatpush1.msra.mxu0 0.0
  %264 = vmatprep.subr.mxu0 0.0
  %265 = vmatpush1.msra.mxu0 0.0
  %266 = vmatprep.subr.mxu0 0.0
  %267 = vmatpush1.msra.mxu0 0.0
  %268 = vmatprep.subr.mxu0 0.0
  %269 = vmatpush1.msra.mxu0 0.0
  %270 = vmatprep.subr.mxu0 0.0
  %271 = vmatpush1.msra.mxu0 0.0
  %272 = vmatprep.subr.mxu0 0.0
  %273 = vmatpush1.msra.mxu0 0.0
  %274 = vmatprep.mubr.f32.mxu0 0.0
  %275 = vmatmul.mubr.f32.gmra.mrb[0].mxu0 %v205
  %v276 = vpop.f32.mrb[0].mxu0
  %v277 = vadd.f32 0.0, %v276
  %v278 = vpop.f32.mrb[0].mxu0
  %v279 = vadd.f32 0.0, %v278
  %280 = vmatprep.mubr.f32.mxu0 0.0
  %281 = vmatmul.mubr.f32.gmra.mrb[0].mxu0 %v208
  %v282 = vpop.f32.mrb[0].mxu0
  %v283 = vadd.f32 0.0, %v282
  %v284 = vpop.f32.mrb[0].mxu0
  %v285 = vadd.f32 0.0, %v284
  %286 = vdwg.mxu0
  %v287 = vmul.f32 %v277, %v125
  %v288 = vmul.f32 %v279, %v129
  %v289 = vmul.f32 %v283, %v125
  %v290 = vmul.f32 %v285, %v129
  %v291 = vadd.f32 %v287, %v140
  %v292 = vadd.f32 %v288, %v144
  %v293 = vadd.f32 %v289, %v140
  %v294 = vadd.f32 %v290, %v144
  %v295 = vsub.f32 %v291, %v180
  %v296 = vsub.f32 %v292, %v181
  %v297 = vsub.f32 %v293, %v182
  %v298 = vsub.f32 %v294, %v183
  %v299 = vmul.f32 %v295, %v151
  %v300 = vmul.f32 %v296, %v151
  %v301 = vmul.f32 %v297, %v151
  %v302 = vmul.f32 %v298, %v151
  %v303 = vadd.f32 %v180, %v299
  %v304 = vadd.f32 %v181, %v300
  %v305 = vadd.f32 %v182, %v301
  %v306 = vadd.f32 %v183, %v302
  %v307 = vsub.f32 %v303, 1.0
  %v308 = vsub.f32 %v304, 1.0
  %v309 = vsub.f32 %v305, 1.0
  %v310 = vsub.f32 %v306, 1.0
  %vm311 = vcmp.ge.f32.partialorder %v307, 0.0
  %vm312 = vcmp.ge.f32.partialorder %v308, 0.0
  %vm313 = vcmp.ge.f32.partialorder %v309, 0.0
  %vm314 = vcmp.ge.f32.partialorder %v310, 0.0
  %v315 = vsel %vm311, 1, 0
  %v316 = vsel %vm312, 1, 0
  %v317 = vsel %vm313, 1, 0
  %v318 = vsel %vm314, 1, 0
  %v319 = vcvt.s32.f32 %v315
  %v320 = vcvt.s32.f32 %v316
  %v321 = vcvt.s32.f32 %v317
  %v322 = vcvt.s32.f32 %v318
  %v323 = vsub.f32 1.0, %v319
  %v324 = vsub.f32 1.0, %v320
  %v325 = vsub.f32 1.0, %v321
  %v326 = vsub.f32 1.0, %v322
  %v327 = vmul.f32 %v303, %v323
  %v328 = vmul.f32 %v304, %v324
  %v329 = vmul.f32 %v305, %v325
  %v330 = vmul.f32 %v306, %v326
  %v331 = vpack.c.bf16 %v321, %v319
  %v332 = vpack.c.bf16 %v322, %v320
  %v335 = vunpack.c.l.b16 %v331
  %v336 = vunpack.c.l.b16 %v332
  %v337 = vunpack.c.h.b16 %v331
  %v338 = vunpack.c.h.b16 %v332
  %v339 = vpack.c.b16 %v336, %v335
  %v340 = vpack.c.b16 %v338, %v337
  %s343 = scalar_lea.vmem %s4, 16
  %344 = vst.msk [vmem:[%s343] sm:$0xff] %vm198, %v339
  %345 = vst.msk [vmem:[%s343 + $0x8] sm:$0xff] %vm198, %v340
  %s346 = scalar_lea.vmem %s0, 32
  %v347 = vld [vmem:[%s346] sm:$0xff]
  %v348 = vld [vmem:[%s346 + $0x8] sm:$0xff]
  %v350 = vsel %vm37, %v347, 0
  %v353 = vsel %vm37, %v348, 0
  %355 = vmatprep.subr.mxu0 %v18
  %356 = vmatpush1.msra.mxu0 %v17
  %357 = vmatprep.subr.mxu0 %v20
  %358 = vmatpush1.msra.mxu0 %v19
  %359 = vmatprep.subr.mxu0 %v22
  %360 = vmatpush1.msra.mxu0 %v21
  %361 = vmatprep.subr.mxu0 %v24
  %362 = vmatpush1.msra.mxu0 %v23
  %363 = vmatprep.subr.mxu0 %v26
  %364 = vmatpush1.msra.mxu0 %v25
  %365 = vmatprep.subr.mxu0 %v28
  %366 = vmatpush1.msra.mxu0 %v27
  %367 = vmatprep.subr.mxu0 %v30
  %368 = vmatpush1.msra.mxu0 %v29
  %369 = vmatprep.subr.mxu0 %v32
  %370 = vmatpush1.msra.mxu0 %v31
  %371 = vmatprep.subr.mxu0 0.0
  %372 = vmatpush1.msra.mxu0 0.0
  %373 = vmatprep.subr.mxu0 0.0
  %374 = vmatpush1.msra.mxu0 0.0
  %375 = vmatprep.subr.mxu0 0.0
  %376 = vmatpush1.msra.mxu0 0.0
  %377 = vmatprep.subr.mxu0 0.0
  %378 = vmatpush1.msra.mxu0 0.0
  %379 = vmatprep.subr.mxu0 0.0
  %380 = vmatpush1.msra.mxu0 0.0
  %381 = vmatprep.subr.mxu0 0.0
  %382 = vmatpush1.msra.mxu0 0.0
  %383 = vmatprep.subr.mxu0 0.0
  %384 = vmatpush1.msra.mxu0 0.0
  %385 = vmatprep.subr.mxu0 0.0
  %386 = vmatpush1.msra.mxu0 0.0
  %387 = vmatprep.subr.mxu0 0.0
  %388 = vmatpush1.msra.mxu0 0.0
  %389 = vmatprep.subr.mxu0 0.0
  %390 = vmatpush1.msra.mxu0 0.0
  %391 = vmatprep.subr.mxu0 0.0
  %392 = vmatpush1.msra.mxu0 0.0
  %393 = vmatprep.subr.mxu0 0.0
  %394 = vmatpush1.msra.mxu0 0.0
  %395 = vmatprep.subr.mxu0 0.0
  %396 = vmatpush1.msra.mxu0 0.0
  %397 = vmatprep.subr.mxu0 0.0
  %398 = vmatpush1.msra.mxu0 0.0
  %399 = vmatprep.subr.mxu0 0.0
  %400 = vmatpush1.msra.mxu0 0.0
  %401 = vmatprep.subr.mxu0 0.0
  %402 = vmatpush1.msra.mxu0 0.0
  %403 = vmatprep.subr.mxu0 0.0
  %404 = vmatpush1.msra.mxu0 0.0
  %405 = vmatprep.subr.mxu0 0.0
  %406 = vmatpush1.msra.mxu0 0.0
  %407 = vmatprep.subr.mxu0 0.0
  %408 = vmatpush1.msra.mxu0 0.0
  %409 = vmatprep.subr.mxu0 0.0
  %410 = vmatpush1.msra.mxu0 0.0
  %411 = vmatprep.subr.mxu0 0.0
  %412 = vmatpush1.msra.mxu0 0.0
  %413 = vmatprep.subr.mxu0 0.0
  %414 = vmatpush1.msra.mxu0 0.0
  %415 = vmatprep.subr.mxu0 0.0
  %416 = vmatpush1.msra.mxu0 0.0
  %417 = vmatprep.subr.mxu0 0.0
  %418 = vmatpush1.msra.mxu0 0.0
  %419 = vmatprep.mubr.f32.mxu0 0.0
  %420 = vmatmul.mubr.f32.gmra.mrb[0].mxu0 %v350
  %v421 = vpop.f32.mrb[0].mxu0
  %v422 = vadd.f32 0.0, %v421
  %v423 = vpop.f32.mrb[0].mxu0
  %v424 = vadd.f32 0.0, %v423
  %425 = vmatprep.mubr.f32.mxu0 0.0
  %426 = vmatmul.mubr.f32.gmra.mrb[0].mxu0 %v353
  %v427 = vpop.f32.mrb[0].mxu0
  %v428 = vadd.f32 0.0, %v427
  %v429 = vpop.f32.mrb[0].mxu0
  %v430 = vadd.f32 0.0, %v429
  %431 = vdwg.mxu0
  %v432 = vmul.f32 %v422, %v125
  %v433 = vmul.f32 %v424, %v129
  %v434 = vmul.f32 %v428, %v125
  %v435 = vmul.f32 %v430, %v129
  %v436 = vadd.f32 %v432, %v140
  %v437 = vadd.f32 %v433, %v144
  %v438 = vadd.f32 %v434, %v140
  %v439 = vadd.f32 %v435, %v144
  %v440 = vsub.f32 %v436, %v327
  %v441 = vsub.f32 %v437, %v328
  %v442 = vsub.f32 %v438, %v329
  %v443 = vsub.f32 %v439, %v330
  %v444 = vmul.f32 %v440, %v151
  %v445 = vmul.f32 %v441, %v151
  %v446 = vmul.f32 %v442, %v151
  %v447 = vmul.f32 %v443, %v151
  %v448 = vadd.f32 %v327, %v444
  %v449 = vadd.f32 %v328, %v445
  %v450 = vadd.f32 %v329, %v446
  %v451 = vadd.f32 %v330, %v447
  %v452 = vsub.f32 %v448, 1.0
  %v453 = vsub.f32 %v449, 1.0
  %v454 = vsub.f32 %v450, 1.0
  %v455 = vsub.f32 %v451, 1.0
  %vm456 = vcmp.ge.f32.partialorder %v452, 0.0
  %vm457 = vcmp.ge.f32.partialorder %v453, 0.0
  %vm458 = vcmp.ge.f32.partialorder %v454, 0.0
  %vm459 = vcmp.ge.f32.partialorder %v455, 0.0
  %v460 = vsel %vm456, 1, 0
  %v461 = vsel %vm457, 1, 0
  %v462 = vsel %vm458, 1, 0
  %v463 = vsel %vm459, 1, 0
  %v464 = vcvt.s32.f32 %v460
  %v465 = vcvt.s32.f32 %v461
  %v466 = vcvt.s32.f32 %v462
  %v467 = vcvt.s32.f32 %v463
  %v468 = vsub.f32 1.0, %v464
  %v469 = vsub.f32 1.0, %v465
  %v470 = vsub.f32 1.0, %v466
  %v471 = vsub.f32 1.0, %v467
  %v472 = vmul.f32 %v448, %v468
  %v473 = vmul.f32 %v449, %v469
  %v474 = vmul.f32 %v450, %v470
  %v475 = vmul.f32 %v451, %v471
  %v476 = vpack.c.bf16 %v466, %v464
  %v477 = vpack.c.bf16 %v467, %v465
  %v480 = vunpack.c.l.b16 %v476
  %v481 = vunpack.c.l.b16 %v477
  %v482 = vunpack.c.h.b16 %v476
  %v483 = vunpack.c.h.b16 %v477
  %v484 = vpack.c.b16 %v481, %v480
  %v485 = vpack.c.b16 %v483, %v482
  %s488 = scalar_lea.vmem %s4, 32
  %489 = vst.msk [vmem:[%s488] sm:$0xff] %vm198, %v484
  %490 = vst.msk [vmem:[%s488 + $0x8] sm:$0xff] %vm198, %v485
  %s491 = scalar_lea.vmem %s0, 48
  %v492 = vld [vmem:[%s491] sm:$0xff]
  %v493 = vld [vmem:[%s491 + $0x8] sm:$0xff]
  %v495 = vsel %vm37, %v492, 0
  %v498 = vsel %vm37, %v493, 0
  %500 = vmatprep.subr.mxu0 %v18
  %501 = vmatpush1.msra.mxu0 %v17
  %502 = vmatprep.subr.mxu0 %v20
  %503 = vmatpush1.msra.mxu0 %v19
  %504 = vmatprep.subr.mxu0 %v22
  %505 = vmatpush1.msra.mxu0 %v21
  %506 = vmatprep.subr.mxu0 %v24
  %507 = vmatpush1.msra.mxu0 %v23
  %508 = vmatprep.subr.mxu0 %v26
  %509 = vmatpush1.msra.mxu0 %v25
  %510 = vmatprep.subr.mxu0 %v28
  %511 = vmatpush1.msra.mxu0 %v27
  %512 = vmatprep.subr.mxu0 %v30
  %513 = vmatpush1.msra.mxu0 %v29
  %514 = vmatprep.subr.mxu0 %v32
  %515 = vmatpush1.msra.mxu0 %v31
  %516 = vmatprep.subr.mxu0 0.0
  %517 = vmatpush1.msra.mxu0 0.0
  %518 = vmatprep.subr.mxu0 0.0
  %519 = vmatpush1.msra.mxu0 0.0
  %520 = vmatprep.subr.mxu0 0.0
  %521 = vmatpush1.msra.mxu0 0.0
  %522 = vmatprep.subr.mxu0 0.0
  %523 = vmatpush1.msra.mxu0 0.0
  %524 = vmatprep.subr.mxu0 0.0
  %525 = vmatpush1.msra.mxu0 0.0
  %526 = vmatprep.subr.mxu0 0.0
  %527 = vmatpush1.msra.mxu0 0.0
  %528 = vmatprep.subr.mxu0 0.0
  %529 = vmatpush1.msra.mxu0 0.0
  %530 = vmatprep.subr.mxu0 0.0
  %531 = vmatpush1.msra.mxu0 0.0
  %532 = vmatprep.subr.mxu0 0.0
  %533 = vmatpush1.msra.mxu0 0.0
  %534 = vmatprep.subr.mxu0 0.0
  %535 = vmatpush1.msra.mxu0 0.0
  %536 = vmatprep.subr.mxu0 0.0
  %537 = vmatpush1.msra.mxu0 0.0
  %538 = vmatprep.subr.mxu0 0.0
  %539 = vmatpush1.msra.mxu0 0.0
  %540 = vmatprep.subr.mxu0 0.0
  %541 = vmatpush1.msra.mxu0 0.0
  %542 = vmatprep.subr.mxu0 0.0
  %543 = vmatpush1.msra.mxu0 0.0
  %544 = vmatprep.subr.mxu0 0.0
  %545 = vmatpush1.msra.mxu0 0.0
  %546 = vmatprep.subr.mxu0 0.0
  %547 = vmatpush1.msra.mxu0 0.0
  %548 = vmatprep.subr.mxu0 0.0
  %549 = vmatpush1.msra.mxu0 0.0
  %550 = vmatprep.subr.mxu0 0.0
  %551 = vmatpush1.msra.mxu0 0.0
  %552 = vmatprep.subr.mxu0 0.0
  %553 = vmatpush1.msra.mxu0 0.0
  %554 = vmatprep.subr.mxu0 0.0
  %555 = vmatpush1.msra.mxu0 0.0
  %556 = vmatprep.subr.mxu0 0.0
  %557 = vmatpush1.msra.mxu0 0.0
  %558 = vmatprep.subr.mxu0 0.0
  %559 = vmatpush1.msra.mxu0 0.0
  %560 = vmatprep.subr.mxu0 0.0
  %561 = vmatpush1.msra.mxu0 0.0
  %562 = vmatprep.subr.mxu0 0.0
  %563 = vmatpush1.msra.mxu0 0.0
  %564 = vmatprep.mubr.f32.mxu0 0.0
  %565 = vmatmul.mubr.f32.gmra.mrb[0].mxu0 %v495
  %v566 = vpop.f32.mrb[0].mxu0
  %v567 = vadd.f32 0.0, %v566
  %v568 = vpop.f32.mrb[0].mxu0
  %v569 = vadd.f32 0.0, %v568
  %570 = vmatprep.mubr.f32.mxu0 0.0
  %571 = vmatmul.mubr.f32.gmra.mrb[0].mxu0 %v498
  %v572 = vpop.f32.mrb[0].mxu0
  %v573 = vadd.f32 0.0, %v572
  %v574 = vpop.f32.mrb[0].mxu0
  %v575 = vadd.f32 0.0, %v574
  %576 = vdwg.mxu0
  %v577 = vmul.f32 %v567, %v125
  %v578 = vmul.f32 %v569, %v129
  %v579 = vmul.f32 %v573, %v125
  %v580 = vmul.f32 %v575, %v129
  %v581 = vadd.f32 %v577, %v140
  %v582 = vadd.f32 %v578, %v144
  %v583 = vadd.f32 %v579, %v140
  %v584 = vadd.f32 %v580, %v144
  %v585 = vsub.f32 %v581, %v472
  %v586 = vsub.f32 %v582, %v473
  %v587 = vsub.f32 %v583, %v474
  %v588 = vsub.f32 %v584, %v475
  %v589 = vmul.f32 %v585, %v151
  %v590 = vmul.f32 %v586, %v151
  %v591 = vmul.f32 %v587, %v151
  %v592 = vmul.f32 %v588, %v151
  %v593 = vadd.f32 %v472, %v589
  %v594 = vadd.f32 %v473, %v590
  %v595 = vadd.f32 %v474, %v591
  %v596 = vadd.f32 %v475, %v592
  %v597 = vsub.f32 %v593, 1.0
  %v598 = vsub.f32 %v594, 1.0
  %v599 = vsub.f32 %v595, 1.0
  %v600 = vsub.f32 %v596, 1.0
  %vm601 = vcmp.ge.f32.partialorder %v597, 0.0
  %vm602 = vcmp.ge.f32.partialorder %v598, 0.0
  %vm603 = vcmp.ge.f32.partialorder %v599, 0.0
  %vm604 = vcmp.ge.f32.partialorder %v600, 0.0
  %v605 = vsel %vm601, 1, 0
  %v606 = vsel %vm602, 1, 0
  %v607 = vsel %vm603, 1, 0
  %v608 = vsel %vm604, 1, 0
  %v609 = vcvt.s32.f32 %v605
  %v610 = vcvt.s32.f32 %v606
  %v611 = vcvt.s32.f32 %v607
  %v612 = vcvt.s32.f32 %v608
  %v613 = vpack.c.bf16 %v611, %v609
  %v614 = vpack.c.bf16 %v612, %v610
  %v617 = vunpack.c.l.b16 %v613
  %v618 = vunpack.c.l.b16 %v614
  %v619 = vunpack.c.h.b16 %v613
  %v620 = vunpack.c.h.b16 %v614
  %v621 = vpack.c.b16 %v618, %v617
  %v622 = vpack.c.b16 %v620, %v619
  %s625 = scalar_lea.vmem %s4, 48
  %626 = vst.msk [vmem:[%s625] sm:$0xff] %vm198, %v621
  %627 = vst.msk [vmem:[%s625 + $0x8] sm:$0xff] %vm198, %v622
  // Predicated region
  $region18: #{text_transformer_forward.15} parent=0 // pred_check
    _
  $region19: #{text_transformer_forward.15} parent=0 // pred_check_branch
    %629 = sbr.rel (0) target = $region21
  $region20: #{text_transformer_forward.15} parent=0 // pred_region
    _
  $region21: #{text_transformer_forward.15} parent=0 // pred_fallthru
    _
  // Predicated region
  $region22: #{text_transformer_forward.15} parent=0 // pred_check
    _
  $region23: #{text_transformer_forward.15} parent=0 // pred_check_branch
    %631 = sbr.rel (0) target = $region25
  $region24: #{text_transformer_forward.15} parent=0 // pred_region
    _
  $region25: #{text_transformer_forward.15} parent=0 // pred_fallthru
    _

// kernel: text_transformer_forward.16
$region0: #{text_transformer_forward.16}
  #allocation0 [shape = 'u32[]', space=smem, size = 0x4, offset = 0x4, fixed_abs, tag = 'smem constant byte address 0x4 - core index']
  #allocation1 [shape = 'u32[144,128]{1,0:T(1,128)}', space=vmem, size = 0x12000, scoped, tag = 'internal scratch']
  %s0 = inlined_call_operand.vmem [shape: bf16[2,8,64], index: 0, kind: input, shape index: {}]
  %s1 = inlined_call_operand.vmem [shape: bf16[2,8,64], index: 1, kind: input, shape index: {}]
  %s2 = inlined_call_operand.vmem [shape: bf16[2,8,64], index: 2, kind: input, shape index: {}]
  %s3 = inlined_call_operand.vmem [shape: f32[2,8,64], index: 3, kind: input, shape index: {}, may-alias: {3,4,5,6}]
  %s4 = inlined_call_operand.vmem [shape: f32[2,8,64], index: 4, kind: input, shape index: {}, may-alias: {3,4,5,6}]
  %s5 = inlined_call_operand.vmem [shape: f32[2,8,64], index: 5, kind: input, shape index: {}, may-alias: {3,4,5,6}]
  %s6 = inlined_call_operand.vmem [shape: f32[2,8,64], index: 6, kind: input, shape index: {}, may-alias: {3,4,5,6}]
  %s7 = inlined_call_operand.vmem [shape: f32[192,64], index: 7, kind: input, shape index: {}]
  %s8 = inlined_call_operand.vmem [shape: f32[1,64], index: 8, kind: input, shape index: {}]
  %s9 = inlined_call_operand.vmem [shape: bf16[2,8,64], index: 9, kind: output, shape index: {0}]
  %s10 = inlined_call_operand.vmem [shape: f32[2,8,64], index: 10, kind: output, shape index: {1}]
  %s11 = inlined_call_operand.vmem [shape: f32[2,8,64], index: 11, kind: output, shape index: {2}]
  %s12 = inlined_call_operand.vmem [shape: f32[2,8,64], index: 12, kind: output, shape index: {3}]
  %s13 = inlined_call_operand.vmem [shape: f32[2,8,64], index: 13, kind: output, shape index: {4}]
  %14 = xla_tuple %s9, %s10, %s11, %s12, %s13
  %s15 = sld [smem:[#allocation0]]
  $region101: #{text_transformer_forward.16} parent=0
    _
  %s17 = ssub.s32 1, %s15
  %s18 = scalar_select 0, %s17, %s15
  loop: start=0, step=1, limit=4
  $region2: #{text_transformer_forward.16} parent=0 // loop_pre_header
    _
  $region3: #{text_transformer_forward.16} parent=0 // loop_header
    %s20 = sphi 0, %s24
    %p21 = scmp.ge.s32.totalorder %s20, 4
    %s30 = sphi 0, %s32
    %s33 = sphi 0, %s30
    %s34 = sphi 0, %s33
    %s50 = sphi 0, %s34
    %s56 = sphi 0, %s58
    %s59 = sphi 0, %s56
    %s60 = sphi 0, %s59
    %s76 = sphi 0, %s60
    %s82 = sphi 0, %s84
    %s85 = sphi 0, %s82
    %s86 = sphi 0, %s85
    %s102 = sphi 0, %s86
    %s108 = sphi 0, %s110
    %s111 = sphi 0, %s108
    %s112 = sphi 0, %s111
    %s128 = sphi 0, %s112
    %s134 = sphi 0, %s136
    %s137 = sphi 0, %s134
    %s138 = sphi 0, %s137
    %s154 = sphi 0, %s138
    %s160 = sphi 0, %s162
    %s163 = sphi 0, %s160
    %s164 = sphi 0, %s163
    %s180 = sphi 0, %s164
    %s186 = sphi 0, %s188
    %s189 = sphi 0, %s186
    %s190 = sphi 0, %s189
    %s206 = sphi 0, %s190
    %s210 = sphi 0, %s210
    %s212 = sphi 0, %s210
    %s213 = sphi 0, %s212
    %s227 = sphi 0, %s213
    %s231 = sphi 0, %s231
    %s233 = sphi 0, %s231
    %s234 = sphi 0, %s233
    %s248 = sphi 0, %s234
    %s254 = sphi 0, %s256
    %s257 = sphi 0, %s254
    %s258 = sphi 0, %s257
    %s274 = sphi 0, %s258
    %s280 = sphi 0, %s282
    %s283 = sphi 0, %s280
    %s284 = sphi 0, %s283
    %s300 = sphi 0, %s284
    %s306 = sphi 0, %s308
    %s309 = sphi 0, %s306
    %s310 = sphi 0, %s309
    %s326 = sphi 0, %s310
    %s332 = sphi 0, %s334
    %s335 = sphi 0, %s332
    %s336 = sphi 0, %s335
    %s352 = sphi 0, %s336
    %s358 = sphi 0, %s360
    %s361 = sphi 0, %s358
    %s362 = sphi 0, %s361
    %s378 = sphi 0, %s362
  $region4: #{text_transformer_forward.16} parent=0 // loop_header_branch
    %23 = sbr.rel (%p21) target = $region8
  $region5: #{text_transformer_forward.16} parent=0 // loop_body
    %s25 = ssub.s32 %s20, 1
    %s26 = ssub.s32 %s20, 2
    %s27 = sadd.s32 %s20, 1
    %s28 = ssub.s32 %s20, %s27
    %p29 = scmp.eq.s32.totalorder %s28, 0
    %s31 = sadd.s32 %s30, 1
    %s32 = scalar_select %p29, %s30, %s31
    %p35 = pneg %p29
    %p36 = scmp.eq.s32.totalorder %s20, 1
    %p37 = por %p35, %p36
    %p38 = scmp.ne.s32.totalorder %s30, %s33
    %p39 = scmp.eq.s32.totalorder %s20, 0
    %p40 = por %p38, %p39
    %p41 = scmp.ne.s32.totalorder %s30, %s33
    %p42 = scmp.eq.s32.totalorder %s25, 1
    %p43 = por %p41, %p42
    %p44 = scmp.ne.s32.totalorder %s33, %s34
    %p45 = scmp.eq.s32.totalorder %s25, 0
    %p46 = por %p44, %p45
    %p47 = scmp.ne.s32.totalorder %s33, %s34
    %p48 = scmp.eq.s32.totalorder %s26, 1
    %p49 = por %p47, %p48
    %p51 = scmp.ne.s32.totalorder %s34, %s50
    %p52 = scmp.eq.s32.totalorder %s26, 0
    %p53 = por %p51, %p52
    %s54 = ssub.s32 %s20, %s27
    %p55 = scmp.eq.s32.totalorder %s54, 0
    %s57 = sadd.s32 %s56, 1
    %s58 = scalar_select %p55, %s56, %s57
    %p61 = pneg %p55
    %p62 = scmp.eq.s32.totalorder %s20, 1
    %p63 = por %p61, %p62
    %p64 = scmp.ne.s32.totalorder %s56, %s59
    %p65 = scmp.eq.s32.totalorder %s20, 0
    %p66 = por %p64, %p65
    %p67 = scmp.ne.s32.totalorder %s56, %s59
    %p68 = scmp.eq.s32.totalorder %s25, 1
    %p69 = por %p67, %p68
    %p70 = scmp.ne.s32.totalorder %s59, %s60
    %p71 = scmp.eq.s32.totalorder %s25, 0
    %p72 = por %p70, %p71
    %p73 = scmp.ne.s32.totalorder %s59, %s60
    %p74 = scmp.eq.s32.totalorder %s26, 1
    %p75 = por %p73, %p74
    %p77 = scmp.ne.s32.totalorder %s60, %s76
    %p78 = scmp.eq.s32.totalorder %s26, 0
    %p79 = por %p77, %p78
    %s80 = ssub.s32 %s20, %s27
    %p81 = scmp.eq.s32.totalorder %s80, 0
    %s83 = sadd.s32 %s82, 1
    %s84 = scalar_select %p81, %s82, %s83
    %p87 = pneg %p81
    %p88 = scmp.eq.s32.totalorder %s20, 1
    %p89 = por %p87, %p88
    %p90 = scmp.ne.s32.totalorder %s82, %s85
    %p91 = scmp.eq.s32.totalorder %s20, 0
    %p92 = por %p90, %p91
    %p93 = scmp.ne.s32.totalorder %s82, %s85
    %p94 = scmp.eq.s32.totalorder %s25, 1
    %p95 = por %p93, %p94
    %p96 = scmp.ne.s32.totalorder %s85, %s86
    %p97 = scmp.eq.s32.totalorder %s25, 0
    %p98 = por %p96, %p97
    %p99 = scmp.ne.s32.totalorder %s85, %s86
    %p100 = scmp.eq.s32.totalorder %s26, 1
    %p101 = por %p99, %p100
    %p103 = scmp.ne.s32.totalorder %s86, %s102
    %p104 = scmp.eq.s32.totalorder %s26, 0
    %p105 = por %p103, %p104
    %s106 = ssub.s32 %s20, %s27
    %p107 = scmp.eq.s32.totalorder %s106, 0
    %s109 = sadd.s32 %s108, 1
    %s110 = scalar_select %p107, %s108, %s109
    %p113 = pneg %p107
    %p114 = scmp.eq.s32.totalorder %s20, 1
    %p115 = por %p113, %p114
    %p116 = scmp.ne.s32.totalorder %s108, %s111
    %p117 = scmp.eq.s32.totalorder %s20, 0
    %p118 = por %p116, %p117
    %p119 = scmp.ne.s32.totalorder %s108, %s111
    %p120 = scmp.eq.s32.totalorder %s25, 1
    %p121 = por %p119, %p120
    %p122 = scmp.ne.s32.totalorder %s111, %s112
    %p123 = scmp.eq.s32.totalorder %s25, 0
    %p124 = por %p122, %p123
    %p125 = scmp.ne.s32.totalorder %s111, %s112
    %p126 = scmp.eq.s32.totalorder %s26, 1
    %p127 = por %p125, %p126
    %p129 = scmp.ne.s32.totalorder %s112, %s128
    %p130 = scmp.eq.s32.totalorder %s26, 0
    %p131 = por %p129, %p130
    %s132 = ssub.s32 %s20, %s27
    %p133 = scmp.eq.s32.totalorder %s132, 0
    %s135 = sadd.s32 %s134, 1
    %s136 = scalar_select %p133, %s134, %s135
    %p139 = pneg %p133
    %p140 = scmp.eq.s32.totalorder %s20, 1
    %p141 = por %p139, %p140
    %p142 = scmp.ne.s32.totalorder %s134, %s137
    %p143 = scmp.eq.s32.totalorder %s20, 0
    %p144 = por %p142, %p143
    %p145 = scmp.ne.s32.totalorder %s134, %s137
    %p146 = scmp.eq.s32.totalorder %s25, 1
    %p147 = por %p145, %p146
    %p148 = scmp.ne.s32.totalorder %s137, %s138
    %p149 = scmp.eq.s32.totalorder %s25, 0
    %p150 = por %p148, %p149
    %p151 = scmp.ne.s32.totalorder %s137, %s138
    %p152 = scmp.eq.s32.totalorder %s26, 1
    %p153 = por %p151, %p152
    %p155 = scmp.ne.s32.totalorder %s138, %s154
    %p156 = scmp.eq.s32.totalorder %s26, 0
    %p157 = por %p155, %p156
    %s158 = ssub.s32 %s20, %s27
    %p159 = scmp.eq.s32.totalorder %s158, 0
    %s161 = sadd.s32 %s160, 1
    %s162 = scalar_select %p159, %s160, %s161
    %p165 = pneg %p159
    %p166 = scmp.eq.s32.totalorder %s20, 1
    %p167 = por %p165, %p166
    %p168 = scmp.ne.s32.totalorder %s160, %s163
    %p169 = scmp.eq.s32.totalorder %s20, 0
    %p170 = por %p168, %p169
    %p171 = scmp.ne.s32.totalorder %s160, %s163
    %p172 = scmp.eq.s32.totalorder %s25, 1
    %p173 = por %p171, %p172
    %p174 = scmp.ne.s32.totalorder %s163, %s164
    %p175 = scmp.eq.s32.totalorder %s25, 0
    %p176 = por %p174, %p175
    %p177 = scmp.ne.s32.totalorder %s163, %s164
    %p178 = scmp.eq.s32.totalorder %s26, 1
    %p179 = por %p177, %p178
    %p181 = scmp.ne.s32.totalorder %s164, %s180
    %p182 = scmp.eq.s32.totalorder %s26, 0
    %p183 = por %p181, %p182
    %s184 = ssub.s32 %s20, %s27
    %p185 = scmp.eq.s32.totalorder %s184, 0
    %s187 = sadd.s32 %s186, 1
    %s188 = scalar_select %p185, %s186, %s187
    %p191 = pneg %p185
    %p192 = scmp.eq.s32.totalorder %s20, 1
    %p193 = por %p191, %p192
    %p194 = scmp.ne.s32.totalorder %s186, %s189
    %p195 = scmp.eq.s32.totalorder %s20, 0
    %p196 = por %p194, %p195
    %p197 = scmp.ne.s32.totalorder %s186, %s189
    %p198 = scmp.eq.s32.totalorder %s25, 1
    %p199 = por %p197, %p198
    %p200 = scmp.ne.s32.totalorder %s189, %s190
    %p201 = scmp.eq.s32.totalorder %s25, 0
    %p202 = por %p200, %p201
    %p203 = scmp.ne.s32.totalorder %s189, %s190
    %p204 = scmp.eq.s32.totalorder %s26, 1
    %p205 = por %p203, %p204
    %p207 = scmp.ne.s32.totalorder %s190, %s206
    %p208 = scmp.eq.s32.totalorder %s26, 0
    %p209 = por %p207, %p208
    %s211 = sadd.s32 %s210, 1
    %p214 = scmp.eq.s32.totalorder %s20, 1
    %p215 = scmp.ne.s32.totalorder %s210, %s212
    %p216 = scmp.eq.s32.totalorder %s20, 0
    %p217 = por %p215, %p216
    %p218 = scmp.ne.s32.totalorder %s210, %s212
    %p219 = scmp.eq.s32.totalorder %s25, 1
    %p220 = por %p218, %p219
    %p221 = scmp.ne.s32.totalorder %s212, %s213
    %p222 = scmp.eq.s32.totalorder %s25, 0
    %p223 = por %p221, %p222
    %p224 = scmp.ne.s32.totalorder %s212, %s213
    %p225 = scmp.eq.s32.totalorder %s26, 1
    %p226 = por %p224, %p225
    %p228 = scmp.ne.s32.totalorder %s213, %s227
    %p229 = scmp.eq.s32.totalorder %s26, 0
    %p230 = por %p228, %p229
    %s232 = sadd.s32 %s231, 1
    %p235 = scmp.eq.s32.totalorder %s20, 1
    %p236 = scmp.ne.s32.totalorder %s231, %s233
    %p237 = scmp.eq.s32.totalorder %s20, 0
    %p238 = por %p236, %p237
    %p239 = scmp.ne.s32.totalorder %s231, %s233
    %p240 = scmp.eq.s32.totalorder %s25, 1
    %p241 = por %p239, %p240
    %p242 = scmp.ne.s32.totalorder %s233, %s234
    %p243 = scmp.eq.s32.totalorder %s25, 0
    %p244 = por %p242, %p243
    %p245 = scmp.ne.s32.totalorder %s233, %s234
    %p246 = scmp.eq.s32.totalorder %s26, 1
    %p247 = por %p245, %p246
    %p249 = scmp.ne.s32.totalorder %s234, %s248
    %p250 = scmp.eq.s32.totalorder %s26, 0
    %p251 = por %p249, %p250
    %s252 = ssub.s32 %s20, %s27
    %p253 = scmp.eq.s32.totalorder %s252, 0
    %s255 = sadd.s32 %s254, 1
    %s256 = scalar_select %p253, %s254, %s255
    %p259 = pneg %p253
    %p260 = scmp.eq.s32.totalorder %s20, 1
    %p261 = por %p259, %p260
    %p262 = scmp.ne.s32.totalorder %s254, %s257
    %p263 = scmp.eq.s32.totalorder %s20, 0
    %p264 = por %p262, %p263
    %p265 = scmp.ne.s32.totalorder %s254, %s257
    %p266 = scmp.eq.s32.totalorder %s25, 1
    %p267 = por %p265, %p266
    %p268 = scmp.ne.s32.totalorder %s257, %s258
    %p269 = scmp.eq.s32.totalorder %s25, 0
    %p270 = por %p268, %p269
    %p271 = scmp.ne.s32.totalorder %s257, %s258
    %p272 = scmp.eq.s32.totalorder %s26, 1
    %p273 = por %p271, %p272
    %p275 = scmp.ne.s32.totalorder %s258, %s274
    %p276 = scmp.eq.s32.totalorder %s26, 0
    %p277 = por %p275, %p276
    %s278 = ssub.s32 %s20, %s27
    %p279 = scmp.eq.s32.totalorder %s278, 0
    %s281 = sadd.s32 %s280, 1
    %s282 = scalar_select %p279, %s280, %s281
    %p285 = pneg %p279
    %p286 = scmp.eq.s32.totalorder %s20, 1
    %p287 = por %p285, %p286
    %p288 = scmp.ne.s32.totalorder %s280, %s283
    %p289 = scmp.eq.s32.totalorder %s20, 0
    %p290 = por %p288, %p289
    %p291 = scmp.ne.s32.totalorder %s280, %s283
    %p292 = scmp.eq.s32.totalorder %s25, 1
    %p293 = por %p291, %p292
    %p294 = scmp.ne.s32.totalorder %s283, %s284
    %p295 = scmp.eq.s32.totalorder %s25, 0
    %p296 = por %p294, %p295
    %p297 = scmp.ne.s32.totalorder %s283, %s284
    %p298 = scmp.eq.s32.totalorder %s26, 1
    %p299 = por %p297, %p298
    %p301 = scmp.ne.s32.totalorder %s284, %s300
    %p302 = scmp.eq.s32.totalorder %s26, 0
    %p303 = por %p301, %p302
    %s304 = ssub.s32 %s20, %s27
    %p305 = scmp.eq.s32.totalorder %s304, 0
    %s307 = sadd.s32 %s306, 1
    %s308 = scalar_select %p305, %s306, %s307
    %p311 = pneg %p305
    %p312 = scmp.eq.s32.totalorder %s20, 1
    %p313 = por %p311, %p312
    %p314 = scmp.ne.s32.totalorder %s306, %s309
    %p315 = scmp.eq.s32.totalorder %s20, 0
    %p316 = por %p314, %p315
    %p317 = scmp.ne.s32.totalorder %s306, %s309
    %p318 = scmp.eq.s32.totalorder %s25, 1
    %p319 = por %p317, %p318
    %p320 = scmp.ne.s32.totalorder %s309, %s310
    %p321 = scmp.eq.s32.totalorder %s25, 0
    %p322 = por %p320, %p321
    %p323 = scmp.ne.s32.totalorder %s309, %s310
    %p324 = scmp.eq.s32.totalorder %s26, 1
    %p325 = por %p323, %p324
    %p327 = scmp.ne.s32.totalorder %s310, %s326
    %p328 = scmp.eq.s32.totalorder %s26, 0
    %p329 = por %p327, %p328
    %s330 = ssub.s32 %s20, %s27
    %p331 = scmp.eq.s32.totalorder %s330, 0
    %s333 = sadd.s32 %s332, 1
    %s334 = scalar_select %p331, %s332, %s333
    %p337 = pneg %p331
    %p338 = scmp.eq.s32.totalorder %s20, 1
    %p339 = por %p337, %p338
    %p340 = scmp.ne.s32.totalorder %s332, %s335
    %p341 = scmp.eq.s32.totalorder %s20, 0
    %p342 = por %p340, %p341
    %p343 = scmp.ne.s32.totalorder %s332, %s335
    %p344 = scmp.eq.s32.totalorder %s25, 1
    %p345 = por %p343, %p344
    %p346 = scmp.ne.s32.totalorder %s335, %s336
    %p347 = scmp.eq.s32.totalorder %s25, 0
    %p348 = por %p346, %p347
    %p349 = scmp.ne.s32.totalorder %s335, %s336
    %p350 = scmp.eq.s32.totalorder %s26, 1
    %p351 = por %p349, %p350
    %p353 = scmp.ne.s32.totalorder %s336, %s352
    %p354 = scmp.eq.s32.totalorder %s26, 0
    %p355 = por %p353, %p354
    %s356 = ssub.s32 %s20, %s27
    %p357 = scmp.eq.s32.totalorder %s356, 0
    %s359 = sadd.s32 %s358, 1
    %s360 = scalar_select %p357, %s358, %s359
    %p363 = pneg %p357
    %p364 = scmp.eq.s32.totalorder %s20, 1
    %p365 = por %p363, %p364
    %p366 = scmp.ne.s32.totalorder %s358, %s361
    %p367 = scmp.eq.s32.totalorder %s20, 0
    %p368 = por %p366, %p367
    %p369 = scmp.ne.s32.totalorder %s358, %s361
    %p370 = scmp.eq.s32.totalorder %s25, 1
    %p371 = por %p369, %p370
    %p372 = scmp.ne.s32.totalorder %s361, %s362
    %p373 = scmp.eq.s32.totalorder %s25, 0
    %p374 = por %p372, %p373
    %p375 = scmp.ne.s32.totalorder %s361, %s362
    %p376 = scmp.eq.s32.totalorder %s26, 1
    %p377 = por %p375, %p376
    %p379 = scmp.ne.s32.totalorder %s362, %s378
    %p380 = scmp.eq.s32.totalorder %s26, 0
    %p381 = por %p379, %p380
    %p382 = scmp.le.s32.totalorder 1, %s20
    %p383 = scmp.lt.s32.totalorder %s20, 3
    %p384 = pnand %p382, %p383
    %p385 = pneg %p384
    // Predicated region
    $region9: #{text_transformer_forward.16} parent=5 // pred_check
      _
    $region10: #{text_transformer_forward.16} parent=5 // pred_check_branch
      %387 = sbr.rel (%p384) target = $region12
    $region11: #{text_transformer_forward.16} parent=5 // pred_region
      %s388 = ssub.s32 %s20, 1
      // Predicated region
      $region13: #{text_transformer_forward.16} parent=11 // pred_check
        %p389 = pneg %p223
      $region14: #{text_transformer_forward.16} parent=11 // pred_check_branch
        %391 = sbr.rel (%p389) target = $region16
      $region15: #{text_transformer_forward.16} parent=11 // pred_region
        _
      $region16: #{text_transformer_forward.16} parent=11 // pred_fallthru
        _
      // Predicated region
      $region17: #{text_transformer_forward.16} parent=11 // pred_check
        %p392 = pneg %p244
      $region18: #{text_transformer_forward.16} parent=11 // pred_check_branch
        %394 = sbr.rel (%p392) target = $region20
      $region19: #{text_transformer_forward.16} parent=11 // pred_region
        _
      $region20: #{text_transformer_forward.16} parent=11 // pred_fallthru
        _
    $region12: #{text_transformer_forward.16} parent=5 // pred_fallthru
      _
    %p395 = scmp.lt.s32.totalorder %s20, 2
    // Predicated region
    $region21: #{text_transformer_forward.16} parent=5 // pred_check
      %p396 = pneg %p395
    $region22: #{text_transformer_forward.16} parent=5 // pred_check_branch
      %398 = sbr.rel (%p396) target = $region24
    $region23: #{text_transformer_forward.16} parent=5 // pred_region
      // Predicated region
      $region25: #{text_transformer_forward.16} parent=23 // pred_check
        %p399 = pneg %p40
      $region26: #{text_transformer_forward.16} parent=23 // pred_check_branch
        %401 = sbr.rel (%p399) target = $region28
      $region27: #{text_transformer_forward.16} parent=23 // pred_region
        %p402 = scmp.lt.s32.totalorder %s20, 1
        %s403 = scalar_select %p402, %s20, 1
        %s404 = smul.addr %s403, 4
        %s405 = scalar_lea.vmem %s0, %s404
      $region28: #{text_transformer_forward.16} parent=23 // pred_fallthru
        _
      // Predicated region
      $region29: #{text_transformer_forward.16} parent=23 // pred_check
        %p406 = pneg %p66
      $region30: #{text_transformer_forward.16} parent=23 // pred_check_branch
        %408 = sbr.rel (%p406) target = $region32
      $region31: #{text_transformer_forward.16} parent=23 // pred_region
        %p409 = scmp.lt.s32.totalorder %s20, 1
        %s410 = scalar_select %p409, %s20, 1
        %s411 = smul.addr %s410, 4
        %s412 = scalar_lea.vmem %s1, %s411
      $region32: #{text_transformer_forward.16} parent=23 // pred_fallthru
        _
      // Predicated region
      $region33: #{text_transformer_forward.16} parent=23 // pred_check
        %p413 = pneg %p92
      $region34: #{text_transformer_forward.16} parent=23 // pred_check_branch
        %415 = sbr.rel (%p413) target = $region36
      $region35: #{text_transformer_forward.16} parent=23 // pred_region
        %p416 = scmp.lt.s32.totalorder %s20, 1
        %s417 = scalar_select %p416, %s20, 1
        %s418 = smul.addr %s417, 4
        %s419 = scalar_lea.vmem %s2, %s418
      $region36: #{text_transformer_forward.16} parent=23 // pred_fallthru
        _
      // Predicated region
      $region37: #{text_transformer_forward.16} parent=23 // pred_check
        %p420 = pneg %p118
      $region38: #{text_transformer_forward.16} parent=23 // pred_check_branch
        %422 = sbr.rel (%p420) target = $region40
      $region39: #{text_transformer_forward.16} parent=23 // pred_region
        %p423 = scmp.lt.s32.totalorder %s20, 1
        %s424 = scalar_select %p423, %s20, 1
        %s425 = smul.addr %s424, 8
        %s426 = scalar_lea.vmem %s3, %s425
      $region40: #{text_transformer_forward.16} parent=23 // pred_fallthru
        _
      // Predicated region
      $region41: #{text_transformer_forward.16} parent=23 // pred_check
        %p427 = pneg %p144
      $region42: #{text_transformer_forward.16} parent=23 // pred_check_branch
        %429 = sbr.rel (%p427) target = $region44
      $region43: #{text_transformer_forward.16} parent=23 // pred_region
        %p430 = scmp.lt.s32.totalorder %s20, 1
        %s431 = scalar_select %p430, %s20, 1
        %s432 = smul.addr %s431, 8
        %s433 = scalar_lea.vmem %s4, %s432
      $region44: #{text_transformer_forward.16} parent=23 // pred_fallthru
        _
      // Predicated region
      $region45: #{text_transformer_forward.16} parent=23 // pred_check
        %p434 = pneg %p170
      $region46: #{text_transformer_forward.16} parent=23 // pred_check_branch
        %436 = sbr.rel (%p434) target = $region48
      $region47: #{text_transformer_forward.16} parent=23 // pred_region
        %p437 = scmp.lt.s32.totalorder %s20, 1
        %s438 = scalar_select %p437, %s20, 1
        %s439 = smul.addr %s438, 8
        %s440 = scalar_lea.vmem %s5, %s439
      $region48: #{text_transformer_forward.16} parent=23 // pred_fallthru
        _
      // Predicated region
      $region49: #{text_transformer_forward.16} parent=23 // pred_check
        %p441 = pneg %p196
      $region50: #{text_transformer_forward.16} parent=23 // pred_check_branch
        %443 = sbr.rel (%p441) target = $region52
      $region51: #{text_transformer_forward.16} parent=23 // pred_region
        %p444 = scmp.lt.s32.totalorder %s20, 1
        %s445 = scalar_select %p444, %s20, 1
        %s446 = smul.addr %s445, 8
        %s447 = scalar_lea.vmem %s6, %s446
      $region52: #{text_transformer_forward.16} parent=23 // pred_fallthru
        _
    $region24: #{text_transformer_forward.16} parent=5 // pred_fallthru
      _
    %p448 = scmp.le.s32.totalorder 1, %s20
    %p449 = scmp.lt.s32.totalorder %s20, 3
    %p450 = pnand %p448, %p449
    %p451 = pneg %p450
    // Predicated region
    $region53: #{text_transformer_forward.16} parent=5 // pred_check
      _
    $region54: #{text_transformer_forward.16} parent=5 // pred_check_branch
      %453 = sbr.rel (%p450) target = $region56
    $region55: #{text_transformer_forward.16} parent=5 // pred_region
      %s454 = ssub.s32 %s20, 1
      %p455 = scmp.lt.s32.totalorder %s25, 1
      %s456 = scalar_select %p455, %s25, 1
      %s457 = smul.addr %s456, 4
      %s458 = scalar_lea.vmem %s0, %s457
      %p459 = pneg %p46
      %p460 = pneg %p43
      %p461 = scmp.lt.s32.totalorder %s25, 1
      %s462 = scalar_select %p461, %s25, 1
      %s463 = smul.addr %s462, 4
      %s464 = scalar_lea.vmem %s1, %s463
      %p465 = pneg %p72
      %p466 = pneg %p69
      %p467 = scmp.lt.s32.totalorder %s25, 1
      %s468 = scalar_select %p467, %s25, 1
      %s469 = smul.addr %s468, 4
      %s470 = scalar_lea.vmem %s2, %s469
      %p471 = pneg %p98
      %p472 = pneg %p95
      %p473 = scmp.lt.s32.totalorder %s25, 1
      %s474 = scalar_select %p473, %s25, 1
      %s475 = smul.addr %s474, 8
      %s476 = scalar_lea.vmem %s3, %s475
      %p477 = pneg %p124
      %p478 = pneg %p121
      %p479 = scmp.lt.s32.totalorder %s25, 1
      %s480 = scalar_select %p479, %s25, 1
      %s481 = smul.addr %s480, 8
      %s482 = scalar_lea.vmem %s4, %s481
      %p483 = pneg %p150
      %p484 = pneg %p147
      %p485 = scmp.lt.s32.totalorder %s25, 1
      %s486 = scalar_select %p485, %s25, 1
      %s487 = smul.addr %s486, 8
      %s488 = scalar_lea.vmem %s5, %s487
      %p489 = pneg %p176
      %p490 = pneg %p173
      %p491 = scmp.lt.s32.totalorder %s25, 1
      %s492 = scalar_select %p491, %s25, 1
      %s493 = smul.addr %s492, 8
      %s494 = scalar_lea.vmem %s6, %s493
      %p495 = pneg %p202
      %p496 = pneg %p199
      %p497 = pneg %p223
      %p498 = pneg %p220
      %p499 = pneg %p244
      %p500 = pneg %p241
      %p501 = pneg %p270
      %p502 = pneg %p267
      %p503 = scmp.lt.s32.totalorder %s25, 1
      %s504 = scalar_select %p503, %s25, 1
      %s505 = smul.addr %s504, 4
      %s506 = scalar_lea.vmem %s9, %s505
      %p507 = pneg %p296
      %p508 = pneg %p293
      %p509 = scmp.lt.s32.totalorder %s25, 1
      %s510 = scalar_select %p509, %s25, 1
      %s511 = smul.addr %s510, 8
      %s512 = scalar_lea.vmem %s10, %s511
      %p513 = pneg %p322
      %p514 = pneg %p319
      %p515 = scmp.lt.s32.totalorder %s25, 1
      %s516 = scalar_select %p515, %s25, 1
      %s517 = smul.addr %s516, 8
      %s518 = scalar_lea.vmem %s11, %s517
      %p519 = pneg %p348
      %p520 = pneg %p345
      %p521 = scmp.lt.s32.totalorder %s25, 1
      %s522 = scalar_select %p521, %s25, 1
      %s523 = smul.addr %s522, 8
      %s524 = scalar_lea.vmem %s12, %s523
      %p525 = pneg %p374
      %p526 = pneg %p371
      %p527 = scmp.lt.s32.totalorder %s25, 1
      %s528 = scalar_select %p527, %s25, 1
      %s529 = smul.addr %s528, 8
      %s530 = scalar_lea.vmem %s13, %s529
      %p531 = scmp.lt.s32.totalorder %s25, 1
      %s532 = scalar_select %p531, %s25, 1
      %s533 = smul.addr %s532, 4
      %s534 = scalar_lea.vmem %s0, %s533
      %p535 = scmp.lt.s32.totalorder %s25, 1
      %s536 = scalar_select %p535, %s25, 1
      %s537 = smul.addr %s536, 4
      %s538 = scalar_lea.vmem %s1, %s537
      %p539 = scmp.lt.s32.totalorder %s25, 1
      %s540 = scalar_select %p539, %s25, 1
      %s541 = smul.addr %s540, 4
      %s542 = scalar_lea.vmem %s2, %s541
      %p543 = scmp.lt.s32.totalorder %s25, 1
      %s544 = scalar_select %p543, %s25, 1
      %s545 = smul.addr %s544, 8
      %s546 = scalar_lea.vmem %s3, %s545
      %p547 = scmp.lt.s32.totalorder %s25, 1
      %s548 = scalar_select %p547, %s25, 1
      %s549 = smul.addr %s548, 8
      %s550 = scalar_lea.vmem %s4, %s549
      %p551 = scmp.lt.s32.totalorder %s25, 1
      %s552 = scalar_select %p551, %s25, 1
      %s553 = smul.addr %s552, 8
      %s554 = scalar_lea.vmem %s5, %s553
      %p555 = scmp.lt.s32.totalorder %s25, 1
      %s556 = scalar_select %p555, %s25, 1
      %s557 = smul.addr %s556, 8
      %s558 = scalar_lea.vmem %s6, %s557
      %p559 = scmp.lt.s32.totalorder %s25, 1
      %s560 = scalar_select %p559, %s25, 1
      %s561 = smul.addr %s560, 4
      %s562 = scalar_lea.vmem %s9, %s561
      %p563 = scmp.lt.s32.totalorder %s25, 1
      %s564 = scalar_select %p563, %s25, 1
      %s565 = smul.addr %s564, 8
      %s566 = scalar_lea.vmem %s10, %s565
      %p567 = scmp.lt.s32.totalorder %s25, 1
      %s568 = scalar_select %p567, %s25, 1
      %s569 = smul.addr %s568, 8
      %s570 = scalar_lea.vmem %s11, %s569
      %p571 = scmp.lt.s32.totalorder %s25, 1
      %s572 = scalar_select %p571, %s25, 1
      %s573 = smul.addr %s572, 8
      %s574 = scalar_lea.vmem %s12, %s573
      %p575 = scmp.lt.s32.totalorder %s25, 1
      %s576 = scalar_select %p575, %s25, 1
      %s577 = smul.addr %s576, 8
      %s578 = scalar_lea.vmem %s13, %s577
      %v580 = vld [vmem:[%s534] sm:$0xf]
      %v581 = vunpack.c.l.bf16 %v580
      %v582 = vld [vmem:[%s550] sm:$0xff]
      %vm583 = vcmask 523264
      %584 = vst.msk [vmem:[%s570] sm:$0xff] %vm583, %v582
      %v585 = vld [vmem:[%s554] sm:$0xff]
      %586 = vst.msk [vmem:[%s574] sm:$0xff] %vm583, %v585
      %v587 = vld [vmem:[%s538] sm:$0xf]
      %v588 = vld [vmem:[%s542] sm:$0xf]
      %v589 = vunpack.c.l.bf16 %v588
      %v591 = vsel %vm583, %v580, 0
      %v594 = vsel %vm583, %v587, 0
      %596 = vmatprep.subr.bf16.mxu0 0
      %597 = vmatpush1.bf16.xpose.msra.mxu0 %v594
      %598 = vmatprep.subr.bf16.mxu0 0
      %599 = vmatpush1.bf16.xpose.msra.mxu0 0
      %600 = vmatprep.subr.bf16.mxu0 0
      %601 = vmatpush1.bf16.xpose.msra.mxu0 0
      %602 = vmatprep.subr.bf16.mxu0 0
      %603 = vmatpush1.bf16.xpose.msra.mxu0 0
      %604 = vmatprep.subr.bf16.mxu0 0
      %605 = vmatpush1.bf16.xpose.msra.mxu0 0
      %606 = vmatprep.subr.bf16.mxu0 0
      %607 = vmatpush1.bf16.xpose.msra.mxu0 0
      %608 = vmatprep.subr.bf16.mxu0 0
      %609 = vmatpush1.bf16.xpose.msra.mxu0 0
      %610 = vmatprep.subr.bf16.mxu0 0
      %611 = vmatpush1.bf16.xpose.msra.mxu0 0
      %612 = vmatprep.subr.bf16.mxu0 0
      %613 = vmatpush1.bf16.xpose.msra.mxu0 0
      %614 = vmatprep.subr.bf16.mxu0 0
      %615 = vmatpush1.bf16.xpose.msra.mxu0 0
      %616 = vmatprep.subr.bf16.mxu0 0
      %617 = vmatpush1.bf16.xpose.msra.mxu0 0
      %618 = vmatprep.subr.bf16.mxu0 0
      %619 = vmatpush1.bf16.xpose.msra.mxu0 0
      %620 = vmatprep.subr.bf16.mxu0 0
      %621 = vmatpush1.bf16.xpose.msra.mxu0 0
      %622 = vmatprep.subr.bf16.mxu0 0
      %623 = vmatpush1.bf16.xpose.msra.mxu0 0
      %624 = vmatprep.subr.bf16.mxu0 0
      %625 = vmatpush1.bf16.xpose.msra.mxu0 0
      %626 = vmatprep.subr.bf16.mxu0 0
      %627 = vmatpush1.bf16.xpose.msra.mxu0 0
      %628 = vmatprep.mubr.bf16.mxu0 0
      %629 = vmatmul.mubr.bf16.gmra.mrb[0].mxu0 %v591
      %v630 = vpop.f32.mrb[0].mxu0
      %v631 = vadd.f32 0.0, %v630
      %v632 = vpop.f32.mrb[0].mxu0
      %v633 = vpop.f32.mrb[0].mxu0
      %v634 = vpop.f32.mrb[0].mxu0
      %635 = vdwg.mxu0
      %v636 = vmul.f32 %v631, 0.125
      %vm637 = vcmask 64512
      %v639 = vsel %vm637, %v636, 0
      %641 = vmatprep.subr.mxu0 0.0
      %642 = vmatpush1.msra.mxu0 %v589
      %643 = vmatprep.subr.mxu0 0.0
      %644 = vmatpush1.msra.mxu0 0.0
      %645 = vmatprep.subr.mxu0 0.0
      %646 = vmatpush1.msra.mxu0 0.0
      %647 = vmatprep.subr.mxu0 0.0
      %648 = vmatpush1.msra.mxu0 0.0
      %649 = vmatprep.subr.mxu0 0.0
      %650 = vmatpush1.msra.mxu0 0.0
      %651 = vmatprep.subr.mxu0 0.0
      %652 = vmatpush1.msra.mxu0 0.0
      %653 = vmatprep.subr.mxu0 0.0
      %654 = vmatpush1.msra.mxu0 0.0
      %655 = vmatprep.subr.mxu0 0.0
      %656 = vmatpush1.msra.mxu0 0.0
      %657 = vmatprep.subr.mxu0 0.0
      %658 = vmatpush1.msra.mxu0 0.0
      %659 = vmatprep.subr.mxu0 0.0
      %660 = vmatpush1.msra.mxu0 0.0
      %661 = vmatprep.subr.mxu0 0.0
      %662 = vmatpush1.msra.mxu0 0.0
      %663 = vmatprep.subr.mxu0 0.0
      %664 = vmatpush1.msra.mxu0 0.0
      %665 = vmatprep.subr.mxu0 0.0
      %666 = vmatpush1.msra.mxu0 0.0
      %667 = vmatprep.subr.mxu0 0.0
      %668 = vmatpush1.msra.mxu0 0.0
      %669 = vmatprep.subr.mxu0 0.0
      %670 = vmatpush1.msra.mxu0 0.0
      %671 = vmatprep.subr.mxu0 0.0
      %672 = vmatpush1.msra.mxu0 0.0
      %673 = vmatprep.subr.mxu0 0.0
      %674 = vmatpush1.msra.mxu0 0.0
      %675 = vmatprep.subr.mxu0 0.0
      %676 = vmatpush1.msra.mxu0 0.0
      %677 = vmatprep.subr.mxu0 0.0
      %678 = vmatpush1.msra.mxu0 0.0
      %679 = vmatprep.subr.mxu0 0.0
      %680 = vmatpush1.msra.mxu0 0.0
      %681 = vmatprep.subr.mxu0 0.0
      %682 = vmatpush1.msra.mxu0 0.0
      %683 = vmatprep.subr.mxu0 0.0
      %684 = vmatpush1.msra.mxu0 0.0
      %685 = vmatprep.subr.mxu0 0.0
      %686 = vmatpush1.msra.mxu0 0.0
      %687 = vmatprep.subr.mxu0 0.0
      %688 = vmatpush1.msra.mxu0 0.0
      %689 = vmatprep.subr.mxu0 0.0
      %690 = vmatpush1.msra.mxu0 0.0
      %691 = vmatprep.subr.mxu0 0.0
      %692 = vmatpush1.msra.mxu0 0.0
      %693 = vmatprep.subr.mxu0 0.0
      %694 = vmatpush1.msra.mxu0 0.0
      %695 = vmatprep.subr.mxu0 0.0
      %696 = vmatpush1.msra.mxu0 0.0
      %697 = vmatprep.subr.mxu0 0.0
      %698 = vmatpush1.msra.mxu0 0.0
      %699 = vmatprep.subr.mxu0 0.0
      %700 = vmatpush1.msra.mxu0 0.0
      %701 = vmatprep.subr.mxu0 0.0
      %702 = vmatpush1.msra.mxu0 0.0
      %703 = vmatprep.subr.mxu0 0.0
      %704 = vmatpush1.msra.mxu0 0.0
      %705 = vmatprep.mubr.f32.mxu0 0.0
      %706 = vmatmul.mubr.f32.gmra.mrb[0].mxu0 %v639
      %v707 = vpop.f32.mrb[0].mxu0
      %v708 = vadd.f32 0.0, %v707
      %v709 = vpop.f32.mrb[0].mxu0
      %710 = vdwg.mxu0
      %v711 = vld [vmem:[%s558] sm:$0xff]
      %v712 = vsub.f32 %v708, %v711
      %v713 = vrcp.pop 2.0
      %v714 = vmul.f32 %v712, %v713
      %v715 = vadd.f32 %v711, %v714
      %v716 = vsub.f32 %v715, 1.0
      %vm717 = vcmp.ge.f32.partialorder %v716, 0.0
      %v718 = vsel %vm717, 1, 0
      %v719 = vcvt.s32.f32 %v718
      %v720 = vsub.f32 1.0, %v719
      %v721 = vmul.f32 %v715, %v720
      %722 = vst.msk [vmem:[%s578] sm:$0xff] %vm583, %v721
      %v723 = vpack.c.bf16 %v719, %v719
      %vm724 = vcmask 519168
      %725 = vst.msk [vmem:[%s562] sm:$0xf] %vm724, %v723
      %v727 = vrot.slane %v581, 7
      %vm729 = vcmask 1040384
      %v730 = vsel %vm729, 0.0, %v727
      %v731 = vrot.slane %v581, 1
      %vm733 = vcmask 1046528
      %v734 = vsel %vm733, %v731, 0.0
      %735 = vrot.lane.b32.xlu0 %v581, 64
      %v736 = vpop.permute.xlu0 %735
      %v738 = vsel %vm583, %v730, %v736
      %v739 = vld [vmem:[%s7] sm:$0xff]
      %v740 = vld [vmem:[%s7 + $0x8] sm:$0xff]
      %v741 = vld [vmem:[%s7 + $0x10] sm:$0xff]
      %v742 = vld [vmem:[%s7 + $0x18] sm:$0xff]
      %v743 = vld [vmem:[%s7 + $0x20] sm:$0xff]
      %v744 = vld [vmem:[%s7 + $0x28] sm:$0xff]
      %v745 = vld [vmem:[%s7 + $0x30] sm:$0xff]
      %v746 = vld [vmem:[%s7 + $0x38] sm:$0xff]
      %v747 = vld [vmem:[%s7 + $0x40] sm:$0xff]
      %v748 = vld [vmem:[%s7 + $0x48] sm:$0xff]
      %v749 = vld [vmem:[%s7 + $0x50] sm:$0xff]
      %v750 = vld [vmem:[%s7 + $0x58] sm:$0xff]
      %v751 = vld [vmem:[%s7 + $0x60] sm:$0xff]
      %v752 = vld [vmem:[%s7 + $0x68] sm:$0xff]
      %v753 = vld [vmem:[%s7 + $0x70] sm:$0xff]
      %v754 = vld [vmem:[%s7 + $0x78] sm:$0xff]
      %v755 = vld [vmem:[%s7 + $0x80] sm:$0xff]
      %v756 = vld [vmem:[%s7 + $0x88] sm:$0xff]
      %v757 = vld [vmem:[%s7 + $0x90] sm:$0xff]
      %v758 = vld [vmem:[%s7 + $0x98] sm:$0xff]
      %v759 = vld [vmem:[%s7 + $0xa0] sm:$0xff]
      %v760 = vld [vmem:[%s7 + $0xa8] sm:$0xff]
      %v761 = vld [vmem:[%s7 + $0xb0] sm:$0xff]
      %v762 = vld [vmem:[%s7 + $0xb8] sm:$0xff]
      %v763 = vld [vmem:[%s8] sm:$0x1]
      %v765 = vlaneseq
      %v766 = vshrl.u32 %v765, 7
      %v767 = vsub.s32 0, %v766
      %v768 = vrot.slane %v763, %v767
      %v771 = vsel %vm583, %v734, 0
      %773 = vmatprep.subr.mxu0 0.0
      %774 = vmatpush1.msra.mxu0 %v739
      %775 = vmatprep.subr.mxu0 0.0
      %776 = vmatpush1.msra.mxu0 %v740
      %777 = vmatprep.subr.mxu0 0.0
      %778 = vmatpush1.msra.mxu0 %v741
      %779 = vmatprep.subr.mxu0 0.0
      %780 = vmatpush1.msra.mxu0 %v742
      %781 = vmatprep.subr.mxu0 0.0
      %782 = vmatpush1.msra.mxu0 %v743
      %783 = vmatprep.subr.mxu0 0.0
      %784 = vmatpush1.msra.mxu0 %v744
      %785 = vmatprep.subr.mxu0 0.0
      %786 = vmatpush1.msra.mxu0 %v745
      %787 = vmatprep.subr.mxu0 0.0
      %788 = vmatpush1.msra.mxu0 %v746
      %789 = vmatprep.subr.mxu0 0.0
      %790 = vmatpush1.msra.mxu0 %v747
      %791 = vmatprep.subr.mxu0 0.0
      %792 = vmatpush1.msra.mxu0 %v748
      %793 = vmatprep.subr.mxu0 0.0
      %794 = vmatpush1.msra.mxu0 %v749
      %795 = vmatprep.subr.mxu0 0.0
      %796 = vmatpush1.msra.mxu0 %v750
      %797 = vmatprep.subr.mxu0 0.0
      %798 = vmatpush1.msra.mxu0 %v751
      %799 = vmatprep.subr.mxu0 0.0
      %800 = vmatpush1.msra.mxu0 %v752
      %801 = vmatprep.subr.mxu0 0.0
      %802 = vmatpush1.msra.mxu0 %v753
      %803 = vmatprep.subr.mxu0 0.0
      %804 = vmatpush1.msra.mxu0 %v754
      %805 = vmatprep.subr.mxu0 0.0
      %806 = vmatpush1.msra.mxu0 %v755
      %807 = vmatprep.subr.mxu0 0.0
      %808 = vmatpush1.msra.mxu0 %v756
      %809 = vmatprep.subr.mxu0 0.0
      %810 = vmatpush1.msra.mxu0 %v757
      %811 = vmatprep.subr.mxu0 0.0
      %812 = vmatpush1.msra.mxu0 %v758
      %813 = vmatprep.subr.mxu0 0.0
      %814 = vmatpush1.msra.mxu0 %v759
      %815 = vmatprep.subr.mxu0 0.0
      %816 = vmatpush1.msra.mxu0 %v760
      %817 = vmatprep.subr.mxu0 0.0
      %818 = vmatpush1.msra.mxu0 %v761
      %819 = vmatprep.subr.mxu0 0.0
      %820 = vmatpush1.msra.mxu0 %v762
      %821 = vmatprep.subr.mxu0 0.0
      %822 = vmatpush1.msra.mxu0 0.0
      %823 = vmatprep.subr.mxu0 0.0
      %824 = vmatpush1.msra.mxu0 0.0
      %825 = vmatprep.subr.mxu0 0.0
      %826 = vmatpush1.msra.mxu0 0.0
      %827 = vmatprep.subr.mxu0 0.0
      %828 = vmatpush1.msra.mxu0 0.0
      %829 = vmatprep.subr.mxu0 0.0
      %830 = vmatpush1.msra.mxu0 0.0
      %831 = vmatprep.subr.mxu0 0.0
      %832 = vmatpush1.msra.mxu0 0.0
      %833 = vmatprep.subr.mxu0 0.0
      %834 = vmatpush1.msra.mxu0 0.0
      %835 = vmatprep.subr.mxu0 0.0
      %836 = vmatpush1.msra.mxu0 0.0
      %837 = vmatprep.mubr.f32.mxu0 %v771
      %838 = vmatmul.mubr.f32.gmra.mrb[0].mxu0 %v738
      %v839 = vpop.f32.mrb[0].mxu0
      %v840 = vadd.f32 %v768, %v839
      %v841 = vpop.f32.mrb[0].mxu0
      %842 = vdwg.mxu0
      %843 = vst.msk [vmem:[%s566] sm:$0xff] %vm583, %v840
      %p844 = scmp.lt.s32.totalorder %s25, 1
      %s845 = scalar_select %p844, %s25, 1
      %s846 = smul.addr %s845, 4
      %s847 = scalar_lea.vmem %s9, %s846
      %p848 = scmp.lt.s32.totalorder %s25, 1
      %s849 = scalar_select %p848, %s25, 1
      %s850 = smul.addr %s849, 8
      %s851 = scalar_lea.vmem %s10, %s850
      %p852 = scmp.lt.s32.totalorder %s25, 1
      %s853 = scalar_select %p852, %s25, 1
      %s854 = smul.addr %s853, 8
      %s855 = scalar_lea.vmem %s11, %s854
      %p856 = scmp.lt.s32.totalorder %s25, 1
      %s857 = scalar_select %p856, %s25, 1
      %s858 = smul.addr %s857, 8
      %s859 = scalar_lea.vmem %s12, %s858
      %p860 = scmp.lt.s32.totalorder %s25, 1
      %s861 = scalar_select %p860, %s25, 1
      %s862 = smul.addr %s861, 8
      %s863 = scalar_lea.vmem %s13, %s862
      // Predicated region
      $region57: #{text_transformer_forward.16} parent=55 // pred_check
        %p864 = pneg %p267
      $region58: #{text_transformer_forward.16} parent=55 // pred_check_branch
        %866 = sbr.rel (%p864) target = $region60
      $region59: #{text_transformer_forward.16} parent=55 // pred_region
        _
      $region60: #{text_transformer_forward.16} parent=55 // pred_fallthru
        _
      // Predicated region
      $region61: #{text_transformer_forward.16} parent=55 // pred_check
        %p867 = pneg %p293
      $region62: #{text_transformer_forward.16} parent=55 // pred_check_branch
        %869 = sbr.rel (%p867) target = $region64
      $region63: #{text_transformer_forward.16} parent=55 // pred_region
        _
      $region64: #{text_transformer_forward.16} parent=55 // pred_fallthru
        _
      // Predicated region
      $region65: #{text_transformer_forward.16} parent=55 // pred_check
        %p870 = pneg %p319
      $region66: #{text_transformer_forward.16} parent=55 // pred_check_branch
        %872 = sbr.rel (%p870) target = $region68
      $region67: #{text_transformer_forward.16} parent=55 // pred_region
        _
      $region68: #{text_transformer_forward.16} parent=55 // pred_fallthru
        _
      // Predicated region
      $region69: #{text_transformer_forward.16} parent=55 // pred_check
        %p873 = pneg %p345
      $region70: #{text_transformer_forward.16} parent=55 // pred_check_branch
        %875 = sbr.rel (%p873) target = $region72
      $region71: #{text_transformer_forward.16} parent=55 // pred_region
        _
      $region72: #{text_transformer_forward.16} parent=55 // pred_fallthru
        _
      // Predicated region
      $region73: #{text_transformer_forward.16} parent=55 // pred_check
        %p876 = pneg %p371
      $region74: #{text_transformer_forward.16} parent=55 // pred_check_branch
        %878 = sbr.rel (%p876) target = $region76
      $region75: #{text_transformer_forward.16} parent=55 // pred_region
        _
      $region76: #{text_transformer_forward.16} parent=55 // pred_fallthru
        _
    $region56: #{text_transformer_forward.16} parent=5 // pred_fallthru
      _
    %p879 = scmp.le.s32.totalorder 2, %s20
    // Predicated region
    $region77: #{text_transformer_forward.16} parent=5 // pred_check
      %p880 = pneg %p879
    $region78: #{text_transformer_forward.16} parent=5 // pred_check_branch
      %882 = sbr.rel (%p880) target = $region80
    $region79: #{text_transformer_forward.16} parent=5 // pred_region
      %s883 = ssub.s32 %s20, 2
      // Predicated region
      $region81: #{text_transformer_forward.16} parent=79 // pred_check
        %p884 = pneg %p273
      $region82: #{text_transformer_forward.16} parent=79 // pred_check_branch
        %886 = sbr.rel (%p884) target = $region84
      $region83: #{text_transformer_forward.16} parent=79 // pred_region
        %p887 = scmp.lt.s32.totalorder %s26, 1
        %s888 = scalar_select %p887, %s26, 1
        %s889 = smul.addr %s888, 4
        %s890 = scalar_lea.vmem %s9, %s889
      $region84: #{text_transformer_forward.16} parent=79 // pred_fallthru
        _
      // Predicated region
      $region85: #{text_transformer_forward.16} parent=79 // pred_check
        %p891 = pneg %p299
      $region86: #{text_transformer_forward.16} parent=79 // pred_check_branch
        %893 = sbr.rel (%p891) target = $region88
      $region87: #{text_transformer_forward.16} parent=79 // pred_region
        %p894 = scmp.lt.s32.totalorder %s26, 1
        %s895 = scalar_select %p894, %s26, 1
        %s896 = smul.addr %s895, 8
        %s897 = scalar_lea.vmem %s10, %s896
      $region88: #{text_transformer_forward.16} parent=79 // pred_fallthru
        _
      // Predicated region
      $region89: #{text_transformer_forward.16} parent=79 // pred_check
        %p898 = pneg %p325
      $region90: #{text_transformer_forward.16} parent=79 // pred_check_branch
        %900 = sbr.rel (%p898) target = $region92
      $region91: #{text_transformer_forward.16} parent=79 // pred_region
        %p901 = scmp.lt.s32.totalorder %s26, 1
        %s902 = scalar_select %p901, %s26, 1
        %s903 = smul.addr %s902, 8
        %s904 = scalar_lea.vmem %s11, %s903
      $region92: #{text_transformer_forward.16} parent=79 // pred_fallthru
        _
      // Predicated region
      $region93: #{text_transformer_forward.16} parent=79 // pred_check
        %p905 = pneg %p351
      $region94: #{text_transformer_forward.16} parent=79 // pred_check_branch
        %907 = sbr.rel (%p905) target = $region96
      $region95: #{text_transformer_forward.16} parent=79 // pred_region
        %p908 = scmp.lt.s32.totalorder %s26, 1
        %s909 = scalar_select %p908, %s26, 1
        %s910 = smul.addr %s909, 8
        %s911 = scalar_lea.vmem %s12, %s910
      $region96: #{text_transformer_forward.16} parent=79 // pred_fallthru
        _
      // Predicated region
      $region97: #{text_transformer_forward.16} parent=79 // pred_check
        %p912 = pneg %p377
      $region98: #{text_transformer_forward.16} parent=79 // pred_check_branch
        %914 = sbr.rel (%p912) target = $region100
      $region99: #{text_transformer_forward.16} parent=79 // pred_region
        %p915 = scmp.lt.s32.totalorder %s26, 1
        %s916 = scalar_select %p915, %s26, 1
        %s917 = smul.addr %s916, 8
        %s918 = scalar_lea.vmem %s13, %s917
      $region100: #{text_transformer_forward.16} parent=79 // pred_fallthru
        _
    $region80: #{text_transformer_forward.16} parent=5 // pred_fallthru
      _
  $region6: #{text_transformer_forward.16} parent=0 // loop_footer
    %s24 = sadd.s32 1, %s20
  $region7: #{text_transformer_forward.16} parent=0 // loop_footer_branch
    %19 = sbr.rel target = $region3
  $region8: #{text_transformer_forward.16} parent=0 // loop_exit
    _

// kernel: text_transformer_forward.19
$region0: #{text_transformer_forward.19}
  #allocation0 [shape = 'u32[]', space=smem, size = 0x4, offset = 0x4, fixed_abs, tag = 'smem constant byte address 0x4 - core index']
  #allocation1 [shape = 'u32[144,128]{1,0:T(1,128)}', space=vmem, size = 0x12000, scoped, tag = 'internal scratch']
  %s0 = inlined_call_operand.vmem [shape: bf16[2,8,64], index: 0, kind: input, shape index: {}]
  %s1 = inlined_call_operand.vmem [shape: bf16[2,8,64], index: 1, kind: input, shape index: {}]
  %s2 = inlined_call_operand.vmem [shape: bf16[2,8,64], index: 2, kind: input, shape index: {}]
  %s3 = inlined_call_operand.vmem [shape: f32[2,8,64], index: 3, kind: input, shape index: {}]
  %s4 = inlined_call_operand.vmem [shape: f32[2,8,64], index: 4, kind: input, shape index: {}]
  %s5 = inlined_call_operand.vmem [shape: f32[2,8,64], index: 5, kind: input, shape index: {}]
  %s6 = inlined_call_operand.vmem [shape: f32[2,8,64], index: 6, kind: input, shape index: {}]
  %s7 = inlined_call_operand.vmem [shape: f32[192,64], index: 7, kind: input, shape index: {}]
  %s8 = inlined_call_operand.vmem [shape: f32[1,64], index: 8, kind: input, shape index: {}]
  %s9 = inlined_call_operand.vmem [shape: bf16[2,8,64], index: 9, kind: output, shape index: {0}]
  %s10 = inlined_call_operand.hbm [shape: f32[2,8,64], index: 10, kind: output, shape index: {1}]
  %s11 = inlined_call_operand.hbm [shape: f32[2,8,64], index: 11, kind: output, shape index: {2}]
  %s12 = inlined_call_operand.hbm [shape: f32[2,8,64], index: 12, kind: output, shape index: {3}]
  %s13 = inlined_call_operand.hbm [shape: f32[2,8,64], index: 13, kind: output, shape index: {4}]
  %14 = xla_tuple %s9, %s10, %s11, %s12, %s13
  %s15 = sld [smem:[#allocation0]]
  $region101: #{text_transformer_forward.19} parent=0
    _
  %s17 = ssub.s32 1, %s15
  %s18 = scalar_select 0, %s17, %s15
  $region1: #{text_transformer_forward.19} parent=0
    #allocation2 [shape = 'u8[8192]{0}', space=vmem, size = 0x2000, scoped, tag = 'output window, operand 1']
    #allocation3 [shape = 's32[2]{0}', space=sflag, size = 0x8, scoped, tag = 'scoped memory for text_transformer_forward.19']
    #allocation4 [shape = 'u8[8192]{0}', space=vmem, size = 0x2000, scoped, tag = 'output window, operand 2']
    #allocation5 [shape = 's32[2]{0}', space=sflag, size = 0x8, scoped, tag = 'scoped memory for text_transformer_forward.19']
    #allocation6 [shape = 'u8[8192]{0}', space=vmem, size = 0x2000, scoped, tag = 'output window, operand 3']
    #allocation7 [shape = 'u8[8192]{0}', space=vmem, size = 0x2000, scoped, tag = 'output window, operand 4']
    #allocation8 [shape = 's32[2]{0}', space=sflag, size = 0x8, scoped, tag = 'scoped memory for text_transformer_forward.19']
    %19 = vsyncpa [#allocation3], 0
    %s20 = scalar_lea.sflag [#allocation3], 1
    %21 = vsyncpa %s20, 0
    %22 = vsyncpa [#allocation5], 0
    %s23 = scalar_lea.sflag [#allocation5], 1
    %24 = vsyncpa %s23, 0
    %25 = vsyncpa [#allocation8], 0
    %s26 = scalar_lea.sflag [#allocation8], 1
    %27 = vsyncpa %s26, 0
    loop: start=0, step=1, limit=4
    $region2: #{text_transformer_forward.19} parent=1 // loop_pre_header
      _
    $region3: #{text_transformer_forward.19} parent=1 // loop_header
      %s29 = sphi 0, %s33
      %p30 = scmp.ge.s32.totalorder %s29, 4
      %s39 = sphi 0, %s41
      %s42 = sphi 0, %s39
      %s43 = sphi 0, %s42
      %s59 = sphi 0, %s43
      %s65 = sphi 0, %s67
      %s68 = sphi 0, %s65
      %s69 = sphi 0, %s68
      %s85 = sphi 0, %s69
      %s91 = sphi 0, %s93
      %s94 = sphi 0, %s91
      %s95 = sphi 0, %s94
      %s111 = sphi 0, %s95
      %s117 = sphi 0, %s119
      %s120 = sphi 0, %s117
      %s121 = sphi 0, %s120
      %s137 = sphi 0, %s121
      %s143 = sphi 0, %s145
      %s146 = sphi 0, %s143
      %s147 = sphi 0, %s146
      %s163 = sphi 0, %s147
      %s169 = sphi 0, %s171
      %s172 = sphi 0, %s169
      %s173 = sphi 0, %s172
      %s189 = sphi 0, %s173
      %s195 = sphi 0, %s197
      %s198 = sphi 0, %s195
      %s199 = sphi 0, %s198
      %s215 = sphi 0, %s199
      %s219 = sphi 0, %s219
      %s221 = sphi 0, %s219
      %s222 = sphi 0, %s221
      %s236 = sphi 0, %s222
      %s240 = sphi 0, %s240
      %s242 = sphi 0, %s240
      %s243 = sphi 0, %s242
      %s257 = sphi 0, %s243
      %s263 = sphi 0, %s265
      %s266 = sphi 0, %s263
      %s267 = sphi 0, %s266
      %s283 = sphi 0, %s267
      %s289 = sphi 0, %s291
      %s292 = sphi 0, %s289
      %s293 = sphi 0, %s292
      %s309 = sphi 0, %s293
      %s315 = sphi 0, %s317
      %s318 = sphi 0, %s315
      %s319 = sphi 0, %s318
      %s335 = sphi 0, %s319
      %s341 = sphi 0, %s343
      %s344 = sphi 0, %s341
      %s345 = sphi 0, %s344
      %s361 = sphi 0, %s345
      %s367 = sphi 0, %s369
      %s370 = sphi 0, %s367
      %s371 = sphi 0, %s370
      %s387 = sphi 0, %s371
    $region4: #{text_transformer_forward.19} parent=1 // loop_header_branch
      %32 = sbr.rel (%p30) target = $region8
    $region5: #{text_transformer_forward.19} parent=1 // loop_body
      %s34 = ssub.s32 %s29, 1
      %s35 = ssub.s32 %s29, 2
      %s36 = sadd.s32 %s29, 1
      %s37 = ssub.s32 %s29, %s36
      %p38 = scmp.eq.s32.totalorder %s37, 0
      %s40 = sadd.s32 %s39, 1
      %s41 = scalar_select %p38, %s39, %s40
      %p44 = pneg %p38
      %p45 = scmp.eq.s32.totalorder %s29, 1
      %p46 = por %p44, %p45
      %p47 = scmp.ne.s32.totalorder %s39, %s42
      %p48 = scmp.eq.s32.totalorder %s29, 0
      %p49 = por %p47, %p48
      %p50 = scmp.ne.s32.totalorder %s39, %s42
      %p51 = scmp.eq.s32.totalorder %s34, 1
      %p52 = por %p50, %p51
      %p53 = scmp.ne.s32.totalorder %s42, %s43
      %p54 = scmp.eq.s32.totalorder %s34, 0
      %p55 = por %p53, %p54
      %p56 = scmp.ne.s32.totalorder %s42, %s43
      %p57 = scmp.eq.s32.totalorder %s35, 1
      %p58 = por %p56, %p57
      %p60 = scmp.ne.s32.totalorder %s43, %s59
      %p61 = scmp.eq.s32.totalorder %s35, 0
      %p62 = por %p60, %p61
      %s63 = ssub.s32 %s29, %s36
      %p64 = scmp.eq.s32.totalorder %s63, 0
      %s66 = sadd.s32 %s65, 1
      %s67 = scalar_select %p64, %s65, %s66
      %p70 = pneg %p64
      %p71 = scmp.eq.s32.totalorder %s29, 1
      %p72 = por %p70, %p71
      %p73 = scmp.ne.s32.totalorder %s65, %s68
      %p74 = scmp.eq.s32.totalorder %s29, 0
      %p75 = por %p73, %p74
      %p76 = scmp.ne.s32.totalorder %s65, %s68
      %p77 = scmp.eq.s32.totalorder %s34, 1
      %p78 = por %p76, %p77
      %p79 = scmp.ne.s32.totalorder %s68, %s69
      %p80 = scmp.eq.s32.totalorder %s34, 0
      %p81 = por %p79, %p80
      %p82 = scmp.ne.s32.totalorder %s68, %s69
      %p83 = scmp.eq.s32.totalorder %s35, 1
      %p84 = por %p82, %p83
      %p86 = scmp.ne.s32.totalorder %s69, %s85
      %p87 = scmp.eq.s32.totalorder %s35, 0
      %p88 = por %p86, %p87
      %s89 = ssub.s32 %s29, %s36
      %p90 = scmp.eq.s32.totalorder %s89, 0
      %s92 = sadd.s32 %s91, 1
      %s93 = scalar_select %p90, %s91, %s92
      %p96 = pneg %p90
      %p97 = scmp.eq.s32.totalorder %s29, 1
      %p98 = por %p96, %p97
      %p99 = scmp.ne.s32.totalorder %s91, %s94
      %p100 = scmp.eq.s32.totalorder %s29, 0
      %p101 = por %p99, %p100
      %p102 = scmp.ne.s32.totalorder %s91, %s94
      %p103 = scmp.eq.s32.totalorder %s34, 1
      %p104 = por %p102, %p103
      %p105 = scmp.ne.s32.totalorder %s94, %s95
      %p106 = scmp.eq.s32.totalorder %s34, 0
      %p107 = por %p105, %p106
      %p108 = scmp.ne.s32.totalorder %s94, %s95
      %p109 = scmp.eq.s32.totalorder %s35, 1
      %p110 = por %p108, %p109
      %p112 = scmp.ne.s32.totalorder %s95, %s111
      %p113 = scmp.eq.s32.totalorder %s35, 0
      %p114 = por %p112, %p113
      %s115 = ssub.s32 %s29, %s36
      %p116 = scmp.eq.s32.totalorder %s115, 0
      %s118 = sadd.s32 %s117, 1
      %s119 = scalar_select %p116, %s117, %s118
      %p122 = pneg %p116
      %p123 = scmp.eq.s32.totalorder %s29, 1
      %p124 = por %p122, %p123
      %p125 = scmp.ne.s32.totalorder %s117, %s120
      %p126 = scmp.eq.s32.totalorder %s29, 0
      %p127 = por %p125, %p126
      %p128 = scmp.ne.s32.totalorder %s117, %s120
      %p129 = scmp.eq.s32.totalorder %s34, 1
      %p130 = por %p128, %p129
      %p131 = scmp.ne.s32.totalorder %s120, %s121
      %p132 = scmp.eq.s32.totalorder %s34, 0
      %p133 = por %p131, %p132
      %p134 = scmp.ne.s32.totalorder %s120, %s121
      %p135 = scmp.eq.s32.totalorder %s35, 1
      %p136 = por %p134, %p135
      %p138 = scmp.ne.s32.totalorder %s121, %s137
      %p139 = scmp.eq.s32.totalorder %s35, 0
      %p140 = por %p138, %p139
      %s141 = ssub.s32 %s29, %s36
      %p142 = scmp.eq.s32.totalorder %s141, 0
      %s144 = sadd.s32 %s143, 1
      %s145 = scalar_select %p142, %s143, %s144
      %p148 = pneg %p142
      %p149 = scmp.eq.s32.totalorder %s29, 1
      %p150 = por %p148, %p149
      %p151 = scmp.ne.s32.totalorder %s143, %s146
      %p152 = scmp.eq.s32.totalorder %s29, 0
      %p153 = por %p151, %p152
      %p154 = scmp.ne.s32.totalorder %s143, %s146
      %p155 = scmp.eq.s32.totalorder %s34, 1
      %p156 = por %p154, %p155
      %p157 = scmp.ne.s32.totalorder %s146, %s147
      %p158 = scmp.eq.s32.totalorder %s34, 0
      %p159 = por %p157, %p158
      %p160 = scmp.ne.s32.totalorder %s146, %s147
      %p161 = scmp.eq.s32.totalorder %s35, 1
      %p162 = por %p160, %p161
      %p164 = scmp.ne.s32.totalorder %s147, %s163
      %p165 = scmp.eq.s32.totalorder %s35, 0
      %p166 = por %p164, %p165
      %s167 = ssub.s32 %s29, %s36
      %p168 = scmp.eq.s32.totalorder %s167, 0
      %s170 = sadd.s32 %s169, 1
      %s171 = scalar_select %p168, %s169, %s170
      %p174 = pneg %p168
      %p175 = scmp.eq.s32.totalorder %s29, 1
      %p176 = por %p174, %p175
      %p177 = scmp.ne.s32.totalorder %s169, %s172
      %p178 = scmp.eq.s32.totalorder %s29, 0
      %p179 = por %p177, %p178
      %p180 = scmp.ne.s32.totalorder %s169, %s172
      %p181 = scmp.eq.s32.totalorder %s34, 1
      %p182 = por %p180, %p181
      %p183 = scmp.ne.s32.totalorder %s172, %s173
      %p184 = scmp.eq.s32.totalorder %s34, 0
      %p185 = por %p183, %p184
      %p186 = scmp.ne.s32.totalorder %s172, %s173
      %p187 = scmp.eq.s32.totalorder %s35, 1
      %p188 = por %p186, %p187
      %p190 = scmp.ne.s32.totalorder %s173, %s189
      %p191 = scmp.eq.s32.totalorder %s35, 0
      %p192 = por %p190, %p191
      %s193 = ssub.s32 %s29, %s36
      %p194 = scmp.eq.s32.totalorder %s193, 0
      %s196 = sadd.s32 %s195, 1
      %s197 = scalar_select %p194, %s195, %s196
      %p200 = pneg %p194
      %p201 = scmp.eq.s32.totalorder %s29, 1
      %p202 = por %p200, %p201
      %p203 = scmp.ne.s32.totalorder %s195, %s198
      %p204 = scmp.eq.s32.totalorder %s29, 0
      %p205 = por %p203, %p204
      %p206 = scmp.ne.s32.totalorder %s195, %s198
      %p207 = scmp.eq.s32.totalorder %s34, 1
      %p208 = por %p206, %p207
      %p209 = scmp.ne.s32.totalorder %s198, %s199
      %p210 = scmp.eq.s32.totalorder %s34, 0
      %p211 = por %p209, %p210
      %p212 = scmp.ne.s32.totalorder %s198, %s199
      %p213 = scmp.eq.s32.totalorder %s35, 1
      %p214 = por %p212, %p213
      %p216 = scmp.ne.s32.totalorder %s199, %s215
      %p217 = scmp.eq.s32.totalorder %s35, 0
      %p218 = por %p216, %p217
      %s220 = sadd.s32 %s219, 1
      %p223 = scmp.eq.s32.totalorder %s29, 1
      %p224 = scmp.ne.s32.totalorder %s219, %s221
      %p225 = scmp.eq.s32.totalorder %s29, 0
      %p226 = por %p224, %p225
      %p227 = scmp.ne.s32.totalorder %s219, %s221
      %p228 = scmp.eq.s32.totalorder %s34, 1
      %p229 = por %p227, %p228
      %p230 = scmp.ne.s32.totalorder %s221, %s222
      %p231 = scmp.eq.s32.totalorder %s34, 0
      %p232 = por %p230, %p231
      %p233 = scmp.ne.s32.totalorder %s221, %s222
      %p234 = scmp.eq.s32.totalorder %s35, 1
      %p235 = por %p233, %p234
      %p237 = scmp.ne.s32.totalorder %s222, %s236
      %p238 = scmp.eq.s32.totalorder %s35, 0
      %p239 = por %p237, %p238
      %s241 = sadd.s32 %s240, 1
      %p244 = scmp.eq.s32.totalorder %s29, 1
      %p245 = scmp.ne.s32.totalorder %s240, %s242
      %p246 = scmp.eq.s32.totalorder %s29, 0
      %p247 = por %p245, %p246
      %p248 = scmp.ne.s32.totalorder %s240, %s242
      %p249 = scmp.eq.s32.totalorder %s34, 1
      %p250 = por %p248, %p249
      %p251 = scmp.ne.s32.totalorder %s242, %s243
      %p252 = scmp.eq.s32.totalorder %s34, 0
      %p253 = por %p251, %p252
      %p254 = scmp.ne.s32.totalorder %s242, %s243
      %p255 = scmp.eq.s32.totalorder %s35, 1
      %p256 = por %p254, %p255
      %p258 = scmp.ne.s32.totalorder %s243, %s257
      %p259 = scmp.eq.s32.totalorder %s35, 0
      %p260 = por %p258, %p259
      %s261 = ssub.s32 %s29, %s36
      %p262 = scmp.eq.s32.totalorder %s261, 0
      %s264 = sadd.s32 %s263, 1
      %s265 = scalar_select %p262, %s263, %s264
      %p268 = pneg %p262
      %p269 = scmp.eq.s32.totalorder %s29, 1
      %p270 = por %p268, %p269
      %p271 = scmp.ne.s32.totalorder %s263, %s266
      %p272 = scmp.eq.s32.totalorder %s29, 0
      %p273 = por %p271, %p272
      %p274 = scmp.ne.s32.totalorder %s263, %s266
      %p275 = scmp.eq.s32.totalorder %s34, 1
      %p276 = por %p274, %p275
      %p277 = scmp.ne.s32.totalorder %s266, %s267
      %p278 = scmp.eq.s32.totalorder %s34, 0
      %p279 = por %p277, %p278
      %p280 = scmp.ne.s32.totalorder %s266, %s267
      %p281 = scmp.eq.s32.totalorder %s35, 1
      %p282 = por %p280, %p281
      %p284 = scmp.ne.s32.totalorder %s267, %s283
      %p285 = scmp.eq.s32.totalorder %s35, 0
      %p286 = por %p284, %p285
      %s287 = ssub.s32 %s29, %s36
      %p288 = scmp.eq.s32.totalorder %s287, 0
      %s290 = sadd.s32 %s289, 1
      %s291 = scalar_select %p288, %s289, %s290
      %p294 = pneg %p288
      %p295 = scmp.eq.s32.totalorder %s29, 1
      %p296 = por %p294, %p295
      %p297 = scmp.ne.s32.totalorder %s289, %s292
      %p298 = scmp.eq.s32.totalorder %s29, 0
      %p299 = por %p297, %p298
      %p300 = scmp.ne.s32.totalorder %s289, %s292
      %p301 = scmp.eq.s32.totalorder %s34, 1
      %p302 = por %p300, %p301
      %p303 = scmp.ne.s32.totalorder %s292, %s293
      %p304 = scmp.eq.s32.totalorder %s34, 0
      %p305 = por %p303, %p304
      %p306 = scmp.ne.s32.totalorder %s292, %s293
      %p307 = scmp.eq.s32.totalorder %s35, 1
      %p308 = por %p306, %p307
      %p310 = scmp.ne.s32.totalorder %s293, %s309
      %p311 = scmp.eq.s32.totalorder %s35, 0
      %p312 = por %p310, %p311
      %s313 = ssub.s32 %s29, %s36
      %p314 = scmp.eq.s32.totalorder %s313, 0
      %s316 = sadd.s32 %s315, 1
      %s317 = scalar_select %p314, %s315, %s316
      %p320 = pneg %p314
      %p321 = scmp.eq.s32.totalorder %s29, 1
      %p322 = por %p320, %p321
      %p323 = scmp.ne.s32.totalorder %s315, %s318
      %p324 = scmp.eq.s32.totalorder %s29, 0
      %p325 = por %p323, %p324
      %p326 = scmp.ne.s32.totalorder %s315, %s318
      %p327 = scmp.eq.s32.totalorder %s34, 1
      %p328 = por %p326, %p327
      %p329 = scmp.ne.s32.totalorder %s318, %s319
      %p330 = scmp.eq.s32.totalorder %s34, 0
      %p331 = por %p329, %p330
      %p332 = scmp.ne.s32.totalorder %s318, %s319
      %p333 = scmp.eq.s32.totalorder %s35, 1
      %p334 = por %p332, %p333
      %p336 = scmp.ne.s32.totalorder %s319, %s335
      %p337 = scmp.eq.s32.totalorder %s35, 0
      %p338 = por %p336, %p337
      %s339 = ssub.s32 %s29, %s36
      %p340 = scmp.eq.s32.totalorder %s339, 0
      %s342 = sadd.s32 %s341, 1
      %s343 = scalar_select %p340, %s341, %s342
      %p346 = pneg %p340
      %p347 = scmp.eq.s32.totalorder %s29, 1
      %p348 = por %p346, %p347
      %p349 = scmp.ne.s32.totalorder %s341, %s344
      %p350 = scmp.eq.s32.totalorder %s29, 0
      %p351 = por %p349, %p350
      %p352 = scmp.ne.s32.totalorder %s341, %s344
      %p353 = scmp.eq.s32.totalorder %s34, 1
      %p354 = por %p352, %p353
      %p355 = scmp.ne.s32.totalorder %s344, %s345
      %p356 = scmp.eq.s32.totalorder %s34, 0
      %p357 = por %p355, %p356
      %p358 = scmp.ne.s32.totalorder %s344, %s345
      %p359 = scmp.eq.s32.totalorder %s35, 1
      %p360 = por %p358, %p359
      %p362 = scmp.ne.s32.totalorder %s345, %s361
      %p363 = scmp.eq.s32.totalorder %s35, 0
      %p364 = por %p362, %p363
      %s365 = ssub.s32 %s29, %s36
      %p366 = scmp.eq.s32.totalorder %s365, 0
      %s368 = sadd.s32 %s367, 1
      %s369 = scalar_select %p366, %s367, %s368
      %p372 = pneg %p366
      %p373 = scmp.eq.s32.totalorder %s29, 1
      %p374 = por %p372, %p373
      %p375 = scmp.ne.s32.totalorder %s367, %s370
      %p376 = scmp.eq.s32.totalorder %s29, 0
      %p377 = por %p375, %p376
      %p378 = scmp.ne.s32.totalorder %s367, %s370
      %p379 = scmp.eq.s32.totalorder %s34, 1
      %p380 = por %p378, %p379
      %p381 = scmp.ne.s32.totalorder %s370, %s371
      %p382 = scmp.eq.s32.totalorder %s34, 0
      %p383 = por %p381, %p382
      %p384 = scmp.ne.s32.totalorder %s370, %s371
      %p385 = scmp.eq.s32.totalorder %s35, 1
      %p386 = por %p384, %p385
      %p388 = scmp.ne.s32.totalorder %s371, %s387
      %p389 = scmp.eq.s32.totalorder %s35, 0
      %p390 = por %p388, %p389
      %p391 = scmp.le.s32.totalorder 1, %s29
      %p392 = scmp.lt.s32.totalorder %s29, 3
      %p393 = pnand %p391, %p392
      %p394 = pneg %p393
      // Predicated region
      $region9: #{text_transformer_forward.19} parent=5 // pred_check
        _
      $region10: #{text_transformer_forward.19} parent=5 // pred_check_branch
        %396 = sbr.rel (%p393) target = $region12
      $region11: #{text_transformer_forward.19} parent=5 // pred_region
        %s397 = ssub.s32 %s29, 1
        // Predicated region
        $region13: #{text_transformer_forward.19} parent=11 // pred_check
          %p398 = pneg %p232
        $region14: #{text_transformer_forward.19} parent=11 // pred_check_branch
          %400 = sbr.rel (%p398) target = $region16
        $region15: #{text_transformer_forward.19} parent=11 // pred_region
          _
        $region16: #{text_transformer_forward.19} parent=11 // pred_fallthru
          _
        // Predicated region
        $region17: #{text_transformer_forward.19} parent=11 // pred_check
          %p401 = pneg %p253
        $region18: #{text_transformer_forward.19} parent=11 // pred_check_branch
          %403 = sbr.rel (%p401) target = $region20
        $region19: #{text_transformer_forward.19} parent=11 // pred_region
          _
        $region20: #{text_transformer_forward.19} parent=11 // pred_fallthru
          _
      $region12: #{text_transformer_forward.19} parent=5 // pred_fallthru
        _
      %p404 = scmp.lt.s32.totalorder %s29, 2
      // Predicated region
      $region21: #{text_transformer_forward.19} parent=5 // pred_check
        %p405 = pneg %p404
      $region22: #{text_transformer_forward.19} parent=5 // pred_check_branch
        %407 = sbr.rel (%p405) target = $region24
      $region23: #{text_transformer_forward.19} parent=5 // pred_region
        // Predicated region
        $region25: #{text_transformer_forward.19} parent=23 // pred_check
          %p408 = pneg %p49
        $region26: #{text_transformer_forward.19} parent=23 // pred_check_branch
          %410 = sbr.rel (%p408) target = $region28
        $region27: #{text_transformer_forward.19} parent=23 // pred_region
          %p411 = scmp.lt.s32.totalorder %s29, 1
          %s412 = scalar_select %p411, %s29, 1
          %s413 = smul.addr %s412, 4
          %s414 = scalar_lea.vmem %s0, %s413
        $region28: #{text_transformer_forward.19} parent=23 // pred_fallthru
          _
        // Predicated region
        $region29: #{text_transformer_forward.19} parent=23 // pred_check
          %p415 = pneg %p75
        $region30: #{text_transformer_forward.19} parent=23 // pred_check_branch
          %417 = sbr.rel (%p415) target = $region32
        $region31: #{text_transformer_forward.19} parent=23 // pred_region
          %p418 = scmp.lt.s32.totalorder %s29, 1
          %s419 = scalar_select %p418, %s29, 1
          %s420 = smul.addr %s419, 4
          %s421 = scalar_lea.vmem %s1, %s420
        $region32: #{text_transformer_forward.19} parent=23 // pred_fallthru
          _
        // Predicated region
        $region33: #{text_transformer_forward.19} parent=23 // pred_check
          %p422 = pneg %p101
        $region34: #{text_transformer_forward.19} parent=23 // pred_check_branch
          %424 = sbr.rel (%p422) target = $region36
        $region35: #{text_transformer_forward.19} parent=23 // pred_region
          %p425 = scmp.lt.s32.totalorder %s29, 1
          %s426 = scalar_select %p425, %s29, 1
          %s427 = smul.addr %s426, 4
          %s428 = scalar_lea.vmem %s2, %s427
        $region36: #{text_transformer_forward.19} parent=23 // pred_fallthru
          _
        // Predicated region
        $region37: #{text_transformer_forward.19} parent=23 // pred_check
          %p429 = pneg %p127
        $region38: #{text_transformer_forward.19} parent=23 // pred_check_branch
          %431 = sbr.rel (%p429) target = $region40
        $region39: #{text_transformer_forward.19} parent=23 // pred_region
          %p432 = scmp.lt.s32.totalorder %s29, 1
          %s433 = scalar_select %p432, %s29, 1
          %s434 = smul.addr %s433, 8
          %s435 = scalar_lea.vmem %s3, %s434
        $region40: #{text_transformer_forward.19} parent=23 // pred_fallthru
          _
        // Predicated region
        $region41: #{text_transformer_forward.19} parent=23 // pred_check
          %p436 = pneg %p153
        $region42: #{text_transformer_forward.19} parent=23 // pred_check_branch
          %438 = sbr.rel (%p436) target = $region44
        $region43: #{text_transformer_forward.19} parent=23 // pred_region
          %p439 = scmp.lt.s32.totalorder %s29, 1
          %s440 = scalar_select %p439, %s29, 1
          %s441 = smul.addr %s440, 8
          %s442 = scalar_lea.vmem %s4, %s441
        $region44: #{text_transformer_forward.19} parent=23 // pred_fallthru
          _
        // Predicated region
        $region45: #{text_transformer_forward.19} parent=23 // pred_check
          %p443 = pneg %p179
        $region46: #{text_transformer_forward.19} parent=23 // pred_check_branch
          %445 = sbr.rel (%p443) target = $region48
        $region47: #{text_transformer_forward.19} parent=23 // pred_region
          %p446 = scmp.lt.s32.totalorder %s29, 1
          %s447 = scalar_select %p446, %s29, 1
          %s448 = smul.addr %s447, 8
          %s449 = scalar_lea.vmem %s5, %s448
        $region48: #{text_transformer_forward.19} parent=23 // pred_fallthru
          _
        // Predicated region
        $region49: #{text_transformer_forward.19} parent=23 // pred_check
          %p450 = pneg %p205
        $region50: #{text_transformer_forward.19} parent=23 // pred_check_branch
          %452 = sbr.rel (%p450) target = $region52
        $region51: #{text_transformer_forward.19} parent=23 // pred_region
          %p453 = scmp.lt.s32.totalorder %s29, 1
          %s454 = scalar_select %p453, %s29, 1
          %s455 = smul.addr %s454, 8
          %s456 = scalar_lea.vmem %s6, %s455
        $region52: #{text_transformer_forward.19} parent=23 // pred_fallthru
          _
      $region24: #{text_transformer_forward.19} parent=5 // pred_fallthru
        _
      %p457 = scmp.le.s32.totalorder 1, %s29
      %p458 = scmp.lt.s32.totalorder %s29, 3
      %p459 = pnand %p457, %p458
      %p460 = pneg %p459
      // Predicated region
      $region53: #{text_transformer_forward.19} parent=5 // pred_check
        _
      $region54: #{text_transformer_forward.19} parent=5 // pred_check_branch
        %462 = sbr.rel (%p459) target = $region56
      $region55: #{text_transformer_forward.19} parent=5 // pred_region
        %s463 = ssub.s32 %s29, 1
        %p464 = scmp.lt.s32.totalorder %s34, 1
        %s465 = scalar_select %p464, %s34, 1
        %s466 = smul.addr %s465, 4
        %s467 = scalar_lea.vmem %s0, %s466
        %p468 = pneg %p55
        %p469 = pneg %p52
        %p470 = scmp.lt.s32.totalorder %s34, 1
        %s471 = scalar_select %p470, %s34, 1
        %s472 = smul.addr %s471, 4
        %s473 = scalar_lea.vmem %s1, %s472
        %p474 = pneg %p81
        %p475 = pneg %p78
        %p476 = scmp.lt.s32.totalorder %s34, 1
        %s477 = scalar_select %p476, %s34, 1
        %s478 = smul.addr %s477, 4
        %s479 = scalar_lea.vmem %s2, %s478
        %p480 = pneg %p107
        %p481 = pneg %p104
        %p482 = scmp.lt.s32.totalorder %s34, 1
        %s483 = scalar_select %p482, %s34, 1
        %s484 = smul.addr %s483, 8
        %s485 = scalar_lea.vmem %s3, %s484
        %p486 = pneg %p133
        %p487 = pneg %p130
        %p488 = scmp.lt.s32.totalorder %s34, 1
        %s489 = scalar_select %p488, %s34, 1
        %s490 = smul.addr %s489, 8
        %s491 = scalar_lea.vmem %s4, %s490
        %p492 = pneg %p159
        %p493 = pneg %p156
        %p494 = scmp.lt.s32.totalorder %s34, 1
        %s495 = scalar_select %p494, %s34, 1
        %s496 = smul.addr %s495, 8
        %s497 = scalar_lea.vmem %s5, %s496
        %p498 = pneg %p185
        %p499 = pneg %p182
        %p500 = scmp.lt.s32.totalorder %s34, 1
        %s501 = scalar_select %p500, %s34, 1
        %s502 = smul.addr %s501, 8
        %s503 = scalar_lea.vmem %s6, %s502
        %p504 = pneg %p211
        %p505 = pneg %p208
        %p506 = pneg %p232
        %p507 = pneg %p229
        %p508 = pneg %p253
        %p509 = pneg %p250
        %p510 = pneg %p279
        %p511 = pneg %p276
        %p512 = scmp.lt.s32.totalorder %s34, 1
        %s513 = scalar_select %p512, %s34, 1
        %s514 = smul.addr %s513, 4
        %s515 = scalar_lea.vmem %s9, %s514
        %p516 = pneg %p305
        %p517 = pneg %p302
        %s518 = sand.u32 %s292, 1
        %s519 = scalar_lea.sflag [#allocation3], %s518
        %s520 = sand.u32 %s292, 1
        %s521 = smul.addr %s520, 8
        %s522 = scalar_lea.vmem [#allocation2], %s521
        %p523 = pneg %p331
        %p524 = pneg %p328
        %s525 = sand.u32 %s34, 1
        %s526 = scalar_lea.sflag [#allocation5], %s525
        %s527 = sand.u32 %s318, 1
        %s528 = smul.addr %s527, 8
        %s529 = scalar_lea.vmem [#allocation4], %s528
        %p530 = pneg %p357
        %p531 = pneg %p354
        %s532 = sand.u32 %s34, 1
        %s533 = scalar_lea.sflag [#allocation5], %s532
        %s534 = sand.u32 %s344, 1
        %s535 = smul.addr %s534, 8
        %s536 = scalar_lea.vmem [#allocation6], %s535
        %p537 = pneg %p383
        %p538 = pneg %p380
        %s539 = sand.u32 %s370, 1
        %s540 = scalar_lea.sflag [#allocation8], %s539
        %s541 = sand.u32 %s370, 1
        %s542 = smul.addr %s541, 8
        %s543 = scalar_lea.vmem [#allocation7], %s542
        %p544 = scmp.lt.s32.totalorder %s34, 1
        %s545 = scalar_select %p544, %s34, 1
        %s546 = smul.addr %s545, 4
        %s547 = scalar_lea.vmem %s0, %s546
        %p548 = scmp.lt.s32.totalorder %s34, 1
        %s549 = scalar_select %p548, %s34, 1
        %s550 = smul.addr %s549, 4
        %s551 = scalar_lea.vmem %s1, %s550
        %p552 = scmp.lt.s32.totalorder %s34, 1
        %s553 = scalar_select %p552, %s34, 1
        %s554 = smul.addr %s553, 4
        %s555 = scalar_lea.vmem %s2, %s554
        %p556 = scmp.lt.s32.totalorder %s34, 1
        %s557 = scalar_select %p556, %s34, 1
        %s558 = smul.addr %s557, 8
        %s559 = scalar_lea.vmem %s3, %s558
        %p560 = scmp.lt.s32.totalorder %s34, 1
        %s561 = scalar_select %p560, %s34, 1
        %s562 = smul.addr %s561, 8
        %s563 = scalar_lea.vmem %s4, %s562
        %p564 = scmp.lt.s32.totalorder %s34, 1
        %s565 = scalar_select %p564, %s34, 1
        %s566 = smul.addr %s565, 8
        %s567 = scalar_lea.vmem %s5, %s566
        %p568 = scmp.lt.s32.totalorder %s34, 1
        %s569 = scalar_select %p568, %s34, 1
        %s570 = smul.addr %s569, 8
        %s571 = scalar_lea.vmem %s6, %s570
        %p572 = scmp.lt.s32.totalorder %s34, 1
        %s573 = scalar_select %p572, %s34, 1
        %s574 = smul.addr %s573, 4
        %s575 = scalar_lea.vmem %s9, %s574
        %v577 = vld [vmem:[%s547] sm:$0xf]
        %v578 = vunpack.c.l.bf16 %v577
        %v579 = vld [vmem:[%s563] sm:$0xff]
        %v580 = vld [vmem:[%s559] sm:$0xff]
        %v581 = vsub.f32 %v580, %v579
        %v582 = vrcp.pop 2.0
        %v583 = vmul.f32 %v581, %v582
        %v584 = vadd.f32 %v579, %v583
        %v585 = vsub.f32 %v584, 1.0
        %vm586 = vcmp.ge.f32.partialorder %v585, 0.0
        %v587 = vsel %vm586, 1, 0
        %v588 = vcvt.s32.f32 %v587
        %v589 = vsub.f32 1.0, %v588
        %v590 = vmul.f32 %v584, %v589
        %vm591 = vcmask 523264
        %592 = vst.msk [vmem:[%s529] sm:$0xff] %vm591, %v590
        %v593 = vmul.f32 %v588, 0.6
        %v594 = vmul.f32 %v578, 0.4
        %v595 = vadd.f32 %v593, %v594
        %v596 = vld [vmem:[%s567] sm:$0xff]
        %v597 = vsub.f32 %v595, %v596
        %v598 = vmul.f32 %v597, %v582
        %v599 = vadd.f32 %v596, %v598
        %v600 = vsub.f32 %v599, 1.0
        %vm601 = vcmp.ge.f32.partialorder %v600, 0.0
        %v602 = vsel %vm601, 1, 0
        %v603 = vcvt.s32.f32 %v602
        %v604 = vsub.f32 1.0, %v603
        %v605 = vmul.f32 %v599, %v604
        %606 = vst.msk [vmem:[%s536] sm:$0xff] %vm591, %v605
        %v607 = vld [vmem:[%s551] sm:$0xf]
        %v608 = vld [vmem:[%s555] sm:$0xf]
        %v609 = vunpack.c.l.bf16 %v608
        %v610 = vpack.c.bf16 %v603, %v603
        %v612 = vsel %vm591, %v610, 0
        %v615 = vsel %vm591, %v607, 0
        %617 = vmatprep.subr.bf16.mxu0 0
        %618 = vmatpush1.bf16.xpose.msra.mxu0 %v615
        %619 = vmatprep.subr.bf16.mxu0 0
        %620 = vmatpush1.bf16.xpose.msra.mxu0 0
        %621 = vmatprep.subr.bf16.mxu0 0
        %622 = vmatpush1.bf16.xpose.msra.mxu0 0
        %623 = vmatprep.subr.bf16.mxu0 0
        %624 = vmatpush1.bf16.xpose.msra.mxu0 0
        %625 = vmatprep.subr.bf16.mxu0 0
        %626 = vmatpush1.bf16.xpose.msra.mxu0 0
        %627 = vmatprep.subr.bf16.mxu0 0
        %628 = vmatpush1.bf16.xpose.msra.mxu0 0
        %629 = vmatprep.subr.bf16.mxu0 0
        %630 = vmatpush1.bf16.xpose.msra.mxu0 0
        %631 = vmatprep.subr.bf16.mxu0 0
        %632 = vmatpush1.bf16.xpose.msra.mxu0 0
        %633 = vmatprep.subr.bf16.mxu0 0
        %634 = vmatpush1.bf16.xpose.msra.mxu0 0
        %635 = vmatprep.subr.bf16.mxu0 0
        %636 = vmatpush1.bf16.xpose.msra.mxu0 0
        %637 = vmatprep.subr.bf16.mxu0 0
        %638 = vmatpush1.bf16.xpose.msra.mxu0 0
        %639 = vmatprep.subr.bf16.mxu0 0
        %640 = vmatpush1.bf16.xpose.msra.mxu0 0
        %641 = vmatprep.subr.bf16.mxu0 0
        %642 = vmatpush1.bf16.xpose.msra.mxu0 0
        %643 = vmatprep.subr.bf16.mxu0 0
        %644 = vmatpush1.bf16.xpose.msra.mxu0 0
        %645 = vmatprep.subr.bf16.mxu0 0
        %646 = vmatpush1.bf16.xpose.msra.mxu0 0
        %647 = vmatprep.subr.bf16.mxu0 0
        %648 = vmatpush1.bf16.xpose.msra.mxu0 0
        %649 = vmatprep.mubr.bf16.mxu0 0
        %650 = vmatmul.mubr.bf16.gmra.mrb[0].mxu0 %v612
        %v651 = vpop.f32.mrb[0].mxu0
        %v652 = vadd.f32 0.0, %v651
        %v653 = vpop.f32.mrb[0].mxu0
        %v654 = vpop.f32.mrb[0].mxu0
        %v655 = vpop.f32.mrb[0].mxu0
        %656 = vdwg.mxu0
        %v657 = vmul.f32 %v652, 0.125
        %vm658 = vcmask 64512
        %v660 = vsel %vm658, %v657, 0
        %662 = vmatprep.subr.mxu0 0.0
        %663 = vmatpush1.msra.mxu0 %v609
        %664 = vmatprep.subr.mxu0 0.0
        %665 = vmatpush1.msra.mxu0 0.0
        %666 = vmatprep.subr.mxu0 0.0
        %667 = vmatpush1.msra.mxu0 0.0
        %668 = vmatprep.subr.mxu0 0.0
        %669 = vmatpush1.msra.mxu0 0.0
        %670 = vmatprep.subr.mxu0 0.0
        %671 = vmatpush1.msra.mxu0 0.0
        %672 = vmatprep.subr.mxu0 0.0
        %673 = vmatpush1.msra.mxu0 0.0
        %674 = vmatprep.subr.mxu0 0.0
        %675 = vmatpush1.msra.mxu0 0.0
        %676 = vmatprep.subr.mxu0 0.0
        %677 = vmatpush1.msra.mxu0 0.0
        %678 = vmatprep.subr.mxu0 0.0
        %679 = vmatpush1.msra.mxu0 0.0
        %680 = vmatprep.subr.mxu0 0.0
        %681 = vmatpush1.msra.mxu0 0.0
        %682 = vmatprep.subr.mxu0 0.0
        %683 = vmatpush1.msra.mxu0 0.0
        %684 = vmatprep.subr.mxu0 0.0
        %685 = vmatpush1.msra.mxu0 0.0
        %686 = vmatprep.subr.mxu0 0.0
        %687 = vmatpush1.msra.mxu0 0.0
        %688 = vmatprep.subr.mxu0 0.0
        %689 = vmatpush1.msra.mxu0 0.0
        %690 = vmatprep.subr.mxu0 0.0
        %691 = vmatpush1.msra.mxu0 0.0
        %692 = vmatprep.subr.mxu0 0.0
        %693 = vmatpush1.msra.mxu0 0.0
        %694 = vmatprep.subr.mxu0 0.0
        %695 = vmatpush1.msra.mxu0 0.0
        %696 = vmatprep.subr.mxu0 0.0
        %697 = vmatpush1.msra.mxu0 0.0
        %698 = vmatprep.subr.mxu0 0.0
        %699 = vmatpush1.msra.mxu0 0.0
        %700 = vmatprep.subr.mxu0 0.0
        %701 = vmatpush1.msra.mxu0 0.0
        %702 = vmatprep.subr.mxu0 0.0
        %703 = vmatpush1.msra.mxu0 0.0
        %704 = vmatprep.subr.mxu0 0.0
        %705 = vmatpush1.msra.mxu0 0.0
        %706 = vmatprep.subr.mxu0 0.0
        %707 = vmatpush1.msra.mxu0 0.0
        %708 = vmatprep.subr.mxu0 0.0
        %709 = vmatpush1.msra.mxu0 0.0
        %710 = vmatprep.subr.mxu0 0.0
        %711 = vmatpush1.msra.mxu0 0.0
        %712 = vmatprep.subr.mxu0 0.0
        %713 = vmatpush1.msra.mxu0 0.0
        %714 = vmatprep.subr.mxu0 0.0
        %715 = vmatpush1.msra.mxu0 0.0
        %716 = vmatprep.subr.mxu0 0.0
        %717 = vmatpush1.msra.mxu0 0.0
        %718 = vmatprep.subr.mxu0 0.0
        %719 = vmatpush1.msra.mxu0 0.0
        %720 = vmatprep.subr.mxu0 0.0
        %721 = vmatpush1.msra.mxu0 0.0
        %722 = vmatprep.subr.mxu0 0.0
        %723 = vmatpush1.msra.mxu0 0.0
        %724 = vmatprep.subr.mxu0 0.0
        %725 = vmatpush1.msra.mxu0 0.0
        %726 = vmatprep.mubr.f32.mxu0 0.0
        %727 = vmatmul.mubr.f32.gmra.mrb[0].mxu0 %v660
        %v728 = vpop.f32.mrb[0].mxu0
        %v729 = vadd.f32 0.0, %v728
        %v730 = vpop.f32.mrb[0].mxu0
        %731 = vdwg.mxu0
        %v732 = vld [vmem:[%s571] sm:$0xff]
        %v733 = vsub.f32 %v729, %v732
        %v734 = vmul.f32 %v733, %v582
        %v735 = vadd.f32 %v732, %v734
        %v736 = vsub.f32 %v735, 1.0
        %vm737 = vcmp.ge.f32.partialorder %v736, 0.0
        %v738 = vsel %vm737, 1, 0
        %v739 = vcvt.s32.f32 %v738
        %v740 = vsub.f32 1.0, %v739
        %v741 = vmul.f32 %v735, %v740
        %742 = vst.msk [vmem:[%s543] sm:$0xff] %vm591, %v741
        %v743 = vpack.c.bf16 %v739, %v739
        %vm744 = vcmask 519168
        %745 = vst.msk [vmem:[%s575] sm:$0xf] %vm744, %v743
        %v747 = vrot.slane %v603, 7
        %vm749 = vcmask 1040384
        %v750 = vsel %vm749, 0.0, %v747
        %v751 = vrot.slane %v603, 1
        %vm753 = vcmask 1046528
        %v754 = vsel %vm753, %v751, 0.0
        %755 = vrot.lane.b32.xlu0 %v603, 64
        %v756 = vpop.permute.xlu0 %755
        %v758 = vsel %vm591, %v750, %v756
        %v759 = vld [vmem:[%s7] sm:$0xff]
        %v760 = vld [vmem:[%s7 + $0x8] sm:$0xff]
        %v761 = vld [vmem:[%s7 + $0x10] sm:$0xff]
        %v762 = vld [vmem:[%s7 + $0x18] sm:$0xff]
        %v763 = vld [vmem:[%s7 + $0x20] sm:$0xff]
        %v764 = vld [vmem:[%s7 + $0x28] sm:$0xff]
        %v765 = vld [vmem:[%s7 + $0x30] sm:$0xff]
        %v766 = vld [vmem:[%s7 + $0x38] sm:$0xff]
        %v767 = vld [vmem:[%s7 + $0x40] sm:$0xff]
        %v768 = vld [vmem:[%s7 + $0x48] sm:$0xff]
        %v769 = vld [vmem:[%s7 + $0x50] sm:$0xff]
        %v770 = vld [vmem:[%s7 + $0x58] sm:$0xff]
        %v771 = vld [vmem:[%s7 + $0x60] sm:$0xff]
        %v772 = vld [vmem:[%s7 + $0x68] sm:$0xff]
        %v773 = vld [vmem:[%s7 + $0x70] sm:$0xff]
        %v774 = vld [vmem:[%s7 + $0x78] sm:$0xff]
        %v775 = vld [vmem:[%s7 + $0x80] sm:$0xff]
        %v776 = vld [vmem:[%s7 + $0x88] sm:$0xff]
        %v777 = vld [vmem:[%s7 + $0x90] sm:$0xff]
        %v778 = vld [vmem:[%s7 + $0x98] sm:$0xff]
        %v779 = vld [vmem:[%s7 + $0xa0] sm:$0xff]
        %v780 = vld [vmem:[%s7 + $0xa8] sm:$0xff]
        %v781 = vld [vmem:[%s7 + $0xb0] sm:$0xff]
        %v782 = vld [vmem:[%s7 + $0xb8] sm:$0xff]
        %v783 = vld [vmem:[%s8] sm:$0x1]
        %v785 = vlaneseq
        %v786 = vshrl.u32 %v785, 7
        %v787 = vsub.s32 0, %v786
        %v788 = vrot.slane %v783, %v787
        %v791 = vsel %vm591, %v754, 0
        %793 = vmatprep.subr.mxu0 0.0
        %794 = vmatpush1.msra.mxu0 %v759
        %795 = vmatprep.subr.mxu0 0.0
        %796 = vmatpush1.msra.mxu0 %v760
        %797 = vmatprep.subr.mxu0 0.0
        %798 = vmatpush1.msra.mxu0 %v761
        %799 = vmatprep.subr.mxu0 0.0
        %800 = vmatpush1.msra.mxu0 %v762
        %801 = vmatprep.subr.mxu0 0.0
        %802 = vmatpush1.msra.mxu0 %v763
        %803 = vmatprep.subr.mxu0 0.0
        %804 = vmatpush1.msra.mxu0 %v764
        %805 = vmatprep.subr.mxu0 0.0
        %806 = vmatpush1.msra.mxu0 %v765
        %807 = vmatprep.subr.mxu0 0.0
        %808 = vmatpush1.msra.mxu0 %v766
        %809 = vmatprep.subr.mxu0 0.0
        %810 = vmatpush1.msra.mxu0 %v767
        %811 = vmatprep.subr.mxu0 0.0
        %812 = vmatpush1.msra.mxu0 %v768
        %813 = vmatprep.subr.mxu0 0.0
        %814 = vmatpush1.msra.mxu0 %v769
        %815 = vmatprep.subr.mxu0 0.0
        %816 = vmatpush1.msra.mxu0 %v770
        %817 = vmatprep.subr.mxu0 0.0
        %818 = vmatpush1.msra.mxu0 %v771
        %819 = vmatprep.subr.mxu0 0.0
        %820 = vmatpush1.msra.mxu0 %v772
        %821 = vmatprep.subr.mxu0 0.0
        %822 = vmatpush1.msra.mxu0 %v773
        %823 = vmatprep.subr.mxu0 0.0
        %824 = vmatpush1.msra.mxu0 %v774
        %825 = vmatprep.subr.mxu0 0.0
        %826 = vmatpush1.msra.mxu0 %v775
        %827 = vmatprep.subr.mxu0 0.0
        %828 = vmatpush1.msra.mxu0 %v776
        %829 = vmatprep.subr.mxu0 0.0
        %830 = vmatpush1.msra.mxu0 %v777
        %831 = vmatprep.subr.mxu0 0.0
        %832 = vmatpush1.msra.mxu0 %v778
        %833 = vmatprep.subr.mxu0 0.0
        %834 = vmatpush1.msra.mxu0 %v779
        %835 = vmatprep.subr.mxu0 0.0
        %836 = vmatpush1.msra.mxu0 %v780
        %837 = vmatprep.subr.mxu0 0.0
        %838 = vmatpush1.msra.mxu0 %v781
        %839 = vmatprep.subr.mxu0 0.0
        %840 = vmatpush1.msra.mxu0 %v782
        %841 = vmatprep.subr.mxu0 0.0
        %842 = vmatpush1.msra.mxu0 0.0
        %843 = vmatprep.subr.mxu0 0.0
        %844 = vmatpush1.msra.mxu0 0.0
        %845 = vmatprep.subr.mxu0 0.0
        %846 = vmatpush1.msra.mxu0 0.0
        %847 = vmatprep.subr.mxu0 0.0
        %848 = vmatpush1.msra.mxu0 0.0
        %849 = vmatprep.subr.mxu0 0.0
        %850 = vmatpush1.msra.mxu0 0.0
        %851 = vmatprep.subr.mxu0 0.0
        %852 = vmatpush1.msra.mxu0 0.0
        %853 = vmatprep.subr.mxu0 0.0
        %854 = vmatpush1.msra.mxu0 0.0
        %855 = vmatprep.subr.mxu0 0.0
        %856 = vmatpush1.msra.mxu0 0.0
        %857 = vmatprep.mubr.f32.mxu0 %v791
        %858 = vmatmul.mubr.f32.gmra.mrb[0].mxu0 %v758
        %v859 = vpop.f32.mrb[0].mxu0
        %v860 = vadd.f32 %v788, %v859
        %v861 = vpop.f32.mrb[0].mxu0
        %862 = vdwg.mxu0
        %863 = vst.msk [vmem:[%s522] sm:$0xff] %vm591, %v860
        %p864 = scmp.lt.s32.totalorder %s34, 1
        %s865 = scalar_select %p864, %s34, 1
        %s866 = smul.addr %s865, 4
        %s867 = scalar_lea.vmem %s9, %s866
        %s868 = sand.u32 %s292, 1
        %s869 = scalar_lea.sflag [#allocation3], %s868
        %s870 = sand.u32 %s292, 1
        %s871 = smul.addr %s870, 8
        %s872 = scalar_lea.vmem [#allocation2], %s871
        %s873 = sand.u32 %s34, 1
        %s874 = scalar_lea.sflag [#allocation5], %s873
        %s875 = sand.u32 %s318, 1
        %s876 = smul.addr %s875, 8
        %s877 = scalar_lea.vmem [#allocation4], %s876
        %s878 = sand.u32 %s34, 1
        %s879 = scalar_lea.sflag [#allocation5], %s878
        %s880 = sand.u32 %s344, 1
        %s881 = smul.addr %s880, 8
        %s882 = scalar_lea.vmem [#allocation6], %s881
        %s883 = sand.u32 %s370, 1
        %s884 = scalar_lea.sflag [#allocation8], %s883
        %s885 = sand.u32 %s370, 1
        %s886 = smul.addr %s885, 8
        %s887 = scalar_lea.vmem [#allocation7], %s886
        // Predicated region
        $region57: #{text_transformer_forward.19} parent=55 // pred_check
          %p888 = pneg %p276
        $region58: #{text_transformer_forward.19} parent=55 // pred_check_branch
          %890 = sbr.rel (%p888) target = $region60
        $region59: #{text_transformer_forward.19} parent=55 // pred_region
          _
        $region60: #{text_transformer_forward.19} parent=55 // pred_fallthru
          _
        // Predicated region
        $region61: #{text_transformer_forward.19} parent=55 // pred_check
          %p891 = pneg %p302
        $region62: #{text_transformer_forward.19} parent=55 // pred_check_branch
          %893 = sbr.rel (%p891) target = $region64
        $region63: #{text_transformer_forward.19} parent=55 // pred_region
          %s895 = ssub.s32 128, 128
          %896 = vsyncadd %s869, %s895
          %s897 = smul.addr %s34, 128
          %s898 = scalar_lea.hbm %s10, %s897
          %s900 = sshll.u32 %s872, 4
          %s901 = int_to_ptr.vmem [resolvable:$true] %s900
          %903 = dma.vmem_to_hbm [thread:$0]  %s901, 128, %s898, %s869
        $region64: #{text_transformer_forward.19} parent=55 // pred_fallthru
          _
        // Predicated region
        $region65: #{text_transformer_forward.19} parent=55 // pred_check
          %p904 = pneg %p328
        $region66: #{text_transformer_forward.19} parent=55 // pred_check_branch
          %906 = sbr.rel (%p904) target = $region68
        $region67: #{text_transformer_forward.19} parent=55 // pred_region
          %s908 = ssub.s32 128, 128
          %909 = vsyncadd %s874, %s908
          %s910 = smul.addr %s34, 128
          %s911 = scalar_lea.hbm %s11, %s910
          %s913 = sshll.u32 %s877, 4
          %s914 = int_to_ptr.vmem [resolvable:$true] %s913
          %916 = dma.vmem_to_hbm [thread:$0]  %s914, 128, %s911, %s874
        $region68: #{text_transformer_forward.19} parent=55 // pred_fallthru
          _
        // Predicated region
        $region69: #{text_transformer_forward.19} parent=55 // pred_check
          %p917 = pneg %p354
        $region70: #{text_transformer_forward.19} parent=55 // pred_check_branch
          %919 = sbr.rel (%p917) target = $region72
        $region71: #{text_transformer_forward.19} parent=55 // pred_region
          %s921 = ssub.s32 128, 128
          %922 = vsyncadd %s879, %s921
          %s923 = smul.addr %s34, 128
          %s924 = scalar_lea.hbm %s12, %s923
          %s926 = sshll.u32 %s882, 4
          %s927 = int_to_ptr.vmem [resolvable:$true] %s926
          %929 = dma.vmem_to_hbm [thread:$0]  %s927, 128, %s924, %s879
        $region72: #{text_transformer_forward.19} parent=55 // pred_fallthru
          _
        // Predicated region
        $region73: #{text_transformer_forward.19} parent=55 // pred_check
          %p930 = pneg %p380
        $region74: #{text_transformer_forward.19} parent=55 // pred_check_branch
          %932 = sbr.rel (%p930) target = $region76
        $region75: #{text_transformer_forward.19} parent=55 // pred_region
          %s934 = ssub.s32 128, 128
          %935 = vsyncadd %s884, %s934
          %s936 = smul.addr %s34, 128
          %s937 = scalar_lea.hbm %s13, %s936
          %s939 = sshll.u32 %s887, 4
          %s940 = int_to_ptr.vmem [resolvable:$true] %s939
          %942 = dma.vmem_to_hbm [thread:$0]  %s940, 128, %s937, %s884
        $region76: #{text_transformer_forward.19} parent=55 // pred_fallthru
          _
      $region56: #{text_transformer_forward.19} parent=5 // pred_fallthru
        _
      %p943 = scmp.le.s32.totalorder 2, %s29
      // Predicated region
      $region77: #{text_transformer_forward.19} parent=5 // pred_check
        %p944 = pneg %p943
      $region78: #{text_transformer_forward.19} parent=5 // pred_check_branch
        %946 = sbr.rel (%p944) target = $region80
      $region79: #{text_transformer_forward.19} parent=5 // pred_region
        %s947 = ssub.s32 %s29, 2
        // Predicated region
        $region81: #{text_transformer_forward.19} parent=79 // pred_check
          %p948 = pneg %p282
        $region82: #{text_transformer_forward.19} parent=79 // pred_check_branch
          %950 = sbr.rel (%p948) target = $region84
        $region83: #{text_transformer_forward.19} parent=79 // pred_region
          %p951 = scmp.lt.s32.totalorder %s35, 1
          %s952 = scalar_select %p951, %s35, 1
          %s953 = smul.addr %s952, 4
          %s954 = scalar_lea.vmem %s9, %s953
        $region84: #{text_transformer_forward.19} parent=79 // pred_fallthru
          _
        // Predicated region
        $region85: #{text_transformer_forward.19} parent=79 // pred_check
          %p955 = pneg %p308
        $region86: #{text_transformer_forward.19} parent=79 // pred_check_branch
          %957 = sbr.rel (%p955) target = $region88
        $region87: #{text_transformer_forward.19} parent=79 // pred_region
          %s958 = sand.u32 %s293, 1
          %s959 = scalar_lea.sflag [#allocation3], %s958
          %s960 = sand.u32 %s293, 1
          %s961 = smul.addr %s960, 8
          %s962 = scalar_lea.vmem [#allocation2], %s961
          %963 = dma.done %s959, 128
        $region88: #{text_transformer_forward.19} parent=79 // pred_fallthru
          _
        // Predicated region
        $region89: #{text_transformer_forward.19} parent=79 // pred_check
          %p964 = pneg %p334
        $region90: #{text_transformer_forward.19} parent=79 // pred_check_branch
          %966 = sbr.rel (%p964) target = $region92
        $region91: #{text_transformer_forward.19} parent=79 // pred_region
          %s967 = sand.u32 %s35, 1
          %s968 = scalar_lea.sflag [#allocation5], %s967
          %s969 = sand.u32 %s319, 1
          %s970 = smul.addr %s969, 8
          %s971 = scalar_lea.vmem [#allocation4], %s970
          %972 = dma.done %s968, 128
        $region92: #{text_transformer_forward.19} parent=79 // pred_fallthru
          _
        // Predicated region
        $region93: #{text_transformer_forward.19} parent=79 // pred_check
          %p973 = pneg %p360
        $region94: #{text_transformer_forward.19} parent=79 // pred_check_branch
          %975 = sbr.rel (%p973) target = $region96
        $region95: #{text_transformer_forward.19} parent=79 // pred_region
          %s976 = sand.u32 %s35, 1
          %s977 = scalar_lea.sflag [#allocation5], %s976
          %s978 = sand.u32 %s345, 1
          %s979 = smul.addr %s978, 8
          %s980 = scalar_lea.vmem [#allocation6], %s979
          %981 = dma.done %s977, 128
        $region96: #{text_transformer_forward.19} parent=79 // pred_fallthru
          _
        // Predicated region
        $region97: #{text_transformer_forward.19} parent=79 // pred_check
          %p982 = pneg %p386
        $region98: #{text_transformer_forward.19} parent=79 // pred_check_branch
          %984 = sbr.rel (%p982) target = $region100
        $region99: #{text_transformer_forward.19} parent=79 // pred_region
          %s985 = sand.u32 %s371, 1
          %s986 = scalar_lea.sflag [#allocation8], %s985
          %s987 = sand.u32 %s371, 1
          %s988 = smul.addr %s987, 8
          %s989 = scalar_lea.vmem [#allocation7], %s988
          %990 = dma.done %s986, 128
        $region100: #{text_transformer_forward.19} parent=79 // pred_fallthru
          _
      $region80: #{text_transformer_forward.19} parent=5 // pred_fallthru
        _
    $region6: #{text_transformer_forward.19} parent=1 // loop_footer
      %s33 = sadd.s32 1, %s29
    $region7: #{text_transformer_forward.19} parent=1 // loop_footer_branch
      %28 = sbr.rel target = $region3
    $region8: #{text_transformer_forward.19} parent=1 // loop_exit
      _
    %991 = vsyncpa [#allocation3], 1
    %s992 = scalar_lea.sflag [#allocation3], 1
    %993 = vsyncpa %s992, 1
    %994 = vsyncpa [#allocation5], 1
    %s995 = scalar_lea.sflag [#allocation5], 1
    %996 = vsyncpa %s995, 1
    %997 = vsyncpa [#allocation8], 1
    %s998 = scalar_lea.sflag [#allocation8], 1
    %999 = vsyncpa %s998, 1

// kernel: text_transformer_forward.17
$region0: #{text_transformer_forward.17}
  #allocation0 [shape = 'u32[]', space=smem, size = 0x4, offset = 0x4, fixed_abs, tag = 'smem constant byte address 0x4 - core index']
  #allocation1 [shape = 'u32[144,128]{1,0:T(1,128)}', space=vmem, size = 0x12000, scoped, tag = 'internal scratch']
  %s0 = inlined_call_operand.vmem [shape: bf16[2,8,64], index: 0, kind: input, shape index: {}]
  %s1 = inlined_call_operand.vmem [shape: bf16[2,8,64], index: 1, kind: input, shape index: {}]
  %s2 = inlined_call_operand.vmem [shape: bf16[2,8,64], index: 2, kind: input, shape index: {}]
  %s3 = inlined_call_operand.vmem [shape: f32[2,8,64], index: 3, kind: input, shape index: {}]
  %s4 = inlined_call_operand.vmem [shape: f32[2,8,64], index: 4, kind: input, shape index: {}]
  %s5 = inlined_call_operand.vmem [shape: f32[2,8,64], index: 5, kind: input, shape index: {}]
  %s6 = inlined_call_operand.vmem [shape: f32[2,8,64], index: 6, kind: input, shape index: {}]
  %s7 = inlined_call_operand.vmem [shape: f32[192,64], index: 7, kind: input, shape index: {}]
  %s8 = inlined_call_operand.vmem [shape: f32[1,64], index: 8, kind: input, shape index: {}]
  %s9 = inlined_call_operand.vmem [shape: bf16[2,8,64], index: 9, kind: output, shape index: {0}]
  %s10 = inlined_call_operand.vmem [shape: f32[2,8,64], index: 10, kind: output, shape index: {1}]
  %s11 = inlined_call_operand.vmem [shape: f32[2,8,64], index: 11, kind: output, shape index: {2}]
  %s12 = inlined_call_operand.vmem [shape: f32[2,8,64], index: 12, kind: output, shape index: {3}]
  %s13 = inlined_call_operand.vmem [shape: f32[2,8,64], index: 13, kind: output, shape index: {4}]
  %14 = xla_tuple %s9, %s10, %s11, %s12, %s13
  %s15 = sld [smem:[#allocation0]]
  $region101: #{text_transformer_forward.17} parent=0
    _
  %s17 = ssub.s32 1, %s15
  %s18 = scalar_select 0, %s17, %s15
  loop: start=0, step=1, limit=4
  $region2: #{text_transformer_forward.17} parent=0 // loop_pre_header
    _
  $region3: #{text_transformer_forward.17} parent=0 // loop_header
    %s20 = sphi 0, %s24
    %p21 = scmp.ge.s32.totalorder %s20, 4
    %s30 = sphi 0, %s32
    %s33 = sphi 0, %s30
    %s34 = sphi 0, %s33
    %s50 = sphi 0, %s34
    %s56 = sphi 0, %s58
    %s59 = sphi 0, %s56
    %s60 = sphi 0, %s59
    %s76 = sphi 0, %s60
    %s82 = sphi 0, %s84
    %s85 = sphi 0, %s82
    %s86 = sphi 0, %s85
    %s102 = sphi 0, %s86
    %s108 = sphi 0, %s110
    %s111 = sphi 0, %s108
    %s112 = sphi 0, %s111
    %s128 = sphi 0, %s112
    %s134 = sphi 0, %s136
    %s137 = sphi 0, %s134
    %s138 = sphi 0, %s137
    %s154 = sphi 0, %s138
    %s160 = sphi 0, %s162
    %s163 = sphi 0, %s160
    %s164 = sphi 0, %s163
    %s180 = sphi 0, %s164
    %s186 = sphi 0, %s188
    %s189 = sphi 0, %s186
    %s190 = sphi 0, %s189
    %s206 = sphi 0, %s190
    %s210 = sphi 0, %s210
    %s212 = sphi 0, %s210
    %s213 = sphi 0, %s212
    %s227 = sphi 0, %s213
    %s231 = sphi 0, %s231
    %s233 = sphi 0, %s231
    %s234 = sphi 0, %s233
    %s248 = sphi 0, %s234
    %s254 = sphi 0, %s256
    %s257 = sphi 0, %s254
    %s258 = sphi 0, %s257
    %s274 = sphi 0, %s258
    %s280 = sphi 0, %s282
    %s283 = sphi 0, %s280
    %s284 = sphi 0, %s283
    %s300 = sphi 0, %s284
    %s306 = sphi 0, %s308
    %s309 = sphi 0, %s306
    %s310 = sphi 0, %s309
    %s326 = sphi 0, %s310
    %s332 = sphi 0, %s334
    %s335 = sphi 0, %s332
    %s336 = sphi 0, %s335
    %s352 = sphi 0, %s336
    %s358 = sphi 0, %s360
    %s361 = sphi 0, %s358
    %s362 = sphi 0, %s361
    %s378 = sphi 0, %s362
  $region4: #{text_transformer_forward.17} parent=0 // loop_header_branch
    %23 = sbr.rel (%p21) target = $region8
  $region5: #{text_transformer_forward.17} parent=0 // loop_body
    %s25 = ssub.s32 %s20, 1
    %s26 = ssub.s32 %s20, 2
    %s27 = sadd.s32 %s20, 1
    %s28 = ssub.s32 %s20, %s27
    %p29 = scmp.eq.s32.totalorder %s28, 0
    %s31 = sadd.s32 %s30, 1
    %s32 = scalar_select %p29, %s30, %s31
    %p35 = pneg %p29
    %p36 = scmp.eq.s32.totalorder %s20, 1
    %p37 = por %p35, %p36
    %p38 = scmp.ne.s32.totalorder %s30, %s33
    %p39 = scmp.eq.s32.totalorder %s20, 0
    %p40 = por %p38, %p39
    %p41 = scmp.ne.s32.totalorder %s30, %s33
    %p42 = scmp.eq.s32.totalorder %s25, 1
    %p43 = por %p41, %p42
    %p44 = scmp.ne.s32.totalorder %s33, %s34
    %p45 = scmp.eq.s32.totalorder %s25, 0
    %p46 = por %p44, %p45
    %p47 = scmp.ne.s32.totalorder %s33, %s34
    %p48 = scmp.eq.s32.totalorder %s26, 1
    %p49 = por %p47, %p48
    %p51 = scmp.ne.s32.totalorder %s34, %s50
    %p52 = scmp.eq.s32.totalorder %s26, 0
    %p53 = por %p51, %p52
    %s54 = ssub.s32 %s20, %s27
    %p55 = scmp.eq.s32.totalorder %s54, 0
    %s57 = sadd.s32 %s56, 1
    %s58 = scalar_select %p55, %s56, %s57
    %p61 = pneg %p55
    %p62 = scmp.eq.s32.totalorder %s20, 1
    %p63 = por %p61, %p62
    %p64 = scmp.ne.s32.totalorder %s56, %s59
    %p65 = scmp.eq.s32.totalorder %s20, 0
    %p66 = por %p64, %p65
    %p67 = scmp.ne.s32.totalorder %s56, %s59
    %p68 = scmp.eq.s32.totalorder %s25, 1
    %p69 = por %p67, %p68
    %p70 = scmp.ne.s32.totalorder %s59, %s60
    %p71 = scmp.eq.s32.totalorder %s25, 0
    %p72 = por %p70, %p71
    %p73 = scmp.ne.s32.totalorder %s59, %s60
    %p74 = scmp.eq.s32.totalorder %s26, 1
    %p75 = por %p73, %p74
    %p77 = scmp.ne.s32.totalorder %s60, %s76
    %p78 = scmp.eq.s32.totalorder %s26, 0
    %p79 = por %p77, %p78
    %s80 = ssub.s32 %s20, %s27
    %p81 = scmp.eq.s32.totalorder %s80, 0
    %s83 = sadd.s32 %s82, 1
    %s84 = scalar_select %p81, %s82, %s83
    %p87 = pneg %p81
    %p88 = scmp.eq.s32.totalorder %s20, 1
    %p89 = por %p87, %p88
    %p90 = scmp.ne.s32.totalorder %s82, %s85
    %p91 = scmp.eq.s32.totalorder %s20, 0
    %p92 = por %p90, %p91
    %p93 = scmp.ne.s32.totalorder %s82, %s85
    %p94 = scmp.eq.s32.totalorder %s25, 1
    %p95 = por %p93, %p94
    %p96 = scmp.ne.s32.totalorder %s85, %s86
    %p97 = scmp.eq.s32.totalorder %s25, 0
    %p98 = por %p96, %p97
    %p99 = scmp.ne.s32.totalorder %s85, %s86
    %p100 = scmp.eq.s32.totalorder %s26, 1
    %p101 = por %p99, %p100
    %p103 = scmp.ne.s32.totalorder %s86, %s102
    %p104 = scmp.eq.s32.totalorder %s26, 0
    %p105 = por %p103, %p104
    %s106 = ssub.s32 %s20, %s27
    %p107 = scmp.eq.s32.totalorder %s106, 0
    %s109 = sadd.s32 %s108, 1
    %s110 = scalar_select %p107, %s108, %s109
    %p113 = pneg %p107
    %p114 = scmp.eq.s32.totalorder %s20, 1
    %p115 = por %p113, %p114
    %p116 = scmp.ne.s32.totalorder %s108, %s111
    %p117 = scmp.eq.s32.totalorder %s20, 0
    %p118 = por %p116, %p117
    %p119 = scmp.ne.s32.totalorder %s108, %s111
    %p120 = scmp.eq.s32.totalorder %s25, 1
    %p121 = por %p119, %p120
    %p122 = scmp.ne.s32.totalorder %s111, %s112
    %p123 = scmp.eq.s32.totalorder %s25, 0
    %p124 = por %p122, %p123
    %p125 = scmp.ne.s32.totalorder %s111, %s112
    %p126 = scmp.eq.s32.totalorder %s26, 1
    %p127 = por %p125, %p126
    %p129 = scmp.ne.s32.totalorder %s112, %s128
    %p130 = scmp.eq.s32.totalorder %s26, 0
    %p131 = por %p129, %p130
    %s132 = ssub.s32 %s20, %s27
    %p133 = scmp.eq.s32.totalorder %s132, 0
    %s135 = sadd.s32 %s134, 1
    %s136 = scalar_select %p133, %s134, %s135
    %p139 = pneg %p133
    %p140 = scmp.eq.s32.totalorder %s20, 1
    %p141 = por %p139, %p140
    %p142 = scmp.ne.s32.totalorder %s134, %s137
    %p143 = scmp.eq.s32.totalorder %s20, 0
    %p144 = por %p142, %p143
    %p145 = scmp.ne.s32.totalorder %s134, %s137
    %p146 = scmp.eq.s32.totalorder %s25, 1
    %p147 = por %p145, %p146
    %p148 = scmp.ne.s32.totalorder %s137, %s138
    %p149 = scmp.eq.s32.totalorder %s25, 0
    %p150 = por %p148, %p149
    %p151 = scmp.ne.s32.totalorder %s137, %s138
    %p152 = scmp.eq.s32.totalorder %s26, 1
    %p153 = por %p151, %p152
    %p155 = scmp.ne.s32.totalorder %s138, %s154
    %p156 = scmp.eq.s32.totalorder %s26, 0
    %p157 = por %p155, %p156
    %s158 = ssub.s32 %s20, %s27
    %p159 = scmp.eq.s32.totalorder %s158, 0
    %s161 = sadd.s32 %s160, 1
    %s162 = scalar_select %p159, %s160, %s161
    %p165 = pneg %p159
    %p166 = scmp.eq.s32.totalorder %s20, 1
    %p167 = por %p165, %p166
    %p168 = scmp.ne.s32.totalorder %s160, %s163
    %p169 = scmp.eq.s32.totalorder %s20, 0
    %p170 = por %p168, %p169
    %p171 = scmp.ne.s32.totalorder %s160, %s163
    %p172 = scmp.eq.s32.totalorder %s25, 1
    %p173 = por %p171, %p172
    %p174 = scmp.ne.s32.totalorder %s163, %s164
    %p175 = scmp.eq.s32.totalorder %s25, 0
    %p176 = por %p174, %p175
    %p177 = scmp.ne.s32.totalorder %s163, %s164
    %p178 = scmp.eq.s32.totalorder %s26, 1
    %p179 = por %p177, %p178
    %p181 = scmp.ne.s32.totalorder %s164, %s180
    %p182 = scmp.eq.s32.totalorder %s26, 0
    %p183 = por %p181, %p182
    %s184 = ssub.s32 %s20, %s27
    %p185 = scmp.eq.s32.totalorder %s184, 0
    %s187 = sadd.s32 %s186, 1
    %s188 = scalar_select %p185, %s186, %s187
    %p191 = pneg %p185
    %p192 = scmp.eq.s32.totalorder %s20, 1
    %p193 = por %p191, %p192
    %p194 = scmp.ne.s32.totalorder %s186, %s189
    %p195 = scmp.eq.s32.totalorder %s20, 0
    %p196 = por %p194, %p195
    %p197 = scmp.ne.s32.totalorder %s186, %s189
    %p198 = scmp.eq.s32.totalorder %s25, 1
    %p199 = por %p197, %p198
    %p200 = scmp.ne.s32.totalorder %s189, %s190
    %p201 = scmp.eq.s32.totalorder %s25, 0
    %p202 = por %p200, %p201
    %p203 = scmp.ne.s32.totalorder %s189, %s190
    %p204 = scmp.eq.s32.totalorder %s26, 1
    %p205 = por %p203, %p204
    %p207 = scmp.ne.s32.totalorder %s190, %s206
    %p208 = scmp.eq.s32.totalorder %s26, 0
    %p209 = por %p207, %p208
    %s211 = sadd.s32 %s210, 1
    %p214 = scmp.eq.s32.totalorder %s20, 1
    %p215 = scmp.ne.s32.totalorder %s210, %s212
    %p216 = scmp.eq.s32.totalorder %s20, 0
    %p217 = por %p215, %p216
    %p218 = scmp.ne.s32.totalorder %s210, %s212
    %p219 = scmp.eq.s32.totalorder %s25, 1
    %p220 = por %p218, %p219
    %p221 = scmp.ne.s32.totalorder %s212, %s213
    %p222 = scmp.eq.s32.totalorder %s25, 0
    %p223 = por %p221, %p222
    %p224 = scmp.ne.s32.totalorder %s212, %s213
    %p225 = scmp.eq.s32.totalorder %s26, 1
    %p226 = por %p224, %p225
    %p228 = scmp.ne.s32.totalorder %s213, %s227
    %p229 = scmp.eq.s32.totalorder %s26, 0
    %p230 = por %p228, %p229
    %s232 = sadd.s32 %s231, 1
    %p235 = scmp.eq.s32.totalorder %s20, 1
    %p236 = scmp.ne.s32.totalorder %s231, %s233
    %p237 = scmp.eq.s32.totalorder %s20, 0
    %p238 = por %p236, %p237
    %p239 = scmp.ne.s32.totalorder %s231, %s233
    %p240 = scmp.eq.s32.totalorder %s25, 1
    %p241 = por %p239, %p240
    %p242 = scmp.ne.s32.totalorder %s233, %s234
    %p243 = scmp.eq.s32.totalorder %s25, 0
    %p244 = por %p242, %p243
    %p245 = scmp.ne.s32.totalorder %s233, %s234
    %p246 = scmp.eq.s32.totalorder %s26, 1
    %p247 = por %p245, %p246
    %p249 = scmp.ne.s32.totalorder %s234, %s248
    %p250 = scmp.eq.s32.totalorder %s26, 0
    %p251 = por %p249, %p250
    %s252 = ssub.s32 %s20, %s27
    %p253 = scmp.eq.s32.totalorder %s252, 0
    %s255 = sadd.s32 %s254, 1
    %s256 = scalar_select %p253, %s254, %s255
    %p259 = pneg %p253
    %p260 = scmp.eq.s32.totalorder %s20, 1
    %p261 = por %p259, %p260
    %p262 = scmp.ne.s32.totalorder %s254, %s257
    %p263 = scmp.eq.s32.totalorder %s20, 0
    %p264 = por %p262, %p263
    %p265 = scmp.ne.s32.totalorder %s254, %s257
    %p266 = scmp.eq.s32.totalorder %s25, 1
    %p267 = por %p265, %p266
    %p268 = scmp.ne.s32.totalorder %s257, %s258
    %p269 = scmp.eq.s32.totalorder %s25, 0
    %p270 = por %p268, %p269
    %p271 = scmp.ne.s32.totalorder %s257, %s258
    %p272 = scmp.eq.s32.totalorder %s26, 1
    %p273 = por %p271, %p272
    %p275 = scmp.ne.s32.totalorder %s258, %s274
    %p276 = scmp.eq.s32.totalorder %s26, 0
    %p277 = por %p275, %p276
    %s278 = ssub.s32 %s20, %s27
    %p279 = scmp.eq.s32.totalorder %s278, 0
    %s281 = sadd.s32 %s280, 1
    %s282 = scalar_select %p279, %s280, %s281
    %p285 = pneg %p279
    %p286 = scmp.eq.s32.totalorder %s20, 1
    %p287 = por %p285, %p286
    %p288 = scmp.ne.s32.totalorder %s280, %s283
    %p289 = scmp.eq.s32.totalorder %s20, 0
    %p290 = por %p288, %p289
    %p291 = scmp.ne.s32.totalorder %s280, %s283
    %p292 = scmp.eq.s32.totalorder %s25, 1
    %p293 = por %p291, %p292
    %p294 = scmp.ne.s32.totalorder %s283, %s284
    %p295 = scmp.eq.s32.totalorder %s25, 0
    %p296 = por %p294, %p295
    %p297 = scmp.ne.s32.totalorder %s283, %s284
    %p298 = scmp.eq.s32.totalorder %s26, 1
    %p299 = por %p297, %p298
    %p301 = scmp.ne.s32.totalorder %s284, %s300
    %p302 = scmp.eq.s32.totalorder %s26, 0
    %p303 = por %p301, %p302
    %s304 = ssub.s32 %s20, %s27
    %p305 = scmp.eq.s32.totalorder %s304, 0
    %s307 = sadd.s32 %s306, 1
    %s308 = scalar_select %p305, %s306, %s307
    %p311 = pneg %p305
    %p312 = scmp.eq.s32.totalorder %s20, 1
    %p313 = por %p311, %p312
    %p314 = scmp.ne.s32.totalorder %s306, %s309
    %p315 = scmp.eq.s32.totalorder %s20, 0
    %p316 = por %p314, %p315
    %p317 = scmp.ne.s32.totalorder %s306, %s309
    %p318 = scmp.eq.s32.totalorder %s25, 1
    %p319 = por %p317, %p318
    %p320 = scmp.ne.s32.totalorder %s309, %s310
    %p321 = scmp.eq.s32.totalorder %s25, 0
    %p322 = por %p320, %p321
    %p323 = scmp.ne.s32.totalorder %s309, %s310
    %p324 = scmp.eq.s32.totalorder %s26, 1
    %p325 = por %p323, %p324
    %p327 = scmp.ne.s32.totalorder %s310, %s326
    %p328 = scmp.eq.s32.totalorder %s26, 0
    %p329 = por %p327, %p328
    %s330 = ssub.s32 %s20, %s27
    %p331 = scmp.eq.s32.totalorder %s330, 0
    %s333 = sadd.s32 %s332, 1
    %s334 = scalar_select %p331, %s332, %s333
    %p337 = pneg %p331
    %p338 = scmp.eq.s32.totalorder %s20, 1
    %p339 = por %p337, %p338
    %p340 = scmp.ne.s32.totalorder %s332, %s335
    %p341 = scmp.eq.s32.totalorder %s20, 0
    %p342 = por %p340, %p341
    %p343 = scmp.ne.s32.totalorder %s332, %s335
    %p344 = scmp.eq.s32.totalorder %s25, 1
    %p345 = por %p343, %p344
    %p346 = scmp.ne.s32.totalorder %s335, %s336
    %p347 = scmp.eq.s32.totalorder %s25, 0
    %p348 = por %p346, %p347
    %p349 = scmp.ne.s32.totalorder %s335, %s336
    %p350 = scmp.eq.s32.totalorder %s26, 1
    %p351 = por %p349, %p350
    %p353 = scmp.ne.s32.totalorder %s336, %s352
    %p354 = scmp.eq.s32.totalorder %s26, 0
    %p355 = por %p353, %p354
    %s356 = ssub.s32 %s20, %s27
    %p357 = scmp.eq.s32.totalorder %s356, 0
    %s359 = sadd.s32 %s358, 1
    %s360 = scalar_select %p357, %s358, %s359
    %p363 = pneg %p357
    %p364 = scmp.eq.s32.totalorder %s20, 1
    %p365 = por %p363, %p364
    %p366 = scmp.ne.s32.totalorder %s358, %s361
    %p367 = scmp.eq.s32.totalorder %s20, 0
    %p368 = por %p366, %p367
    %p369 = scmp.ne.s32.totalorder %s358, %s361
    %p370 = scmp.eq.s32.totalorder %s25, 1
    %p371 = por %p369, %p370
    %p372 = scmp.ne.s32.totalorder %s361, %s362
    %p373 = scmp.eq.s32.totalorder %s25, 0
    %p374 = por %p372, %p373
    %p375 = scmp.ne.s32.totalorder %s361, %s362
    %p376 = scmp.eq.s32.totalorder %s26, 1
    %p377 = por %p375, %p376
    %p379 = scmp.ne.s32.totalorder %s362, %s378
    %p380 = scmp.eq.s32.totalorder %s26, 0
    %p381 = por %p379, %p380
    %p382 = scmp.le.s32.totalorder 1, %s20
    %p383 = scmp.lt.s32.totalorder %s20, 3
    %p384 = pnand %p382, %p383
    %p385 = pneg %p384
    // Predicated region
    $region9: #{text_transformer_forward.17} parent=5 // pred_check
      _
    $region10: #{text_transformer_forward.17} parent=5 // pred_check_branch
      %387 = sbr.rel (%p384) target = $region12
    $region11: #{text_transformer_forward.17} parent=5 // pred_region
      %s388 = ssub.s32 %s20, 1
      // Predicated region
      $region13: #{text_transformer_forward.17} parent=11 // pred_check
        %p389 = pneg %p223
      $region14: #{text_transformer_forward.17} parent=11 // pred_check_branch
        %391 = sbr.rel (%p389) target = $region16
      $region15: #{text_transformer_forward.17} parent=11 // pred_region
        _
      $region16: #{text_transformer_forward.17} parent=11 // pred_fallthru
        _
      // Predicated region
      $region17: #{text_transformer_forward.17} parent=11 // pred_check
        %p392 = pneg %p244
      $region18: #{text_transformer_forward.17} parent=11 // pred_check_branch
        %394 = sbr.rel (%p392) target = $region20
      $region19: #{text_transformer_forward.17} parent=11 // pred_region
        _
      $region20: #{text_transformer_forward.17} parent=11 // pred_fallthru
        _
    $region12: #{text_transformer_forward.17} parent=5 // pred_fallthru
      _
    %p395 = scmp.lt.s32.totalorder %s20, 2
    // Predicated region
    $region21: #{text_transformer_forward.17} parent=5 // pred_check
      %p396 = pneg %p395
    $region22: #{text_transformer_forward.17} parent=5 // pred_check_branch
      %398 = sbr.rel (%p396) target = $region24
    $region23: #{text_transformer_forward.17} parent=5 // pred_region
      // Predicated region
      $region25: #{text_transformer_forward.17} parent=23 // pred_check
        %p399 = pneg %p40
      $region26: #{text_transformer_forward.17} parent=23 // pred_check_branch
        %401 = sbr.rel (%p399) target = $region28
      $region27: #{text_transformer_forward.17} parent=23 // pred_region
        %p402 = scmp.lt.s32.totalorder %s20, 1
        %s403 = scalar_select %p402, %s20, 1
        %s404 = smul.addr %s403, 4
        %s405 = scalar_lea.vmem %s0, %s404
      $region28: #{text_transformer_forward.17} parent=23 // pred_fallthru
        _
      // Predicated region
      $region29: #{text_transformer_forward.17} parent=23 // pred_check
        %p406 = pneg %p66
      $region30: #{text_transformer_forward.17} parent=23 // pred_check_branch
        %408 = sbr.rel (%p406) target = $region32
      $region31: #{text_transformer_forward.17} parent=23 // pred_region
        %p409 = scmp.lt.s32.totalorder %s20, 1
        %s410 = scalar_select %p409, %s20, 1
        %s411 = smul.addr %s410, 4
        %s412 = scalar_lea.vmem %s1, %s411
      $region32: #{text_transformer_forward.17} parent=23 // pred_fallthru
        _
      // Predicated region
      $region33: #{text_transformer_forward.17} parent=23 // pred_check
        %p413 = pneg %p92
      $region34: #{text_transformer_forward.17} parent=23 // pred_check_branch
        %415 = sbr.rel (%p413) target = $region36
      $region35: #{text_transformer_forward.17} parent=23 // pred_region
        %p416 = scmp.lt.s32.totalorder %s20, 1
        %s417 = scalar_select %p416, %s20, 1
        %s418 = smul.addr %s417, 4
        %s419 = scalar_lea.vmem %s2, %s418
      $region36: #{text_transformer_forward.17} parent=23 // pred_fallthru
        _
      // Predicated region
      $region37: #{text_transformer_forward.17} parent=23 // pred_check
        %p420 = pneg %p118
      $region38: #{text_transformer_forward.17} parent=23 // pred_check_branch
        %422 = sbr.rel (%p420) target = $region40
      $region39: #{text_transformer_forward.17} parent=23 // pred_region
        %p423 = scmp.lt.s32.totalorder %s20, 1
        %s424 = scalar_select %p423, %s20, 1
        %s425 = smul.addr %s424, 8
        %s426 = scalar_lea.vmem %s3, %s425
      $region40: #{text_transformer_forward.17} parent=23 // pred_fallthru
        _
      // Predicated region
      $region41: #{text_transformer_forward.17} parent=23 // pred_check
        %p427 = pneg %p144
      $region42: #{text_transformer_forward.17} parent=23 // pred_check_branch
        %429 = sbr.rel (%p427) target = $region44
      $region43: #{text_transformer_forward.17} parent=23 // pred_region
        %p430 = scmp.lt.s32.totalorder %s20, 1
        %s431 = scalar_select %p430, %s20, 1
        %s432 = smul.addr %s431, 8
        %s433 = scalar_lea.vmem %s4, %s432
      $region44: #{text_transformer_forward.17} parent=23 // pred_fallthru
        _
      // Predicated region
      $region45: #{text_transformer_forward.17} parent=23 // pred_check
        %p434 = pneg %p170
      $region46: #{text_transformer_forward.17} parent=23 // pred_check_branch
        %436 = sbr.rel (%p434) target = $region48
      $region47: #{text_transformer_forward.17} parent=23 // pred_region
        %p437 = scmp.lt.s32.totalorder %s20, 1
        %s438 = scalar_select %p437, %s20, 1
        %s439 = smul.addr %s438, 8
        %s440 = scalar_lea.vmem %s5, %s439
      $region48: #{text_transformer_forward.17} parent=23 // pred_fallthru
        _
      // Predicated region
      $region49: #{text_transformer_forward.17} parent=23 // pred_check
        %p441 = pneg %p196
      $region50: #{text_transformer_forward.17} parent=23 // pred_check_branch
        %443 = sbr.rel (%p441) target = $region52
      $region51: #{text_transformer_forward.17} parent=23 // pred_region
        %p444 = scmp.lt.s32.totalorder %s20, 1
        %s445 = scalar_select %p444, %s20, 1
        %s446 = smul.addr %s445, 8
        %s447 = scalar_lea.vmem %s6, %s446
      $region52: #{text_transformer_forward.17} parent=23 // pred_fallthru
        _
    $region24: #{text_transformer_forward.17} parent=5 // pred_fallthru
      _
    %p448 = scmp.le.s32.totalorder 1, %s20
    %p449 = scmp.lt.s32.totalorder %s20, 3
    %p450 = pnand %p448, %p449
    %p451 = pneg %p450
    // Predicated region
    $region53: #{text_transformer_forward.17} parent=5 // pred_check
      _
    $region54: #{text_transformer_forward.17} parent=5 // pred_check_branch
      %453 = sbr.rel (%p450) target = $region56
    $region55: #{text_transformer_forward.17} parent=5 // pred_region
      %s454 = ssub.s32 %s20, 1
      %p455 = scmp.lt.s32.totalorder %s25, 1
      %s456 = scalar_select %p455, %s25, 1
      %s457 = smul.addr %s456, 4
      %s458 = scalar_lea.vmem %s0, %s457
      %p459 = pneg %p46
      %p460 = pneg %p43
      %p461 = scmp.lt.s32.totalorder %s25, 1
      %s462 = scalar_select %p461, %s25, 1
      %s463 = smul.addr %s462, 4
      %s464 = scalar_lea.vmem %s1, %s463
      %p465 = pneg %p72
      %p466 = pneg %p69
      %p467 = scmp.lt.s32.totalorder %s25, 1
      %s468 = scalar_select %p467, %s25, 1
      %s469 = smul.addr %s468, 4
      %s470 = scalar_lea.vmem %s2, %s469
      %p471 = pneg %p98
      %p472 = pneg %p95
      %p473 = scmp.lt.s32.totalorder %s25, 1
      %s474 = scalar_select %p473, %s25, 1
      %s475 = smul.addr %s474, 8
      %s476 = scalar_lea.vmem %s3, %s475
      %p477 = pneg %p124
      %p478 = pneg %p121
      %p479 = scmp.lt.s32.totalorder %s25, 1
      %s480 = scalar_select %p479, %s25, 1
      %s481 = smul.addr %s480, 8
      %s482 = scalar_lea.vmem %s4, %s481
      %p483 = pneg %p150
      %p484 = pneg %p147
      %p485 = scmp.lt.s32.totalorder %s25, 1
      %s486 = scalar_select %p485, %s25, 1
      %s487 = smul.addr %s486, 8
      %s488 = scalar_lea.vmem %s5, %s487
      %p489 = pneg %p176
      %p490 = pneg %p173
      %p491 = scmp.lt.s32.totalorder %s25, 1
      %s492 = scalar_select %p491, %s25, 1
      %s493 = smul.addr %s492, 8
      %s494 = scalar_lea.vmem %s6, %s493
      %p495 = pneg %p202
      %p496 = pneg %p199
      %p497 = pneg %p223
      %p498 = pneg %p220
      %p499 = pneg %p244
      %p500 = pneg %p241
      %p501 = pneg %p270
      %p502 = pneg %p267
      %p503 = scmp.lt.s32.totalorder %s25, 1
      %s504 = scalar_select %p503, %s25, 1
      %s505 = smul.addr %s504, 4
      %s506 = scalar_lea.vmem %s9, %s505
      %p507 = pneg %p296
      %p508 = pneg %p293
      %p509 = scmp.lt.s32.totalorder %s25, 1
      %s510 = scalar_select %p509, %s25, 1
      %s511 = smul.addr %s510, 8
      %s512 = scalar_lea.vmem %s10, %s511
      %p513 = pneg %p322
      %p514 = pneg %p319
      %p515 = scmp.lt.s32.totalorder %s25, 1
      %s516 = scalar_select %p515, %s25, 1
      %s517 = smul.addr %s516, 8
      %s518 = scalar_lea.vmem %s11, %s517
      %p519 = pneg %p348
      %p520 = pneg %p345
      %p521 = scmp.lt.s32.totalorder %s25, 1
      %s522 = scalar_select %p521, %s25, 1
      %s523 = smul.addr %s522, 8
      %s524 = scalar_lea.vmem %s12, %s523
      %p525 = pneg %p374
      %p526 = pneg %p371
      %p527 = scmp.lt.s32.totalorder %s25, 1
      %s528 = scalar_select %p527, %s25, 1
      %s529 = smul.addr %s528, 8
      %s530 = scalar_lea.vmem %s13, %s529
      %p531 = scmp.lt.s32.totalorder %s25, 1
      %s532 = scalar_select %p531, %s25, 1
      %s533 = smul.addr %s532, 4
      %s534 = scalar_lea.vmem %s0, %s533
      %p535 = scmp.lt.s32.totalorder %s25, 1
      %s536 = scalar_select %p535, %s25, 1
      %s537 = smul.addr %s536, 4
      %s538 = scalar_lea.vmem %s1, %s537
      %p539 = scmp.lt.s32.totalorder %s25, 1
      %s540 = scalar_select %p539, %s25, 1
      %s541 = smul.addr %s540, 4
      %s542 = scalar_lea.vmem %s2, %s541
      %p543 = scmp.lt.s32.totalorder %s25, 1
      %s544 = scalar_select %p543, %s25, 1
      %s545 = smul.addr %s544, 8
      %s546 = scalar_lea.vmem %s3, %s545
      %p547 = scmp.lt.s32.totalorder %s25, 1
      %s548 = scalar_select %p547, %s25, 1
      %s549 = smul.addr %s548, 8
      %s550 = scalar_lea.vmem %s4, %s549
      %p551 = scmp.lt.s32.totalorder %s25, 1
      %s552 = scalar_select %p551, %s25, 1
      %s553 = smul.addr %s552, 8
      %s554 = scalar_lea.vmem %s5, %s553
      %p555 = scmp.lt.s32.totalorder %s25, 1
      %s556 = scalar_select %p555, %s25, 1
      %s557 = smul.addr %s556, 8
      %s558 = scalar_lea.vmem %s6, %s557
      %p559 = scmp.lt.s32.totalorder %s25, 1
      %s560 = scalar_select %p559, %s25, 1
      %s561 = smul.addr %s560, 4
      %s562 = scalar_lea.vmem %s9, %s561
      %p563 = scmp.lt.s32.totalorder %s25, 1
      %s564 = scalar_select %p563, %s25, 1
      %s565 = smul.addr %s564, 8
      %s566 = scalar_lea.vmem %s10, %s565
      %p567 = scmp.lt.s32.totalorder %s25, 1
      %s568 = scalar_select %p567, %s25, 1
      %s569 = smul.addr %s568, 8
      %s570 = scalar_lea.vmem %s11, %s569
      %p571 = scmp.lt.s32.totalorder %s25, 1
      %s572 = scalar_select %p571, %s25, 1
      %s573 = smul.addr %s572, 8
      %s574 = scalar_lea.vmem %s12, %s573
      %p575 = scmp.lt.s32.totalorder %s25, 1
      %s576 = scalar_select %p575, %s25, 1
      %s577 = smul.addr %s576, 8
      %s578 = scalar_lea.vmem %s13, %s577
      %v580 = vld [vmem:[%s534] sm:$0xf]
      %v581 = vunpack.c.l.bf16 %v580
      %v582 = vld [vmem:[%s550] sm:$0xff]
      %v583 = vld [vmem:[%s546] sm:$0xff]
      %v584 = vsub.f32 %v583, %v582
      %v585 = vrcp.pop 2.0
      %v586 = vmul.f32 %v584, %v585
      %v587 = vadd.f32 %v582, %v586
      %v588 = vsub.f32 %v587, 1.0
      %vm589 = vcmp.ge.f32.partialorder %v588, 0.0
      %v590 = vsel %vm589, 1, 0
      %v591 = vcvt.s32.f32 %v590
      %v592 = vsub.f32 1.0, %v591
      %v593 = vmul.f32 %v587, %v592
      %vm594 = vcmask 523264
      %595 = vst.msk [vmem:[%s570] sm:$0xff] %vm594, %v593
      %v596 = vmul.f32 %v591, 0.6
      %v597 = vmul.f32 %v581, 0.4
      %v598 = vadd.f32 %v596, %v597
      %v599 = vld [vmem:[%s554] sm:$0xff]
      %v600 = vsub.f32 %v598, %v599
      %v601 = vmul.f32 %v600, %v585
      %v602 = vadd.f32 %v599, %v601
      %v603 = vsub.f32 %v602, 1.0
      %vm604 = vcmp.ge.f32.partialorder %v603, 0.0
      %v605 = vsel %vm604, 1, 0
      %v606 = vcvt.s32.f32 %v605
      %v607 = vsub.f32 1.0, %v606
      %v608 = vmul.f32 %v602, %v607
      %609 = vst.msk [vmem:[%s574] sm:$0xff] %vm594, %v608
      %v610 = vld [vmem:[%s538] sm:$0xf]
      %v611 = vld [vmem:[%s542] sm:$0xf]
      %v612 = vunpack.c.l.bf16 %v611
      %v613 = vpack.c.bf16 %v606, %v606
      %v615 = vsel %vm594, %v613, 0
      %v618 = vsel %vm594, %v610, 0
      %620 = vmatprep.subr.bf16.mxu0 0
      %621 = vmatpush1.bf16.xpose.msra.mxu0 %v618
      %622 = vmatprep.subr.bf16.mxu0 0
      %623 = vmatpush1.bf16.xpose.msra.mxu0 0
      %624 = vmatprep.subr.bf16.mxu0 0
      %625 = vmatpush1.bf16.xpose.msra.mxu0 0
      %626 = vmatprep.subr.bf16.mxu0 0
      %627 = vmatpush1.bf16.xpose.msra.mxu0 0
      %628 = vmatprep.subr.bf16.mxu0 0
      %629 = vmatpush1.bf16.xpose.msra.mxu0 0
      %630 = vmatprep.subr.bf16.mxu0 0
      %631 = vmatpush1.bf16.xpose.msra.mxu0 0
      %632 = vmatprep.subr.bf16.mxu0 0
      %633 = vmatpush1.bf16.xpose.msra.mxu0 0
      %634 = vmatprep.subr.bf16.mxu0 0
      %635 = vmatpush1.bf16.xpose.msra.mxu0 0
      %636 = vmatprep.subr.bf16.mxu0 0
      %637 = vmatpush1.bf16.xpose.msra.mxu0 0
      %638 = vmatprep.subr.bf16.mxu0 0
      %639 = vmatpush1.bf16.xpose.msra.mxu0 0
      %640 = vmatprep.subr.bf16.mxu0 0
      %641 = vmatpush1.bf16.xpose.msra.mxu0 0
      %642 = vmatprep.subr.bf16.mxu0 0
      %643 = vmatpush1.bf16.xpose.msra.mxu0 0
      %644 = vmatprep.subr.bf16.mxu0 0
      %645 = vmatpush1.bf16.xpose.msra.mxu0 0
      %646 = vmatprep.subr.bf16.mxu0 0
      %647 = vmatpush1.bf16.xpose.msra.mxu0 0
      %648 = vmatprep.subr.bf16.mxu0 0
      %649 = vmatpush1.bf16.xpose.msra.mxu0 0
      %650 = vmatprep.subr.bf16.mxu0 0
      %651 = vmatpush1.bf16.xpose.msra.mxu0 0
      %652 = vmatprep.mubr.bf16.mxu0 0
      %653 = vmatmul.mubr.bf16.gmra.mrb[0].mxu0 %v615
      %v654 = vpop.f32.mrb[0].mxu0
      %v655 = vadd.f32 0.0, %v654
      %v656 = vpop.f32.mrb[0].mxu0
      %v657 = vpop.f32.mrb[0].mxu0
      %v658 = vpop.f32.mrb[0].mxu0
      %659 = vdwg.mxu0
      %v660 = vmul.f32 %v655, 0.125
      %vm661 = vcmask 64512
      %v663 = vsel %vm661, %v660, 0
      %665 = vmatprep.subr.mxu0 0.0
      %666 = vmatpush1.msra.mxu0 %v612
      %667 = vmatprep.subr.mxu0 0.0
      %668 = vmatpush1.msra.mxu0 0.0
      %669 = vmatprep.subr.mxu0 0.0
      %670 = vmatpush1.msra.mxu0 0.0
      %671 = vmatprep.subr.mxu0 0.0
      %672 = vmatpush1.msra.mxu0 0.0
      %673 = vmatprep.subr.mxu0 0.0
      %674 = vmatpush1.msra.mxu0 0.0
      %675 = vmatprep.subr.mxu0 0.0
      %676 = vmatpush1.msra.mxu0 0.0
      %677 = vmatprep.subr.mxu0 0.0
      %678 = vmatpush1.msra.mxu0 0.0
      %679 = vmatprep.subr.mxu0 0.0
      %680 = vmatpush1.msra.mxu0 0.0
      %681 = vmatprep.subr.mxu0 0.0
      %682 = vmatpush1.msra.mxu0 0.0
      %683 = vmatprep.subr.mxu0 0.0
      %684 = vmatpush1.msra.mxu0 0.0
      %685 = vmatprep.subr.mxu0 0.0
      %686 = vmatpush1.msra.mxu0 0.0
      %687 = vmatprep.subr.mxu0 0.0
      %688 = vmatpush1.msra.mxu0 0.0
      %689 = vmatprep.subr.mxu0 0.0
      %690 = vmatpush1.msra.mxu0 0.0
      %691 = vmatprep.subr.mxu0 0.0
      %692 = vmatpush1.msra.mxu0 0.0
      %693 = vmatprep.subr.mxu0 0.0
      %694 = vmatpush1.msra.mxu0 0.0
      %695 = vmatprep.subr.mxu0 0.0
      %696 = vmatpush1.msra.mxu0 0.0
      %697 = vmatprep.subr.mxu0 0.0
      %698 = vmatpush1.msra.mxu0 0.0
      %699 = vmatprep.subr.mxu0 0.0
      %700 = vmatpush1.msra.mxu0 0.0
      %701 = vmatprep.subr.mxu0 0.0
      %702 = vmatpush1.msra.mxu0 0.0
      %703 = vmatprep.subr.mxu0 0.0
      %704 = vmatpush1.msra.mxu0 0.0
      %705 = vmatprep.subr.mxu0 0.0
      %706 = vmatpush1.msra.mxu0 0.0
      %707 = vmatprep.subr.mxu0 0.0
      %708 = vmatpush1.msra.mxu0 0.0
      %709 = vmatprep.subr.mxu0 0.0
      %710 = vmatpush1.msra.mxu0 0.0
      %711 = vmatprep.subr.mxu0 0.0
      %712 = vmatpush1.msra.mxu0 0.0
      %713 = vmatprep.subr.mxu0 0.0
      %714 = vmatpush1.msra.mxu0 0.0
      %715 = vmatprep.subr.mxu0 0.0
      %716 = vmatpush1.msra.mxu0 0.0
      %717 = vmatprep.subr.mxu0 0.0
      %718 = vmatpush1.msra.mxu0 0.0
      %719 = vmatprep.subr.mxu0 0.0
      %720 = vmatpush1.msra.mxu0 0.0
      %721 = vmatprep.subr.mxu0 0.0
      %722 = vmatpush1.msra.mxu0 0.0
      %723 = vmatprep.subr.mxu0 0.0
      %724 = vmatpush1.msra.mxu0 0.0
      %725 = vmatprep.subr.mxu0 0.0
      %726 = vmatpush1.msra.mxu0 0.0
      %727 = vmatprep.subr.mxu0 0.0
      %728 = vmatpush1.msra.mxu0 0.0
      %729 = vmatprep.mubr.f32.mxu0 0.0
      %730 = vmatmul.mubr.f32.gmra.mrb[0].mxu0 %v663
      %v731 = vpop.f32.mrb[0].mxu0
      %v732 = vadd.f32 0.0, %v731
      %v733 = vpop.f32.mrb[0].mxu0
      %734 = vdwg.mxu0
      %v735 = vld [vmem:[%s558] sm:$0xff]
      %v736 = vsub.f32 %v732, %v735
      %v737 = vmul.f32 %v736, %v585
      %v738 = vadd.f32 %v735, %v737
      %v739 = vsub.f32 %v738, 1.0
      %vm740 = vcmp.ge.f32.partialorder %v739, 0.0
      %v741 = vsel %vm740, 1, 0
      %v742 = vcvt.s32.f32 %v741
      %v743 = vsub.f32 1.0, %v742
      %v744 = vmul.f32 %v738, %v743
      %745 = vst.msk [vmem:[%s578] sm:$0xff] %vm594, %v744
      %v746 = vpack.c.bf16 %v742, %v742
      %vm747 = vcmask 519168
      %748 = vst.msk [vmem:[%s562] sm:$0xf] %vm747, %v746
      %v750 = vrot.slane %v606, 7
      %vm752 = vcmask 1040384
      %v753 = vsel %vm752, 0.0, %v750
      %v754 = vrot.slane %v606, 1
      %vm756 = vcmask 1046528
      %v757 = vsel %vm756, %v754, 0.0
      %758 = vrot.lane.b32.xlu0 %v606, 64
      %v759 = vpop.permute.xlu0 %758
      %v761 = vsel %vm594, %v753, %v759
      %v762 = vld [vmem:[%s7] sm:$0xff]
      %v763 = vld [vmem:[%s7 + $0x8] sm:$0xff]
      %v764 = vld [vmem:[%s7 + $0x10] sm:$0xff]
      %v765 = vld [vmem:[%s7 + $0x18] sm:$0xff]
      %v766 = vld [vmem:[%s7 + $0x20] sm:$0xff]
      %v767 = vld [vmem:[%s7 + $0x28] sm:$0xff]
      %v768 = vld [vmem:[%s7 + $0x30] sm:$0xff]
      %v769 = vld [vmem:[%s7 + $0x38] sm:$0xff]
      %v770 = vld [vmem:[%s7 + $0x40] sm:$0xff]
      %v771 = vld [vmem:[%s7 + $0x48] sm:$0xff]
      %v772 = vld [vmem:[%s7 + $0x50] sm:$0xff]
      %v773 = vld [vmem:[%s7 + $0x58] sm:$0xff]
      %v774 = vld [vmem:[%s7 + $0x60] sm:$0xff]
      %v775 = vld [vmem:[%s7 + $0x68] sm:$0xff]
      %v776 = vld [vmem:[%s7 + $0x70] sm:$0xff]
      %v777 = vld [vmem:[%s7 + $0x78] sm:$0xff]
      %v778 = vld [vmem:[%s7 + $0x80] sm:$0xff]
      %v779 = vld [vmem:[%s7 + $0x88] sm:$0xff]
      %v780 = vld [vmem:[%s7 + $0x90] sm:$0xff]
      %v781 = vld [vmem:[%s7 + $0x98] sm:$0xff]
      %v782 = vld [vmem:[%s7 + $0xa0] sm:$0xff]
      %v783 = vld [vmem:[%s7 + $0xa8] sm:$0xff]
      %v784 = vld [vmem:[%s7 + $0xb0] sm:$0xff]
      %v785 = vld [vmem:[%s7 + $0xb8] sm:$0xff]
      %v786 = vld [vmem:[%s8] sm:$0x1]
      %v788 = vlaneseq
      %v789 = vshrl.u32 %v788, 7
      %v790 = vsub.s32 0, %v789
      %v791 = vrot.slane %v786, %v790
      %v794 = vsel %vm594, %v757, 0
      %796 = vmatprep.subr.mxu0 0.0
      %797 = vmatpush1.msra.mxu0 %v762
      %798 = vmatprep.subr.mxu0 0.0
      %799 = vmatpush1.msra.mxu0 %v763
      %800 = vmatprep.subr.mxu0 0.0
      %801 = vmatpush1.msra.mxu0 %v764
      %802 = vmatprep.subr.mxu0 0.0
      %803 = vmatpush1.msra.mxu0 %v765
      %804 = vmatprep.subr.mxu0 0.0
      %805 = vmatpush1.msra.mxu0 %v766
      %806 = vmatprep.subr.mxu0 0.0
      %807 = vmatpush1.msra.mxu0 %v767
      %808 = vmatprep.subr.mxu0 0.0
      %809 = vmatpush1.msra.mxu0 %v768
      %810 = vmatprep.subr.mxu0 0.0
      %811 = vmatpush1.msra.mxu0 %v769
      %812 = vmatprep.subr.mxu0 0.0
      %813 = vmatpush1.msra.mxu0 %v770
      %814 = vmatprep.subr.mxu0 0.0
      %815 = vmatpush1.msra.mxu0 %v771
      %816 = vmatprep.subr.mxu0 0.0
      %817 = vmatpush1.msra.mxu0 %v772
      %818 = vmatprep.subr.mxu0 0.0
      %819 = vmatpush1.msra.mxu0 %v773
      %820 = vmatprep.subr.mxu0 0.0
      %821 = vmatpush1.msra.mxu0 %v774
      %822 = vmatprep.subr.mxu0 0.0
      %823 = vmatpush1.msra.mxu0 %v775
      %824 = vmatprep.subr.mxu0 0.0
      %825 = vmatpush1.msra.mxu0 %v776
      %826 = vmatprep.subr.mxu0 0.0
      %827 = vmatpush1.msra.mxu0 %v777
      %828 = vmatprep.subr.mxu0 0.0
      %829 = vmatpush1.msra.mxu0 %v778
      %830 = vmatprep.subr.mxu0 0.0
      %831 = vmatpush1.msra.mxu0 %v779
      %832 = vmatprep.subr.mxu0 0.0
      %833 = vmatpush1.msra.mxu0 %v780
      %834 = vmatprep.subr.mxu0 0.0
      %835 = vmatpush1.msra.mxu0 %v781
      %836 = vmatprep.subr.mxu0 0.0
      %837 = vmatpush1.msra.mxu0 %v782
      %838 = vmatprep.subr.mxu0 0.0
      %839 = vmatpush1.msra.mxu0 %v783
      %840 = vmatprep.subr.mxu0 0.0
      %841 = vmatpush1.msra.mxu0 %v784
      %842 = vmatprep.subr.mxu0 0.0
      %843 = vmatpush1.msra.mxu0 %v785
      %844 = vmatprep.subr.mxu0 0.0
      %845 = vmatpush1.msra.mxu0 0.0
      %846 = vmatprep.subr.mxu0 0.0
      %847 = vmatpush1.msra.mxu0 0.0
      %848 = vmatprep.subr.mxu0 0.0
      %849 = vmatpush1.msra.mxu0 0.0
      %850 = vmatprep.subr.mxu0 0.0
      %851 = vmatpush1.msra.mxu0 0.0
      %852 = vmatprep.subr.mxu0 0.0
      %853 = vmatpush1.msra.mxu0 0.0
      %854 = vmatprep.subr.mxu0 0.0
      %855 = vmatpush1.msra.mxu0 0.0
      %856 = vmatprep.subr.mxu0 0.0
      %857 = vmatpush1.msra.mxu0 0.0
      %858 = vmatprep.subr.mxu0 0.0
      %859 = vmatpush1.msra.mxu0 0.0
      %860 = vmatprep.mubr.f32.mxu0 %v794
      %861 = vmatmul.mubr.f32.gmra.mrb[0].mxu0 %v761
      %v862 = vpop.f32.mrb[0].mxu0
      %v863 = vadd.f32 %v791, %v862
      %v864 = vpop.f32.mrb[0].mxu0
      %865 = vdwg.mxu0
      %866 = vst.msk [vmem:[%s566] sm:$0xff] %vm594, %v863
      %p867 = scmp.lt.s32.totalorder %s25, 1
      %s868 = scalar_select %p867, %s25, 1
      %s869 = smul.addr %s868, 4
      %s870 = scalar_lea.vmem %s9, %s869
      %p871 = scmp.lt.s32.totalorder %s25, 1
      %s872 = scalar_select %p871, %s25, 1
      %s873 = smul.addr %s872, 8
      %s874 = scalar_lea.vmem %s10, %s873
      %p875 = scmp.lt.s32.totalorder %s25, 1
      %s876 = scalar_select %p875, %s25, 1
      %s877 = smul.addr %s876, 8
      %s878 = scalar_lea.vmem %s11, %s877
      %p879 = scmp.lt.s32.totalorder %s25, 1
      %s880 = scalar_select %p879, %s25, 1
      %s881 = smul.addr %s880, 8
      %s882 = scalar_lea.vmem %s12, %s881
      %p883 = scmp.lt.s32.totalorder %s25, 1
      %s884 = scalar_select %p883, %s25, 1
      %s885 = smul.addr %s884, 8
      %s886 = scalar_lea.vmem %s13, %s885
      // Predicated region
      $region57: #{text_transformer_forward.17} parent=55 // pred_check
        %p887 = pneg %p267
      $region58: #{text_transformer_forward.17} parent=55 // pred_check_branch
        %889 = sbr.rel (%p887) target = $region60
      $region59: #{text_transformer_forward.17} parent=55 // pred_region
        _
      $region60: #{text_transformer_forward.17} parent=55 // pred_fallthru
        _
      // Predicated region
      $region61: #{text_transformer_forward.17} parent=55 // pred_check
        %p890 = pneg %p293
      $region62: #{text_transformer_forward.17} parent=55 // pred_check_branch
        %892 = sbr.rel (%p890) target = $region64
      $region63: #{text_transformer_forward.17} parent=55 // pred_region
        _
      $region64: #{text_transformer_forward.17} parent=55 // pred_fallthru
        _
      // Predicated region
      $region65: #{text_transformer_forward.17} parent=55 // pred_check
        %p893 = pneg %p319
      $region66: #{text_transformer_forward.17} parent=55 // pred_check_branch
        %895 = sbr.rel (%p893) target = $region68
      $region67: #{text_transformer_forward.17} parent=55 // pred_region
        _
      $region68: #{text_transformer_forward.17} parent=55 // pred_fallthru
        _
      // Predicated region
      $region69: #{text_transformer_forward.17} parent=55 // pred_check
        %p896 = pneg %p345
      $region70: #{text_transformer_forward.17} parent=55 // pred_check_branch
        %898 = sbr.rel (%p896) target = $region72
      $region71: #{text_transformer_forward.17} parent=55 // pred_region
        _
      $region72: #{text_transformer_forward.17} parent=55 // pred_fallthru
        _
      // Predicated region
      $region73: #{text_transformer_forward.17} parent=55 // pred_check
        %p899 = pneg %p371
      $region74: #{text_transformer_forward.17} parent=55 // pred_check_branch
        %901 = sbr.rel (%p899) target = $region76
      $region75: #{text_transformer_forward.17} parent=55 // pred_region
        _
      $region76: #{text_transformer_forward.17} parent=55 // pred_fallthru
        _
    $region56: #{text_transformer_forward.17} parent=5 // pred_fallthru
      _
    %p902 = scmp.le.s32.totalorder 2, %s20
    // Predicated region
    $region77: #{text_transformer_forward.17} parent=5 // pred_check
      %p903 = pneg %p902
    $region78: #{text_transformer_forward.17} parent=5 // pred_check_branch
      %905 = sbr.rel (%p903) target = $region80
    $region79: #{text_transformer_forward.17} parent=5 // pred_region
      %s906 = ssub.s32 %s20, 2
      // Predicated region
      $region81: #{text_transformer_forward.17} parent=79 // pred_check
        %p907 = pneg %p273
      $region82: #{text_transformer_forward.17} parent=79 // pred_check_branch
        %909 = sbr.rel (%p907) target = $region84
      $region83: #{text_transformer_forward.17} parent=79 // pred_region
        %p910 = scmp.lt.s32.totalorder %s26, 1
        %s911 = scalar_select %p910, %s26, 1
        %s912 = smul.addr %s911, 4
        %s913 = scalar_lea.vmem %s9, %s912
      $region84: #{text_transformer_forward.17} parent=79 // pred_fallthru
        _
      // Predicated region
      $region85: #{text_transformer_forward.17} parent=79 // pred_check
        %p914 = pneg %p299
      $region86: #{text_transformer_forward.17} parent=79 // pred_check_branch
        %916 = sbr.rel (%p914) target = $region88
      $region87: #{text_transformer_forward.17} parent=79 // pred_region
        %p917 = scmp.lt.s32.totalorder %s26, 1
        %s918 = scalar_select %p917, %s26, 1
        %s919 = smul.addr %s918, 8
        %s920 = scalar_lea.vmem %s10, %s919
      $region88: #{text_transformer_forward.17} parent=79 // pred_fallthru
        _
      // Predicated region
      $region89: #{text_transformer_forward.17} parent=79 // pred_check
        %p921 = pneg %p325
      $region90: #{text_transformer_forward.17} parent=79 // pred_check_branch
        %923 = sbr.rel (%p921) target = $region92
      $region91: #{text_transformer_forward.17} parent=79 // pred_region
        %p924 = scmp.lt.s32.totalorder %s26, 1
        %s925 = scalar_select %p924, %s26, 1
        %s926 = smul.addr %s925, 8
        %s927 = scalar_lea.vmem %s11, %s926
      $region92: #{text_transformer_forward.17} parent=79 // pred_fallthru
        _
      // Predicated region
      $region93: #{text_transformer_forward.17} parent=79 // pred_check
        %p928 = pneg %p351
      $region94: #{text_transformer_forward.17} parent=79 // pred_check_branch
        %930 = sbr.rel (%p928) target = $region96
      $region95: #{text_transformer_forward.17} parent=79 // pred_region
        %p931 = scmp.lt.s32.totalorder %s26, 1
        %s932 = scalar_select %p931, %s26, 1
        %s933 = smul.addr %s932, 8
        %s934 = scalar_lea.vmem %s12, %s933
      $region96: #{text_transformer_forward.17} parent=79 // pred_fallthru
        _
      // Predicated region
      $region97: #{text_transformer_forward.17} parent=79 // pred_check
        %p935 = pneg %p377
      $region98: #{text_transformer_forward.17} parent=79 // pred_check_branch
        %937 = sbr.rel (%p935) target = $region100
      $region99: #{text_transformer_forward.17} parent=79 // pred_region
        %p938 = scmp.lt.s32.totalorder %s26, 1
        %s939 = scalar_select %p938, %s26, 1
        %s940 = smul.addr %s939, 8
        %s941 = scalar_lea.vmem %s13, %s940
      $region100: #{text_transformer_forward.17} parent=79 // pred_fallthru
        _
    $region80: #{text_transformer_forward.17} parent=5 // pred_fallthru
      _
  $region6: #{text_transformer_forward.17} parent=0 // loop_footer
    %s24 = sadd.s32 1, %s20
  $region7: #{text_transformer_forward.17} parent=0 // loop_footer_branch
    %19 = sbr.rel target = $region3
  $region8: #{text_transformer_forward.17} parent=0 // loop_exit
    _

// kernel: text_transformer_forward.29
$region0: #{text_transformer_forward.29}
  #allocation0 [shape = 'u32[]', space=smem, size = 0x4, offset = 0x4, fixed_abs, tag = 'smem constant byte address 0x4 - core index']
  #allocation1 [shape = 'u32[144,128]{1,0:T(1,128)}', space=vmem, size = 0x12000, scoped, tag = 'internal scratch']
  %s0 = inlined_call_operand.vmem [shape: f32[4,2,64], index: 0, kind: input, shape index: {}]
  %s1 = inlined_call_operand.vmem [shape: f32[1,64], index: 1, kind: input, shape index: {}]
  %s2 = inlined_call_operand.hbm [shape: f32[2,64], index: 2, kind: output, shape index: {}]
  %s3 = sld [smem:[#allocation0]]
  $region18: #{text_transformer_forward.29} parent=0
    _
  %s5 = ssub.s32 1, %s3
  %s6 = scalar_select 0, %s5, %s3
  $region1: #{text_transformer_forward.29} parent=0
    #allocation2 [shape = 'u8[1024]{0}', space=vmem, size = 0x400, scoped, tag = 'output window, operand 0, single buffered']
    #allocation3 [shape = 's32[1]{0}', space=sflag, size = 0x4, scoped, tag = 'scoped memory for text_transformer_forward.29']
    %7 = vsyncpa [#allocation3], 0
    // Predicated region
    $region2: #{text_transformer_forward.29} parent=1 // pred_check
      _
    $region3: #{text_transformer_forward.29} parent=1 // pred_check_branch
      %9 = sbr.rel (0) target = $region5
    $region4: #{text_transformer_forward.29} parent=1 // pred_region
      _
    $region5: #{text_transformer_forward.29} parent=1 // pred_fallthru
      _
    // Predicated region
    $region6: #{text_transformer_forward.29} parent=1 // pred_check
      _
    $region7: #{text_transformer_forward.29} parent=1 // pred_check_branch
      %11 = sbr.rel (0) target = $region9
    $region8: #{text_transformer_forward.29} parent=1 // pred_region
      _
    $region9: #{text_transformer_forward.29} parent=1 // pred_fallthru
      _
    %v12 = vld [vmem:[%s0] sm:$0x3]
    %v13 = vld [vmem:[%s0 + $0x2] sm:$0x3]
    %v14 = vld [vmem:[%s0 + $0x4] sm:$0x3]
    %v15 = vld [vmem:[%s0 + $0x6] sm:$0x3]
    %v16 = vadd.f32 %v12, %v13
    %v17 = vadd.f32 %v16, %v14
    %v18 = vadd.f32 %v17, %v15
    %v19 = vrcp.pop 4.0
    %v20 = vmul.f32 %v18, %v19
    %vm21 = vcmask 517120
    %v22 = vsel %vm21, %v20, 0.0
    %23 = vadd.xlane.f32.xlu0 %v22
    %v24 = vpop.xlane.xlu0 %23
    %v25 = vrcp.pop 64.0
    %v26 = vmul.f32 %v24, %v25
    %v27 = vsub.f32 %v20, %v26
    %v28 = vmul.f32 %v27, %v27
    %v29 = vsel %vm21, %v28, 0.0
    %30 = vadd.xlane.f32.xlu0 %v29
    %v31 = vpop.xlane.xlu0 %30
    %v32 = vmul.f32 %v31, %v25
    %v33 = vadd.f32 %v32, 1e-05
    %v34 = vrsqrt.pop %v33
    %v35 = vmul.f32 %v27, %v34
    %v36 = vld [vmem:[%s1] sm:$0x1]
    %v38 = vlaneseq
    %v39 = vshrl.u32 %v38, 7
    %v40 = vsub.s32 0, %v39
    %v41 = vrot.slane %v36, %v40
    %v43 = vmul.f32 %v35, %v41
    %44 = vst.msk [vmem:[#allocation2] sm:$0x3] %vm21, %v43
    // Predicated region
    $region10: #{text_transformer_forward.29} parent=1 // pred_check
      _
    $region11: #{text_transformer_forward.29} parent=1 // pred_check_branch
      %46 = sbr.rel (0) target = $region13
    $region12: #{text_transformer_forward.29} parent=1 // pred_region
      %s48 = ssub.s32 32, 32
      %49 = vsyncadd [#allocation3], %s48
      %s51 = sshll.u32 [#allocation2], 4
      %s52 = int_to_ptr.vmem [resolvable:$true] %s51
      %54 = dma.vmem_to_hbm [thread:$0]  %s52, 32, %s2, [#allocation3]
    $region13: #{text_transformer_forward.29} parent=1 // pred_fallthru
      _
    // Predicated region
    $region14: #{text_transformer_forward.29} parent=1 // pred_check
      _
    $region15: #{text_transformer_forward.29} parent=1 // pred_check_branch
      %56 = sbr.rel (0) target = $region17
    $region16: #{text_transformer_forward.29} parent=1 // pred_region
      %57 = dma.done [#allocation3], 32
    $region17: #{text_transformer_forward.29} parent=1 // pred_fallthru
      _
    %58 = vsyncpa [#allocation3], 1

// kernel: text_transformer_forward.20
$region0: #{text_transformer_forward.20}
  #allocation0 [shape = 'u32[]', space=smem, size = 0x4, offset = 0x4, fixed_abs, tag = 'smem constant byte address 0x4 - core index']
  #allocation1 [shape = 'u32[144,128]{1,0:T(1,128)}', space=vmem, size = 0x12000, scoped, tag = 'internal scratch']
  %s0 = inlined_call_operand.vmem [shape: bf16[4,16,64], index: 0, kind: input, shape index: {}]
  %s1 = inlined_call_operand.vmem [shape: f32[64,64], index: 1, kind: input, shape index: {}]
  %s2 = inlined_call_operand.vmem [shape: f32[1,64], index: 2, kind: input, shape index: {}]
  %s3 = inlined_call_operand.vmem [shape: f32[1,64], index: 3, kind: input, shape index: {}]
  %s4 = inlined_call_operand.vmem [shape: f32[4,16,64], index: 4, kind: input, shape index: {}]
  %s5 = inlined_call_operand.vmem [shape: f32[4,16,64], index: 5, kind: output, shape index: {}]
  %s6 = sld [smem:[#allocation0]]
  $region30: #{text_transformer_forward.20} parent=0
    _
  %s8 = ssub.s32 1, %s6
  %s9 = scalar_select 0, %s8, %s6
  // Predicated region
  $region2: #{text_transformer_forward.20} parent=0 // pred_check
    _
  $region3: #{text_transformer_forward.20} parent=0 // pred_check_branch
    %11 = sbr.rel (0) target = $region5
  $region4: #{text_transformer_forward.20} parent=0 // pred_region
    _
  $region5: #{text_transformer_forward.20} parent=0 // pred_fallthru
    _
  // Predicated region
  $region6: #{text_transformer_forward.20} parent=0 // pred_check
    _
  $region7: #{text_transformer_forward.20} parent=0 // pred_check_branch
    %13 = sbr.rel (0) target = $region9
  $region8: #{text_transformer_forward.20} parent=0 // pred_region
    _
  $region9: #{text_transformer_forward.20} parent=0 // pred_fallthru
    _
  // Predicated region
  $region10: #{text_transformer_forward.20} parent=0 // pred_check
    _
  $region11: #{text_transformer_forward.20} parent=0 // pred_check_branch
    %15 = sbr.rel (0) target = $region13
  $region12: #{text_transformer_forward.20} parent=0 // pred_region
    _
  $region13: #{text_transformer_forward.20} parent=0 // pred_fallthru
    _
  // Predicated region
  $region14: #{text_transformer_forward.20} parent=0 // pred_check
    _
  $region15: #{text_transformer_forward.20} parent=0 // pred_check_branch
    %17 = sbr.rel (0) target = $region17
  $region16: #{text_transformer_forward.20} parent=0 // pred_region
    _
  $region17: #{text_transformer_forward.20} parent=0 // pred_fallthru
    _
  // Predicated region
  $region18: #{text_transformer_forward.20} parent=0 // pred_check
    _
  $region19: #{text_transformer_forward.20} parent=0 // pred_check_branch
    %19 = sbr.rel (0) target = $region21
  $region20: #{text_transformer_forward.20} parent=0 // pred_region
    _
  $region21: #{text_transformer_forward.20} parent=0 // pred_fallthru
    _
  %v20 = vld [vmem:[%s1] sm:$0xff]
  %v21 = vld [vmem:[%s1 + $0x8] sm:$0xff]
  %v22 = vld [vmem:[%s1 + $0x10] sm:$0xff]
  %v23 = vld [vmem:[%s1 + $0x18] sm:$0xff]
  %v24 = vld [vmem:[%s1 + $0x20] sm:$0xff]
  %v25 = vld [vmem:[%s1 + $0x28] sm:$0xff]
  %v26 = vld [vmem:[%s1 + $0x30] sm:$0xff]
  %v27 = vld [vmem:[%s1 + $0x38] sm:$0xff]
  %v28 = vld [vmem:[%s2] sm:$0x1]
  %v29 = vld [vmem:[%s3] sm:$0x1]
  %v30 = vld [vmem:[%s0] sm:$0xf]
  %v31 = vld [vmem:[%s0 + $0x4] sm:$0xf]
  %v32 = vunpack.c.l.bf16 %v30
  %v33 = vunpack.c.l.bf16 %v31
  %vm34 = vcmask 523264
  %v36 = vsel %vm34, %v32, 0
  %v39 = vsel %vm34, %v33, 0
  %41 = vmatprep.subr.mxu0 0.0
  %42 = vmatpush1.msra.mxu0 %v20
  %43 = vmatprep.subr.mxu0 0.0
  %44 = vmatpush1.msra.mxu0 %v21
  %45 = vmatprep.subr.mxu0 0.0
  %46 = vmatpush1.msra.mxu0 %v22
  %47 = vmatprep.subr.mxu0 0.0
  %48 = vmatpush1.msra.mxu0 %v23
  %49 = vmatprep.subr.mxu0 0.0
  %50 = vmatpush1.msra.mxu0 %v24
  %51 = vmatprep.subr.mxu0 0.0
  %52 = vmatpush1.msra.mxu0 %v25
  %53 = vmatprep.subr.mxu0 0.0
  %54 = vmatpush1.msra.mxu0 %v26
  %55 = vmatprep.subr.mxu0 0.0
  %56 = vmatpush1.msra.mxu0 %v27
  %57 = vmatprep.subr.mxu0 0.0
  %58 = vmatpush1.msra.mxu0 0.0
  %59 = vmatprep.subr.mxu0 0.0
  %60 = vmatpush1.msra.mxu0 0.0
  %61 = vmatprep.subr.mxu0 0.0
  %62 = vmatpush1.msra.mxu0 0.0
  %63 = vmatprep.subr.mxu0 0.0
  %64 = vmatpush1.msra.mxu0 0.0
  %65 = vmatprep.subr.mxu0 0.0
  %66 = vmatpush1.msra.mxu0 0.0
  %67 = vmatprep.subr.mxu0 0.0
  %68 = vmatpush1.msra.mxu0 0.0
  %69 = vmatprep.subr.mxu0 0.0
  %70 = vmatpush1.msra.mxu0 0.0
  %71 = vmatprep.subr.mxu0 0.0
  %72 = vmatpush1.msra.mxu0 0.0
  %73 = vmatprep.subr.mxu0 0.0
  %74 = vmatpush1.msra.mxu0 0.0
  %75 = vmatprep.subr.mxu0 0.0
  %76 = vmatpush1.msra.mxu0 0.0
  %77 = vmatprep.subr.mxu0 0.0
  %78 = vmatpush1.msra.mxu0 0.0
  %79 = vmatprep.subr.mxu0 0.0
  %80 = vmatpush1.msra.mxu0 0.0
  %81 = vmatprep.subr.mxu0 0.0
  %82 = vmatpush1.msra.mxu0 0.0
  %83 = vmatprep.subr.mxu0 0.0
  %84 = vmatpush1.msra.mxu0 0.0
  %85 = vmatprep.subr.mxu0 0.0
  %86 = vmatpush1.msra.mxu0 0.0
  %87 = vmatprep.subr.mxu0 0.0
  %88 = vmatpush1.msra.mxu0 0.0
  %89 = vmatprep.subr.mxu0 0.0
  %90 = vmatpush1.msra.mxu0 0.0
  %91 = vmatprep.subr.mxu0 0.0
  %92 = vmatpush1.msra.mxu0 0.0
  %93 = vmatprep.subr.mxu0 0.0
  %94 = vmatpush1.msra.mxu0 0.0
  %95 = vmatprep.subr.mxu0 0.0
  %96 = vmatpush1.msra.mxu0 0.0
  %97 = vmatprep.subr.mxu0 0.0
  %98 = vmatpush1.msra.mxu0 0.0
  %99 = vmatprep.subr.mxu0 0.0
  %100 = vmatpush1.msra.mxu0 0.0
  %101 = vmatprep.subr.mxu0 0.0
  %102 = vmatpush1.msra.mxu0 0.0
  %103 = vmatprep.subr.mxu0 0.0
  %104 = vmatpush1.msra.mxu0 0.0
  %105 = vmatprep.mubr.f32.mxu0 0.0
  %106 = vmatmul.mubr.f32.gmra.mrb[0].mxu0 %v36
  %v107 = vpop.f32.mrb[0].mxu0
  %v108 = vadd.f32 0.0, %v107
  %v109 = vpop.f32.mrb[0].mxu0
  %110 = vmatprep.mubr.f32.mxu0 0.0
  %111 = vmatmul.mubr.f32.gmra.mrb[0].mxu0 %v39
  %v112 = vpop.f32.mrb[0].mxu0
  %v113 = vadd.f32 0.0, %v112
  %v114 = vpop.f32.mrb[0].mxu0
  %115 = vdwg.mxu0
  %v117 = vlaneseq
  %v118 = vshrl.u32 %v117, 7
  %v119 = vsub.s32 0, %v118
  %v120 = vrot.slane %v28, %v119
  %v122 = vmul.f32 %v108, %v120
  %v123 = vmul.f32 %v113, %v120
  %v125 = vlaneseq
  %v126 = vshrl.u32 %v125, 7
  %v127 = vsub.s32 0, %v126
  %v128 = vrot.slane %v29, %v127
  %v130 = vadd.f32 %v122, %v128
  %v131 = vadd.f32 %v123, %v128
  %v132 = vrcp.pop 2.0
  %v133 = vmul.f32 %v130, %v132
  %v134 = vmul.f32 %v131, %v132
  %v135 = vadd.f32 %v133, 0.0
  %v136 = vadd.f32 %v134, 0.0
  %v137 = vsub.f32 %v135, 1.0
  %v138 = vsub.f32 %v136, 1.0
  %vm139 = vcmp.ge.f32.partialorder %v137, 0.0
  %vm140 = vcmp.ge.f32.partialorder %v138, 0.0
  %v141 = vsel %vm139, 1, 0
  %v142 = vsel %vm140, 1, 0
  %v143 = vcvt.s32.f32 %v141
  %v144 = vcvt.s32.f32 %v142
  %v145 = vsub.f32 1.0, %v143
  %v146 = vsub.f32 1.0, %v144
  %v147 = vmul.f32 %v135, %v145
  %v148 = vmul.f32 %v136, %v146
  %v149 = vld [vmem:[%s4] sm:$0xff]
  %v150 = vld [vmem:[%s4 + $0x8] sm:$0xff]
  %v151 = vadd.f32 %v143, %v149
  %v152 = vadd.f32 %v144, %v150
  %153 = vst.msk [vmem:[%s5] sm:$0xff] %vm34, %v151
  %154 = vst.msk [vmem:[%s5 + $0x8] sm:$0xff] %vm34, %v152
  %s155 = scalar_lea.vmem %s0, 8
  %v156 = vld [vmem:[%s155] sm:$0xf]
  %v157 = vld [vmem:[%s155 + $0x4] sm:$0xf]
  %v158 = vunpack.c.l.bf16 %v156
  %v159 = vunpack.c.l.bf16 %v157
  %v161 = vsel %vm34, %v158, 0
  %v164 = vsel %vm34, %v159, 0
  %166 = vmatprep.subr.mxu0 0.0
  %167 = vmatpush1.msra.mxu0 %v20
  %168 = vmatprep.subr.mxu0 0.0
  %169 = vmatpush1.msra.mxu0 %v21
  %170 = vmatprep.subr.mxu0 0.0
  %171 = vmatpush1.msra.mxu0 %v22
  %172 = vmatprep.subr.mxu0 0.0
  %173 = vmatpush1.msra.mxu0 %v23
  %174 = vmatprep.subr.mxu0 0.0
  %175 = vmatpush1.msra.mxu0 %v24
  %176 = vmatprep.subr.mxu0 0.0
  %177 = vmatpush1.msra.mxu0 %v25
  %178 = vmatprep.subr.mxu0 0.0
  %179 = vmatpush1.msra.mxu0 %v26
  %180 = vmatprep.subr.mxu0 0.0
  %181 = vmatpush1.msra.mxu0 %v27
  %182 = vmatprep.subr.mxu0 0.0
  %183 = vmatpush1.msra.mxu0 0.0
  %184 = vmatprep.subr.mxu0 0.0
  %185 = vmatpush1.msra.mxu0 0.0
  %186 = vmatprep.subr.mxu0 0.0
  %187 = vmatpush1.msra.mxu0 0.0
  %188 = vmatprep.subr.mxu0 0.0
  %189 = vmatpush1.msra.mxu0 0.0
  %190 = vmatprep.subr.mxu0 0.0
  %191 = vmatpush1.msra.mxu0 0.0
  %192 = vmatprep.subr.mxu0 0.0
  %193 = vmatpush1.msra.mxu0 0.0
  %194 = vmatprep.subr.mxu0 0.0
  %195 = vmatpush1.msra.mxu0 0.0
  %196 = vmatprep.subr.mxu0 0.0
  %197 = vmatpush1.msra.mxu0 0.0
  %198 = vmatprep.subr.mxu0 0.0
  %199 = vmatpush1.msra.mxu0 0.0
  %200 = vmatprep.subr.mxu0 0.0
  %201 = vmatpush1.msra.mxu0 0.0
  %202 = vmatprep.subr.mxu0 0.0
  %203 = vmatpush1.msra.mxu0 0.0
  %204 = vmatprep.subr.mxu0 0.0
  %205 = vmatpush1.msra.mxu0 0.0
  %206 = vmatprep.subr.mxu0 0.0
  %207 = vmatpush1.msra.mxu0 0.0
  %208 = vmatprep.subr.mxu0 0.0
  %209 = vmatpush1.msra.mxu0 0.0
  %210 = vmatprep.subr.mxu0 0.0
  %211 = vmatpush1.msra.mxu0 0.0
  %212 = vmatprep.subr.mxu0 0.0
  %213 = vmatpush1.msra.mxu0 0.0
  %214 = vmatprep.subr.mxu0 0.0
  %215 = vmatpush1.msra.mxu0 0.0
  %216 = vmatprep.subr.mxu0 0.0
  %217 = vmatpush1.msra.mxu0 0.0
  %218 = vmatprep.subr.mxu0 0.0
  %219 = vmatpush1.msra.mxu0 0.0
  %220 = vmatprep.subr.mxu0 0.0
  %221 = vmatpush1.msra.mxu0 0.0
  %222 = vmatprep.subr.mxu0 0.0
  %223 = vmatpush1.msra.mxu0 0.0
  %224 = vmatprep.subr.mxu0 0.0
  %225 = vmatpush1.msra.mxu0 0.0
  %226 = vmatprep.subr.mxu0 0.0
  %227 = vmatpush1.msra.mxu0 0.0
  %228 = vmatprep.subr.mxu0 0.0
  %229 = vmatpush1.msra.mxu0 0.0
  %230 = vmatprep.mubr.f32.mxu0 0.0
  %231 = vmatmul.mubr.f32.gmra.mrb[0].mxu0 %v161
  %v232 = vpop.f32.mrb[0].mxu0
  %v233 = vadd.f32 0.0, %v232
  %v234 = vpop.f32.mrb[0].mxu0
  %235 = vmatprep.mubr.f32.mxu0 0.0
  %236 = vmatmul.mubr.f32.gmra.mrb[0].mxu0 %v164
  %v237 = vpop.f32.mrb[0].mxu0
  %v238 = vadd.f32 0.0, %v237
  %v239 = vpop.f32.mrb[0].mxu0
  %240 = vdwg.mxu0
  %v241 = vmul.f32 %v233, %v120
  %v242 = vmul.f32 %v238, %v120
  %v243 = vadd.f32 %v241, %v128
  %v244 = vadd.f32 %v242, %v128
  %v245 = vsub.f32 %v243, %v147
  %v246 = vsub.f32 %v244, %v148
  %v247 = vmul.f32 %v245, %v132
  %v248 = vmul.f32 %v246, %v132
  %v249 = vadd.f32 %v147, %v247
  %v250 = vadd.f32 %v148, %v248
  %v251 = vsub.f32 %v249, 1.0
  %v252 = vsub.f32 %v250, 1.0
  %vm253 = vcmp.ge.f32.partialorder %v251, 0.0
  %vm254 = vcmp.ge.f32.partialorder %v252, 0.0
  %v255 = vsel %vm253, 1, 0
  %v256 = vsel %vm254, 1, 0
  %v257 = vcvt.s32.f32 %v255
  %v258 = vcvt.s32.f32 %v256
  %v259 = vsub.f32 1.0, %v257
  %v260 = vsub.f32 1.0, %v258
  %v261 = vmul.f32 %v249, %v259
  %v262 = vmul.f32 %v250, %v260
  %s263 = scalar_lea.vmem %s4, 16
  %v264 = vld [vmem:[%s263] sm:$0xff]
  %v265 = vld [vmem:[%s263 + $0x8] sm:$0xff]
  %v266 = vadd.f32 %v257, %v264
  %v267 = vadd.f32 %v258, %v265
  %s268 = scalar_lea.vmem %s5, 16
  %269 = vst.msk [vmem:[%s268] sm:$0xff] %vm34, %v266
  %270 = vst.msk [vmem:[%s268 + $0x8] sm:$0xff] %vm34, %v267
  %s271 = scalar_lea.vmem %s0, 16
  %v272 = vld [vmem:[%s271] sm:$0xf]
  %v273 = vld [vmem:[%s271 + $0x4] sm:$0xf]
  %v274 = vunpack.c.l.bf16 %v272
  %v275 = vunpack.c.l.bf16 %v273
  %v277 = vsel %vm34, %v274, 0
  %v280 = vsel %vm34, %v275, 0
  %282 = vmatprep.subr.mxu0 0.0
  %283 = vmatpush1.msra.mxu0 %v20
  %284 = vmatprep.subr.mxu0 0.0
  %285 = vmatpush1.msra.mxu0 %v21
  %286 = vmatprep.subr.mxu0 0.0
  %287 = vmatpush1.msra.mxu0 %v22
  %288 = vmatprep.subr.mxu0 0.0
  %289 = vmatpush1.msra.mxu0 %v23
  %290 = vmatprep.subr.mxu0 0.0
  %291 = vmatpush1.msra.mxu0 %v24
  %292 = vmatprep.subr.mxu0 0.0
  %293 = vmatpush1.msra.mxu0 %v25
  %294 = vmatprep.subr.mxu0 0.0
  %295 = vmatpush1.msra.mxu0 %v26
  %296 = vmatprep.subr.mxu0 0.0
  %297 = vmatpush1.msra.mxu0 %v27
  %298 = vmatprep.subr.mxu0 0.0
  %299 = vmatpush1.msra.mxu0 0.0
  %300 = vmatprep.subr.mxu0 0.0
  %301 = vmatpush1.msra.mxu0 0.0
  %302 = vmatprep.subr.mxu0 0.0
  %303 = vmatpush1.msra.mxu0 0.0
  %304 = vmatprep.subr.mxu0 0.0
  %305 = vmatpush1.msra.mxu0 0.0
  %306 = vmatprep.subr.mxu0 0.0
  %307 = vmatpush1.msra.mxu0 0.0
  %308 = vmatprep.subr.mxu0 0.0
  %309 = vmatpush1.msra.mxu0 0.0
  %310 = vmatprep.subr.mxu0 0.0
  %311 = vmatpush1.msra.mxu0 0.0
  %312 = vmatprep.subr.mxu0 0.0
  %313 = vmatpush1.msra.mxu0 0.0
  %314 = vmatprep.subr.mxu0 0.0
  %315 = vmatpush1.msra.mxu0 0.0
  %316 = vmatprep.subr.mxu0 0.0
  %317 = vmatpush1.msra.mxu0 0.0
  %318 = vmatprep.subr.mxu0 0.0
  %319 = vmatpush1.msra.mxu0 0.0
  %320 = vmatprep.subr.mxu0 0.0
  %321 = vmatpush1.msra.mxu0 0.0
  %322 = vmatprep.subr.mxu0 0.0
  %323 = vmatpush1.msra.mxu0 0.0
  %324 = vmatprep.subr.mxu0 0.0
  %325 = vmatpush1.msra.mxu0 0.0
  %326 = vmatprep.subr.mxu0 0.0
  %327 = vmatpush1.msra.mxu0 0.0
  %328 = vmatprep.subr.mxu0 0.0
  %329 = vmatpush1.msra.mxu0 0.0
  %330 = vmatprep.subr.mxu0 0.0
  %331 = vmatpush1.msra.mxu0 0.0
  %332 = vmatprep.subr.mxu0 0.0
  %333 = vmatpush1.msra.mxu0 0.0
  %334 = vmatprep.subr.mxu0 0.0
  %335 = vmatpush1.msra.mxu0 0.0
  %336 = vmatprep.subr.mxu0 0.0
  %337 = vmatpush1.msra.mxu0 0.0
  %338 = vmatprep.subr.mxu0 0.0
  %339 = vmatpush1.msra.mxu0 0.0
  %340 = vmatprep.subr.mxu0 0.0
  %341 = vmatpush1.msra.mxu0 0.0
  %342 = vmatprep.subr.mxu0 0.0
  %343 = vmatpush1.msra.mxu0 0.0
  %344 = vmatprep.subr.mxu0 0.0
  %345 = vmatpush1.msra.mxu0 0.0
  %346 = vmatprep.mubr.f32.mxu0 0.0
  %347 = vmatmul.mubr.f32.gmra.mrb[0].mxu0 %v277
  %v348 = vpop.f32.mrb[0].mxu0
  %v349 = vadd.f32 0.0, %v348
  %v350 = vpop.f32.mrb[0].mxu0
  %351 = vmatprep.mubr.f32.mxu0 0.0
  %352 = vmatmul.mubr.f32.gmra.mrb[0].mxu0 %v280
  %v353 = vpop.f32.mrb[0].mxu0
  %v354 = vadd.f32 0.0, %v353
  %v355 = vpop.f32.mrb[0].mxu0
  %356 = vdwg.mxu0
  %v357 = vmul.f32 %v349, %v120
  %v358 = vmul.f32 %v354, %v120
  %v359 = vadd.f32 %v357, %v128
  %v360 = vadd.f32 %v358, %v128
  %v361 = vsub.f32 %v359, %v261
  %v362 = vsub.f32 %v360, %v262
  %v363 = vmul.f32 %v361, %v132
  %v364 = vmul.f32 %v362, %v132
  %v365 = vadd.f32 %v261, %v363
  %v366 = vadd.f32 %v262, %v364
  %v367 = vsub.f32 %v365, 1.0
  %v368 = vsub.f32 %v366, 1.0
  %vm369 = vcmp.ge.f32.partialorder %v367, 0.0
  %vm370 = vcmp.ge.f32.partialorder %v368, 0.0
  %v371 = vsel %vm369, 1, 0
  %v372 = vsel %vm370, 1, 0
  %v373 = vcvt.s32.f32 %v371
  %v374 = vcvt.s32.f32 %v372
  %v375 = vsub.f32 1.0, %v373
  %v376 = vsub.f32 1.0, %v374
  %v377 = vmul.f32 %v365, %v375
  %v378 = vmul.f32 %v366, %v376
  %s379 = scalar_lea.vmem %s4, 32
  %v380 = vld [vmem:[%s379] sm:$0xff]
  %v381 = vld [vmem:[%s379 + $0x8] sm:$0xff]
  %v382 = vadd.f32 %v373, %v380
  %v383 = vadd.f32 %v374, %v381
  %s384 = scalar_lea.vmem %s5, 32
  %385 = vst.msk [vmem:[%s384] sm:$0xff] %vm34, %v382
  %386 = vst.msk [vmem:[%s384 + $0x8] sm:$0xff] %vm34, %v383
  %s387 = scalar_lea.vmem %s0, 24
  %v388 = vld [vmem:[%s387] sm:$0xf]
  %v389 = vld [vmem:[%s387 + $0x4] sm:$0xf]
  %v390 = vunpack.c.l.bf16 %v388
  %v391 = vunpack.c.l.bf16 %v389
  %v393 = vsel %vm34, %v390, 0
  %v396 = vsel %vm34, %v391, 0
  %398 = vmatprep.subr.mxu0 0.0
  %399 = vmatpush1.msra.mxu0 %v20
  %400 = vmatprep.subr.mxu0 0.0
  %401 = vmatpush1.msra.mxu0 %v21
  %402 = vmatprep.subr.mxu0 0.0
  %403 = vmatpush1.msra.mxu0 %v22
  %404 = vmatprep.subr.mxu0 0.0
  %405 = vmatpush1.msra.mxu0 %v23
  %406 = vmatprep.subr.mxu0 0.0
  %407 = vmatpush1.msra.mxu0 %v24
  %408 = vmatprep.subr.mxu0 0.0
  %409 = vmatpush1.msra.mxu0 %v25
  %410 = vmatprep.subr.mxu0 0.0
  %411 = vmatpush1.msra.mxu0 %v26
  %412 = vmatprep.subr.mxu0 0.0
  %413 = vmatpush1.msra.mxu0 %v27
  %414 = vmatprep.subr.mxu0 0.0
  %415 = vmatpush1.msra.mxu0 0.0
  %416 = vmatprep.subr.mxu0 0.0
  %417 = vmatpush1.msra.mxu0 0.0
  %418 = vmatprep.subr.mxu0 0.0
  %419 = vmatpush1.msra.mxu0 0.0
  %420 = vmatprep.subr.mxu0 0.0
  %421 = vmatpush1.msra.mxu0 0.0
  %422 = vmatprep.subr.mxu0 0.0
  %423 = vmatpush1.msra.mxu0 0.0
  %424 = vmatprep.subr.mxu0 0.0
  %425 = vmatpush1.msra.mxu0 0.0
  %426 = vmatprep.subr.mxu0 0.0
  %427 = vmatpush1.msra.mxu0 0.0
  %428 = vmatprep.subr.mxu0 0.0
  %429 = vmatpush1.msra.mxu0 0.0
  %430 = vmatprep.subr.mxu0 0.0
  %431 = vmatpush1.msra.mxu0 0.0
  %432 = vmatprep.subr.mxu0 0.0
  %433 = vmatpush1.msra.mxu0 0.0
  %434 = vmatprep.subr.mxu0 0.0
  %435 = vmatpush1.msra.mxu0 0.0
  %436 = vmatprep.subr.mxu0 0.0
  %437 = vmatpush1.msra.mxu0 0.0
  %438 = vmatprep.subr.mxu0 0.0
  %439 = vmatpush1.msra.mxu0 0.0
  %440 = vmatprep.subr.mxu0 0.0
  %441 = vmatpush1.msra.mxu0 0.0
  %442 = vmatprep.subr.mxu0 0.0
  %443 = vmatpush1.msra.mxu0 0.0
  %444 = vmatprep.subr.mxu0 0.0
  %445 = vmatpush1.msra.mxu0 0.0
  %446 = vmatprep.subr.mxu0 0.0
  %447 = vmatpush1.msra.mxu0 0.0
  %448 = vmatprep.subr.mxu0 0.0
  %449 = vmatpush1.msra.mxu0 0.0
  %450 = vmatprep.subr.mxu0 0.0
  %451 = vmatpush1.msra.mxu0 0.0
  %452 = vmatprep.subr.mxu0 0.0
  %453 = vmatpush1.msra.mxu0 0.0
  %454 = vmatprep.subr.mxu0 0.0
  %455 = vmatpush1.msra.mxu0 0.0
  %456 = vmatprep.subr.mxu0 0.0
  %457 = vmatpush1.msra.mxu0 0.0
  %458 = vmatprep.subr.mxu0 0.0
  %459 = vmatpush1.msra.mxu0 0.0
  %460 = vmatprep.subr.mxu0 0.0
  %461 = vmatpush1.msra.mxu0 0.0
  %462 = vmatprep.mubr.f32.mxu0 0.0
  %463 = vmatmul.mubr.f32.gmra.mrb[0].mxu0 %v393
  %v464 = vpop.f32.mrb[0].mxu0
  %v465 = vadd.f32 0.0, %v464
  %v466 = vpop.f32.mrb[0].mxu0
  %467 = vmatprep.mubr.f32.mxu0 0.0
  %468 = vmatmul.mubr.f32.gmra.mrb[0].mxu0 %v396
  %v469 = vpop.f32.mrb[0].mxu0
  %v470 = vadd.f32 0.0, %v469
  %v471 = vpop.f32.mrb[0].mxu0
  %472 = vdwg.mxu0
  %v473 = vmul.f32 %v465, %v120
  %v474 = vmul.f32 %v470, %v120
  %v475 = vadd.f32 %v473, %v128
  %v476 = vadd.f32 %v474, %v128
  %v477 = vsub.f32 %v475, %v377
  %v478 = vsub.f32 %v476, %v378
  %v479 = vmul.f32 %v477, %v132
  %v480 = vmul.f32 %v478, %v132
  %v481 = vadd.f32 %v377, %v479
  %v482 = vadd.f32 %v378, %v480
  %v483 = vsub.f32 %v481, 1.0
  %v484 = vsub.f32 %v482, 1.0
  %vm485 = vcmp.ge.f32.partialorder %v483, 0.0
  %vm486 = vcmp.ge.f32.partialorder %v484, 0.0
  %v487 = vsel %vm485, 1, 0
  %v488 = vsel %vm486, 1, 0
  %v489 = vcvt.s32.f32 %v487
  %v490 = vcvt.s32.f32 %v488
  %s491 = scalar_lea.vmem %s4, 48
  %v492 = vld [vmem:[%s491] sm:$0xff]
  %v493 = vld [vmem:[%s491 + $0x8] sm:$0xff]
  %v494 = vadd.f32 %v489, %v492
  %v495 = vadd.f32 %v490, %v493
  %s496 = scalar_lea.vmem %s5, 48
  %497 = vst.msk [vmem:[%s496] sm:$0xff] %vm34, %v494
  %498 = vst.msk [vmem:[%s496 + $0x8] sm:$0xff] %vm34, %v495
  // Predicated region
  $region22: #{text_transformer_forward.20} parent=0 // pred_check
    _
  $region23: #{text_transformer_forward.20} parent=0 // pred_check_branch
    %500 = sbr.rel (0) target = $region25
  $region24: #{text_transformer_forward.20} parent=0 // pred_region
    _
  $region25: #{text_transformer_forward.20} parent=0 // pred_fallthru
    _
  // Predicated region
  $region26: #{text_transformer_forward.20} parent=0 // pred_check
    _
  $region27: #{text_transformer_forward.20} parent=0 // pred_check_branch
    %502 = sbr.rel (0) target = $region29
  $region28: #{text_transformer_forward.20} parent=0 // pred_region
    _
  $region29: #{text_transformer_forward.20} parent=0 // pred_fallthru
    _

// kernel: text_transformer_forward.21
$region0: #{text_transformer_forward.21}
  #allocation0 [shape = 'u32[]', space=smem, size = 0x4, offset = 0x4, fixed_abs, tag = 'smem constant byte address 0x4 - core index']
  #allocation1 [shape = 'u32[144,128]{1,0:T(1,128)}', space=vmem, size = 0x12000, scoped, tag = 'internal scratch']
  #allocation2 [shape = 'f32[64,64]{1,0:T(8,128)}', space=vmem, size = 0x8000, scoped, tag = 'scratch operand']
  %s0 = inlined_call_operand.vmem [shape: f32[64,64], index: 0, kind: input, shape index: {}, may-alias: {0,5}]
  %s1 = inlined_call_operand.vmem [shape: f32[1,64], index: 1, kind: input, shape index: {}]
  %s2 = inlined_call_operand.vmem [shape: f32[64,170], index: 2, kind: input, shape index: {}]
  %s3 = inlined_call_operand.vmem [shape: f32[64,170], index: 3, kind: input, shape index: {}]
  %s4 = inlined_call_operand.vmem [shape: f32[170,64], index: 4, kind: input, shape index: {}]
  %s5 = inlined_call_operand.vmem [shape: f32[64,64], index: 5, kind: input, shape index: {}, may-alias: {0,5}]
  %s6 = inlined_call_operand.vmem [shape: f32[64,64], index: 6, kind: output, shape index: {}]
  %s7 = sld [smem:[#allocation0]]
  $region42: #{text_transformer_forward.21} parent=0
    _
  %s9 = ssub.s32 1, %s7
  %s10 = scalar_select 0, %s9, %s7
  // Predicated region
  $region2: #{text_transformer_forward.21} parent=0 // pred_check
    _
  $region3: #{text_transformer_forward.21} parent=0 // pred_check_branch
    %12 = sbr.rel (0) target = $region5
  $region4: #{text_transformer_forward.21} parent=0 // pred_region
    _
  $region5: #{text_transformer_forward.21} parent=0 // pred_fallthru
    _
  // Predicated region
  $region6: #{text_transformer_forward.21} parent=0 // pred_check
    _
  $region7: #{text_transformer_forward.21} parent=0 // pred_check_branch
    %14 = sbr.rel (0) target = $region9
  $region8: #{text_transformer_forward.21} parent=0 // pred_region
    _
  $region9: #{text_transformer_forward.21} parent=0 // pred_fallthru
    _
  // Predicated region
  $region10: #{text_transformer_forward.21} parent=0 // pred_check
    _
  $region11: #{text_transformer_forward.21} parent=0 // pred_check_branch
    %16 = sbr.rel (0) target = $region13
  $region12: #{text_transformer_forward.21} parent=0 // pred_region
    _
  $region13: #{text_transformer_forward.21} parent=0 // pred_fallthru
    _
  // Predicated region
  $region14: #{text_transformer_forward.21} parent=0 // pred_check
    _
  $region15: #{text_transformer_forward.21} parent=0 // pred_check_branch
    %18 = sbr.rel (0) target = $region17
  $region16: #{text_transformer_forward.21} parent=0 // pred_region
    _
  $region17: #{text_transformer_forward.21} parent=0 // pred_fallthru
    _
  // Predicated region
  $region18: #{text_transformer_forward.21} parent=0 // pred_check
    _
  $region19: #{text_transformer_forward.21} parent=0 // pred_check_branch
    %20 = sbr.rel (0) target = $region21
  $region20: #{text_transformer_forward.21} parent=0 // pred_region
    _
  $region21: #{text_transformer_forward.21} parent=0 // pred_fallthru
    _
  // Predicated region
  $region22: #{text_transformer_forward.21} parent=0 // pred_check
    _
  $region23: #{text_transformer_forward.21} parent=0 // pred_check_branch
    %22 = sbr.rel (0) target = $region25
  $region24: #{text_transformer_forward.21} parent=0 // pred_region
    _
  $region25: #{text_transformer_forward.21} parent=0 // pred_fallthru
    _
  %p23 = scmp.eq.s32.totalorder 0, 0
  // Predicated region
  $region26: #{text_transformer_forward.21} parent=0 // pred_check
    %p24 = pneg %p23
  $region27: #{text_transformer_forward.21} parent=0 // pred_check_branch
    %26 = sbr.rel (%p24) target = $region29
  $region28: #{text_transformer_forward.21} parent=0 // pred_region
    %vm27 = vcmask 523264
    %28 = vst.msk [vmem:[#allocation2] sm:$0xff] %vm27, 0.0
    %29 = vst.msk [vmem:[#allocation2 + $0x8] sm:$0xff] %vm27, 0.0
    %30 = vst.msk [vmem:[#allocation2 + $0x10] sm:$0xff] %vm27, 0.0
    %31 = vst.msk [vmem:[#allocation2 + $0x18] sm:$0xff] %vm27, 0.0
    %32 = vst.msk [vmem:[#allocation2 + $0x20] sm:$0xff] %vm27, 0.0
    %33 = vst.msk [vmem:[#allocation2 + $0x28] sm:$0xff] %vm27, 0.0
    %34 = vst.msk [vmem:[#allocation2 + $0x30] sm:$0xff] %vm27, 0.0
    %35 = vst.msk [vmem:[#allocation2 + $0x38] sm:$0xff] %vm27, 0.0
  $region29: #{text_transformer_forward.21} parent=0 // pred_fallthru
    _
  %v36 = vld [vmem:[%s0] sm:$0xff]
  %v37 = vld [vmem:[%s0 + $0x8] sm:$0xff]
  %v38 = vld [vmem:[%s0 + $0x10] sm:$0xff]
  %v39 = vld [vmem:[%s0 + $0x18] sm:$0xff]
  %v40 = vld [vmem:[%s0 + $0x20] sm:$0xff]
  %v41 = vld [vmem:[%s0 + $0x28] sm:$0xff]
  %v42 = vld [vmem:[%s0 + $0x30] sm:$0xff]
  %v43 = vld [vmem:[%s0 + $0x38] sm:$0xff]
  %vm44 = vcmask 523264
  %v45 = vsel %vm44, %v36, 0.0
  %46 = vadd.xlane.f32.xlu0 %v45
  %v47 = vpop.xlane.xlu0 %46
  %v48 = vsel %vm44, %v37, 0.0
  %49 = vadd.xlane.f32.xlu0 %v48
  %v50 = vpop.xlane.xlu0 %49
  %v51 = vsel %vm44, %v38, 0.0
  %52 = vadd.xlane.f32.xlu0 %v51
  %v53 = vpop.xlane.xlu0 %52
  %v54 = vsel %vm44, %v39, 0.0
  %55 = vadd.xlane.f32.xlu0 %v54
  %v56 = vpop.xlane.xlu0 %55
  %v57 = vsel %vm44, %v40, 0.0
  %58 = vadd.xlane.f32.xlu0 %v57
  %v59 = vpop.xlane.xlu0 %58
  %v60 = vsel %vm44, %v41, 0.0
  %61 = vadd.xlane.f32.xlu0 %v60
  %v62 = vpop.xlane.xlu0 %61
  %v63 = vsel %vm44, %v42, 0.0
  %64 = vadd.xlane.f32.xlu0 %v63
  %v65 = vpop.xlane.xlu0 %64
  %v66 = vsel %vm44, %v43, 0.0
  %67 = vadd.xlane.f32.xlu0 %v66
  %v68 = vpop.xlane.xlu0 %67
  %v69 = vrcp.pop 64.0
  %v70 = vmul.f32 %v47, %v69
  %v71 = vmul.f32 %v50, %v69
  %v72 = vmul.f32 %v53, %v69
  %v73 = vmul.f32 %v56, %v69
  %v74 = vmul.f32 %v59, %v69
  %v75 = vmul.f32 %v62, %v69
  %v76 = vmul.f32 %v65, %v69
  %v77 = vmul.f32 %v68, %v69
  %v78 = vsub.f32 %v36, %v70
  %v79 = vsub.f32 %v37, %v71
  %v80 = vsub.f32 %v38, %v72
  %v81 = vsub.f32 %v39, %v73
  %v82 = vsub.f32 %v40, %v74
  %v83 = vsub.f32 %v41, %v75
  %v84 = vsub.f32 %v42, %v76
  %v85 = vsub.f32 %v43, %v77
  %v86 = vmul.f32 %v78, %v78
  %v87 = vmul.f32 %v79, %v79
  %v88 = vmul.f32 %v80, %v80
  %v89 = vmul.f32 %v81, %v81
  %v90 = vmul.f32 %v82, %v82
  %v91 = vmul.f32 %v83, %v83
  %v92 = vmul.f32 %v84, %v84
  %v93 = vmul.f32 %v85, %v85
  %v94 = vsel %vm44, %v86, 0.0
  %95 = vadd.xlane.f32.xlu0 %v94
  %v96 = vpop.xlane.xlu0 %95
  %v97 = vsel %vm44, %v87, 0.0
  %98 = vadd.xlane.f32.xlu0 %v97
  %v99 = vpop.xlane.xlu0 %98
  %v100 = vsel %vm44, %v88, 0.0
  %101 = vadd.xlane.f32.xlu0 %v100
  %v102 = vpop.xlane.xlu0 %101
  %v103 = vsel %vm44, %v89, 0.0
  %104 = vadd.xlane.f32.xlu0 %v103
  %v105 = vpop.xlane.xlu0 %104
  %v106 = vsel %vm44, %v90, 0.0
  %107 = vadd.xlane.f32.xlu0 %v106
  %v108 = vpop.xlane.xlu0 %107
  %v109 = vsel %vm44, %v91, 0.0
  %110 = vadd.xlane.f32.xlu0 %v109
  %v111 = vpop.xlane.xlu0 %110
  %v112 = vsel %vm44, %v92, 0.0
  %113 = vadd.xlane.f32.xlu0 %v112
  %v114 = vpop.xlane.xlu0 %113
  %v115 = vsel %vm44, %v93, 0.0
  %116 = vadd.xlane.f32.xlu0 %v115
  %v117 = vpop.xlane.xlu0 %116
  %v118 = vmul.f32 %v96, %v69
  %v119 = vmul.f32 %v99, %v69
  %v120 = vmul.f32 %v102, %v69
  %v121 = vmul.f32 %v105, %v69
  %v122 = vmul.f32 %v108, %v69
  %v123 = vmul.f32 %v111, %v69
  %v124 = vmul.f32 %v114, %v69
  %v125 = vmul.f32 %v117, %v69
  %v126 = vadd.f32 %v118, 1e-05
  %v127 = vadd.f32 %v119, 1e-05
  %v128 = vadd.f32 %v120, 1e-05
  %v129 = vadd.f32 %v121, 1e-05
  %v130 = vadd.f32 %v122, 1e-05
  %v131 = vadd.f32 %v123, 1e-05
  %v132 = vadd.f32 %v124, 1e-05
  %v133 = vadd.f32 %v125, 1e-05
  %v134 = vrsqrt.pop %v126
  %v135 = vrsqrt.pop %v127
  %v136 = vrsqrt.pop %v128
  %v137 = vrsqrt.pop %v129
  %v138 = vrsqrt.pop %v130
  %v139 = vrsqrt.pop %v131
  %v140 = vrsqrt.pop %v132
  %v141 = vrsqrt.pop %v133
  %v142 = vmul.f32 %v78, %v134
  %v143 = vmul.f32 %v79, %v135
  %v144 = vmul.f32 %v80, %v136
  %v145 = vmul.f32 %v81, %v137
  %v146 = vmul.f32 %v82, %v138
  %v147 = vmul.f32 %v83, %v139
  %v148 = vmul.f32 %v84, %v140
  %v149 = vmul.f32 %v85, %v141
  %v150 = vld [vmem:[%s1] sm:$0x1]
  %v152 = vlaneseq
  %v153 = vshrl.u32 %v152, 7
  %v154 = vsub.s32 0, %v153
  %v155 = vrot.slane %v150, %v154
  %v157 = vmul.f32 %v142, %v155
  %v158 = vmul.f32 %v143, %v155
  %v159 = vmul.f32 %v144, %v155
  %v160 = vmul.f32 %v145, %v155
  %v161 = vmul.f32 %v146, %v155
  %v162 = vmul.f32 %v147, %v155
  %v163 = vmul.f32 %v148, %v155
  %v164 = vmul.f32 %v149, %v155
  %v165 = vld [vmem:[%s2] sm:$0xff]
  %v166 = vld [vmem:[%s2 + $0x8] sm:$0xff]
  %v167 = vld [vmem:[%s2 + $0x10] sm:$0xff]
  %v168 = vld [vmem:[%s2 + $0x18] sm:$0xff]
  %v169 = vld [vmem:[%s2 + $0x20] sm:$0xff]
  %v170 = vld [vmem:[%s2 + $0x28] sm:$0xff]
  %v171 = vld [vmem:[%s2 + $0x30] sm:$0xff]
  %v172 = vld [vmem:[%s2 + $0x38] sm:$0xff]
  %v173 = vld [vmem:[%s2 + $0x40] sm:$0xff]
  %v174 = vld [vmem:[%s2 + $0x48] sm:$0xff]
  %v175 = vld [vmem:[%s2 + $0x50] sm:$0xff]
  %v176 = vld [vmem:[%s2 + $0x58] sm:$0xff]
  %v177 = vld [vmem:[%s2 + $0x60] sm:$0xff]
  %v178 = vld [vmem:[%s2 + $0x68] sm:$0xff]
  %v179 = vld [vmem:[%s2 + $0x70] sm:$0xff]
  %v180 = vld [vmem:[%s2 + $0x78] sm:$0xff]
  %v182 = vsel %vm44, %v157, 0
  %v185 = vsel %vm44, %v158, 0
  %v188 = vsel %vm44, %v159, 0
  %v191 = vsel %vm44, %v160, 0
  %v194 = vsel %vm44, %v161, 0
  %v197 = vsel %vm44, %v162, 0
  %v200 = vsel %vm44, %v163, 0
  %v203 = vsel %vm44, %v164, 0
  %205 = vmatprep.subr.mxu0 %v166
  %206 = vmatpush1.msra.mxu0 %v165
  %207 = vmatprep.subr.mxu0 %v168
  %208 = vmatpush1.msra.mxu0 %v167
  %209 = vmatprep.subr.mxu0 %v170
  %210 = vmatpush1.msra.mxu0 %v169
  %211 = vmatprep.subr.mxu0 %v172
  %212 = vmatpush1.msra.mxu0 %v171
  %213 = vmatprep.subr.mxu0 %v174
  %214 = vmatpush1.msra.mxu0 %v173
  %215 = vmatprep.subr.mxu0 %v176
  %216 = vmatpush1.msra.mxu0 %v175
  %217 = vmatprep.subr.mxu0 %v178
  %218 = vmatpush1.msra.mxu0 %v177
  %219 = vmatprep.subr.mxu0 %v180
  %220 = vmatpush1.msra.mxu0 %v179
  %221 = vmatprep.subr.mxu0 0.0
  %222 = vmatpush1.msra.mxu0 0.0
  %223 = vmatprep.subr.mxu0 0.0
  %224 = vmatpush1.msra.mxu0 0.0
  %225 = vmatprep.subr.mxu0 0.0
  %226 = vmatpush1.msra.mxu0 0.0
  %227 = vmatprep.subr.mxu0 0.0
  %228 = vmatpush1.msra.mxu0 0.0
  %229 = vmatprep.subr.mxu0 0.0
  %230 = vmatpush1.msra.mxu0 0.0
  %231 = vmatprep.subr.mxu0 0.0
  %232 = vmatpush1.msra.mxu0 0.0
  %233 = vmatprep.subr.mxu0 0.0
  %234 = vmatpush1.msra.mxu0 0.0
  %235 = vmatprep.subr.mxu0 0.0
  %236 = vmatpush1.msra.mxu0 0.0
  %237 = vmatprep.subr.mxu0 0.0
  %238 = vmatpush1.msra.mxu0 0.0
  %239 = vmatprep.subr.mxu0 0.0
  %240 = vmatpush1.msra.mxu0 0.0
  %241 = vmatprep.subr.mxu0 0.0
  %242 = vmatpush1.msra.mxu0 0.0
  %243 = vmatprep.subr.mxu0 0.0
  %244 = vmatpush1.msra.mxu0 0.0
  %245 = vmatprep.subr.mxu0 0.0
  %246 = vmatpush1.msra.mxu0 0.0
  %247 = vmatprep.subr.mxu0 0.0
  %248 = vmatpush1.msra.mxu0 0.0
  %249 = vmatprep.subr.mxu0 0.0
  %250 = vmatpush1.msra.mxu0 0.0
  %251 = vmatprep.subr.mxu0 0.0
  %252 = vmatpush1.msra.mxu0 0.0
  %253 = vmatprep.subr.mxu0 0.0
  %254 = vmatpush1.msra.mxu0 0.0
  %255 = vmatprep.subr.mxu0 0.0
  %256 = vmatpush1.msra.mxu0 0.0
  %257 = vmatprep.subr.mxu0 0.0
  %258 = vmatpush1.msra.mxu0 0.0
  %259 = vmatprep.subr.mxu0 0.0
  %260 = vmatpush1.msra.mxu0 0.0
  %261 = vmatprep.subr.mxu0 0.0
  %262 = vmatpush1.msra.mxu0 0.0
  %263 = vmatprep.subr.mxu0 0.0
  %264 = vmatpush1.msra.mxu0 0.0
  %265 = vmatprep.subr.mxu0 0.0
  %266 = vmatpush1.msra.mxu0 0.0
  %267 = vmatprep.subr.mxu0 0.0
  %268 = vmatpush1.msra.mxu0 0.0
  %269 = vmatprep.mubr.f32.mxu0 0.0
  %270 = vmatmul.mubr.f32.gmra.mrb[0].mxu0 %v182
  %v271 = vpop.f32.mrb[0].mxu0
  %v272 = vadd.f32 0.0, %v271
  %v273 = vpop.f32.mrb[0].mxu0
  %v274 = vadd.f32 0.0, %v273
  %275 = vmatprep.mubr.f32.mxu0 0.0
  %276 = vmatmul.mubr.f32.gmra.mrb[0].mxu0 %v185
  %v277 = vpop.f32.mrb[0].mxu0
  %v278 = vadd.f32 0.0, %v277
  %v279 = vpop.f32.mrb[0].mxu0
  %v280 = vadd.f32 0.0, %v279
  %281 = vmatprep.mubr.f32.mxu0 0.0
  %282 = vmatmul.mubr.f32.gmra.mrb[0].mxu0 %v188
  %v283 = vpop.f32.mrb[0].mxu0
  %v284 = vadd.f32 0.0, %v283
  %v285 = vpop.f32.mrb[0].mxu0
  %v286 = vadd.f32 0.0, %v285
  %287 = vmatprep.mubr.f32.mxu0 0.0
  %288 = vmatmul.mubr.f32.gmra.mrb[0].mxu0 %v191
  %v289 = vpop.f32.mrb[0].mxu0
  %v290 = vadd.f32 0.0, %v289
  %v291 = vpop.f32.mrb[0].mxu0
  %v292 = vadd.f32 0.0, %v291
  %293 = vmatprep.mubr.f32.mxu0 0.0
  %294 = vmatmul.mubr.f32.gmra.mrb[0].mxu0 %v194
  %v295 = vpop.f32.mrb[0].mxu0
  %v296 = vadd.f32 0.0, %v295
  %v297 = vpop.f32.mrb[0].mxu0
  %v298 = vadd.f32 0.0, %v297
  %299 = vmatprep.mubr.f32.mxu0 0.0
  %300 = vmatmul.mubr.f32.gmra.mrb[0].mxu0 %v197
  %v301 = vpop.f32.mrb[0].mxu0
  %v302 = vadd.f32 0.0, %v301
  %v303 = vpop.f32.mrb[0].mxu0
  %v304 = vadd.f32 0.0, %v303
  %305 = vmatprep.mubr.f32.mxu0 0.0
  %306 = vmatmul.mubr.f32.gmra.mrb[0].mxu0 %v200
  %v307 = vpop.f32.mrb[0].mxu0
  %v308 = vadd.f32 0.0, %v307
  %v309 = vpop.f32.mrb[0].mxu0
  %v310 = vadd.f32 0.0, %v309
  %311 = vmatprep.mubr.f32.mxu0 0.0
  %312 = vmatmul.mubr.f32.gmra.mrb[0].mxu0 %v203
  %v313 = vpop.f32.mrb[0].mxu0
  %v314 = vadd.f32 0.0, %v313
  %v315 = vpop.f32.mrb[0].mxu0
  %v316 = vadd.f32 0.0, %v315
  %317 = vdwg.mxu0
  %v318 = vld [vmem:[%s3] sm:$0xff]
  %v319 = vld [vmem:[%s3 + $0x8] sm:$0xff]
  %v320 = vld [vmem:[%s3 + $0x10] sm:$0xff]
  %v321 = vld [vmem:[%s3 + $0x18] sm:$0xff]
  %v322 = vld [vmem:[%s3 + $0x20] sm:$0xff]
  %v323 = vld [vmem:[%s3 + $0x28] sm:$0xff]
  %v324 = vld [vmem:[%s3 + $0x30] sm:$0xff]
  %v325 = vld [vmem:[%s3 + $0x38] sm:$0xff]
  %v326 = vld [vmem:[%s3 + $0x40] sm:$0xff]
  %v327 = vld [vmem:[%s3 + $0x48] sm:$0xff]
  %v328 = vld [vmem:[%s3 + $0x50] sm:$0xff]
  %v329 = vld [vmem:[%s3 + $0x58] sm:$0xff]
  %v330 = vld [vmem:[%s3 + $0x60] sm:$0xff]
  %v331 = vld [vmem:[%s3 + $0x68] sm:$0xff]
  %v332 = vld [vmem:[%s3 + $0x70] sm:$0xff]
  %v333 = vld [vmem:[%s3 + $0x78] sm:$0xff]
  %334 = vmatprep.subr.mxu0 %v319
  %335 = vmatpush1.msra.mxu0 %v318
  %336 = vmatprep.subr.mxu0 %v321
  %337 = vmatpush1.msra.mxu0 %v320
  %338 = vmatprep.subr.mxu0 %v323
  %339 = vmatpush1.msra.mxu0 %v322
  %340 = vmatprep.subr.mxu0 %v325
  %341 = vmatpush1.msra.mxu0 %v324
  %342 = vmatprep.subr.mxu0 %v327
  %343 = vmatpush1.msra.mxu0 %v326
  %344 = vmatprep.subr.mxu0 %v329
  %345 = vmatpush1.msra.mxu0 %v328
  %346 = vmatprep.subr.mxu0 %v331
  %347 = vmatpush1.msra.mxu0 %v330
  %348 = vmatprep.subr.mxu0 %v333
  %349 = vmatpush1.msra.mxu0 %v332
  %350 = vmatprep.subr.mxu0 0.0
  %351 = vmatpush1.msra.mxu0 0.0
  %352 = vmatprep.subr.mxu0 0.0
  %353 = vmatpush1.msra.mxu0 0.0
  %354 = vmatprep.subr.mxu0 0.0
  %355 = vmatpush1.msra.mxu0 0.0
  %356 = vmatprep.subr.mxu0 0.0
  %357 = vmatpush1.msra.mxu0 0.0
  %358 = vmatprep.subr.mxu0 0.0
  %359 = vmatpush1.msra.mxu0 0.0
  %360 = vmatprep.subr.mxu0 0.0
  %361 = vmatpush1.msra.mxu0 0.0
  %362 = vmatprep.subr.mxu0 0.0
  %363 = vmatpush1.msra.mxu0 0.0
  %364 = vmatprep.subr.mxu0 0.0
  %365 = vmatpush1.msra.mxu0 0.0
  %366 = vmatprep.subr.mxu0 0.0
  %367 = vmatpush1.msra.mxu0 0.0
  %368 = vmatprep.subr.mxu0 0.0
  %369 = vmatpush1.msra.mxu0 0.0
  %370 = vmatprep.subr.mxu0 0.0
  %371 = vmatpush1.msra.mxu0 0.0
  %372 = vmatprep.subr.mxu0 0.0
  %373 = vmatpush1.msra.mxu0 0.0
  %374 = vmatprep.subr.mxu0 0.0
  %375 = vmatpush1.msra.mxu0 0.0
  %376 = vmatprep.subr.mxu0 0.0
  %377 = vmatpush1.msra.mxu0 0.0
  %378 = vmatprep.subr.mxu0 0.0
  %379 = vmatpush1.msra.mxu0 0.0
  %380 = vmatprep.subr.mxu0 0.0
  %381 = vmatpush1.msra.mxu0 0.0
  %382 = vmatprep.subr.mxu0 0.0
  %383 = vmatpush1.msra.mxu0 0.0
  %384 = vmatprep.subr.mxu0 0.0
  %385 = vmatpush1.msra.mxu0 0.0
  %386 = vmatprep.subr.mxu0 0.0
  %387 = vmatpush1.msra.mxu0 0.0
  %388 = vmatprep.subr.mxu0 0.0
  %389 = vmatpush1.msra.mxu0 0.0
  %390 = vmatprep.subr.mxu0 0.0
  %391 = vmatpush1.msra.mxu0 0.0
  %392 = vmatprep.subr.mxu0 0.0
  %393 = vmatpush1.msra.mxu0 0.0
  %394 = vmatprep.subr.mxu0 0.0
  %395 = vmatpush1.msra.mxu0 0.0
  %396 = vmatprep.subr.mxu0 0.0
  %397 = vmatpush1.msra.mxu0 0.0
  %398 = vmatprep.mubr.f32.mxu0 0.0
  %399 = vmatmul.mubr.f32.gmra.mrb[0].mxu0 %v182
  %v400 = vpop.f32.mrb[0].mxu0
  %v401 = vadd.f32 0.0, %v400
  %v402 = vpop.f32.mrb[0].mxu0
  %v403 = vadd.f32 0.0, %v402
  %404 = vmatprep.mubr.f32.mxu0 0.0
  %405 = vmatmul.mubr.f32.gmra.mrb[0].mxu0 %v185
  %v406 = vpop.f32.mrb[0].mxu0
  %v407 = vadd.f32 0.0, %v406
  %v408 = vpop.f32.mrb[0].mxu0
  %v409 = vadd.f32 0.0, %v408
  %410 = vmatprep.mubr.f32.mxu0 0.0
  %411 = vmatmul.mubr.f32.gmra.mrb[0].mxu0 %v188
  %v412 = vpop.f32.mrb[0].mxu0
  %v413 = vadd.f32 0.0, %v412
  %v414 = vpop.f32.mrb[0].mxu0
  %v415 = vadd.f32 0.0, %v414
  %416 = vmatprep.mubr.f32.mxu0 0.0
  %417 = vmatmul.mubr.f32.gmra.mrb[0].mxu0 %v191
  %v418 = vpop.f32.mrb[0].mxu0
  %v419 = vadd.f32 0.0, %v418
  %v420 = vpop.f32.mrb[0].mxu0
  %v421 = vadd.f32 0.0, %v420
  %422 = vmatprep.mubr.f32.mxu0 0.0
  %423 = vmatmul.mubr.f32.gmra.mrb[0].mxu0 %v194
  %v424 = vpop.f32.mrb[0].mxu0
  %v425 = vadd.f32 0.0, %v424
  %v426 = vpop.f32.mrb[0].mxu0
  %v427 = vadd.f32 0.0, %v426
  %428 = vmatprep.mubr.f32.mxu0 0.0
  %429 = vmatmul.mubr.f32.gmra.mrb[0].mxu0 %v197
  %v430 = vpop.f32.mrb[0].mxu0
  %v431 = vadd.f32 0.0, %v430
  %v432 = vpop.f32.mrb[0].mxu0
  %v433 = vadd.f32 0.0, %v432
  %434 = vmatprep.mubr.f32.mxu0 0.0
  %435 = vmatmul.mubr.f32.gmra.mrb[0].mxu0 %v200
  %v436 = vpop.f32.mrb[0].mxu0
  %v437 = vadd.f32 0.0, %v436
  %v438 = vpop.f32.mrb[0].mxu0
  %v439 = vadd.f32 0.0, %v438
  %440 = vmatprep.mubr.f32.mxu0 0.0
  %441 = vmatmul.mubr.f32.gmra.mrb[0].mxu0 %v203
  %v442 = vpop.f32.mrb[0].mxu0
  %v443 = vadd.f32 0.0, %v442
  %v444 = vpop.f32.mrb[0].mxu0
  %v445 = vadd.f32 0.0, %v444
  %446 = vdwg.mxu0
  %v447 = vmul.f32 %v401, 0.5
  %v448 = vmul.f32 %v403, 0.5
  %v449 = vmul.f32 %v407, 0.5
  %v450 = vmul.f32 %v409, 0.5
  %v451 = vmul.f32 %v413, 0.5
  %v452 = vmul.f32 %v415, 0.5
  %v453 = vmul.f32 %v419, 0.5
  %v454 = vmul.f32 %v421, 0.5
  %v455 = vmul.f32 %v425, 0.5
  %v456 = vmul.f32 %v427, 0.5
  %v457 = vmul.f32 %v431, 0.5
  %v458 = vmul.f32 %v433, 0.5
  %v459 = vmul.f32 %v437, 0.5
  %v460 = vmul.f32 %v439, 0.5
  %v461 = vmul.f32 %v443, 0.5
  %v462 = vmul.f32 %v445, 0.5
  %v463 = vmul.f32 %v401, 0.70710677
  %v464 = vmul.f32 %v403, 0.70710677
  %v465 = vmul.f32 %v407, 0.70710677
  %v466 = vmul.f32 %v409, 0.70710677
  %v467 = vmul.f32 %v413, 0.70710677
  %v468 = vmul.f32 %v415, 0.70710677
  %v469 = vmul.f32 %v419, 0.70710677
  %v470 = vmul.f32 %v421, 0.70710677
  %v471 = vmul.f32 %v425, 0.70710677
  %v472 = vmul.f32 %v427, 0.70710677
  %v473 = vmul.f32 %v431, 0.70710677
  %v474 = vmul.f32 %v433, 0.70710677
  %v475 = vmul.f32 %v437, 0.70710677
  %v476 = vmul.f32 %v439, 0.70710677
  %v477 = vmul.f32 %v443, 0.70710677
  %v478 = vmul.f32 %v445, 0.70710677
  %v479 = vand.u32 2147483647, %v463
  %v480 = vand.u32 2147483647, %v464
  %v481 = vand.u32 2147483647, %v465
  %v482 = vand.u32 2147483647, %v466
  %v483 = vand.u32 2147483647, %v467
  %v484 = vand.u32 2147483647, %v468
  %v485 = vand.u32 2147483647, %v469
  %v486 = vand.u32 2147483647, %v470
  %v487 = vand.u32 2147483647, %v471
  %v488 = vand.u32 2147483647, %v472
  %v489 = vand.u32 2147483647, %v473
  %v490 = vand.u32 2147483647, %v474
  %v491 = vand.u32 2147483647, %v475
  %v492 = vand.u32 2147483647, %v476
  %v493 = vand.u32 2147483647, %v477
  %v494 = vand.u32 2147483647, %v478
  %v495 = vmul.f32 %v479, 0.3275911
  %v496 = vmul.f32 %v480, 0.3275911
  %v497 = vmul.f32 %v481, 0.3275911
  %v498 = vmul.f32 %v482, 0.3275911
  %v499 = vmul.f32 %v483, 0.3275911
  %v500 = vmul.f32 %v484, 0.3275911
  %v501 = vmul.f32 %v485, 0.3275911
  %v502 = vmul.f32 %v486, 0.3275911
  %v503 = vmul.f32 %v487, 0.3275911
  %v504 = vmul.f32 %v488, 0.3275911
  %v505 = vmul.f32 %v489, 0.3275911
  %v506 = vmul.f32 %v490, 0.3275911
  %v507 = vmul.f32 %v491, 0.3275911
  %v508 = vmul.f32 %v492, 0.3275911
  %v509 = vmul.f32 %v493, 0.3275911
  %v510 = vmul.f32 %v494, 0.3275911
  %v511 = vadd.f32 %v495, 1.0
  %v512 = vadd.f32 %v496, 1.0
  %v513 = vadd.f32 %v497, 1.0
  %v514 = vadd.f32 %v498, 1.0
  %v515 = vadd.f32 %v499, 1.0
  %v516 = vadd.f32 %v500, 1.0
  %v517 = vadd.f32 %v501, 1.0
  %v518 = vadd.f32 %v502, 1.0
  %v519 = vadd.f32 %v503, 1.0
  %v520 = vadd.f32 %v504, 1.0
  %v521 = vadd.f32 %v505, 1.0
  %v522 = vadd.f32 %v506, 1.0
  %v523 = vadd.f32 %v507, 1.0
  %v524 = vadd.f32 %v508, 1.0
  %v525 = vadd.f32 %v509, 1.0
  %v526 = vadd.f32 %v510, 1.0
  %v527 = vrcp.pop %v511
  %v528 = vmul.f32 1.0, %v527
  %v529 = vrcp.pop %v512
  %v530 = vmul.f32 1.0, %v529
  %v531 = vrcp.pop %v513
  %v532 = vmul.f32 1.0, %v531
  %v533 = vrcp.pop %v514
  %v534 = vmul.f32 1.0, %v533
  %v535 = vrcp.pop %v515
  %v536 = vmul.f32 1.0, %v535
  %v537 = vrcp.pop %v516
  %v538 = vmul.f32 1.0, %v537
  %v539 = vrcp.pop %v517
  %v540 = vmul.f32 1.0, %v539
  %v541 = vrcp.pop %v518
  %v542 = vmul.f32 1.0, %v541
  %v543 = vrcp.pop %v519
  %v544 = vmul.f32 1.0, %v543
  %v545 = vrcp.pop %v520
  %v546 = vmul.f32 1.0, %v545
  %v547 = vrcp.pop %v521
  %v548 = vmul.f32 1.0, %v547
  %v549 = vrcp.pop %v522
  %v550 = vmul.f32 1.0, %v549
  %v551 = vrcp.pop %v523
  %v552 = vmul.f32 1.0, %v551
  %v553 = vrcp.pop %v524
  %v554 = vmul.f32 1.0, %v553
  %v555 = vrcp.pop %v525
  %v556 = vmul.f32 1.0, %v555
  %v557 = vrcp.pop %v526
  %v558 = vmul.f32 1.0, %v557
  %v559 = vmul.f32 %v528, 1.0614054
  %v560 = vmul.f32 %v530, 1.0614054
  %v561 = vmul.f32 %v532, 1.0614054
  %v562 = vmul.f32 %v534, 1.0614054
  %v563 = vmul.f32 %v536, 1.0614054
  %v564 = vmul.f32 %v538, 1.0614054
  %v565 = vmul.f32 %v540, 1.0614054
  %v566 = vmul.f32 %v542, 1.0614054
  %v567 = vmul.f32 %v544, 1.0614054
  %v568 = vmul.f32 %v546, 1.0614054
  %v569 = vmul.f32 %v548, 1.0614054
  %v570 = vmul.f32 %v550, 1.0614054
  %v571 = vmul.f32 %v552, 1.0614054
  %v572 = vmul.f32 %v554, 1.0614054
  %v573 = vmul.f32 %v556, 1.0614054
  %v574 = vmul.f32 %v558, 1.0614054
  %v575 = vadd.f32 %v559, -1.4531521
  %v576 = vadd.f32 %v560, -1.4531521
  %v577 = vadd.f32 %v561, -1.4531521
  %v578 = vadd.f32 %v562, -1.4531521
  %v579 = vadd.f32 %v563, -1.4531521
  %v580 = vadd.f32 %v564, -1.4531521
  %v581 = vadd.f32 %v565, -1.4531521
  %v582 = vadd.f32 %v566, -1.4531521
  %v583 = vadd.f32 %v567, -1.4531521
  %v584 = vadd.f32 %v568, -1.4531521
  %v585 = vadd.f32 %v569, -1.4531521
  %v586 = vadd.f32 %v570, -1.4531521
  %v587 = vadd.f32 %v571, -1.4531521
  %v588 = vadd.f32 %v572, -1.4531521
  %v589 = vadd.f32 %v573, -1.4531521
  %v590 = vadd.f32 %v574, -1.4531521
  %v591 = vmul.f32 %v575, %v528
  %v592 = vmul.f32 %v576, %v530
  %v593 = vmul.f32 %v577, %v532
  %v594 = vmul.f32 %v578, %v534
  %v595 = vmul.f32 %v579, %v536
  %v596 = vmul.f32 %v580, %v538
  %v597 = vmul.f32 %v581, %v540
  %v598 = vmul.f32 %v582, %v542
  %v599 = vmul.f32 %v583, %v544
  %v600 = vmul.f32 %v584, %v546
  %v601 = vmul.f32 %v585, %v548
  %v602 = vmul.f32 %v586, %v550
  %v603 = vmul.f32 %v587, %v552
  %v604 = vmul.f32 %v588, %v554
  %v605 = vmul.f32 %v589, %v556
  %v606 = vmul.f32 %v590, %v558
  %v607 = vadd.f32 %v591, 1.4214138
  %v608 = vadd.f32 %v592, 1.4214138
  %v609 = vadd.f32 %v593, 1.4214138
  %v610 = vadd.f32 %v594, 1.4214138
  %v611 = vadd.f32 %v595, 1.4214138
  %v612 = vadd.f32 %v596, 1.4214138
  %v613 = vadd.f32 %v597, 1.4214138
  %v614 = vadd.f32 %v598, 1.4214138
  %v615 = vadd.f32 %v599, 1.4214138
  %v616 = vadd.f32 %v600, 1.4214138
  %v617 = vadd.f32 %v601, 1.4214138
  %v618 = vadd.f32 %v602, 1.4214138
  %v619 = vadd.f32 %v603, 1.4214138
  %v620 = vadd.f32 %v604, 1.4214138
  %v621 = vadd.f32 %v605, 1.4214138
  %v622 = vadd.f32 %v606, 1.4214138
  %v623 = vmul.f32 %v607, %v528
  %v624 = vmul.f32 %v608, %v530
  %v625 = vmul.f32 %v609, %v532
  %v626 = vmul.f32 %v610, %v534
  %v627 = vmul.f32 %v611, %v536
  %v628 = vmul.f32 %v612, %v538
  %v629 = vmul.f32 %v613, %v540
  %v630 = vmul.f32 %v614, %v542
  %v631 = vmul.f32 %v615, %v544
  %v632 = vmul.f32 %v616, %v546
  %v633 = vmul.f32 %v617, %v548
  %v634 = vmul.f32 %v618, %v550
  %v635 = vmul.f32 %v619, %v552
  %v636 = vmul.f32 %v620, %v554
  %v637 = vmul.f32 %v621, %v556
  %v638 = vmul.f32 %v622, %v558
  %v639 = vadd.f32 %v623, -0.28449672
  %v640 = vadd.f32 %v624, -0.28449672
  %v641 = vadd.f32 %v625, -0.28449672
  %v642 = vadd.f32 %v626, -0.28449672
  %v643 = vadd.f32 %v627, -0.28449672
  %v644 = vadd.f32 %v628, -0.28449672
  %v645 = vadd.f32 %v629, -0.28449672
  %v646 = vadd.f32 %v630, -0.28449672
  %v647 = vadd.f32 %v631, -0.28449672
  %v648 = vadd.f32 %v632, -0.28449672
  %v649 = vadd.f32 %v633, -0.28449672
  %v650 = vadd.f32 %v634, -0.28449672
  %v651 = vadd.f32 %v635, -0.28449672
  %v652 = vadd.f32 %v636, -0.28449672
  %v653 = vadd.f32 %v637, -0.28449672
  %v654 = vadd.f32 %v638, -0.28449672
  %v655 = vmul.f32 %v639, %v528
  %v656 = vmul.f32 %v640, %v530
  %v657 = vmul.f32 %v641, %v532
  %v658 = vmul.f32 %v642, %v534
  %v659 = vmul.f32 %v643, %v536
  %v660 = vmul.f32 %v644, %v538
  %v661 = vmul.f32 %v645, %v540
  %v662 = vmul.f32 %v646, %v542
  %v663 = vmul.f32 %v647, %v544
  %v664 = vmul.f32 %v648, %v546
  %v665 = vmul.f32 %v649, %v548
  %v666 = vmul.f32 %v650, %v550
  %v667 = vmul.f32 %v651, %v552
  %v668 = vmul.f32 %v652, %v554
  %v669 = vmul.f32 %v653, %v556
  %v670 = vmul.f32 %v654, %v558
  %v671 = vadd.f32 %v655, 0.2548296
  %v672 = vadd.f32 %v656, 0.2548296
  %v673 = vadd.f32 %v657, 0.2548296
  %v674 = vadd.f32 %v658, 0.2548296
  %v675 = vadd.f32 %v659, 0.2548296
  %v676 = vadd.f32 %v660, 0.2548296
  %v677 = vadd.f32 %v661, 0.2548296
  %v678 = vadd.f32 %v662, 0.2548296
  %v679 = vadd.f32 %v663, 0.2548296
  %v680 = vadd.f32 %v664, 0.2548296
  %v681 = vadd.f32 %v665, 0.2548296
  %v682 = vadd.f32 %v666, 0.2548296
  %v683 = vadd.f32 %v667, 0.2548296
  %v684 = vadd.f32 %v668, 0.2548296
  %v685 = vadd.f32 %v669, 0.2548296
  %v686 = vadd.f32 %v670, 0.2548296
  %v687 = vmul.f32 %v671, %v528
  %v688 = vmul.f32 %v672, %v530
  %v689 = vmul.f32 %v673, %v532
  %v690 = vmul.f32 %v674, %v534
  %v691 = vmul.f32 %v675, %v536
  %v692 = vmul.f32 %v676, %v538
  %v693 = vmul.f32 %v677, %v540
  %v694 = vmul.f32 %v678, %v542
  %v695 = vmul.f32 %v679, %v544
  %v696 = vmul.f32 %v680, %v546
  %v697 = vmul.f32 %v681, %v548
  %v698 = vmul.f32 %v682, %v550
  %v699 = vmul.f32 %v683, %v552
  %v700 = vmul.f32 %v684, %v554
  %v701 = vmul.f32 %v685, %v556
  %v702 = vmul.f32 %v686, %v558
  %v703 = vsub.f32 0.0, %v479
  %v704 = vsub.f32 0.0, %v480
  %v705 = vsub.f32 0.0, %v481
  %v706 = vsub.f32 0.0, %v482
  %v707 = vsub.f32 0.0, %v483
  %v708 = vsub.f32 0.0, %v484
  %v709 = vsub.f32 0.0, %v485
  %v710 = vsub.f32 0.0, %v486
  %v711 = vsub.f32 0.0, %v487
  %v712 = vsub.f32 0.0, %v488
  %v713 = vsub.f32 0.0, %v489
  %v714 = vsub.f32 0.0, %v490
  %v715 = vsub.f32 0.0, %v491
  %v716 = vsub.f32 0.0, %v492
  %v717 = vsub.f32 0.0, %v493
  %v718 = vsub.f32 0.0, %v494
  %v719 = vmul.f32 %v703, %v479
  %v720 = vmul.f32 %v704, %v480
  %v721 = vmul.f32 %v705, %v481
  %v722 = vmul.f32 %v706, %v482
  %v723 = vmul.f32 %v707, %v483
  %v724 = vmul.f32 %v708, %v484
  %v725 = vmul.f32 %v709, %v485
  %v726 = vmul.f32 %v710, %v486
  %v727 = vmul.f32 %v711, %v487
  %v728 = vmul.f32 %v712, %v488
  %v729 = vmul.f32 %v713, %v489
  %v730 = vmul.f32 %v714, %v490
  %v731 = vmul.f32 %v715, %v491
  %v732 = vmul.f32 %v716, %v492
  %v733 = vmul.f32 %v717, %v493
  %v734 = vmul.f32 %v718, %v494
  %v735 = vmul.f32 %v719, 1.442695
  %v736 = vpow.pop %v735
  %v737 = vmul.f32 %v720, 1.442695
  %v738 = vpow.pop %v737
  %v739 = vmul.f32 %v721, 1.442695
  %v740 = vpow.pop %v739
  %v741 = vmul.f32 %v722, 1.442695
  %v742 = vpow.pop %v741
  %v743 = vmul.f32 %v723, 1.442695
  %v744 = vpow.pop %v743
  %v745 = vmul.f32 %v724, 1.442695
  %v746 = vpow.pop %v745
  %v747 = vmul.f32 %v725, 1.442695
  %v748 = vpow.pop %v747
  %v749 = vmul.f32 %v726, 1.442695
  %v750 = vpow.pop %v749
  %v751 = vmul.f32 %v727, 1.442695
  %v752 = vpow.pop %v751
  %v753 = vmul.f32 %v728, 1.442695
  %v754 = vpow.pop %v753
  %v755 = vmul.f32 %v729, 1.442695
  %v756 = vpow.pop %v755
  %v757 = vmul.f32 %v730, 1.442695
  %v758 = vpow.pop %v757
  %v759 = vmul.f32 %v731, 1.442695
  %v760 = vpow.pop %v759
  %v761 = vmul.f32 %v732, 1.442695
  %v762 = vpow.pop %v761
  %v763 = vmul.f32 %v733, 1.442695
  %v764 = vpow.pop %v763
  %v765 = vmul.f32 %v734, 1.442695
  %v766 = vpow.pop %v765
  %v767 = vmul.f32 %v687, %v736
  %v768 = vmul.f32 %v688, %v738
  %v769 = vmul.f32 %v689, %v740
  %v770 = vmul.f32 %v690, %v742
  %v771 = vmul.f32 %v691, %v744
  %v772 = vmul.f32 %v692, %v746
  %v773 = vmul.f32 %v693, %v748
  %v774 = vmul.f32 %v694, %v750
  %v775 = vmul.f32 %v695, %v752
  %v776 = vmul.f32 %v696, %v754
  %v777 = vmul.f32 %v697, %v756
  %v778 = vmul.f32 %v698, %v758
  %v779 = vmul.f32 %v699, %v760
  %v780 = vmul.f32 %v700, %v762
  %v781 = vmul.f32 %v701, %v764
  %v782 = vmul.f32 %v702, %v766
  %v783 = vsub.f32 1.0, %v767
  %v784 = vsub.f32 1.0, %v768
  %v785 = vsub.f32 1.0, %v769
  %v786 = vsub.f32 1.0, %v770
  %v787 = vsub.f32 1.0, %v771
  %v788 = vsub.f32 1.0, %v772
  %v789 = vsub.f32 1.0, %v773
  %v790 = vsub.f32 1.0, %v774
  %v791 = vsub.f32 1.0, %v775
  %v792 = vsub.f32 1.0, %v776
  %v793 = vsub.f32 1.0, %v777
  %v794 = vsub.f32 1.0, %v778
  %v795 = vsub.f32 1.0, %v779
  %v796 = vsub.f32 1.0, %v780
  %v797 = vsub.f32 1.0, %v781
  %v798 = vsub.f32 1.0, %v782
  %vm799 = vcmp.ge.f32.partialorder %v463, 0.0
  %vm800 = vcmp.ge.f32.partialorder %v464, 0.0
  %vm801 = vcmp.ge.f32.partialorder %v465, 0.0
  %vm802 = vcmp.ge.f32.partialorder %v466, 0.0
  %vm803 = vcmp.ge.f32.partialorder %v467, 0.0
  %vm804 = vcmp.ge.f32.partialorder %v468, 0.0
  %vm805 = vcmp.ge.f32.partialorder %v469, 0.0
  %vm806 = vcmp.ge.f32.partialorder %v470, 0.0
  %vm807 = vcmp.ge.f32.partialorder %v471, 0.0
  %vm808 = vcmp.ge.f32.partialorder %v472, 0.0
  %vm809 = vcmp.ge.f32.partialorder %v473, 0.0
  %vm810 = vcmp.ge.f32.partialorder %v474, 0.0
  %vm811 = vcmp.ge.f32.partialorder %v475, 0.0
  %vm812 = vcmp.ge.f32.partialorder %v476, 0.0
  %vm813 = vcmp.ge.f32.partialorder %v477, 0.0
  %vm814 = vcmp.ge.f32.partialorder %v478, 0.0
  %v815 = vsub.f32 0.0, %v783
  %v816 = vsub.f32 0.0, %v784
  %v817 = vsub.f32 0.0, %v785
  %v818 = vsub.f32 0.0, %v786
  %v819 = vsub.f32 0.0, %v787
  %v820 = vsub.f32 0.0, %v788
  %v821 = vsub.f32 0.0, %v789
  %v822 = vsub.f32 0.0, %v790
  %v823 = vsub.f32 0.0, %v791
  %v824 = vsub.f32 0.0, %v792
  %v825 = vsub.f32 0.0, %v793
  %v826 = vsub.f32 0.0, %v794
  %v827 = vsub.f32 0.0, %v795
  %v828 = vsub.f32 0.0, %v796
  %v829 = vsub.f32 0.0, %v797
  %v830 = vsub.f32 0.0, %v798
  %v831 = vsel %vm799, %v783, %v815
  %v832 = vsel %vm800, %v784, %v816
  %v833 = vsel %vm801, %v785, %v817
  %v834 = vsel %vm802, %v786, %v818
  %v835 = vsel %vm803, %v787, %v819
  %v836 = vsel %vm804, %v788, %v820
  %v837 = vsel %vm805, %v789, %v821
  %v838 = vsel %vm806, %v790, %v822
  %v839 = vsel %vm807, %v791, %v823
  %v840 = vsel %vm808, %v792, %v824
  %v841 = vsel %vm809, %v793, %v825
  %v842 = vsel %vm810, %v794, %v826
  %v843 = vsel %vm811, %v795, %v827
  %v844 = vsel %vm812, %v796, %v828
  %v845 = vsel %vm813, %v797, %v829
  %v846 = vsel %vm814, %v798, %v830
  %v847 = vadd.f32 %v831, 1.0
  %v848 = vadd.f32 %v832, 1.0
  %v849 = vadd.f32 %v833, 1.0
  %v850 = vadd.f32 %v834, 1.0
  %v851 = vadd.f32 %v835, 1.0
  %v852 = vadd.f32 %v836, 1.0
  %v853 = vadd.f32 %v837, 1.0
  %v854 = vadd.f32 %v838, 1.0
  %v855 = vadd.f32 %v839, 1.0
  %v856 = vadd.f32 %v840, 1.0
  %v857 = vadd.f32 %v841, 1.0
  %v858 = vadd.f32 %v842, 1.0
  %v859 = vadd.f32 %v843, 1.0
  %v860 = vadd.f32 %v844, 1.0
  %v861 = vadd.f32 %v845, 1.0
  %v862 = vadd.f32 %v846, 1.0
  %v863 = vmul.f32 %v447, %v847
  %v864 = vmul.f32 %v448, %v848
  %v865 = vmul.f32 %v449, %v849
  %v866 = vmul.f32 %v450, %v850
  %v867 = vmul.f32 %v451, %v851
  %v868 = vmul.f32 %v452, %v852
  %v869 = vmul.f32 %v453, %v853
  %v870 = vmul.f32 %v454, %v854
  %v871 = vmul.f32 %v455, %v855
  %v872 = vmul.f32 %v456, %v856
  %v873 = vmul.f32 %v457, %v857
  %v874 = vmul.f32 %v458, %v858
  %v875 = vmul.f32 %v459, %v859
  %v876 = vmul.f32 %v460, %v860
  %v877 = vmul.f32 %v461, %v861
  %v878 = vmul.f32 %v462, %v862
  %v879 = vmul.f32 %v863, %v272
  %v880 = vmul.f32 %v864, %v274
  %v881 = vmul.f32 %v865, %v278
  %v882 = vmul.f32 %v866, %v280
  %v883 = vmul.f32 %v867, %v284
  %v884 = vmul.f32 %v868, %v286
  %v885 = vmul.f32 %v869, %v290
  %v886 = vmul.f32 %v870, %v292
  %v887 = vmul.f32 %v871, %v296
  %v888 = vmul.f32 %v872, %v298
  %v889 = vmul.f32 %v873, %v302
  %v890 = vmul.f32 %v874, %v304
  %v891 = vmul.f32 %v875, %v308
  %v892 = vmul.f32 %v876, %v310
  %v893 = vmul.f32 %v877, %v314
  %v894 = vmul.f32 %v878, %v316
  %v895 = vld [vmem:[#allocation2] sm:$0xff]
  %v896 = vld [vmem:[#allocation2 + $0x8] sm:$0xff]
  %v897 = vld [vmem:[#allocation2 + $0x10] sm:$0xff]
  %v898 = vld [vmem:[#allocation2 + $0x18] sm:$0xff]
  %v899 = vld [vmem:[#allocation2 + $0x20] sm:$0xff]
  %v900 = vld [vmem:[#allocation2 + $0x28] sm:$0xff]
  %v901 = vld [vmem:[#allocation2 + $0x30] sm:$0xff]
  %v902 = vld [vmem:[#allocation2 + $0x38] sm:$0xff]
  %v903 = vld [vmem:[%s4] sm:$0xff]
  %v904 = vld [vmem:[%s4 + $0x8] sm:$0xff]
  %v905 = vld [vmem:[%s4 + $0x10] sm:$0xff]
  %v906 = vld [vmem:[%s4 + $0x18] sm:$0xff]
  %v907 = vld [vmem:[%s4 + $0x20] sm:$0xff]
  %v908 = vld [vmem:[%s4 + $0x28] sm:$0xff]
  %v909 = vld [vmem:[%s4 + $0x30] sm:$0xff]
  %v910 = vld [vmem:[%s4 + $0x38] sm:$0xff]
  %v911 = vld [vmem:[%s4 + $0x40] sm:$0xff]
  %v912 = vld [vmem:[%s4 + $0x48] sm:$0xff]
  %v913 = vld [vmem:[%s4 + $0x50] sm:$0xff]
  %v914 = vld [vmem:[%s4 + $0x58] sm:$0xff]
  %v915 = vld [vmem:[%s4 + $0x60] sm:$0xff]
  %v916 = vld [vmem:[%s4 + $0x68] sm:$0xff]
  %v917 = vld [vmem:[%s4 + $0x70] sm:$0xff]
  %v918 = vld [vmem:[%s4 + $0x78] sm:$0xff]
  %v919 = vld [vmem:[%s4 + $0x80] sm:$0xff]
  %v920 = vld [vmem:[%s4 + $0x88] sm:$0xff]
  %v921 = vld [vmem:[%s4 + $0x90] sm:$0xff]
  %v922 = vld [vmem:[%s4 + $0x98] sm:$0xff]
  %v923 = vld [vmem:[%s4 + $0xa0] sm:$0xff]
  %v924 = vld [vmem:[%s4 + $0xa8] sm:$0x3]
  %vm925 = vcmask 343040
  %v927 = vsel %vm925, %v880, 0
  %v930 = vsel %vm925, %v882, 0
  %v933 = vsel %vm925, %v884, 0
  %v936 = vsel %vm925, %v886, 0
  %v939 = vsel %vm925, %v888, 0
  %v942 = vsel %vm925, %v890, 0
  %v945 = vsel %vm925, %v892, 0
  %v948 = vsel %vm925, %v894, 0
  %vm950 = vcmask 1041408
  %v952 = vsel %vm950, %v924, 0
  %954 = vmatprep.subr.mxu0 0.0
  %955 = vmatpush1.msra.mxu0 %v903
  %956 = vmatprep.subr.mxu0 0.0
  %957 = vmatpush1.msra.mxu0 %v904
  %958 = vmatprep.subr.mxu0 0.0
  %959 = vmatpush1.msra.mxu0 %v905
  %960 = vmatprep.subr.mxu0 0.0
  %961 = vmatpush1.msra.mxu0 %v906
  %962 = vmatprep.subr.mxu0 0.0
  %963 = vmatpush1.msra.mxu0 %v907
  %964 = vmatprep.subr.mxu0 0.0
  %965 = vmatpush1.msra.mxu0 %v908
  %966 = vmatprep.subr.mxu0 0.0
  %967 = vmatpush1.msra.mxu0 %v909
  %968 = vmatprep.subr.mxu0 0.0
  %969 = vmatpush1.msra.mxu0 %v910
  %970 = vmatprep.subr.mxu0 0.0
  %971 = vmatpush1.msra.mxu0 %v911
  %972 = vmatprep.subr.mxu0 0.0
  %973 = vmatpush1.msra.mxu0 %v912
  %974 = vmatprep.subr.mxu0 0.0
  %975 = vmatpush1.msra.mxu0 %v913
  %976 = vmatprep.subr.mxu0 0.0
  %977 = vmatpush1.msra.mxu0 %v914
  %978 = vmatprep.subr.mxu0 0.0
  %979 = vmatpush1.msra.mxu0 %v915
  %980 = vmatprep.subr.mxu0 0.0
  %981 = vmatpush1.msra.mxu0 %v916
  %982 = vmatprep.subr.mxu0 0.0
  %983 = vmatpush1.msra.mxu0 %v917
  %984 = vmatprep.subr.mxu0 0.0
  %985 = vmatpush1.msra.mxu0 %v918
  %986 = vmatprep.subr.mxu0 0.0
  %987 = vmatpush1.msra.mxu0 %v919
  %988 = vmatprep.subr.mxu0 0.0
  %989 = vmatpush1.msra.mxu0 %v920
  %990 = vmatprep.subr.mxu0 0.0
  %991 = vmatpush1.msra.mxu0 %v921
  %992 = vmatprep.subr.mxu0 0.0
  %993 = vmatpush1.msra.mxu0 %v922
  %994 = vmatprep.subr.mxu0 0.0
  %995 = vmatpush1.msra.mxu0 %v923
  %996 = vmatprep.subr.mxu0 0.0
  %997 = vmatpush1.msra.mxu0 %v952
  %998 = vmatprep.subr.mxu0 0.0
  %999 = vmatpush1.msra.mxu0 0.0
  %1000 = vmatprep.subr.mxu0 0.0
  %1001 = vmatpush1.msra.mxu0 0.0
  %1002 = vmatprep.subr.mxu0 0.0
  %1003 = vmatpush1.msra.mxu0 0.0
  %1004 = vmatprep.subr.mxu0 0.0
  %1005 = vmatpush1.msra.mxu0 0.0
  %1006 = vmatprep.subr.mxu0 0.0
  %1007 = vmatpush1.msra.mxu0 0.0
  %1008 = vmatprep.subr.mxu0 0.0
  %1009 = vmatpush1.msra.mxu0 0.0
  %1010 = vmatprep.subr.mxu0 0.0
  %1011 = vmatpush1.msra.mxu0 0.0
  %1012 = vmatprep.subr.mxu0 0.0
  %1013 = vmatpush1.msra.mxu0 0.0
  %1014 = vmatprep.subr.mxu0 0.0
  %1015 = vmatpush1.msra.mxu0 0.0
  %1016 = vmatprep.subr.mxu0 0.0
  %1017 = vmatpush1.msra.mxu0 0.0
  %1018 = vmatprep.mubr.f32.mxu0 %v927
  %1019 = vmatmul.mubr.f32.gmra.mrb[0].mxu0 %v879
  %v1020 = vpop.f32.mrb[0].mxu0
  %v1021 = vadd.f32 0.0, %v1020
  %v1022 = vpop.f32.mrb[0].mxu0
  %1023 = vmatprep.mubr.f32.mxu0 %v930
  %1024 = vmatmul.mubr.f32.gmra.mrb[0].mxu0 %v881
  %v1025 = vpop.f32.mrb[0].mxu0
  %v1026 = vadd.f32 0.0, %v1025
  %v1027 = vpop.f32.mrb[0].mxu0
  %1028 = vmatprep.mubr.f32.mxu0 %v933
  %1029 = vmatmul.mubr.f32.gmra.mrb[0].mxu0 %v883
  %v1030 = vpop.f32.mrb[0].mxu0
  %v1031 = vadd.f32 0.0, %v1030
  %v1032 = vpop.f32.mrb[0].mxu0
  %1033 = vmatprep.mubr.f32.mxu0 %v936
  %1034 = vmatmul.mubr.f32.gmra.mrb[0].mxu0 %v885
  %v1035 = vpop.f32.mrb[0].mxu0
  %v1036 = vadd.f32 0.0, %v1035
  %v1037 = vpop.f32.mrb[0].mxu0
  %1038 = vmatprep.mubr.f32.mxu0 %v939
  %1039 = vmatmul.mubr.f32.gmra.mrb[0].mxu0 %v887
  %v1040 = vpop.f32.mrb[0].mxu0
  %v1041 = vadd.f32 0.0, %v1040
  %v1042 = vpop.f32.mrb[0].mxu0
  %1043 = vmatprep.mubr.f32.mxu0 %v942
  %1044 = vmatmul.mubr.f32.gmra.mrb[0].mxu0 %v889
  %v1045 = vpop.f32.mrb[0].mxu0
  %v1046 = vadd.f32 0.0, %v1045
  %v1047 = vpop.f32.mrb[0].mxu0
  %1048 = vmatprep.mubr.f32.mxu0 %v945
  %1049 = vmatmul.mubr.f32.gmra.mrb[0].mxu0 %v891
  %v1050 = vpop.f32.mrb[0].mxu0
  %v1051 = vadd.f32 0.0, %v1050
  %v1052 = vpop.f32.mrb[0].mxu0
  %1053 = vmatprep.mubr.f32.mxu0 %v948
  %1054 = vmatmul.mubr.f32.gmra.mrb[0].mxu0 %v893
  %v1055 = vpop.f32.mrb[0].mxu0
  %v1056 = vadd.f32 0.0, %v1055
  %v1057 = vpop.f32.mrb[0].mxu0
  %1058 = vdwg.mxu0
  %v1059 = vadd.f32 %v895, %v1021
  %v1060 = vadd.f32 %v896, %v1026
  %v1061 = vadd.f32 %v897, %v1031
  %v1062 = vadd.f32 %v898, %v1036
  %v1063 = vadd.f32 %v899, %v1041
  %v1064 = vadd.f32 %v900, %v1046
  %v1065 = vadd.f32 %v901, %v1051
  %v1066 = vadd.f32 %v902, %v1056
  %1067 = vst.msk [vmem:[#allocation2] sm:$0xff] %vm44, %v1059
  %1068 = vst.msk [vmem:[#allocation2 + $0x8] sm:$0xff] %vm44, %v1060
  %1069 = vst.msk [vmem:[#allocation2 + $0x10] sm:$0xff] %vm44, %v1061
  %1070 = vst.msk [vmem:[#allocation2 + $0x18] sm:$0xff] %vm44, %v1062
  %1071 = vst.msk [vmem:[#allocation2 + $0x20] sm:$0xff] %vm44, %v1063
  %1072 = vst.msk [vmem:[#allocation2 + $0x28] sm:$0xff] %vm44, %v1064
  %1073 = vst.msk [vmem:[#allocation2 + $0x30] sm:$0xff] %vm44, %v1065
  %1074 = vst.msk [vmem:[#allocation2 + $0x38] sm:$0xff] %vm44, %v1066
  // Predicated region
  $region30: #{text_transformer_forward.21} parent=0 // pred_check
    %p1075 = pneg %p23
  $region31: #{text_transformer_forward.21} parent=0 // pred_check_branch
    %1077 = sbr.rel (%p1075) target = $region33
  $region32: #{text_transformer_forward.21} parent=0 // pred_region
    %v1078 = vld [vmem:[#allocation2] sm:$0xff]
    %v1079 = vld [vmem:[#allocation2 + $0x8] sm:$0xff]
    %v1080 = vld [vmem:[#allocation2 + $0x10] sm:$0xff]
    %v1081 = vld [vmem:[#allocation2 + $0x18] sm:$0xff]
    %v1082 = vld [vmem:[#allocation2 + $0x20] sm:$0xff]
    %v1083 = vld [vmem:[#allocation2 + $0x28] sm:$0xff]
    %v1084 = vld [vmem:[#allocation2 + $0x30] sm:$0xff]
    %v1085 = vld [vmem:[#allocation2 + $0x38] sm:$0xff]
    %v1086 = vld [vmem:[%s5] sm:$0xff]
    %v1087 = vld [vmem:[%s5 + $0x8] sm:$0xff]
    %v1088 = vld [vmem:[%s5 + $0x10] sm:$0xff]
    %v1089 = vld [vmem:[%s5 + $0x18] sm:$0xff]
    %v1090 = vld [vmem:[%s5 + $0x20] sm:$0xff]
    %v1091 = vld [vmem:[%s5 + $0x28] sm:$0xff]
    %v1092 = vld [vmem:[%s5 + $0x30] sm:$0xff]
    %v1093 = vld [vmem:[%s5 + $0x38] sm:$0xff]
    %v1094 = vadd.f32 %v1078, %v1086
    %v1095 = vadd.f32 %v1079, %v1087
    %v1096 = vadd.f32 %v1080, %v1088
    %v1097 = vadd.f32 %v1081, %v1089
    %v1098 = vadd.f32 %v1082, %v1090
    %v1099 = vadd.f32 %v1083, %v1091
    %v1100 = vadd.f32 %v1084, %v1092
    %v1101 = vadd.f32 %v1085, %v1093
    %1102 = vst.msk [vmem:[%s6] sm:$0xff] %vm44, %v1094
    %1103 = vst.msk [vmem:[%s6 + $0x8] sm:$0xff] %vm44, %v1095
    %1104 = vst.msk [vmem:[%s6 + $0x10] sm:$0xff] %vm44, %v1096
    %1105 = vst.msk [vmem:[%s6 + $0x18] sm:$0xff] %vm44, %v1097
    %1106 = vst.msk [vmem:[%s6 + $0x20] sm:$0xff] %vm44, %v1098
    %1107 = vst.msk [vmem:[%s6 + $0x28] sm:$0xff] %vm44, %v1099
    %1108 = vst.msk [vmem:[%s6 + $0x30] sm:$0xff] %vm44, %v1100
    %1109 = vst.msk [vmem:[%s6 + $0x38] sm:$0xff] %vm44, %v1101
  $region33: #{text_transformer_forward.21} parent=0 // pred_fallthru
    _
  // Predicated region
  $region34: #{text_transformer_forward.21} parent=0 // pred_check
    _
  $region35: #{text_transformer_forward.21} parent=0 // pred_check_branch
    %1111 = sbr.rel (0) target = $region37
  $region36: #{text_transformer_forward.21} parent=0 // pred_region
    _
  $region37: #{text_transformer_forward.21} parent=0 // pred_fallthru
    _
  // Predicated region
  $region38: #{text_transformer_forward.21} parent=0 // pred_check
    _
  $region39: #{text_transformer_forward.21} parent=0 // pred_check_branch
    %1113 = sbr.rel (0) target = $region41
  $region40: #{text_transformer_forward.21} parent=0 // pred_region
    _
  $region41: #{text_transformer_forward.21} parent=0 // pred_fallthru
    _

</llo_original>
